<compile_context>
chip_gen: v6e
topology: v6e:2x2x1
jax: 0.10.0
libtpu: 0.0.40
codegen_flags: <defaults>
</compile_context>

<pallas_src>
import functools
import math

import jax
import jax.numpy as jnp
from jax import lax
from jax.experimental import pallas as pl
from jax.experimental.pallas import tpu as pltpu


_MASK_VALUE = -1e30  # large finite negative instead of -inf (NaN-safe)


# -----------------------------------------------------------------------------
# BlockSpec helpers
# -----------------------------------------------------------------------------

def _batch_spec(shape):
    """Block over the leading (batch) dim, full extent on the remaining dims."""
    n = len(shape)
    return pl.BlockSpec((None,) + tuple(shape[1:]),
                        lambda b, n=n: (b,) + (0,) * (n - 1))


def _bcast_spec(shape):
    """Full-array block, same block for every grid step (weights / biases)."""
    n = len(shape)
    return pl.BlockSpec(tuple(shape), lambda b, n=n: (0,) * n)


def _parallel(n_axes=1):
    return pltpu.CompilerParams(dimension_semantics=("parallel",) * n_axes)


# -----------------------------------------------------------------------------
# In-kernel math helpers (bf16 MXU operands, f32 accumulation / element-wise)
# -----------------------------------------------------------------------------

def _mm(a, w):
    """MXU matmul: activations cast to bf16, weights already bf16, f32 accum."""
    return jnp.dot(a.astype(jnp.bfloat16), w, preferred_element_type=jnp.float32)


def _ln(x, g, b, eps=1e-5):
    mu = jnp.mean(x, axis=-1, keepdims=True)
    xc = x - mu
    var = jnp.mean(xc * xc, axis=-1, keepdims=True)
    return xc * lax.rsqrt(var + eps) * g + b


# -----------------------------------------------------------------------------
# Kernels
# -----------------------------------------------------------------------------

def _prologue_kernel(time_ref, acte_ref, rtg_ref, st_ref,
                     w_ret_ref, b_ret_ref, w_st_ref, b_st_ref,
                     g_ref, beta_ref,
                     wq_ref, bq_ref, wk_ref, bk_ref, wv_ref, bv_ref,
                     x_ref, q_ref, k_ref, v_ref):
    """Embeddings + time add + (R,S,A) interleave + LayerNorm + QKV of block 0.

    One grid step = one batch element.  Outputs:
      x_ref: (S, 3, E)   normalized interleaved tokens
      q/k/v: (S, 3, nh*E)  QKV projections for GPT block 0
    """
    t = time_ref[...]                                             # (S, E)
    ret = rtg_ref[...] * w_ret_ref[...] + b_ret_ref[...]          # Linear(1, E)
    st = _mm(st_ref[...], w_st_ref[...]) + b_st_ref[...]          # state encoder
    act = acte_ref[...]
    g, beta = g_ref[...], beta_ref[...]
    # Token order within each timestep: (return, state, action).
    tokens = (_ln(ret + t, g, beta), _ln(st + t, g, beta), _ln(act + t, g, beta))
    wq, wk, wv = wq_ref[...], wk_ref[...], wv_ref[...]
    bq, bk, bv = bq_ref[...], bk_ref[...], bv_ref[...]
    for i, tok in enumerate(tokens):
        x_ref[:, i, :] = tok
        tb = tok.astype(jnp.bfloat16)
        q_ref[:, i, :] = jnp.dot(tb, wq, preferred_element_type=jnp.float32) + bq
        k_ref[:, i, :] = jnp.dot(tb, wk, preferred_element_type=jnp.float32) + bk
        v_ref[:, i, :] = jnp.dot(tb, wv, preferred_element_type=jnp.float32) + bv


def _attn_kernel(q_ref, k_ref, v_ref, o_ref):
    """Masked attention over all heads of one batch element; blocks (nh, L, E)."""
    q = q_ref[...].astype(jnp.bfloat16)
    k = k_ref[...].astype(jnp.bfloat16)
    v = v_ref[...].astype(jnp.bfloat16)
    e_dim = q_ref.shape[-1]
    s = lax.dot_general(q, k, (((2,), (2,)), ((0,), (0,))),
                        preferred_element_type=jnp.float32)       # (nh, L, L)
    s = s * (1.0 / math.sqrt(e_dim))
    row = lax.broadcasted_iota(jnp.int32, s.shape, 1)
    col = lax.broadcasted_iota(jnp.int32, s.shape, 2)
    s = jnp.where(col <= row, s, _MASK_VALUE)                     # causal triu(1)
    m = jnp.max(s, axis=-1, keepdims=True)                        # f32 softmax
    p = jnp.exp(s - m)
    p = p / jnp.sum(p, axis=-1, keepdims=True)
    o_ref[...] = lax.dot_general(p.astype(jnp.bfloat16), v,
                                 (((2,), (1,)), ((0,), (0,))),
                                 preferred_element_type=jnp.float32)


def _block_tail(attn, x, w_out, b_out, g1, be1, w1, b1, w2, b2, g2, be2):
    ao = _mm(attn, w_out) + b_out                  # output projection
    h = _ln(ao + x, g1, be1)                       # dropout = identity (eval)
    f = jnp.maximum(_mm(h, w1) + b1, 0.0)          # FFN hidden = 4E = 128 lanes
    f = _mm(f, w2) + b2
    return _ln(f + h, g2, be2)


def _post_kernel(attn_ref, x_ref, w_out_ref, b_out_ref, g1_ref, be1_ref,
                 w1_ref, b1_ref, w2_ref, b2_ref, g2_ref, be2_ref, xo_ref):
    """out-proj + add&LN1 + FFN + add&LN2 (last GPT block)."""
    xo_ref[...] = _block_tail(
        attn_ref[...], x_ref[...], w_out_ref[...], b_out_ref[...],
        g1_ref[...], be1_ref[...], w1_ref[...], b1_ref[...],
        w2_ref[...], b2_ref[...], g2_ref[...], be2_ref[...])


def _post_kernel_qkv(attn_ref, x_ref, w_out_ref, b_out_ref, g1_ref, be1_ref,
                     w1_ref, b1_ref, w2_ref, b2_ref, g2_ref, be2_ref,
                     wq_ref, bq_ref, wk_ref, bk_ref, wv_ref, bv_ref,
                     xo_ref, qo_ref, ko_ref, vo_ref):
    """Same as _post_kernel, plus the *next* block's QKV projection."""
    x2 = _block_tail(
        attn_ref[...], x_ref[...], w_out_ref[...], b_out_ref[...],
        g1_ref[...], be1_ref[...], w1_ref[...], b1_ref[...],
        w2_ref[...], b2_ref[...], g2_ref[...], be2_ref[...])
    xo_ref[...] = x2
    xb = x2.astype(jnp.bfloat16)
    qo_ref[...] = jnp.dot(xb, wq_ref[...], preferred_element_type=jnp.float32) + bq_ref[...]
    ko_ref[...] = jnp.dot(xb, wk_ref[...], preferred_element_type=jnp.float32) + bk_ref[...]
    vo_ref[...] = jnp.dot(xb, wv_ref[...], preferred_element_type=jnp.float32) + bv_ref[...]


def _head_kernel(x_ref, w1_ref, b1_ref, w2_ref, b2_ref, o_ref, *, act_dim):
    """Linear -> ReLU -> Linear -> Softmax, lane-padded output (act_dim -> 128)."""
    h = jnp.maximum(_mm(x_ref[...], w1_ref[...]) + b1_ref[...], 0.0)
    logits = _mm(h, w2_ref[...]) + b2_ref[...]                    # (S, A_pad)
    col = lax.broadcasted_iota(jnp.int32, logits.shape, 1)
    logits = jnp.where(col < act_dim, logits, _MASK_VALUE)        # mask pad lanes
    m = jnp.max(logits, axis=-1, keepdims=True)
    e = jnp.exp(logits - m)
    o_ref[...] = e / jnp.sum(e, axis=-1, keepdims=True)


# -----------------------------------------------------------------------------
# pallas_call wrappers
# -----------------------------------------------------------------------------

def _prologue(time_emb, act_emb, rtg, st_flat, params, blk0):
    B, S, E = time_emb.shape
    nhE = blk0["wq"].shape[1]
    operands = (time_emb, act_emb, rtg, st_flat,
                params["w_return"], params["b_return"],
                params["w_state"], params["b_state"],
                params["ln_emb_g"], params["ln_emb_b"],
                blk0["wq"], blk0["bq"], blk0["wk"], blk0["bk"],
                blk0["wv"], blk0["bv"])
    in_specs = ([_batch_spec(a.shape) for a in operands[:4]] +
                [_bcast_spec(a.shape) for a in operands[4:]])
    out_shape = (jax.ShapeDtypeStruct((B, S, 3, E), jnp.float32),) + tuple(
        jax.ShapeDtypeStruct((B, S, 3, nhE), jnp.float32) for _ in range(3))
    out_specs = tuple(_batch_spec(s.shape) for s in out_shape)
    return pl.pallas_call(
        _prologue_kernel,
        grid=(B,),
        out_shape=out_shape,
        in_specs=in_specs,
        out_specs=out_specs,
        compiler_params=_parallel(),
    )(*operands)


def _attention(q, k, v):
    B = q.shape[0]
    spec = _batch_spec(q.shape)
    return pl.pallas_call(
        _attn_kernel,
        grid=(B,),
        out_shape=jax.ShapeDtypeStruct(q.shape, jnp.float32),
        in_specs=[spec, spec, spec],
        out_specs=spec,
        compiler_params=_parallel(),
    )(q, k, v)


def _block_post(attn, x, bp, next_bp=None):
    B, L, E = x.shape
    nhE = attn.shape[-1]
    operands = (attn, x, bp["w_out"], bp["b_out"], bp["ln1_g"], bp["ln1_b"],
                bp["ff_w1"], bp["ff_b1"], bp["ff_w2"], bp["ff_b2"],
                bp["ln2_g"], bp["ln2_b"])
    in_specs = ([_batch_spec(attn.shape), _batch_spec(x.shape)] +
                [_bcast_spec(a.shape) for a in operands[2:]])
    if next_bp is None:
        return pl.pallas_call(
            _post_kernel,
            grid=(B,),
            out_shape=jax.ShapeDtypeStruct((B, L, E), jnp.float32),
            in_specs=in_specs,
            out_specs=_batch_spec((B, L, E)),
            compiler_params=_parallel(),
        )(*operands)
    extra = (next_bp["wq"], next_bp["bq"], next_bp["wk"], next_bp["bk"],
             next_bp["wv"], next_bp["bv"])
    in_specs = in_specs + [_bcast_spec(a.shape) for a in extra]
    out_shape = (jax.ShapeDtypeStruct((B, L, E), jnp.float32),) + tuple(
        jax.ShapeDtypeStruct((B, L, nhE), jnp.float32) for _ in range(3))
    out_specs = tuple(_batch_spec(s.shape) for s in out_shape)
    return pl.pallas_call(
        _post_kernel_qkv,
        grid=(B,),
        out_shape=out_shape,
        in_specs=in_specs,
        out_specs=out_specs,
        compiler_params=_parallel(),
    )(*(operands + extra))


def _predict_head(act_tokens, params):
    B, S, _ = act_tokens.shape
    w1, b1, w2, b2 = (params["head_w1"], params["head_b1"],
                      params["head_w2"], params["head_b2"])
    a_pad = w2.shape[1]
    act_dim = params["embed_action"].shape[0]
    probs = pl.pallas_call(
        functools.partial(_head_kernel, act_dim=act_dim),
        grid=(B,),
        out_shape=jax.ShapeDtypeStruct((B, S, a_pad), jnp.float32),
        in_specs=([_batch_spec(act_tokens.shape)] +
                  [_bcast_spec(a.shape) for a in (w1, b1, w2, b2)]),
        out_specs=_batch_spec((B, S, a_pad)),
        compiler_params=_parallel(),
    )(act_tokens, w1, b1, w2, b2)
    return probs[:, :, :act_dim]


# -----------------------------------------------------------------------------
# Forward pass (reshapes / gathers are JAX glue; all hot math in Pallas)
# -----------------------------------------------------------------------------

def decision_transformer(params, states, actions, returns_to_go, timesteps):
    B, S, C, H, W = states.shape
    E = params["embed_time"].shape[1]
    nhE = params["blocks"][0]["wq"].shape[1]
    nh = nhE // E
    L = 3 * S

    # Embedding-table gathers stay in JAX glue.
    time_emb = jnp.take(params["embed_time"], timesteps, axis=0)    # (B, S, E)
    act_emb = jnp.take(params["embed_action"], actions, axis=0)     # (B, S, E)
    rtg = returns_to_go.reshape(B, S, 1)
    st_flat = states.reshape(B, S, C * H * W)

    x, q, k, v = _prologue(time_emb, act_emb, rtg, st_flat, params,
                           params["blocks"][0])
    # (B, S, 3, .) -> (B, 3S, .): free row-major merges (interleaved R,S,A tokens).
    x = x.reshape(B, L, E)
    q = q.reshape(B, L, nhE)
    k = k.reshape(B, L, nhE)
    v = v.reshape(B, L, nhE)

    blocks = params["blocks"]
    for i, bp in enumerate(blocks):
        # Reproduce the reference's view exactly:
        # (B, L, nh*E).view(-1, nh, L, E) -- pure row-major reinterpretation.
        attn = _attention(q.reshape(B, nh, L, E),
                          k.reshape(B, nh, L, E),
                          v.reshape(B, nh, L, E))
        attn = attn.reshape(B, L, nhE)          # .view(-1, L, nh*E)
        next_bp = blocks[i + 1] if i + 1 < len(blocks) else None
        if next_bp is None:
            x = _block_post(attn, x, bp)
        else:
            x, q, k, v = _block_post(attn, x, bp, next_bp)

    # Action-token positions (index 2 of each (return, state, action) triplet).
    act_tokens = x.reshape(B, S, 3, E)[:, :, 2, :]
    return _predict_head(act_tokens, params)


# -----------------------------------------------------------------------------
# Deterministic parameter initialization (matmul weights stored in bf16)
# -----------------------------------------------------------------------------

def init_params(key, *, num_blocks, num_heads, embedding_dim, max_ep_len,
                img_channels, img_h, img_w, act_dim):
    E = embedding_dim
    ff = 4 * E
    nhE = num_heads * E
    chw = img_channels * img_h * img_w
    a_pad = ((act_dim + 127) // 128) * 128      # lane-dense head output
    keys = iter(jax.random.split(key, 8 + 8 * num_blocks))

    def w(shape, dtype=jnp.bfloat16, scale=0.02):
        return (scale * jax.random.normal(next(keys), shape, jnp.float32)).astype(dtype)

    zeros = lambda shape: jnp.zeros(shape, jnp.float32)
    ones = lambda shape: jnp.ones(shape, jnp.float32)

    head_w2 = jnp.pad(w((ff, act_dim), jnp.float32),
                      ((0, 0), (0, a_pad - act_dim))).astype(jnp.bfloat16)
    params = {
        # Embedding tables / LN params / biases stay f32; matmul weights bf16.
        "embed_time": w((max_ep_len, E), jnp.float32),
        "embed_action": w((act_dim, E), jnp.float32),
        "w_return": w((1, E), jnp.float32),
        "b_return": zeros((1, E)),
        "w_state": w((chw, E)),         # TODO(synk): Bitchnet stand-in weights
        "b_state": zeros((1, E)),
        "ln_emb_g": ones((1, E)),
        "ln_emb_b": zeros((1, E)),
        "head_w1": w((E, ff)),
        "head_b1": zeros((1, ff)),
        "head_w2": head_w2,
        "head_b2": zeros((1, a_pad)),
        "blocks": [],
    }
    for _ in range(num_blocks):
        params["blocks"].append({
            "wq": w((E, nhE)), "bq": zeros((1, nhE)),
            "wk": w((E, nhE)), "bk": zeros((1, nhE)),
            "wv": w((E, nhE)), "bv": zeros((1, nhE)),
            "w_out": w((nhE, E)), "b_out": zeros((1, E)),
            "ln1_g": ones((1, E)), "ln1_b": zeros((1, E)),
            "ff_w1": w((E, ff)), "ff_b1": zeros((1, ff)),
            "ff_w2": w((ff, E)), "ff_b2": zeros((1, E)),
            "ln2_g": ones((1, E)), "ln2_b": zeros((1, E)),
        })
    return params


# -----------------------------------------------------------------------------
# Pure-JAX reference (f32 math on the same bf16-rounded weights) for validation
# -----------------------------------------------------------------------------

def reference_forward(params, states, actions, returns_to_go, timesteps):
    B, S, C, H, W = states.shape
    E = params["embed_time"].shape[1]
    nhE = params["blocks"][0]["wq"].shape[1]
    nh = nhE // E
    L = 3 * S
    act_dim = params["embed_action"].shape[0]
    f32 = lambda a: a.astype(jnp.float32)

    def ln(x, g, b):
        mu = x.mean(-1, keepdims=True)
        var = ((x - mu) ** 2).mean(-1, keepdims=True)
        return (x - mu) / jnp.sqrt(var + 1e-5) * g + b

    t = jnp.take(params["embed_time"], timesteps, axis=0)
    a = jnp.take(params["embed_action"], actions, axis=0)
    r = returns_to_go.reshape(B, S, 1) @ params["w_return"] + params["b_return"]
    s_ = states.reshape(B, S, -1) @ f32(params["w_state"]) + params["b_state"]
    x = jnp.stack((r + t, s_ + t, a + t), axis=2)                 # (B, S, 3, E)
    x = ln(x, params["ln_emb_g"], params["ln_emb_b"]).reshape(B, L, E)
    for bp in params["blocks"]:
        q = (x @ f32(bp["wq"]) + bp["bq"]).reshape(B, nh, L, E)
        k = (x @ f32(bp["wk"]) + bp["bk"]).reshape(B, nh, L, E)
        v = (x @ f32(bp["wv"]) + bp["bv"]).reshape(B, nh, L, E)
        s = (q @ jnp.swapaxes(k, -1, -2)) / math.sqrt(E)
        mask = jnp.triu(jnp.full((L, L), -jnp.inf, jnp.float32), 1)
        p = jax.nn.softmax(s + mask, axis=-1)
        o = (p @ v).reshape(B, L, nhE)
        o = o @ f32(bp["w_out"]) + bp["b_out"]
        x = ln(o + x, bp["ln1_g"], bp["ln1_b"])
        f = jax.nn.relu(x @ f32(bp["ff_w1"]) + bp["ff_b1"])
        f = f @ f32(bp["ff_w2"]) + bp["ff_b2"]
        x = ln(f + x, bp["ln2_g"], bp["ln2_b"])
    at = x.reshape(B, S, 3, E)[:, :, 2, :]
    h = jax.nn.relu(at @ f32(params["head_w1"]) + params["head_b1"])
    logits = (h @ f32(params["head_w2"]) + params["head_b2"])[..., :act_dim]
    return jax.nn.softmax(logits, axis=-1)


# -----------------------------------------------------------------------------
# Main
# -----------------------------------------------------------------------------

if __name__ == "__main__":
    B, S = 2, 8
    C, H, W = 4, 16, 16
    E, NH, NB = 32, 2, 2
    MAX_EP = 16
    ACT = 9

    key = jax.random.PRNGKey(0)
    kp, ks, ka, kr, kt = jax.random.split(key, 5)

    params = init_params(
        kp, num_blocks=NB, num_heads=NH, embedding_dim=E, max_ep_len=MAX_EP,
        img_channels=C, img_h=H, img_w=W, act_dim=ACT)

    states = jax.random.normal(ks, (B, S, C, H, W), jnp.float32)
    actions = jax.random.randint(ka, (B, S), 0, ACT, dtype=jnp.int32)
    returns_to_go = jax.random.normal(kr, (B, S, 1), jnp.float32)
    timesteps = jax.random.randint(kt, (B, S), 0, MAX_EP, dtype=jnp.int32)

    fwd = jax.jit(decision_transformer)
    out = jax.block_until_ready(fwd(params, states, actions, returns_to_go, timesteps))

    assert out.shape == (B, S, ACT), out.shape
    assert bool(jnp.all(jnp.isfinite(out)))
    # final softmax rows must sum to ~1
    assert bool(jnp.allclose(jnp.sum(out, axis=-1), 1.0, atol=1e-3))

    # Cross-check against a pure-JAX reference (bf16 matmul operands in the
    # kernels vs f32 reference -> loose tolerance).
    ref = jax.jit(reference_forward)(params, states, actions, returns_to_go, timesteps)
    assert bool(jnp.allclose(out, ref, atol=2e-2))

    print("KERNEL_OK")
</pallas_src>

<mosaic_0001>
module attributes {stable_mosaic.version = 11 : i64} {
  func.func @_attn_kernel(%arg0: i32, %arg1: memref<1x2x24x32xf32, #tpu.memory_space<vmem>>, %arg2: memref<1x2x24x32xf32, #tpu.memory_space<vmem>>, %arg3: memref<1x2x24x32xf32, #tpu.memory_space<vmem>>, %arg4: memref<1x2x24x32xf32, #tpu.memory_space<vmem>>) attributes {dimension_semantics = [#tpu.dimension_semantics<parallel>], iteration_bounds = array<i64: 2>, scalar_prefetch = 0 : i64, scratch_operands = 0 : i64, tpu.core_type = #tpu.core_type<tc>, window_params = [{transform_indices = @transform_0, window_bounds = array<i64: 1, 2, 24, 32>}, {transform_indices = @transform_1, window_bounds = array<i64: 1, 2, 24, 32>}, {transform_indices = @transform_2, window_bounds = array<i64: 1, 2, 24, 32>}, {transform_indices = @transform_3, window_bounds = array<i64: 1, 2, 24, 32>}]} {
    %c0 = arith.constant 0 : index
    %c0_0 = arith.constant 0 : index
    %c0_1 = arith.constant 0 : index
    %c0_2 = arith.constant 0 : index
    %0 = vector.load %arg1[%c0, %c0_0, %c0_1, %c0_2] : memref<1x2x24x32xf32, #tpu.memory_space<vmem>>, vector<1x2x24x32xf32>
    %1 = vector.shape_cast %0 : vector<1x2x24x32xf32> to vector<2x24x32xf32>
    %2 = arith.truncf %1 : vector<2x24x32xf32> to vector<2x24x32xbf16>
    %c0_3 = arith.constant 0 : index
    %c0_4 = arith.constant 0 : index
    %c0_5 = arith.constant 0 : index
    %c0_6 = arith.constant 0 : index
    %3 = vector.load %arg2[%c0_3, %c0_4, %c0_5, %c0_6] : memref<1x2x24x32xf32, #tpu.memory_space<vmem>>, vector<1x2x24x32xf32>
    %4 = vector.shape_cast %3 : vector<1x2x24x32xf32> to vector<2x24x32xf32>
    %5 = arith.truncf %4 : vector<2x24x32xf32> to vector<2x24x32xbf16>
    %c0_7 = arith.constant 0 : index
    %c0_8 = arith.constant 0 : index
    %c0_9 = arith.constant 0 : index
    %c0_10 = arith.constant 0 : index
    %6 = vector.load %arg3[%c0_7, %c0_8, %c0_9, %c0_10] : memref<1x2x24x32xf32, #tpu.memory_space<vmem>>, vector<1x2x24x32xf32>
    %7 = vector.shape_cast %6 : vector<1x2x24x32xf32> to vector<2x24x32xf32>
    %8 = arith.truncf %7 : vector<2x24x32xf32> to vector<2x24x32xbf16>
    %cst = arith.constant dense<0.000000e+00> : vector<2x24x24xf32>
    %9 = tpu.matmul %2, %5, %cst {dimension_numbers = #tpu.dot_dimension_numbers<[2], [2], [1], [1], [0, 0, 0, 1, 1, 1], [0], [0]>} : vector<2x24x32xbf16>, vector<2x24x32xbf16>, vector<2x24x24xf32> -> vector<2x24x24xf32>
    %cst_11 = arith.constant 0.176776692 : f32
    %10 = vector.broadcast %cst_11 : f32 to vector<2x24x24xf32>
    %11 = arith.mulf %9, %10 : vector<2x24x24xf32>
    %12 = tpu.iota {dimensions = array<i32: 1>} : vector<2x24x24xi32>
    %13 = tpu.iota {dimensions = array<i32: 2>} : vector<2x24x24xi32>
    %14 = arith.cmpi sle, %13, %12 : vector<2x24x24xi32>
    %cst_12 = arith.constant -1.000000e+30 : f32
    %15 = vector.broadcast %cst_12 : f32 to vector<2x24x24xf32>
    %16 = arith.select %14, %11, %15 : vector<2x24x24xi1>, vector<2x24x24xf32>
    %cst_13 = arith.constant dense<0xFF800000> : vector<2x24xf32>
    %17 = vector.multi_reduction <maximumf>, %16, %cst_13 [2] : vector<2x24x24xf32> to vector<2x24xf32>
    %18 = vector.shape_cast %17 : vector<2x24xf32> to vector<2x24x1xf32>
    %19 = vector.broadcast %18 : vector<2x24x1xf32> to vector<2x24x24xf32>
    %20 = arith.subf %16, %19 : vector<2x24x24xf32>
    %21 = math.exp %20 : vector<2x24x24xf32>
    %cst_14 = arith.constant dense<0.000000e+00> : vector<2x24xf32>
    %22 = vector.multi_reduction <add>, %21, %cst_14 [2] : vector<2x24x24xf32> to vector<2x24xf32>
    %23 = vector.shape_cast %22 : vector<2x24xf32> to vector<2x24x1xf32>
    %24 = vector.broadcast %23 : vector<2x24x1xf32> to vector<2x24x24xf32>
    %25 = arith.divf %21, %24 : vector<2x24x24xf32>
    %26 = arith.truncf %25 : vector<2x24x24xf32> to vector<2x24x24xbf16>
    %cst_15 = arith.constant dense<0.000000e+00> : vector<2x24x32xf32>
    %27 = tpu.matmul %26, %8, %cst_15 {dimension_numbers = #tpu.dot_dimension_numbers<[2], [1], [1], [2], [0, 0, 0, 1, 1, 2], [0], [0]>} : vector<2x24x24xbf16>, vector<2x24x32xbf16>, vector<2x24x32xf32> -> vector<2x24x32xf32>
    %c0_16 = arith.constant 0 : index
    %c0_17 = arith.constant 0 : index
    %c0_18 = arith.constant 0 : index
    %c0_19 = arith.constant 0 : index
    %28 = vector.load %arg4[%c0_16, %c0_17, %c0_18, %c0_19] : memref<1x2x24x32xf32, #tpu.memory_space<vmem>>, vector<1x2x24x32xf32>
    %29 = vector.shape_cast %28 : vector<1x2x24x32xf32> to vector<2x24x32xf32>
    %30 = vector.shape_cast %27 : vector<2x24x32xf32> to vector<1x2x24x32xf32>
    tpu.vector_store %arg4[%c0_16, %c0_17, %c0_18, %c0_19], %30 {strides = array<i32>} : memref<1x2x24x32xf32, #tpu.memory_space<vmem>>, vector<1x2x24x32xf32>,
    return
  }
  func.func @transform_0(%arg0: i32) -> (i32, i32, i32, i32) {
    %c0_i32 = arith.constant 0 : i32
    %c0_i32_0 = arith.constant 0 : i32
    %c0_i32_1 = arith.constant 0 : i32
    %c0_i32_2 = arith.constant 0 : i32
    return %arg0, %c0_i32, %c0_i32_0, %c0_i32_1 : i32, i32, i32, i32
  }
  func.func @transform_1(%arg0: i32) -> (i32, i32, i32, i32) {
    %c0_i32 = arith.constant 0 : i32
    %c0_i32_0 = arith.constant 0 : i32
    %c0_i32_1 = arith.constant 0 : i32
    %c0_i32_2 = arith.constant 0 : i32
    return %arg0, %c0_i32, %c0_i32_0, %c0_i32_1 : i32, i32, i32, i32
  }
  func.func @transform_2(%arg0: i32) -> (i32, i32, i32, i32) {
    %c0_i32 = arith.constant 0 : i32
    %c0_i32_0 = arith.constant 0 : i32
    %c0_i32_1 = arith.constant 0 : i32
    %c0_i32_2 = arith.constant 0 : i32
    return %arg0, %c0_i32, %c0_i32_0, %c0_i32_1 : i32, i32, i32, i32
  }
  func.func @transform_3(%arg0: i32) -> (i32, i32, i32, i32) {
    %c0_i32 = arith.constant 0 : i32
    %c0_i32_0 = arith.constant 0 : i32
    %c0_i32_1 = arith.constant 0 : i32
    %c0_i32_2 = arith.constant 0 : i32
    return %arg0, %c0_i32, %c0_i32_0, %c0_i32_1 : i32, i32, i32, i32
  }
}

module attributes {stable_mosaic.version = 11 : i64} {
  func.func @_prologue_kernel(%arg0: i32, %arg1: memref<1x8x32xf32, #tpu.memory_space<vmem>>, %arg2: memref<1x8x32xf32, #tpu.memory_space<vmem>>, %arg3: memref<1x8x1xf32, #tpu.memory_space<vmem>>, %arg4: memref<1x8x1024xf32, #tpu.memory_space<vmem>>, %arg5: memref<1x32xf32, #tpu.memory_space<vmem>>, %arg6: memref<1x32xf32, #tpu.memory_space<vmem>>, %arg7: memref<1024x32xbf16, #tpu.memory_space<vmem>>, %arg8: memref<1x32xf32, #tpu.memory_space<vmem>>, %arg9: memref<1x32xf32, #tpu.memory_space<vmem>>, %arg10: memref<1x32xf32, #tpu.memory_space<vmem>>, %arg11: memref<32x64xbf16, #tpu.memory_space<vmem>>, %arg12: memref<1x64xf32, #tpu.memory_space<vmem>>, %arg13: memref<32x64xbf16, #tpu.memory_space<vmem>>, %arg14: memref<1x64xf32, #tpu.memory_space<vmem>>, %arg15: memref<32x64xbf16, #tpu.memory_space<vmem>>, %arg16: memref<1x64xf32, #tpu.memory_space<vmem>>, %arg17: memref<1x8x3x32xf32, #tpu.memory_space<vmem>>, %arg18: memref<1x8x3x64xf32, #tpu.memory_space<vmem>>, %arg19: memref<1x8x3x64xf32, #tpu.memory_space<vmem>>, %arg20: memref<1x8x3x64xf32, #tpu.memory_space<vmem>>) attributes {dimension_semantics = [#tpu.dimension_semantics<parallel>], iteration_bounds = array<i64: 2>, scalar_prefetch = 0 : i64, scratch_operands = 0 : i64, tpu.core_type = #tpu.core_type<tc>, window_params = [{transform_indices = @transform_0, window_bounds = array<i64: 1, 8, 32>}, {transform_indices = @transform_1, window_bounds = array<i64: 1, 8, 32>}, {transform_indices = @transform_2, window_bounds = array<i64: 1, 8, 1>}, {transform_indices = @transform_3, window_bounds = array<i64: 1, 8, 1024>}, {pipeline_mode = #tpu.pipeline_mode<synchronous>, transform_indices = @transform_4, window_bounds = array<i64: 1, 32>}, {pipeline_mode = #tpu.pipeline_mode<synchronous>, transform_indices = @transform_5, window_bounds = array<i64: 1, 32>}, {pipeline_mode = #tpu.pipeline_mode<synchronous>, transform_indices = @transform_6, window_bounds = array<i64: 1024, 32>}, {pipeline_mode = #tpu.pipeline_mode<synchronous>, transform_indices = @transform_7, window_bounds = array<i64: 1, 32>}, {pipeline_mode = #tpu.pipeline_mode<synchronous>, transform_indices = @transform_8, window_bounds = array<i64: 1, 32>}, {pipeline_mode = #tpu.pipeline_mode<synchronous>, transform_indices = @transform_9, window_bounds = array<i64: 1, 32>}, {pipeline_mode = #tpu.pipeline_mode<synchronous>, transform_indices = @transform_10, window_bounds = array<i64: 32, 64>}, {pipeline_mode = #tpu.pipeline_mode<synchronous>, transform_indices = @transform_11, window_bounds = array<i64: 1, 64>}, {pipeline_mode = #tpu.pipeline_mode<synchronous>, transform_indices = @transform_12, window_bounds = array<i64: 32, 64>}, {pipeline_mode = #tpu.pipeline_mode<synchronous>, transform_indices = @transform_13, window_bounds = array<i64: 1, 64>}, {pipeline_mode = #tpu.pipeline_mode<synchronous>, transform_indices = @transform_14, window_bounds = array<i64: 32, 64>}, {pipeline_mode = #tpu.pipeline_mode<synchronous>, transform_indices = @transform_15, window_bounds = array<i64: 1, 64>}, {transform_indices = @transform_16, window_bounds = array<i64: 1, 8, 3, 32>}, {transform_indices = @transform_17, window_bounds = array<i64: 1, 8, 3, 64>}, {transform_indices = @transform_18, window_bounds = array<i64: 1, 8, 3, 64>}, {transform_indices = @transform_19, window_bounds = array<i64: 1, 8, 3, 64>}]} {
    %c0 = arith.constant 0 : index
    %c0_0 = arith.constant 0 : index
    %c0_1 = arith.constant 0 : index
    %0 = vector.load %arg1[%c0, %c0_0, %c0_1] : memref<1x8x32xf32, #tpu.memory_space<vmem>>, vector<1x8x32xf32>
    %1 = vector.shape_cast %0 : vector<1x8x32xf32> to vector<8x32xf32>
    %c0_2 = arith.constant 0 : index
    %c0_3 = arith.constant 0 : index
    %c0_4 = arith.constant 0 : index
    %2 = vector.load %arg3[%c0_2, %c0_3, %c0_4] : memref<1x8x1xf32, #tpu.memory_space<vmem>>, vector<1x8x1xf32>
    %3 = vector.shape_cast %2 : vector<1x8x1xf32> to vector<8x1xf32>
    %c0_5 = arith.constant 0 : index
    %c0_6 = arith.constant 0 : index
    %4 = vector.load %arg5[%c0_5, %c0_6] : memref<1x32xf32, #tpu.memory_space<vmem>>, vector<1x32xf32>
    %5 = vector.broadcast %3 : vector<8x1xf32> to vector<8x32xf32>
    %6 = vector.broadcast %4 : vector<1x32xf32> to vector<8x32xf32>
    %7 = arith.mulf %5, %6 : vector<8x32xf32>
    %c0_7 = arith.constant 0 : index
    %c0_8 = arith.constant 0 : index
    %8 = vector.load %arg6[%c0_7, %c0_8] : memref<1x32xf32, #tpu.memory_space<vmem>>, vector<1x32xf32>
    %9 = vector.broadcast %8 : vector<1x32xf32> to vector<8x32xf32>
    %10 = arith.addf %7, %9 : vector<8x32xf32>
    %c0_9 = arith.constant 0 : index
    %c0_10 = arith.constant 0 : index
    %c0_11 = arith.constant 0 : index
    %11 = vector.load %arg4[%c0_9, %c0_10, %c0_11] : memref<1x8x1024xf32, #tpu.memory_space<vmem>>, vector<1x8x1024xf32>
    %12 = vector.shape_cast %11 : vector<1x8x1024xf32> to vector<8x1024xf32>
    %c0_12 = arith.constant 0 : index
    %c0_13 = arith.constant 0 : index
    %13 = vector.load %arg7[%c0_12, %c0_13] : memref<1024x32xbf16, #tpu.memory_space<vmem>>, vector<1024x32xbf16>
    %14 = arith.truncf %12 : vector<8x1024xf32> to vector<8x1024xbf16>
    %cst = arith.constant dense<0.000000e+00> : vector<8x32xf32>
    %15 = tpu.matmul %14, %13, %cst {dimension_numbers = #tpu.dot_dimension_numbers<[1], [0], [0], [1], [0, 0, 1, 1], [], []>} : vector<8x1024xbf16>, vector<1024x32xbf16>, vector<8x32xf32> -> vector<8x32xf32>
    %c0_14 = arith.constant 0 : index
    %c0_15 = arith.constant 0 : index
    %16 = vector.load %arg8[%c0_14, %c0_15] : memref<1x32xf32, #tpu.memory_space<vmem>>, vector<1x32xf32>
    %17 = vector.broadcast %16 : vector<1x32xf32> to vector<8x32xf32>
    %18 = arith.addf %15, %17 : vector<8x32xf32>
    %c0_16 = arith.constant 0 : index
    %c0_17 = arith.constant 0 : index
    %c0_18 = arith.constant 0 : index
    %19 = vector.load %arg2[%c0_16, %c0_17, %c0_18] : memref<1x8x32xf32, #tpu.memory_space<vmem>>, vector<1x8x32xf32>
    %20 = vector.shape_cast %19 : vector<1x8x32xf32> to vector<8x32xf32>
    %c0_19 = arith.constant 0 : index
    %c0_20 = arith.constant 0 : index
    %21 = vector.load %arg9[%c0_19, %c0_20] : memref<1x32xf32, #tpu.memory_space<vmem>>, vector<1x32xf32>
    %c0_21 = arith.constant 0 : index
    %c0_22 = arith.constant 0 : index
    %22 = vector.load %arg10[%c0_21, %c0_22] : memref<1x32xf32, #tpu.memory_space<vmem>>, vector<1x32xf32>
    %23 = arith.addf %10, %1 : vector<8x32xf32>
    %cst_23 = arith.constant dense<0.000000e+00> : vector<8xf32>
    %24 = vector.multi_reduction <add>, %23, %cst_23 [1] : vector<8x32xf32> to vector<8xf32>
    %25 = vector.shape_cast %24 : vector<8xf32> to vector<8x1xf32>
    %cst_24 = arith.constant 3.200000e+01 : f32
    %26 = vector.broadcast %cst_24 : f32 to vector<8x1xf32>
    %27 = arith.divf %25, %26 : vector<8x1xf32>
    %28 = vector.broadcast %27 : vector<8x1xf32> to vector<8x32xf32>
    %29 = arith.subf %23, %28 : vector<8x32xf32>
    %30 = arith.mulf %29, %29 : vector<8x32xf32>
    %cst_25 = arith.constant dense<0.000000e+00> : vector<8xf32>
    %31 = vector.multi_reduction <add>, %30, %cst_25 [1] : vector<8x32xf32> to vector<8xf32>
    %32 = vector.shape_cast %31 : vector<8xf32> to vector<8x1xf32>
    %cst_26 = arith.constant 3.200000e+01 : f32
    %33 = vector.broadcast %cst_26 : f32 to vector<8x1xf32>
    %34 = arith.divf %32, %33 : vector<8x1xf32>
    %cst_27 = arith.constant 9.99999974E-6 : f32
    %35 = vector.broadcast %cst_27 : f32 to vector<8x1xf32>
    %36 = arith.addf %34, %35 : vector<8x1xf32>
    %37 = math.rsqrt %36 : vector<8x1xf32>
    %38 = vector.broadcast %37 : vector<8x1xf32> to vector<8x32xf32>
    %39 = arith.mulf %29, %38 : vector<8x32xf32>
    %40 = vector.broadcast %21 : vector<1x32xf32> to vector<8x32xf32>
    %41 = arith.mulf %39, %40 : vector<8x32xf32>
    %42 = vector.broadcast %22 : vector<1x32xf32> to vector<8x32xf32>
    %43 = arith.addf %41, %42 : vector<8x32xf32>
    %44 = arith.addf %18, %1 : vector<8x32xf32>
    %cst_28 = arith.constant dense<0.000000e+00> : vector<8xf32>
    %45 = vector.multi_reduction <add>, %44, %cst_28 [1] : vector<8x32xf32> to vector<8xf32>
    %46 = vector.shape_cast %45 : vector<8xf32> to vector<8x1xf32>
    %cst_29 = arith.constant 3.200000e+01 : f32
    %47 = vector.broadcast %cst_29 : f32 to vector<8x1xf32>
    %48 = arith.divf %46, %47 : vector<8x1xf32>
    %49 = vector.broadcast %48 : vector<8x1xf32> to vector<8x32xf32>
    %50 = arith.subf %44, %49 : vector<8x32xf32>
    %51 = arith.mulf %50, %50 : vector<8x32xf32>
    %cst_30 = arith.constant dense<0.000000e+00> : vector<8xf32>
    %52 = vector.multi_reduction <add>, %51, %cst_30 [1] : vector<8x32xf32> to vector<8xf32>
    %53 = vector.shape_cast %52 : vector<8xf32> to vector<8x1xf32>
    %cst_31 = arith.constant 3.200000e+01 : f32
    %54 = vector.broadcast %cst_31 : f32 to vector<8x1xf32>
    %55 = arith.divf %53, %54 : vector<8x1xf32>
    %cst_32 = arith.constant 9.99999974E-6 : f32
    %56 = vector.broadcast %cst_32 : f32 to vector<8x1xf32>
    %57 = arith.addf %55, %56 : vector<8x1xf32>
    %58 = math.rsqrt %57 : vector<8x1xf32>
    %59 = vector.broadcast %58 : vector<8x1xf32> to vector<8x32xf32>
    %60 = arith.mulf %50, %59 : vector<8x32xf32>
    %61 = vector.broadcast %21 : vector<1x32xf32> to vector<8x32xf32>
    %62 = arith.mulf %60, %61 : vector<8x32xf32>
    %63 = vector.broadcast %22 : vector<1x32xf32> to vector<8x32xf32>
    %64 = arith.addf %62, %63 : vector<8x32xf32>
    %65 = arith.addf %20, %1 : vector<8x32xf32>
    %cst_33 = arith.constant dense<0.000000e+00> : vector<8xf32>
    %66 = vector.multi_reduction <add>, %65, %cst_33 [1] : vector<8x32xf32> to vector<8xf32>
    %67 = vector.shape_cast %66 : vector<8xf32> to vector<8x1xf32>
    %cst_34 = arith.constant 3.200000e+01 : f32
    %68 = vector.broadcast %cst_34 : f32 to vector<8x1xf32>
    %69 = arith.divf %67, %68 : vector<8x1xf32>
    %70 = vector.broadcast %69 : vector<8x1xf32> to vector<8x32xf32>
    %71 = arith.subf %65, %70 : vector<8x32xf32>
    %72 = arith.mulf %71, %71 : vector<8x32xf32>
    %cst_35 = arith.constant dense<0.000000e+00> : vector<8xf32>
    %73 = vector.multi_reduction <add>, %72, %cst_35 [1] : vector<8x32xf32> to vector<8xf32>
    %74 = vector.shape_cast %73 : vector<8xf32> to vector<8x1xf32>
    %cst_36 = arith.constant 3.200000e+01 : f32
    %75 = vector.broadcast %cst_36 : f32 to vector<8x1xf32>
    %76 = arith.divf %74, %75 : vector<8x1xf32>
    %cst_37 = arith.constant 9.99999974E-6 : f32
    %77 = vector.broadcast %cst_37 : f32 to vector<8x1xf32>
    %78 = arith.addf %76, %77 : vector<8x1xf32>
    %79 = math.rsqrt %78 : vector<8x1xf32>
    %80 = vector.broadcast %79 : vector<8x1xf32> to vector<8x32xf32>
    %81 = arith.mulf %71, %80 : vector<8x32xf32>
    %82 = vector.broadcast %21 : vector<1x32xf32> to vector<8x32xf32>
    %83 = arith.mulf %81, %82 : vector<8x32xf32>
    %84 = vector.broadcast %22 : vector<1x32xf32> to vector<8x32xf32>
    %85 = arith.addf %83, %84 : vector<8x32xf32>
    %c0_38 = arith.constant 0 : index
    %c0_39 = arith.constant 0 : index
    %86 = vector.load %arg11[%c0_38, %c0_39] : memref<32x64xbf16, #tpu.memory_space<vmem>>, vector<32x64xbf16>
    %c0_40 = arith.constant 0 : index
    %c0_41 = arith.constant 0 : index
    %87 = vector.load %arg13[%c0_40, %c0_41] : memref<32x64xbf16, #tpu.memory_space<vmem>>, vector<32x64xbf16>
    %c0_42 = arith.constant 0 : index
    %c0_43 = arith.constant 0 : index
    %88 = vector.load %arg15[%c0_42, %c0_43] : memref<32x64xbf16, #tpu.memory_space<vmem>>, vector<32x64xbf16>
    %c0_44 = arith.constant 0 : index
    %c0_45 = arith.constant 0 : index
    %89 = vector.load %arg12[%c0_44, %c0_45] : memref<1x64xf32, #tpu.memory_space<vmem>>, vector<1x64xf32>
    %c0_46 = arith.constant 0 : index
    %c0_47 = arith.constant 0 : index
    %90 = vector.load %arg14[%c0_46, %c0_47] : memref<1x64xf32, #tpu.memory_space<vmem>>, vector<1x64xf32>
    %c0_48 = arith.constant 0 : index
    %c0_49 = arith.constant 0 : index
    %91 = vector.load %arg16[%c0_48, %c0_49] : memref<1x64xf32, #tpu.memory_space<vmem>>, vector<1x64xf32>
    %c0_50 = arith.constant 0 : index
    %c0_51 = arith.constant 0 : index
    %c0_52 = arith.constant 0 : index
    %c0_53 = arith.constant 0 : index
    %92 = vector.load %arg17[%c0_50, %c0_51, %c0_52, %c0_53] : memref<1x8x3x32xf32, #tpu.memory_space<vmem>>, vector<1x8x1x32xf32>
    %93 = vector.shape_cast %92 : vector<1x8x1x32xf32> to vector<8x32xf32>
    %94 = vector.shape_cast %43 : vector<8x32xf32> to vector<1x8x1x32xf32>
    tpu.vector_store %arg17[%c0_50, %c0_51, %c0_52, %c0_53], %94 {strides = array<i32>} : memref<1x8x3x32xf32, #tpu.memory_space<vmem>>, vector<1x8x1x32xf32>,
    %95 = arith.truncf %43 : vector<8x32xf32> to vector<8x32xbf16>
    %cst_54 = arith.constant dense<0.000000e+00> : vector<8x64xf32>
    %96 = tpu.matmul %95, %86, %cst_54 {dimension_numbers = #tpu.dot_dimension_numbers<[1], [0], [0], [1], [0, 0, 1, 1], [], []>} : vector<8x32xbf16>, vector<32x64xbf16>, vector<8x64xf32> -> vector<8x64xf32>
    %97 = vector.broadcast %89 : vector<1x64xf32> to vector<8x64xf32>
    %98 = arith.addf %96, %97 : vector<8x64xf32>
    %c0_55 = arith.constant 0 : index
    %c0_56 = arith.constant 0 : index
    %c0_57 = arith.constant 0 : index
    %c0_58 = arith.constant 0 : index
    %99 = vector.load %arg18[%c0_55, %c0_56, %c0_57, %c0_58] : memref<1x8x3x64xf32, #tpu.memory_space<vmem>>, vector<1x8x1x64xf32>
    %100 = vector.shape_cast %99 : vector<1x8x1x64xf32> to vector<8x64xf32>
    %101 = vector.shape_cast %98 : vector<8x64xf32> to vector<1x8x1x64xf32>
    tpu.vector_store %arg18[%c0_55, %c0_56, %c0_57, %c0_58], %101 {strides = array<i32>} : memref<1x8x3x64xf32, #tpu.memory_space<vmem>>, vector<1x8x1x64xf32>,
    %cst_59 = arith.constant dense<0.000000e+00> : vector<8x64xf32>
    %102 = tpu.matmul %95, %87, %cst_59 {dimension_numbers = #tpu.dot_dimension_numbers<[1], [0], [0], [1], [0, 0, 1, 1], [], []>} : vector<8x32xbf16>, vector<32x64xbf16>, vector<8x64xf32> -> vector<8x64xf32>
    %103 = vector.broadcast %90 : vector<1x64xf32> to vector<8x64xf32>
    %104 = arith.addf %102, %103 : vector<8x64xf32>
    %c0_60 = arith.constant 0 : index
    %c0_61 = arith.constant 0 : index
    %c0_62 = arith.constant 0 : index
    %c0_63 = arith.constant 0 : index
    %105 = vector.load %arg19[%c0_60, %c0_61, %c0_62, %c0_63] : memref<1x8x3x64xf32, #tpu.memory_space<vmem>>, vector<1x8x1x64xf32>
    %106 = vector.shape_cast %105 : vector<1x8x1x64xf32> to vector<8x64xf32>
    %107 = vector.shape_cast %104 : vector<8x64xf32> to vector<1x8x1x64xf32>
    tpu.vector_store %arg19[%c0_60, %c0_61, %c0_62, %c0_63], %107 {strides = array<i32>} : memref<1x8x3x64xf32, #tpu.memory_space<vmem>>, vector<1x8x1x64xf32>,
    %cst_64 = arith.constant dense<0.000000e+00> : vector<8x64xf32>
    %108 = tpu.matmul %95, %88, %cst_64 {dimension_numbers = #tpu.dot_dimension_numbers<[1], [0], [0], [1], [0, 0, 1, 1], [], []>} : vector<8x32xbf16>, vector<32x64xbf16>, vector<8x64xf32> -> vector<8x64xf32>
    %109 = vector.broadcast %91 : vector<1x64xf32> to vector<8x64xf32>
    %110 = arith.addf %108, %109 : vector<8x64xf32>
    %c0_65 = arith.constant 0 : index
    %c0_66 = arith.constant 0 : index
    %c0_67 = arith.constant 0 : index
    %c0_68 = arith.constant 0 : index
    %111 = vector.load %arg20[%c0_65, %c0_66, %c0_67, %c0_68] : memref<1x8x3x64xf32, #tpu.memory_space<vmem>>, vector<1x8x1x64xf32>
    %112 = vector.shape_cast %111 : vector<1x8x1x64xf32> to vector<8x64xf32>
    %113 = vector.shape_cast %110 : vector<8x64xf32> to vector<1x8x1x64xf32>
    tpu.vector_store %arg20[%c0_65, %c0_66, %c0_67, %c0_68], %113 {strides = array<i32>} : memref<1x8x3x64xf32, #tpu.memory_space<vmem>>, vector<1x8x1x64xf32>,
    %c0_69 = arith.constant 0 : index
    %c0_70 = arith.constant 0 : index
    %c1 = arith.constant 1 : index
    %c0_71 = arith.constant 0 : index
    %114 = vector.load %arg17[%c0_69, %c0_70, %c1, %c0_71] : memref<1x8x3x32xf32, #tpu.memory_space<vmem>>, vector<1x8x1x32xf32>
    %115 = vector.shape_cast %114 : vector<1x8x1x32xf32> to vector<8x32xf32>
    %116 = vector.shape_cast %64 : vector<8x32xf32> to vector<1x8x1x32xf32>
    tpu.vector_store %arg17[%c0_69, %c0_70, %c1, %c0_71], %116 {strides = array<i32>} : memref<1x8x3x32xf32, #tpu.memory_space<vmem>>, vector<1x8x1x32xf32>,
    %117 = arith.truncf %64 : vector<8x32xf32> to vector<8x32xbf16>
    %cst_72 = arith.constant dense<0.000000e+00> : vector<8x64xf32>
    %118 = tpu.matmul %117, %86, %cst_72 {dimension_numbers = #tpu.dot_dimension_numbers<[1], [0], [0], [1], [0, 0, 1, 1], [], []>} : vector<8x32xbf16>, vector<32x64xbf16>, vector<8x64xf32> -> vector<8x64xf32>
    %119 = vector.broadcast %89 : vector<1x64xf32> to vector<8x64xf32>
    %120 = arith.addf %118, %119 : vector<8x64xf32>
    %c0_73 = arith.constant 0 : index
    %c0_74 = arith.constant 0 : index
    %c1_75 = arith.constant 1 : index
    %c0_76 = arith.constant 0 : index
    %121 = vector.load %arg18[%c0_73, %c0_74, %c1_75, %c0_76] : memref<1x8x3x64xf32, #tpu.memory_space<vmem>>, vector<1x8x1x64xf32>
    %122 = vector.shape_cast %121 : vector<1x8x1x64xf32> to vector<8x64xf32>
    %123 = vector.shape_cast %120 : vector<8x64xf32> to vector<1x8x1x64xf32>
    tpu.vector_store %arg18[%c0_73, %c0_74, %c1_75, %c0_76], %123 {strides = array<i32>} : memref<1x8x3x64xf32, #tpu.memory_space<vmem>>, vector<1x8x1x64xf32>,
    %cst_77 = arith.constant dense<0.000000e+00> : vector<8x64xf32>
    %124 = tpu.matmul %117, %87, %cst_77 {dimension_numbers = #tpu.dot_dimension_numbers<[1], [0], [0], [1], [0, 0, 1, 1], [], []>} : vector<8x32xbf16>, vector<32x64xbf16>, vector<8x64xf32> -> vector<8x64xf32>
    %125 = vector.broadcast %90 : vector<1x64xf32> to vector<8x64xf32>
    %126 = arith.addf %124, %125 : vector<8x64xf32>
    %c0_78 = arith.constant 0 : index
    %c0_79 = arith.constant 0 : index
    %c1_80 = arith.constant 1 : index
    %c0_81 = arith.constant 0 : index
    %127 = vector.load %arg19[%c0_78, %c0_79, %c1_80, %c0_81] : memref<1x8x3x64xf32, #tpu.memory_space<vmem>>, vector<1x8x1x64xf32>
    %128 = vector.shape_cast %127 : vector<1x8x1x64xf32> to vector<8x64xf32>
    %129 = vector.shape_cast %126 : vector<8x64xf32> to vector<1x8x1x64xf32>
    tpu.vector_store %arg19[%c0_78, %c0_79, %c1_80, %c0_81], %129 {strides = array<i32>} : memref<1x8x3x64xf32, #tpu.memory_space<vmem>>, vector<1x8x1x64xf32>,
    %cst_82 = arith.constant dense<0.000000e+00> : vector<8x64xf32>
    %130 = tpu.matmul %117, %88, %cst_82 {dimension_numbers = #tpu.dot_dimension_numbers<[1], [0], [0], [1], [0, 0, 1, 1], [], []>} : vector<8x32xbf16>, vector<32x64xbf16>, vector<8x64xf32> -> vector<8x64xf32>
    %131 = vector.broadcast %91 : vector<1x64xf32> to vector<8x64xf32>
    %132 = arith.addf %130, %131 : vector<8x64xf32>
    %c0_83 = arith.constant 0 : index
    %c0_84 = arith.constant 0 : index
    %c1_85 = arith.constant 1 : index
    %c0_86 = arith.constant 0 : index
    %133 = vector.load %arg20[%c0_83, %c0_84, %c1_85, %c0_86] : memref<1x8x3x64xf32, #tpu.memory_space<vmem>>, vector<1x8x1x64xf32>
    %134 = vector.shape_cast %133 : vector<1x8x1x64xf32> to vector<8x64xf32>
    %135 = vector.shape_cast %132 : vector<8x64xf32> to vector<1x8x1x64xf32>
    tpu.vector_store %arg20[%c0_83, %c0_84, %c1_85, %c0_86], %135 {strides = array<i32>} : memref<1x8x3x64xf32, #tpu.memory_space<vmem>>, vector<1x8x1x64xf32>,
    %c0_87 = arith.constant 0 : index
    %c0_88 = arith.constant 0 : index
    %c2 = arith.constant 2 : index
    %c0_89 = arith.constant 0 : index
    %136 = vector.load %arg17[%c0_87, %c0_88, %c2, %c0_89] : memref<1x8x3x32xf32, #tpu.memory_space<vmem>>, vector<1x8x1x32xf32>
    %137 = vector.shape_cast %136 : vector<1x8x1x32xf32> to vector<8x32xf32>
    %138 = vector.shape_cast %85 : vector<8x32xf32> to vector<1x8x1x32xf32>
    tpu.vector_store %arg17[%c0_87, %c0_88, %c2, %c0_89], %138 {strides = array<i32>} : memref<1x8x3x32xf32, #tpu.memory_space<vmem>>, vector<1x8x1x32xf32>,
    %139 = arith.truncf %85 : vector<8x32xf32> to vector<8x32xbf16>
    %cst_90 = arith.constant dense<0.000000e+00> : vector<8x64xf32>
    %140 = tpu.matmul %139, %86, %cst_90 {dimension_numbers = #tpu.dot_dimension_numbers<[1], [0], [0], [1], [0, 0, 1, 1], [], []>} : vector<8x32xbf16>, vector<32x64xbf16>, vector<8x64xf32> -> vector<8x64xf32>
    %141 = vector.broadcast %89 : vector<1x64xf32> to vector<8x64xf32>
    %142 = arith.addf %140, %141 : vector<8x64xf32>
    %c0_91 = arith.constant 0 : index
    %c0_92 = arith.constant 0 : index
    %c2_93 = arith.constant 2 : index
    %c0_94 = arith.constant 0 : index
    %143 = vector.load %arg18[%c0_91, %c0_92, %c2_93, %c0_94] : memref<1x8x3x64xf32, #tpu.memory_space<vmem>>, vector<1x8x1x64xf32>
    %144 = vector.shape_cast %143 : vector<1x8x1x64xf32> to vector<8x64xf32>
    %145 = vector.shape_cast %142 : vector<8x64xf32> to vector<1x8x1x64xf32>
    tpu.vector_store %arg18[%c0_91, %c0_92, %c2_93, %c0_94], %145 {strides = array<i32>} : memref<1x8x3x64xf32, #tpu.memory_space<vmem>>, vector<1x8x1x64xf32>,
    %cst_95 = arith.constant dense<0.000000e+00> : vector<8x64xf32>
    %146 = tpu.matmul %139, %87, %cst_95 {dimension_numbers = #tpu.dot_dimension_numbers<[1], [0], [0], [1], [0, 0, 1, 1], [], []>} : vector<8x32xbf16>, vector<32x64xbf16>, vector<8x64xf32> -> vector<8x64xf32>
    %147 = vector.broadcast %90 : vector<1x64xf32> to vector<8x64xf32>
    %148 = arith.addf %146, %147 : vector<8x64xf32>
    %c0_96 = arith.constant 0 : index
    %c0_97 = arith.constant 0 : index
    %c2_98 = arith.constant 2 : index
    %c0_99 = arith.constant 0 : index
    %149 = vector.load %arg19[%c0_96, %c0_97, %c2_98, %c0_99] : memref<1x8x3x64xf32, #tpu.memory_space<vmem>>, vector<1x8x1x64xf32>
    %150 = vector.shape_cast %149 : vector<1x8x1x64xf32> to vector<8x64xf32>
    %151 = vector.shape_cast %148 : vector<8x64xf32> to vector<1x8x1x64xf32>
    tpu.vector_store %arg19[%c0_96, %c0_97, %c2_98, %c0_99], %151 {strides = array<i32>} : memref<1x8x3x64xf32, #tpu.memory_space<vmem>>, vector<1x8x1x64xf32>,
    %cst_100 = arith.constant dense<0.000000e+00> : vector<8x64xf32>
    %152 = tpu.matmul %139, %88, %cst_100 {dimension_numbers = #tpu.dot_dimension_numbers<[1], [0], [0], [1], [0, 0, 1, 1], [], []>} : vector<8x32xbf16>, vector<32x64xbf16>, vector<8x64xf32> -> vector<8x64xf32>
    %153 = vector.broadcast %91 : vector<1x64xf32> to vector<8x64xf32>
    %154 = arith.addf %152, %153 : vector<8x64xf32>
    %c0_101 = arith.constant 0 : index
    %c0_102 = arith.constant 0 : index
    %c2_103 = arith.constant 2 : index
    %c0_104 = arith.constant 0 : index
    %155 = vector.load %arg20[%c0_101, %c0_102, %c2_103, %c0_104] : memref<1x8x3x64xf32, #tpu.memory_space<vmem>>, vector<1x8x1x64xf32>
    %156 = vector.shape_cast %155 : vector<1x8x1x64xf32> to vector<8x64xf32>
    %157 = vector.shape_cast %154 : vector<8x64xf32> to vector<1x8x1x64xf32>
    tpu.vector_store %arg20[%c0_101, %c0_102, %c2_103, %c0_104], %157 {strides = array<i32>} : memref<1x8x3x64xf32, #tpu.memory_space<vmem>>, vector<1x8x1x64xf32>,
    return
  }
  func.func @transform_0(%arg0: i32) -> (i32, i32, i32) {
    %c0_i32 = arith.constant 0 : i32
    %c0_i32_0 = arith.constant 0 : i32
    %c0_i32_1 = arith.constant 0 : i32
    return %arg0, %c0_i32, %c0_i32_0 : i32, i32, i32
  }
  func.func @transform_1(%arg0: i32) -> (i32, i32, i32) {
    %c0_i32 = arith.constant 0 : i32
    %c0_i32_0 = arith.constant 0 : i32
    %c0_i32_1 = arith.constant 0 : i32
    return %arg0, %c0_i32, %c0_i32_0 : i32, i32, i32
  }
  func.func @transform_2(%arg0: i32) -> (i32, i32, i32) {
    %c0_i32 = arith.constant 0 : i32
    %c0_i32_0 = arith.constant 0 : i32
    %c0_i32_1 = arith.constant 0 : i32
    return %arg0, %c0_i32, %c0_i32_0 : i32, i32, i32
  }
  func.func @transform_3(%arg0: i32) -> (i32, i32, i32) {
    %c0_i32 = arith.constant 0 : i32
    %c0_i32_0 = arith.constant 0 : i32
    %c0_i32_1 = arith.constant 0 : i32
    return %arg0, %c0_i32, %c0_i32_0 : i32, i32, i32
  }
  func.func @transform_4(%arg0: i32) -> (i32, i32) {
    %c0_i32 = arith.constant 0 : i32
    %c0_i32_0 = arith.constant 0 : i32
    %c0_i32_1 = arith.constant 0 : i32
    return %c0_i32, %c0_i32_0 : i32, i32
  }
  func.func @transform_5(%arg0: i32) -> (i32, i32) {
    %c0_i32 = arith.constant 0 : i32
    %c0_i32_0 = arith.constant 0 : i32
    %c0_i32_1 = arith.constant 0 : i32
    return %c0_i32, %c0_i32_0 : i32, i32
  }
  func.func @transform_6(%arg0: i32) -> (i32, i32) {
    %c0_i32 = arith.constant 0 : i32
    %c0_i32_0 = arith.constant 0 : i32
    %c0_i32_1 = arith.constant 0 : i32
    return %c0_i32, %c0_i32_0 : i32, i32
  }
  func.func @transform_7(%arg0: i32) -> (i32, i32) {
    %c0_i32 = arith.constant 0 : i32
    %c0_i32_0 = arith.constant 0 : i32
    %c0_i32_1 = arith.constant 0 : i32
    return %c0_i32, %c0_i32_0 : i32, i32
  }
  func.func @transform_8(%arg0: i32) -> (i32, i32) {
    %c0_i32 = arith.constant 0 : i32
    %c0_i32_0 = arith.constant 0 : i32
    %c0_i32_1 = arith.constant 0 : i32
    return %c0_i32, %c0_i32_0 : i32, i32
  }
  func.func @transform_9(%arg0: i32) -> (i32, i32) {
    %c0_i32 = arith.constant 0 : i32
    %c0_i32_0 = arith.constant 0 : i32
    %c0_i32_1 = arith.constant 0 : i32
    return %c0_i32, %c0_i32_0 : i32, i32
  }
  func.func @transform_10(%arg0: i32) -> (i32, i32) {
    %c0_i32 = arith.constant 0 : i32
    %c0_i32_0 = arith.constant 0 : i32
    %c0_i32_1 = arith.constant 0 : i32
    return %c0_i32, %c0_i32_0 : i32, i32
  }
  func.func @transform_11(%arg0: i32) -> (i32, i32) {
    %c0_i32 = arith.constant 0 : i32
    %c0_i32_0 = arith.constant 0 : i32
    %c0_i32_1 = arith.constant 0 : i32
    return %c0_i32, %c0_i32_0 : i32, i32
  }
  func.func @transform_12(%arg0: i32) -> (i32, i32) {
    %c0_i32 = arith.constant 0 : i32
    %c0_i32_0 = arith.constant 0 : i32
    %c0_i32_1 = arith.constant 0 : i32
    return %c0_i32, %c0_i32_0 : i32, i32
  }
  func.func @transform_13(%arg0: i32) -> (i32, i32) {
    %c0_i32 = arith.constant 0 : i32
    %c0_i32_0 = arith.constant 0 : i32
    %c0_i32_1 = arith.constant 0 : i32
    return %c0_i32, %c0_i32_0 : i32, i32
  }
  func.func @transform_14(%arg0: i32) -> (i32, i32) {
    %c0_i32 = arith.constant 0 : i32
    %c0_i32_0 = arith.constant 0 : i32
    %c0_i32_1 = arith.constant 0 : i32
    return %c0_i32, %c0_i32_0 : i32, i32
  }
  func.func @transform_15(%arg0: i32) -> (i32, i32) {
    %c0_i32 = arith.constant 0 : i32
    %c0_i32_0 = arith.constant 0 : i32
    %c0_i32_1 = arith.constant 0 : i32
    return %c0_i32, %c0_i32_0 : i32, i32
  }
  func.func @transform_16(%arg0: i32) -> (i32, i32, i32, i32) {
    %c0_i32 = arith.constant 0 : i32
    %c0_i32_0 = arith.constant 0 : i32
    %c0_i32_1 = arith.constant 0 : i32
    %c0_i32_2 = arith.constant 0 : i32
    return %arg0, %c0_i32, %c0_i32_0, %c0_i32_1 : i32, i32, i32, i32
  }
  func.func @transform_17(%arg0: i32) -> (i32, i32, i32, i32) {
    %c0_i32 = arith.constant 0 : i32
    %c0_i32_0 = arith.constant 0 : i32
    %c0_i32_1 = arith.constant 0 : i32
    %c0_i32_2 = arith.constant 0 : i32
    return %arg0, %c0_i32, %c0_i32_0, %c0_i32_1 : i32, i32, i32, i32
  }
  func.func @transform_18(%arg0: i32) -> (i32, i32, i32, i32) {
    %c0_i32 = arith.constant 0 : i32
    %c0_i32_0 = arith.constant 0 : i32
    %c0_i32_1 = arith.constant 0 : i32
    %c0_i32_2 = arith.constant 0 : i32
    return %arg0, %c0_i32, %c0_i32_0, %c0_i32_1 : i32, i32, i32, i32
  }
  func.func @transform_19(%arg0: i32) -> (i32, i32, i32, i32) {
    %c0_i32 = arith.constant 0 : i32
    %c0_i32_0 = arith.constant 0 : i32
    %c0_i32_1 = arith.constant 0 : i32
    %c0_i32_2 = arith.constant 0 : i32
    return %arg0, %c0_i32, %c0_i32_0, %c0_i32_1 : i32, i32, i32, i32
  }
}

module attributes {stable_mosaic.version = 11 : i64} {
  func.func @_post_kernel_qkv(%arg0: i32, %arg1: memref<1x24x64xf32, #tpu.memory_space<vmem>>, %arg2: memref<1x24x32xf32, #tpu.memory_space<vmem>>, %arg3: memref<64x32xbf16, #tpu.memory_space<vmem>>, %arg4: memref<1x32xf32, #tpu.memory_space<vmem>>, %arg5: memref<1x32xf32, #tpu.memory_space<vmem>>, %arg6: memref<1x32xf32, #tpu.memory_space<vmem>>, %arg7: memref<32x128xbf16, #tpu.memory_space<vmem>>, %arg8: memref<1x128xf32, #tpu.memory_space<vmem>>, %arg9: memref<128x32xbf16, #tpu.memory_space<vmem>>, %arg10: memref<1x32xf32, #tpu.memory_space<vmem>>, %arg11: memref<1x32xf32, #tpu.memory_space<vmem>>, %arg12: memref<1x32xf32, #tpu.memory_space<vmem>>, %arg13: memref<32x64xbf16, #tpu.memory_space<vmem>>, %arg14: memref<1x64xf32, #tpu.memory_space<vmem>>, %arg15: memref<32x64xbf16, #tpu.memory_space<vmem>>, %arg16: memref<1x64xf32, #tpu.memory_space<vmem>>, %arg17: memref<32x64xbf16, #tpu.memory_space<vmem>>, %arg18: memref<1x64xf32, #tpu.memory_space<vmem>>, %arg19: memref<1x24x32xf32, #tpu.memory_space<vmem>>, %arg20: memref<1x24x64xf32, #tpu.memory_space<vmem>>, %arg21: memref<1x24x64xf32, #tpu.memory_space<vmem>>, %arg22: memref<1x24x64xf32, #tpu.memory_space<vmem>>) attributes {dimension_semantics = [#tpu.dimension_semantics<parallel>], iteration_bounds = array<i64: 2>, scalar_prefetch = 0 : i64, scratch_operands = 0 : i64, tpu.core_type = #tpu.core_type<tc>, window_params = [{transform_indices = @transform_0, window_bounds = array<i64: 1, 24, 64>}, {transform_indices = @transform_1, window_bounds = array<i64: 1, 24, 32>}, {pipeline_mode = #tpu.pipeline_mode<synchronous>, transform_indices = @transform_2, window_bounds = array<i64: 64, 32>}, {pipeline_mode = #tpu.pipeline_mode<synchronous>, transform_indices = @transform_3, window_bounds = array<i64: 1, 32>}, {pipeline_mode = #tpu.pipeline_mode<synchronous>, transform_indices = @transform_4, window_bounds = array<i64: 1, 32>}, {pipeline_mode = #tpu.pipeline_mode<synchronous>, transform_indices = @transform_5, window_bounds = array<i64: 1, 32>}, {pipeline_mode = #tpu.pipeline_mode<synchronous>, transform_indices = @transform_6, window_bounds = array<i64: 32, 128>}, {pipeline_mode = #tpu.pipeline_mode<synchronous>, transform_indices = @transform_7, window_bounds = array<i64: 1, 128>}, {pipeline_mode = #tpu.pipeline_mode<synchronous>, transform_indices = @transform_8, window_bounds = array<i64: 128, 32>}, {pipeline_mode = #tpu.pipeline_mode<synchronous>, transform_indices = @transform_9, window_bounds = array<i64: 1, 32>}, {pipeline_mode = #tpu.pipeline_mode<synchronous>, transform_indices = @transform_10, window_bounds = array<i64: 1, 32>}, {pipeline_mode = #tpu.pipeline_mode<synchronous>, transform_indices = @transform_11, window_bounds = array<i64: 1, 32>}, {pipeline_mode = #tpu.pipeline_mode<synchronous>, transform_indices = @transform_12, window_bounds = array<i64: 32, 64>}, {pipeline_mode = #tpu.pipeline_mode<synchronous>, transform_indices = @transform_13, window_bounds = array<i64: 1, 64>}, {pipeline_mode = #tpu.pipeline_mode<synchronous>, transform_indices = @transform_14, window_bounds = array<i64: 32, 64>}, {pipeline_mode = #tpu.pipeline_mode<synchronous>, transform_indices = @transform_15, window_bounds = array<i64: 1, 64>}, {pipeline_mode = #tpu.pipeline_mode<synchronous>, transform_indices = @transform_16, window_bounds = array<i64: 32, 64>}, {pipeline_mode = #tpu.pipeline_mode<synchronous>, transform_indices = @transform_17, window_bounds = array<i64: 1, 64>}, {transform_indices = @transform_18, window_bounds = array<i64: 1, 24, 32>}, {transform_indices = @transform_19, window_bounds = array<i64: 1, 24, 64>}, {transform_indices = @transform_20, window_bounds = array<i64: 1, 24, 64>}, {transform_indices = @transform_21, window_bounds = array<i64: 1, 24, 64>}]} {
    %c0 = arith.constant 0 : index
    %c0_0 = arith.constant 0 : index
    %c0_1 = arith.constant 0 : index
    %0 = vector.load %arg1[%c0, %c0_0, %c0_1] : memref<1x24x64xf32, #tpu.memory_space<vmem>>, vector<1x24x64xf32>
    %1 = vector.shape_cast %0 : vector<1x24x64xf32> to vector<24x64xf32>
    %c0_2 = arith.constant 0 : index
    %c0_3 = arith.constant 0 : index
    %c0_4 = arith.constant 0 : index
    %2 = vector.load %arg2[%c0_2, %c0_3, %c0_4] : memref<1x24x32xf32, #tpu.memory_space<vmem>>, vector<1x24x32xf32>
    %3 = vector.shape_cast %2 : vector<1x24x32xf32> to vector<24x32xf32>
    %c0_5 = arith.constant 0 : index
    %c0_6 = arith.constant 0 : index
    %4 = vector.load %arg3[%c0_5, %c0_6] : memref<64x32xbf16, #tpu.memory_space<vmem>>, vector<64x32xbf16>
    %c0_7 = arith.constant 0 : index
    %c0_8 = arith.constant 0 : index
    %5 = vector.load %arg4[%c0_7, %c0_8] : memref<1x32xf32, #tpu.memory_space<vmem>>, vector<1x32xf32>
    %c0_9 = arith.constant 0 : index
    %c0_10 = arith.constant 0 : index
    %6 = vector.load %arg5[%c0_9, %c0_10] : memref<1x32xf32, #tpu.memory_space<vmem>>, vector<1x32xf32>
    %c0_11 = arith.constant 0 : index
    %c0_12 = arith.constant 0 : index
    %7 = vector.load %arg6[%c0_11, %c0_12] : memref<1x32xf32, #tpu.memory_space<vmem>>, vector<1x32xf32>
    %c0_13 = arith.constant 0 : index
    %c0_14 = arith.constant 0 : index
    %8 = vector.load %arg7[%c0_13, %c0_14] : memref<32x128xbf16, #tpu.memory_space<vmem>>, vector<32x128xbf16>
    %c0_15 = arith.constant 0 : index
    %c0_16 = arith.constant 0 : index
    %9 = vector.load %arg8[%c0_15, %c0_16] : memref<1x128xf32, #tpu.memory_space<vmem>>, vector<1x128xf32>
    %c0_17 = arith.constant 0 : index
    %c0_18 = arith.constant 0 : index
    %10 = vector.load %arg9[%c0_17, %c0_18] : memref<128x32xbf16, #tpu.memory_space<vmem>>, vector<128x32xbf16>
    %c0_19 = arith.constant 0 : index
    %c0_20 = arith.constant 0 : index
    %11 = vector.load %arg10[%c0_19, %c0_20] : memref<1x32xf32, #tpu.memory_space<vmem>>, vector<1x32xf32>
    %c0_21 = arith.constant 0 : index
    %c0_22 = arith.constant 0 : index
    %12 = vector.load %arg11[%c0_21, %c0_22] : memref<1x32xf32, #tpu.memory_space<vmem>>, vector<1x32xf32>
    %c0_23 = arith.constant 0 : index
    %c0_24 = arith.constant 0 : index
    %13 = vector.load %arg12[%c0_23, %c0_24] : memref<1x32xf32, #tpu.memory_space<vmem>>, vector<1x32xf32>
    %14 = arith.truncf %1 : vector<24x64xf32> to vector<24x64xbf16>
    %cst = arith.constant dense<0.000000e+00> : vector<24x32xf32>
    %15 = tpu.matmul %14, %4, %cst {dimension_numbers = #tpu.dot_dimension_numbers<[1], [0], [0], [1], [0, 0, 1, 1], [], []>} : vector<24x64xbf16>, vector<64x32xbf16>, vector<24x32xf32> -> vector<24x32xf32>
    %16 = vector.broadcast %5 : vector<1x32xf32> to vector<24x32xf32>
    %17 = arith.addf %15, %16 : vector<24x32xf32>
    %18 = arith.addf %17, %3 : vector<24x32xf32>
    %cst_25 = arith.constant dense<0.000000e+00> : vector<24xf32>
    %19 = vector.multi_reduction <add>, %18, %cst_25 [1] : vector<24x32xf32> to vector<24xf32>
    %20 = vector.shape_cast %19 : vector<24xf32> to vector<24x1xf32>
    %cst_26 = arith.constant 3.200000e+01 : f32
    %21 = vector.broadcast %cst_26 : f32 to vector<24x1xf32>
    %22 = arith.divf %20, %21 : vector<24x1xf32>
    %23 = vector.broadcast %22 : vector<24x1xf32> to vector<24x32xf32>
    %24 = arith.subf %18, %23 : vector<24x32xf32>
    %25 = arith.mulf %24, %24 : vector<24x32xf32>
    %cst_27 = arith.constant dense<0.000000e+00> : vector<24xf32>
    %26 = vector.multi_reduction <add>, %25, %cst_27 [1] : vector<24x32xf32> to vector<24xf32>
    %27 = vector.shape_cast %26 : vector<24xf32> to vector<24x1xf32>
    %cst_28 = arith.constant 3.200000e+01 : f32
    %28 = vector.broadcast %cst_28 : f32 to vector<24x1xf32>
    %29 = arith.divf %27, %28 : vector<24x1xf32>
    %cst_29 = arith.constant 9.99999974E-6 : f32
    %30 = vector.broadcast %cst_29 : f32 to vector<24x1xf32>
    %31 = arith.addf %29, %30 : vector<24x1xf32>
    %32 = math.rsqrt %31 : vector<24x1xf32>
    %33 = vector.broadcast %32 : vector<24x1xf32> to vector<24x32xf32>
    %34 = arith.mulf %24, %33 : vector<24x32xf32>
    %35 = vector.broadcast %6 : vector<1x32xf32> to vector<24x32xf32>
    %36 = arith.mulf %34, %35 : vector<24x32xf32>
    %37 = vector.broadcast %7 : vector<1x32xf32> to vector<24x32xf32>
    %38 = arith.addf %36, %37 : vector<24x32xf32>
    %39 = arith.truncf %38 : vector<24x32xf32> to vector<24x32xbf16>
    %cst_30 = arith.constant dense<0.000000e+00> : vector<24x128xf32>
    %40 = tpu.matmul %39, %8, %cst_30 {dimension_numbers = #tpu.dot_dimension_numbers<[1], [0], [0], [1], [0, 0, 1, 1], [], []>} : vector<24x32xbf16>, vector<32x128xbf16>, vector<24x128xf32> -> vector<24x128xf32>
    %41 = vector.broadcast %9 : vector<1x128xf32> to vector<24x128xf32>
    %42 = arith.addf %40, %41 : vector<24x128xf32>
    %cst_31 = arith.constant 0.000000e+00 : f32
    %43 = vector.broadcast %cst_31 : f32 to vector<24x128xf32>
    %44 = arith.maximumf %42, %43 : vector<24x128xf32>
    %45 = arith.truncf %44 : vector<24x128xf32> to vector<24x128xbf16>
    %cst_32 = arith.constant dense<0.000000e+00> : vector<24x32xf32>
    %46 = tpu.matmul %45, %10, %cst_32 {dimension_numbers = #tpu.dot_dimension_numbers<[1], [0], [0], [1], [0, 0, 1, 1], [], []>} : vector<24x128xbf16>, vector<128x32xbf16>, vector<24x32xf32> -> vector<24x32xf32>
    %47 = vector.broadcast %11 : vector<1x32xf32> to vector<24x32xf32>
    %48 = arith.addf %46, %47 : vector<24x32xf32>
    %49 = arith.addf %48, %38 : vector<24x32xf32>
    %cst_33 = arith.constant dense<0.000000e+00> : vector<24xf32>
    %50 = vector.multi_reduction <add>, %49, %cst_33 [1] : vector<24x32xf32> to vector<24xf32>
    %51 = vector.shape_cast %50 : vector<24xf32> to vector<24x1xf32>
    %cst_34 = arith.constant 3.200000e+01 : f32
    %52 = vector.broadcast %cst_34 : f32 to vector<24x1xf32>
    %53 = arith.divf %51, %52 : vector<24x1xf32>
    %54 = vector.broadcast %53 : vector<24x1xf32> to vector<24x32xf32>
    %55 = arith.subf %49, %54 : vector<24x32xf32>
    %56 = arith.mulf %55, %55 : vector<24x32xf32>
    %cst_35 = arith.constant dense<0.000000e+00> : vector<24xf32>
    %57 = vector.multi_reduction <add>, %56, %cst_35 [1] : vector<24x32xf32> to vector<24xf32>
    %58 = vector.shape_cast %57 : vector<24xf32> to vector<24x1xf32>
    %cst_36 = arith.constant 3.200000e+01 : f32
    %59 = vector.broadcast %cst_36 : f32 to vector<24x1xf32>
    %60 = arith.divf %58, %59 : vector<24x1xf32>
    %cst_37 = arith.constant 9.99999974E-6 : f32
    %61 = vector.broadcast %cst_37 : f32 to vector<24x1xf32>
    %62 = arith.addf %60, %61 : vector<24x1xf32>
    %63 = math.rsqrt %62 : vector<24x1xf32>
    %64 = vector.broadcast %63 : vector<24x1xf32> to vector<24x32xf32>
    %65 = arith.mulf %55, %64 : vector<24x32xf32>
    %66 = vector.broadcast %12 : vector<1x32xf32> to vector<24x32xf32>
    %67 = arith.mulf %65, %66 : vector<24x32xf32>
    %68 = vector.broadcast %13 : vector<1x32xf32> to vector<24x32xf32>
    %69 = arith.addf %67, %68 : vector<24x32xf32>
    %c0_38 = arith.constant 0 : index
    %c0_39 = arith.constant 0 : index
    %c0_40 = arith.constant 0 : index
    %70 = vector.load %arg19[%c0_38, %c0_39, %c0_40] : memref<1x24x32xf32, #tpu.memory_space<vmem>>, vector<1x24x32xf32>
    %71 = vector.shape_cast %70 : vector<1x24x32xf32> to vector<24x32xf32>
    %72 = vector.shape_cast %69 : vector<24x32xf32> to vector<1x24x32xf32>
    tpu.vector_store %arg19[%c0_38, %c0_39, %c0_40], %72 {strides = array<i32>} : memref<1x24x32xf32, #tpu.memory_space<vmem>>, vector<1x24x32xf32>,
    %73 = arith.truncf %69 : vector<24x32xf32> to vector<24x32xbf16>
    %c0_41 = arith.constant 0 : index
    %c0_42 = arith.constant 0 : index
    %74 = vector.load %arg13[%c0_41, %c0_42] : memref<32x64xbf16, #tpu.memory_space<vmem>>, vector<32x64xbf16>
    %cst_43 = arith.constant dense<0.000000e+00> : vector<24x64xf32>
    %75 = tpu.matmul %73, %74, %cst_43 {dimension_numbers = #tpu.dot_dimension_numbers<[1], [0], [0], [1], [0, 0, 1, 1], [], []>} : vector<24x32xbf16>, vector<32x64xbf16>, vector<24x64xf32> -> vector<24x64xf32>
    %c0_44 = arith.constant 0 : index
    %c0_45 = arith.constant 0 : index
    %76 = vector.load %arg14[%c0_44, %c0_45] : memref<1x64xf32, #tpu.memory_space<vmem>>, vector<1x64xf32>
    %77 = vector.broadcast %76 : vector<1x64xf32> to vector<24x64xf32>
    %78 = arith.addf %75, %77 : vector<24x64xf32>
    %c0_46 = arith.constant 0 : index
    %c0_47 = arith.constant 0 : index
    %c0_48 = arith.constant 0 : index
    %79 = vector.load %arg20[%c0_46, %c0_47, %c0_48] : memref<1x24x64xf32, #tpu.memory_space<vmem>>, vector<1x24x64xf32>
    %80 = vector.shape_cast %79 : vector<1x24x64xf32> to vector<24x64xf32>
    %81 = vector.shape_cast %78 : vector<24x64xf32> to vector<1x24x64xf32>
    tpu.vector_store %arg20[%c0_46, %c0_47, %c0_48], %81 {strides = array<i32>} : memref<1x24x64xf32, #tpu.memory_space<vmem>>, vector<1x24x64xf32>,
    %c0_49 = arith.constant 0 : index
    %c0_50 = arith.constant 0 : index
    %82 = vector.load %arg15[%c0_49, %c0_50] : memref<32x64xbf16, #tpu.memory_space<vmem>>, vector<32x64xbf16>
    %cst_51 = arith.constant dense<0.000000e+00> : vector<24x64xf32>
    %83 = tpu.matmul %73, %82, %cst_51 {dimension_numbers = #tpu.dot_dimension_numbers<[1], [0], [0], [1], [0, 0, 1, 1], [], []>} : vector<24x32xbf16>, vector<32x64xbf16>, vector<24x64xf32> -> vector<24x64xf32>
    %c0_52 = arith.constant 0 : index
    %c0_53 = arith.constant 0 : index
    %84 = vector.load %arg16[%c0_52, %c0_53] : memref<1x64xf32, #tpu.memory_space<vmem>>, vector<1x64xf32>
    %85 = vector.broadcast %84 : vector<1x64xf32> to vector<24x64xf32>
    %86 = arith.addf %83, %85 : vector<24x64xf32>
    %c0_54 = arith.constant 0 : index
    %c0_55 = arith.constant 0 : index
    %c0_56 = arith.constant 0 : index
    %87 = vector.load %arg21[%c0_54, %c0_55, %c0_56] : memref<1x24x64xf32, #tpu.memory_space<vmem>>, vector<1x24x64xf32>
    %88 = vector.shape_cast %87 : vector<1x24x64xf32> to vector<24x64xf32>
    %89 = vector.shape_cast %86 : vector<24x64xf32> to vector<1x24x64xf32>
    tpu.vector_store %arg21[%c0_54, %c0_55, %c0_56], %89 {strides = array<i32>} : memref<1x24x64xf32, #tpu.memory_space<vmem>>, vector<1x24x64xf32>,
    %c0_57 = arith.constant 0 : index
    %c0_58 = arith.constant 0 : index
    %90 = vector.load %arg17[%c0_57, %c0_58] : memref<32x64xbf16, #tpu.memory_space<vmem>>, vector<32x64xbf16>
    %cst_59 = arith.constant dense<0.000000e+00> : vector<24x64xf32>
    %91 = tpu.matmul %73, %90, %cst_59 {dimension_numbers = #tpu.dot_dimension_numbers<[1], [0], [0], [1], [0, 0, 1, 1], [], []>} : vector<24x32xbf16>, vector<32x64xbf16>, vector<24x64xf32> -> vector<24x64xf32>
    %c0_60 = arith.constant 0 : index
    %c0_61 = arith.constant 0 : index
    %92 = vector.load %arg18[%c0_60, %c0_61] : memref<1x64xf32, #tpu.memory_space<vmem>>, vector<1x64xf32>
    %93 = vector.broadcast %92 : vector<1x64xf32> to vector<24x64xf32>
    %94 = arith.addf %91, %93 : vector<24x64xf32>
    %c0_62 = arith.constant 0 : index
    %c0_63 = arith.constant 0 : index
    %c0_64 = arith.constant 0 : index
    %95 = vector.load %arg22[%c0_62, %c0_63, %c0_64] : memref<1x24x64xf32, #tpu.memory_space<vmem>>, vector<1x24x64xf32>
    %96 = vector.shape_cast %95 : vector<1x24x64xf32> to vector<24x64xf32>
    %97 = vector.shape_cast %94 : vector<24x64xf32> to vector<1x24x64xf32>
    tpu.vector_store %arg22[%c0_62, %c0_63, %c0_64], %97 {strides = array<i32>} : memref<1x24x64xf32, #tpu.memory_space<vmem>>, vector<1x24x64xf32>,
    return
  }
  func.func @transform_0(%arg0: i32) -> (i32, i32, i32) {
    %c0_i32 = arith.constant 0 : i32
    %c0_i32_0 = arith.constant 0 : i32
    %c0_i32_1 = arith.constant 0 : i32
    return %arg0, %c0_i32, %c0_i32_0 : i32, i32, i32
  }
  func.func @transform_1(%arg0: i32) -> (i32, i32, i32) {
    %c0_i32 = arith.constant 0 : i32
    %c0_i32_0 = arith.constant 0 : i32
    %c0_i32_1 = arith.constant 0 : i32
    return %arg0, %c0_i32, %c0_i32_0 : i32, i32, i32
  }
  func.func @transform_2(%arg0: i32) -> (i32, i32) {
    %c0_i32 = arith.constant 0 : i32
    %c0_i32_0 = arith.constant 0 : i32
    %c0_i32_1 = arith.constant 0 : i32
    return %c0_i32, %c0_i32_0 : i32, i32
  }
  func.func @transform_3(%arg0: i32) -> (i32, i32) {
    %c0_i32 = arith.constant 0 : i32
    %c0_i32_0 = arith.constant 0 : i32
    %c0_i32_1 = arith.constant 0 : i32
    return %c0_i32, %c0_i32_0 : i32, i32
  }
  func.func @transform_4(%arg0: i32) -> (i32, i32) {
    %c0_i32 = arith.constant 0 : i32
    %c0_i32_0 = arith.constant 0 : i32
    %c0_i32_1 = arith.constant 0 : i32
    return %c0_i32, %c0_i32_0 : i32, i32
  }
  func.func @transform_5(%arg0: i32) -> (i32, i32) {
    %c0_i32 = arith.constant 0 : i32
    %c0_i32_0 = arith.constant 0 : i32
    %c0_i32_1 = arith.constant 0 : i32
    return %c0_i32, %c0_i32_0 : i32, i32
  }
  func.func @transform_6(%arg0: i32) -> (i32, i32) {
    %c0_i32 = arith.constant 0 : i32
    %c0_i32_0 = arith.constant 0 : i32
    %c0_i32_1 = arith.constant 0 : i32
    return %c0_i32, %c0_i32_0 : i32, i32
  }
  func.func @transform_7(%arg0: i32) -> (i32, i32) {
    %c0_i32 = arith.constant 0 : i32
    %c0_i32_0 = arith.constant 0 : i32
    %c0_i32_1 = arith.constant 0 : i32
    return %c0_i32, %c0_i32_0 : i32, i32
  }
  func.func @transform_8(%arg0: i32) -> (i32, i32) {
    %c0_i32 = arith.constant 0 : i32
    %c0_i32_0 = arith.constant 0 : i32
    %c0_i32_1 = arith.constant 0 : i32
    return %c0_i32, %c0_i32_0 : i32, i32
  }
  func.func @transform_9(%arg0: i32) -> (i32, i32) {
    %c0_i32 = arith.constant 0 : i32
    %c0_i32_0 = arith.constant 0 : i32
    %c0_i32_1 = arith.constant 0 : i32
    return %c0_i32, %c0_i32_0 : i32, i32
  }
  func.func @transform_10(%arg0: i32) -> (i32, i32) {
    %c0_i32 = arith.constant 0 : i32
    %c0_i32_0 = arith.constant 0 : i32
    %c0_i32_1 = arith.constant 0 : i32
    return %c0_i32, %c0_i32_0 : i32, i32
  }
  func.func @transform_11(%arg0: i32) -> (i32, i32) {
    %c0_i32 = arith.constant 0 : i32
    %c0_i32_0 = arith.constant 0 : i32
    %c0_i32_1 = arith.constant 0 : i32
    return %c0_i32, %c0_i32_0 : i32, i32
  }
  func.func @transform_12(%arg0: i32) -> (i32, i32) {
    %c0_i32 = arith.constant 0 : i32
    %c0_i32_0 = arith.constant 0 : i32
    %c0_i32_1 = arith.constant 0 : i32
    return %c0_i32, %c0_i32_0 : i32, i32
  }
  func.func @transform_13(%arg0: i32) -> (i32, i32) {
    %c0_i32 = arith.constant 0 : i32
    %c0_i32_0 = arith.constant 0 : i32
    %c0_i32_1 = arith.constant 0 : i32
    return %c0_i32, %c0_i32_0 : i32, i32
  }
  func.func @transform_14(%arg0: i32) -> (i32, i32) {
    %c0_i32 = arith.constant 0 : i32
    %c0_i32_0 = arith.constant 0 : i32
    %c0_i32_1 = arith.constant 0 : i32
    return %c0_i32, %c0_i32_0 : i32, i32
  }
  func.func @transform_15(%arg0: i32) -> (i32, i32) {
    %c0_i32 = arith.constant 0 : i32
    %c0_i32_0 = arith.constant 0 : i32
    %c0_i32_1 = arith.constant 0 : i32
    return %c0_i32, %c0_i32_0 : i32, i32
  }
  func.func @transform_16(%arg0: i32) -> (i32, i32) {
    %c0_i32 = arith.constant 0 : i32
    %c0_i32_0 = arith.constant 0 : i32
    %c0_i32_1 = arith.constant 0 : i32
    return %c0_i32, %c0_i32_0 : i32, i32
  }
  func.func @transform_17(%arg0: i32) -> (i32, i32) {
    %c0_i32 = arith.constant 0 : i32
    %c0_i32_0 = arith.constant 0 : i32
    %c0_i32_1 = arith.constant 0 : i32
    return %c0_i32, %c0_i32_0 : i32, i32
  }
  func.func @transform_18(%arg0: i32) -> (i32, i32, i32) {
    %c0_i32 = arith.constant 0 : i32
    %c0_i32_0 = arith.constant 0 : i32
    %c0_i32_1 = arith.constant 0 : i32
    return %arg0, %c0_i32, %c0_i32_0 : i32, i32, i32
  }
  func.func @transform_19(%arg0: i32) -> (i32, i32, i32) {
    %c0_i32 = arith.constant 0 : i32
    %c0_i32_0 = arith.constant 0 : i32
    %c0_i32_1 = arith.constant 0 : i32
    return %arg0, %c0_i32, %c0_i32_0 : i32, i32, i32
  }
  func.func @transform_20(%arg0: i32) -> (i32, i32, i32) {
    %c0_i32 = arith.constant 0 : i32
    %c0_i32_0 = arith.constant 0 : i32
    %c0_i32_1 = arith.constant 0 : i32
    return %arg0, %c0_i32, %c0_i32_0 : i32, i32, i32
  }
  func.func @transform_21(%arg0: i32) -> (i32, i32, i32) {
    %c0_i32 = arith.constant 0 : i32
    %c0_i32_0 = arith.constant 0 : i32
    %c0_i32_1 = arith.constant 0 : i32
    return %arg0, %c0_i32, %c0_i32_0 : i32, i32, i32
  }
}

module attributes {stable_mosaic.version = 11 : i64} {
  func.func @_post_kernel(%arg0: i32, %arg1: memref<1x24x64xf32, #tpu.memory_space<vmem>>, %arg2: memref<1x24x32xf32, #tpu.memory_space<vmem>>, %arg3: memref<64x32xbf16, #tpu.memory_space<vmem>>, %arg4: memref<1x32xf32, #tpu.memory_space<vmem>>, %arg5: memref<1x32xf32, #tpu.memory_space<vmem>>, %arg6: memref<1x32xf32, #tpu.memory_space<vmem>>, %arg7: memref<32x128xbf16, #tpu.memory_space<vmem>>, %arg8: memref<1x128xf32, #tpu.memory_space<vmem>>, %arg9: memref<128x32xbf16, #tpu.memory_space<vmem>>, %arg10: memref<1x32xf32, #tpu.memory_space<vmem>>, %arg11: memref<1x32xf32, #tpu.memory_space<vmem>>, %arg12: memref<1x32xf32, #tpu.memory_space<vmem>>, %arg13: memref<1x24x32xf32, #tpu.memory_space<vmem>>) attributes {dimension_semantics = [#tpu.dimension_semantics<parallel>], iteration_bounds = array<i64: 2>, scalar_prefetch = 0 : i64, scratch_operands = 0 : i64, tpu.core_type = #tpu.core_type<tc>, window_params = [{transform_indices = @transform_0, window_bounds = array<i64: 1, 24, 64>}, {transform_indices = @transform_1, window_bounds = array<i64: 1, 24, 32>}, {pipeline_mode = #tpu.pipeline_mode<synchronous>, transform_indices = @transform_2, window_bounds = array<i64: 64, 32>}, {pipeline_mode = #tpu.pipeline_mode<synchronous>, transform_indices = @transform_3, window_bounds = array<i64: 1, 32>}, {pipeline_mode = #tpu.pipeline_mode<synchronous>, transform_indices = @transform_4, window_bounds = array<i64: 1, 32>}, {pipeline_mode = #tpu.pipeline_mode<synchronous>, transform_indices = @transform_5, window_bounds = array<i64: 1, 32>}, {pipeline_mode = #tpu.pipeline_mode<synchronous>, transform_indices = @transform_6, window_bounds = array<i64: 32, 128>}, {pipeline_mode = #tpu.pipeline_mode<synchronous>, transform_indices = @transform_7, window_bounds = array<i64: 1, 128>}, {pipeline_mode = #tpu.pipeline_mode<synchronous>, transform_indices = @transform_8, window_bounds = array<i64: 128, 32>}, {pipeline_mode = #tpu.pipeline_mode<synchronous>, transform_indices = @transform_9, window_bounds = array<i64: 1, 32>}, {pipeline_mode = #tpu.pipeline_mode<synchronous>, transform_indices = @transform_10, window_bounds = array<i64: 1, 32>}, {pipeline_mode = #tpu.pipeline_mode<synchronous>, transform_indices = @transform_11, window_bounds = array<i64: 1, 32>}, {transform_indices = @transform_12, window_bounds = array<i64: 1, 24, 32>}]} {
    %c0 = arith.constant 0 : index
    %c0_0 = arith.constant 0 : index
    %c0_1 = arith.constant 0 : index
    %0 = vector.load %arg1[%c0, %c0_0, %c0_1] : memref<1x24x64xf32, #tpu.memory_space<vmem>>, vector<1x24x64xf32>
    %1 = vector.shape_cast %0 : vector<1x24x64xf32> to vector<24x64xf32>
    %c0_2 = arith.constant 0 : index
    %c0_3 = arith.constant 0 : index
    %c0_4 = arith.constant 0 : index
    %2 = vector.load %arg2[%c0_2, %c0_3, %c0_4] : memref<1x24x32xf32, #tpu.memory_space<vmem>>, vector<1x24x32xf32>
    %3 = vector.shape_cast %2 : vector<1x24x32xf32> to vector<24x32xf32>
    %c0_5 = arith.constant 0 : index
    %c0_6 = arith.constant 0 : index
    %4 = vector.load %arg3[%c0_5, %c0_6] : memref<64x32xbf16, #tpu.memory_space<vmem>>, vector<64x32xbf16>
    %c0_7 = arith.constant 0 : index
    %c0_8 = arith.constant 0 : index
    %5 = vector.load %arg4[%c0_7, %c0_8] : memref<1x32xf32, #tpu.memory_space<vmem>>, vector<1x32xf32>
    %c0_9 = arith.constant 0 : index
    %c0_10 = arith.constant 0 : index
    %6 = vector.load %arg5[%c0_9, %c0_10] : memref<1x32xf32, #tpu.memory_space<vmem>>, vector<1x32xf32>
    %c0_11 = arith.constant 0 : index
    %c0_12 = arith.constant 0 : index
    %7 = vector.load %arg6[%c0_11, %c0_12] : memref<1x32xf32, #tpu.memory_space<vmem>>, vector<1x32xf32>
    %c0_13 = arith.constant 0 : index
    %c0_14 = arith.constant 0 : index
    %8 = vector.load %arg7[%c0_13, %c0_14] : memref<32x128xbf16, #tpu.memory_space<vmem>>, vector<32x128xbf16>
    %c0_15 = arith.constant 0 : index
    %c0_16 = arith.constant 0 : index
    %9 = vector.load %arg8[%c0_15, %c0_16] : memref<1x128xf32, #tpu.memory_space<vmem>>, vector<1x128xf32>
    %c0_17 = arith.constant 0 : index
    %c0_18 = arith.constant 0 : index
    %10 = vector.load %arg9[%c0_17, %c0_18] : memref<128x32xbf16, #tpu.memory_space<vmem>>, vector<128x32xbf16>
    %c0_19 = arith.constant 0 : index
    %c0_20 = arith.constant 0 : index
    %11 = vector.load %arg10[%c0_19, %c0_20] : memref<1x32xf32, #tpu.memory_space<vmem>>, vector<1x32xf32>
    %c0_21 = arith.constant 0 : index
    %c0_22 = arith.constant 0 : index
    %12 = vector.load %arg11[%c0_21, %c0_22] : memref<1x32xf32, #tpu.memory_space<vmem>>, vector<1x32xf32>
    %c0_23 = arith.constant 0 : index
    %c0_24 = arith.constant 0 : index
    %13 = vector.load %arg12[%c0_23, %c0_24] : memref<1x32xf32, #tpu.memory_space<vmem>>, vector<1x32xf32>
    %14 = arith.truncf %1 : vector<24x64xf32> to vector<24x64xbf16>
    %cst = arith.constant dense<0.000000e+00> : vector<24x32xf32>
    %15 = tpu.matmul %14, %4, %cst {dimension_numbers = #tpu.dot_dimension_numbers<[1], [0], [0], [1], [0, 0, 1, 1], [], []>} : vector<24x64xbf16>, vector<64x32xbf16>, vector<24x32xf32> -> vector<24x32xf32>
    %16 = vector.broadcast %5 : vector<1x32xf32> to vector<24x32xf32>
    %17 = arith.addf %15, %16 : vector<24x32xf32>
    %18 = arith.addf %17, %3 : vector<24x32xf32>
    %cst_25 = arith.constant dense<0.000000e+00> : vector<24xf32>
    %19 = vector.multi_reduction <add>, %18, %cst_25 [1] : vector<24x32xf32> to vector<24xf32>
    %20 = vector.shape_cast %19 : vector<24xf32> to vector<24x1xf32>
    %cst_26 = arith.constant 3.200000e+01 : f32
    %21 = vector.broadcast %cst_26 : f32 to vector<24x1xf32>
    %22 = arith.divf %20, %21 : vector<24x1xf32>
    %23 = vector.broadcast %22 : vector<24x1xf32> to vector<24x32xf32>
    %24 = arith.subf %18, %23 : vector<24x32xf32>
    %25 = arith.mulf %24, %24 : vector<24x32xf32>
    %cst_27 = arith.constant dense<0.000000e+00> : vector<24xf32>
    %26 = vector.multi_reduction <add>, %25, %cst_27 [1] : vector<24x32xf32> to vector<24xf32>
    %27 = vector.shape_cast %26 : vector<24xf32> to vector<24x1xf32>
    %cst_28 = arith.constant 3.200000e+01 : f32
    %28 = vector.broadcast %cst_28 : f32 to vector<24x1xf32>
    %29 = arith.divf %27, %28 : vector<24x1xf32>
    %cst_29 = arith.constant 9.99999974E-6 : f32
    %30 = vector.broadcast %cst_29 : f32 to vector<24x1xf32>
    %31 = arith.addf %29, %30 : vector<24x1xf32>
    %32 = math.rsqrt %31 : vector<24x1xf32>
    %33 = vector.broadcast %32 : vector<24x1xf32> to vector<24x32xf32>
    %34 = arith.mulf %24, %33 : vector<24x32xf32>
    %35 = vector.broadcast %6 : vector<1x32xf32> to vector<24x32xf32>
    %36 = arith.mulf %34, %35 : vector<24x32xf32>
    %37 = vector.broadcast %7 : vector<1x32xf32> to vector<24x32xf32>
    %38 = arith.addf %36, %37 : vector<24x32xf32>
    %39 = arith.truncf %38 : vector<24x32xf32> to vector<24x32xbf16>
    %cst_30 = arith.constant dense<0.000000e+00> : vector<24x128xf32>
    %40 = tpu.matmul %39, %8, %cst_30 {dimension_numbers = #tpu.dot_dimension_numbers<[1], [0], [0], [1], [0, 0, 1, 1], [], []>} : vector<24x32xbf16>, vector<32x128xbf16>, vector<24x128xf32> -> vector<24x128xf32>
    %41 = vector.broadcast %9 : vector<1x128xf32> to vector<24x128xf32>
    %42 = arith.addf %40, %41 : vector<24x128xf32>
    %cst_31 = arith.constant 0.000000e+00 : f32
    %43 = vector.broadcast %cst_31 : f32 to vector<24x128xf32>
    %44 = arith.maximumf %42, %43 : vector<24x128xf32>
    %45 = arith.truncf %44 : vector<24x128xf32> to vector<24x128xbf16>
    %cst_32 = arith.constant dense<0.000000e+00> : vector<24x32xf32>
    %46 = tpu.matmul %45, %10, %cst_32 {dimension_numbers = #tpu.dot_dimension_numbers<[1], [0], [0], [1], [0, 0, 1, 1], [], []>} : vector<24x128xbf16>, vector<128x32xbf16>, vector<24x32xf32> -> vector<24x32xf32>
    %47 = vector.broadcast %11 : vector<1x32xf32> to vector<24x32xf32>
    %48 = arith.addf %46, %47 : vector<24x32xf32>
    %49 = arith.addf %48, %38 : vector<24x32xf32>
    %cst_33 = arith.constant dense<0.000000e+00> : vector<24xf32>
    %50 = vector.multi_reduction <add>, %49, %cst_33 [1] : vector<24x32xf32> to vector<24xf32>
    %51 = vector.shape_cast %50 : vector<24xf32> to vector<24x1xf32>
    %cst_34 = arith.constant 3.200000e+01 : f32
    %52 = vector.broadcast %cst_34 : f32 to vector<24x1xf32>
    %53 = arith.divf %51, %52 : vector<24x1xf32>
    %54 = vector.broadcast %53 : vector<24x1xf32> to vector<24x32xf32>
    %55 = arith.subf %49, %54 : vector<24x32xf32>
    %56 = arith.mulf %55, %55 : vector<24x32xf32>
    %cst_35 = arith.constant dense<0.000000e+00> : vector<24xf32>
    %57 = vector.multi_reduction <add>, %56, %cst_35 [1] : vector<24x32xf32> to vector<24xf32>
    %58 = vector.shape_cast %57 : vector<24xf32> to vector<24x1xf32>
    %cst_36 = arith.constant 3.200000e+01 : f32
    %59 = vector.broadcast %cst_36 : f32 to vector<24x1xf32>
    %60 = arith.divf %58, %59 : vector<24x1xf32>
    %cst_37 = arith.constant 9.99999974E-6 : f32
    %61 = vector.broadcast %cst_37 : f32 to vector<24x1xf32>
    %62 = arith.addf %60, %61 : vector<24x1xf32>
    %63 = math.rsqrt %62 : vector<24x1xf32>
    %64 = vector.broadcast %63 : vector<24x1xf32> to vector<24x32xf32>
    %65 = arith.mulf %55, %64 : vector<24x32xf32>
    %66 = vector.broadcast %12 : vector<1x32xf32> to vector<24x32xf32>
    %67 = arith.mulf %65, %66 : vector<24x32xf32>
    %68 = vector.broadcast %13 : vector<1x32xf32> to vector<24x32xf32>
    %69 = arith.addf %67, %68 : vector<24x32xf32>
    %c0_38 = arith.constant 0 : index
    %c0_39 = arith.constant 0 : index
    %c0_40 = arith.constant 0 : index
    %70 = vector.load %arg13[%c0_38, %c0_39, %c0_40] : memref<1x24x32xf32, #tpu.memory_space<vmem>>, vector<1x24x32xf32>
    %71 = vector.shape_cast %70 : vector<1x24x32xf32> to vector<24x32xf32>
    %72 = vector.shape_cast %69 : vector<24x32xf32> to vector<1x24x32xf32>
    tpu.vector_store %arg13[%c0_38, %c0_39, %c0_40], %72 {strides = array<i32>} : memref<1x24x32xf32, #tpu.memory_space<vmem>>, vector<1x24x32xf32>,
    return
  }
  func.func @transform_0(%arg0: i32) -> (i32, i32, i32) {
    %c0_i32 = arith.constant 0 : i32
    %c0_i32_0 = arith.constant 0 : i32
    %c0_i32_1 = arith.constant 0 : i32
    return %arg0, %c0_i32, %c0_i32_0 : i32, i32, i32
  }
  func.func @transform_1(%arg0: i32) -> (i32, i32, i32) {
    %c0_i32 = arith.constant 0 : i32
    %c0_i32_0 = arith.constant 0 : i32
    %c0_i32_1 = arith.constant 0 : i32
    return %arg0, %c0_i32, %c0_i32_0 : i32, i32, i32
  }
  func.func @transform_2(%arg0: i32) -> (i32, i32) {
    %c0_i32 = arith.constant 0 : i32
    %c0_i32_0 = arith.constant 0 : i32
    %c0_i32_1 = arith.constant 0 : i32
    return %c0_i32, %c0_i32_0 : i32, i32
  }
  func.func @transform_3(%arg0: i32) -> (i32, i32) {
    %c0_i32 = arith.constant 0 : i32
    %c0_i32_0 = arith.constant 0 : i32
    %c0_i32_1 = arith.constant 0 : i32
    return %c0_i32, %c0_i32_0 : i32, i32
  }
  func.func @transform_4(%arg0: i32) -> (i32, i32) {
    %c0_i32 = arith.constant 0 : i32
    %c0_i32_0 = arith.constant 0 : i32
    %c0_i32_1 = arith.constant 0 : i32
    return %c0_i32, %c0_i32_0 : i32, i32
  }
  func.func @transform_5(%arg0: i32) -> (i32, i32) {
    %c0_i32 = arith.constant 0 : i32
    %c0_i32_0 = arith.constant 0 : i32
    %c0_i32_1 = arith.constant 0 : i32
    return %c0_i32, %c0_i32_0 : i32, i32
  }
  func.func @transform_6(%arg0: i32) -> (i32, i32) {
    %c0_i32 = arith.constant 0 : i32
    %c0_i32_0 = arith.constant 0 : i32
    %c0_i32_1 = arith.constant 0 : i32
    return %c0_i32, %c0_i32_0 : i32, i32
  }
  func.func @transform_7(%arg0: i32) -> (i32, i32) {
    %c0_i32 = arith.constant 0 : i32
    %c0_i32_0 = arith.constant 0 : i32
    %c0_i32_1 = arith.constant 0 : i32
    return %c0_i32, %c0_i32_0 : i32, i32
  }
  func.func @transform_8(%arg0: i32) -> (i32, i32) {
    %c0_i32 = arith.constant 0 : i32
    %c0_i32_0 = arith.constant 0 : i32
    %c0_i32_1 = arith.constant 0 : i32
    return %c0_i32, %c0_i32_0 : i32, i32
  }
  func.func @transform_9(%arg0: i32) -> (i32, i32) {
    %c0_i32 = arith.constant 0 : i32
    %c0_i32_0 = arith.constant 0 : i32
    %c0_i32_1 = arith.constant 0 : i32
    return %c0_i32, %c0_i32_0 : i32, i32
  }
  func.func @transform_10(%arg0: i32) -> (i32, i32) {
    %c0_i32 = arith.constant 0 : i32
    %c0_i32_0 = arith.constant 0 : i32
    %c0_i32_1 = arith.constant 0 : i32
    return %c0_i32, %c0_i32_0 : i32, i32
  }
  func.func @transform_11(%arg0: i32) -> (i32, i32) {
    %c0_i32 = arith.constant 0 : i32
    %c0_i32_0 = arith.constant 0 : i32
    %c0_i32_1 = arith.constant 0 : i32
    return %c0_i32, %c0_i32_0 : i32, i32
  }
  func.func @transform_12(%arg0: i32) -> (i32, i32, i32) {
    %c0_i32 = arith.constant 0 : i32
    %c0_i32_0 = arith.constant 0 : i32
    %c0_i32_1 = arith.constant 0 : i32
    return %arg0, %c0_i32, %c0_i32_0 : i32, i32, i32
  }
}

module attributes {stable_mosaic.version = 11 : i64} {
  func.func @_head_kernel(%arg0: i32, %arg1: memref<1x8x32xf32, #tpu.memory_space<vmem>>, %arg2: memref<32x128xbf16, #tpu.memory_space<vmem>>, %arg3: memref<1x128xf32, #tpu.memory_space<vmem>>, %arg4: memref<128x128xbf16, #tpu.memory_space<vmem>>, %arg5: memref<1x128xf32, #tpu.memory_space<vmem>>, %arg6: memref<1x8x128xf32, #tpu.memory_space<vmem>>) attributes {dimension_semantics = [#tpu.dimension_semantics<parallel>], iteration_bounds = array<i64: 2>, scalar_prefetch = 0 : i64, scratch_operands = 0 : i64, tpu.core_type = #tpu.core_type<tc>, window_params = [{transform_indices = @transform_0, window_bounds = array<i64: 1, 8, 32>}, {pipeline_mode = #tpu.pipeline_mode<synchronous>, transform_indices = @transform_1, window_bounds = array<i64: 32, 128>}, {pipeline_mode = #tpu.pipeline_mode<synchronous>, transform_indices = @transform_2, window_bounds = array<i64: 1, 128>}, {pipeline_mode = #tpu.pipeline_mode<synchronous>, transform_indices = @transform_3, window_bounds = array<i64: 128, 128>}, {pipeline_mode = #tpu.pipeline_mode<synchronous>, transform_indices = @transform_4, window_bounds = array<i64: 1, 128>}, {transform_indices = @transform_5, window_bounds = array<i64: 1, 8, 128>}]} {
    %c0 = arith.constant 0 : index
    %c0_0 = arith.constant 0 : index
    %c0_1 = arith.constant 0 : index
    %0 = vector.load %arg1[%c0, %c0_0, %c0_1] : memref<1x8x32xf32, #tpu.memory_space<vmem>>, vector<1x8x32xf32>
    %1 = vector.shape_cast %0 : vector<1x8x32xf32> to vector<8x32xf32>
    %c0_2 = arith.constant 0 : index
    %c0_3 = arith.constant 0 : index
    %2 = vector.load %arg2[%c0_2, %c0_3] : memref<32x128xbf16, #tpu.memory_space<vmem>>, vector<32x128xbf16>
    %3 = arith.truncf %1 : vector<8x32xf32> to vector<8x32xbf16>
    %cst = arith.constant dense<0.000000e+00> : vector<8x128xf32>
    %4 = tpu.matmul %3, %2, %cst {dimension_numbers = #tpu.dot_dimension_numbers<[1], [0], [0], [1], [0, 0, 1, 1], [], []>} : vector<8x32xbf16>, vector<32x128xbf16>, vector<8x128xf32> -> vector<8x128xf32>
    %c0_4 = arith.constant 0 : index
    %c0_5 = arith.constant 0 : index
    %5 = vector.load %arg3[%c0_4, %c0_5] : memref<1x128xf32, #tpu.memory_space<vmem>>, vector<1x128xf32>
    %6 = vector.broadcast %5 : vector<1x128xf32> to vector<8x128xf32>
    %7 = arith.addf %4, %6 : vector<8x128xf32>
    %cst_6 = arith.constant 0.000000e+00 : f32
    %8 = vector.broadcast %cst_6 : f32 to vector<8x128xf32>
    %9 = arith.maximumf %7, %8 : vector<8x128xf32>
    %c0_7 = arith.constant 0 : index
    %c0_8 = arith.constant 0 : index
    %10 = vector.load %arg4[%c0_7, %c0_8] : memref<128x128xbf16, #tpu.memory_space<vmem>>, vector<128x128xbf16>
    %11 = arith.truncf %9 : vector<8x128xf32> to vector<8x128xbf16>
    %cst_9 = arith.constant dense<0.000000e+00> : vector<8x128xf32>
    %12 = tpu.matmul %11, %10, %cst_9 {dimension_numbers = #tpu.dot_dimension_numbers<[1], [0], [0], [1], [0, 0, 1, 1], [], []>} : vector<8x128xbf16>, vector<128x128xbf16>, vector<8x128xf32> -> vector<8x128xf32>
    %c0_10 = arith.constant 0 : index
    %c0_11 = arith.constant 0 : index
    %13 = vector.load %arg5[%c0_10, %c0_11] : memref<1x128xf32, #tpu.memory_space<vmem>>, vector<1x128xf32>
    %14 = vector.broadcast %13 : vector<1x128xf32> to vector<8x128xf32>
    %15 = arith.addf %12, %14 : vector<8x128xf32>
    %16 = tpu.iota {dimensions = array<i32: 1>} : vector<8x128xi32>
    %c9_i32 = arith.constant 9 : i32
    %17 = vector.broadcast %c9_i32 : i32 to vector<8x128xi32>
    %18 = arith.cmpi slt, %16, %17 : vector<8x128xi32>
    %cst_12 = arith.constant -1.000000e+30 : f32
    %19 = vector.broadcast %cst_12 : f32 to vector<8x128xf32>
    %20 = arith.select %18, %15, %19 : vector<8x128xi1>, vector<8x128xf32>
    %cst_13 = arith.constant dense<0xFF800000> : vector<8xf32>
    %21 = vector.multi_reduction <maximumf>, %20, %cst_13 [1] : vector<8x128xf32> to vector<8xf32>
    %22 = vector.shape_cast %21 : vector<8xf32> to vector<8x1xf32>
    %23 = vector.broadcast %22 : vector<8x1xf32> to vector<8x128xf32>
    %24 = arith.subf %20, %23 : vector<8x128xf32>
    %25 = math.exp %24 : vector<8x128xf32>
    %cst_14 = arith.constant dense<0.000000e+00> : vector<8xf32>
    %26 = vector.multi_reduction <add>, %25, %cst_14 [1] : vector<8x128xf32> to vector<8xf32>
    %27 = vector.shape_cast %26 : vector<8xf32> to vector<8x1xf32>
    %28 = vector.broadcast %27 : vector<8x1xf32> to vector<8x128xf32>
    %29 = arith.divf %25, %28 : vector<8x128xf32>
    %c0_15 = arith.constant 0 : index
    %c0_16 = arith.constant 0 : index
    %c0_17 = arith.constant 0 : index
    %30 = vector.load %arg6[%c0_15, %c0_16, %c0_17] : memref<1x8x128xf32, #tpu.memory_space<vmem>>, vector<1x8x128xf32>
    %31 = vector.shape_cast %30 : vector<1x8x128xf32> to vector<8x128xf32>
    %32 = vector.shape_cast %29 : vector<8x128xf32> to vector<1x8x128xf32>
    tpu.vector_store %arg6[%c0_15, %c0_16, %c0_17], %32 {strides = array<i32>} : memref<1x8x128xf32, #tpu.memory_space<vmem>>, vector<1x8x128xf32>,
    return
  }
  func.func @transform_0(%arg0: i32) -> (i32, i32, i32) {
    %c0_i32 = arith.constant 0 : i32
    %c0_i32_0 = arith.constant 0 : i32
    %c0_i32_1 = arith.constant 0 : i32
    return %arg0, %c0_i32, %c0_i32_0 : i32, i32, i32
  }
  func.func @transform_1(%arg0: i32) -> (i32, i32) {
    %c0_i32 = arith.constant 0 : i32
    %c0_i32_0 = arith.constant 0 : i32
    %c0_i32_1 = arith.constant 0 : i32
    return %c0_i32, %c0_i32_0 : i32, i32
  }
  func.func @transform_2(%arg0: i32) -> (i32, i32) {
    %c0_i32 = arith.constant 0 : i32
    %c0_i32_0 = arith.constant 0 : i32
    %c0_i32_1 = arith.constant 0 : i32
    return %c0_i32, %c0_i32_0 : i32, i32
  }
  func.func @transform_3(%arg0: i32) -> (i32, i32) {
    %c0_i32 = arith.constant 0 : i32
    %c0_i32_0 = arith.constant 0 : i32
    %c0_i32_1 = arith.constant 0 : i32
    return %c0_i32, %c0_i32_0 : i32, i32
  }
  func.func @transform_4(%arg0: i32) -> (i32, i32) {
    %c0_i32 = arith.constant 0 : i32
    %c0_i32_0 = arith.constant 0 : i32
    %c0_i32_1 = arith.constant 0 : i32
    return %c0_i32, %c0_i32_0 : i32, i32
  }
  func.func @transform_5(%arg0: i32) -> (i32, i32, i32) {
    %c0_i32 = arith.constant 0 : i32
    %c0_i32_0 = arith.constant 0 : i32
    %c0_i32_1 = arith.constant 0 : i32
    return %arg0, %c0_i32, %c0_i32_0 : i32, i32, i32
  }
}

</mosaic_0001>

<llo_original>
// kernel: decision_transformer.7
$region0: #{decision_transformer.7}
  #allocation0 [shape = 'u32[]', space=smem, size = 0x4, offset = 0x4, fixed_abs, tag = 'smem constant byte address 0x4 - core index']
  #allocation1 [shape = 'u32[144,128]{1,0:T(1,128)}', space=vmem, size = 0x12000, scoped, tag = 'internal scratch']
  %s0 = inlined_call_operand.vmem [shape: f32[2,2,24,32], index: 0, kind: input, shape index: {}]
  %s1 = inlined_call_operand.vmem [shape: f32[2,2,24,32], index: 1, kind: input, shape index: {}]
  %s2 = inlined_call_operand.vmem [shape: f32[2,2,24,32], index: 2, kind: input, shape index: {}]
  %s3 = inlined_call_operand.vmem [shape: f32[2,2,24,32], index: 3, kind: output, shape index: {}]
  %s4 = sld [smem:[#allocation0]]
  $region45: #{decision_transformer.7} parent=0
    _
  %s6 = ssub.s32 1, %s4
  %s7 = scalar_select 0, %s6, %s4
  loop: start=0, step=1, limit=4
  $region2: #{decision_transformer.7} parent=0 // loop_pre_header
    _
  $region3: #{decision_transformer.7} parent=0 // loop_header
    %s9 = sphi 0, %s13
    %p10 = scmp.ge.s32.totalorder %s9, 4
    %s19 = sphi 0, %s21
    %s22 = sphi 0, %s19
    %s23 = sphi 0, %s22
    %s39 = sphi 0, %s23
    %s45 = sphi 0, %s47
    %s48 = sphi 0, %s45
    %s49 = sphi 0, %s48
    %s65 = sphi 0, %s49
    %s71 = sphi 0, %s73
    %s74 = sphi 0, %s71
    %s75 = sphi 0, %s74
    %s91 = sphi 0, %s75
    %s97 = sphi 0, %s99
    %s100 = sphi 0, %s97
    %s101 = sphi 0, %s100
    %s117 = sphi 0, %s101
  $region4: #{decision_transformer.7} parent=0 // loop_header_branch
    %12 = sbr.rel (%p10) target = $region8
  $region5: #{decision_transformer.7} parent=0 // loop_body
    %s14 = ssub.s32 %s9, 1
    %s15 = ssub.s32 %s9, 2
    %s16 = sadd.s32 %s9, 1
    %s17 = ssub.s32 %s9, %s16
    %p18 = scmp.eq.s32.totalorder %s17, 0
    %s20 = sadd.s32 %s19, 1
    %s21 = scalar_select %p18, %s19, %s20
    %p24 = pneg %p18
    %p25 = scmp.eq.s32.totalorder %s9, 1
    %p26 = por %p24, %p25
    %p27 = scmp.ne.s32.totalorder %s19, %s22
    %p28 = scmp.eq.s32.totalorder %s9, 0
    %p29 = por %p27, %p28
    %p30 = scmp.ne.s32.totalorder %s19, %s22
    %p31 = scmp.eq.s32.totalorder %s14, 1
    %p32 = por %p30, %p31
    %p33 = scmp.ne.s32.totalorder %s22, %s23
    %p34 = scmp.eq.s32.totalorder %s14, 0
    %p35 = por %p33, %p34
    %p36 = scmp.ne.s32.totalorder %s22, %s23
    %p37 = scmp.eq.s32.totalorder %s15, 1
    %p38 = por %p36, %p37
    %p40 = scmp.ne.s32.totalorder %s23, %s39
    %p41 = scmp.eq.s32.totalorder %s15, 0
    %p42 = por %p40, %p41
    %s43 = ssub.s32 %s9, %s16
    %p44 = scmp.eq.s32.totalorder %s43, 0
    %s46 = sadd.s32 %s45, 1
    %s47 = scalar_select %p44, %s45, %s46
    %p50 = pneg %p44
    %p51 = scmp.eq.s32.totalorder %s9, 1
    %p52 = por %p50, %p51
    %p53 = scmp.ne.s32.totalorder %s45, %s48
    %p54 = scmp.eq.s32.totalorder %s9, 0
    %p55 = por %p53, %p54
    %p56 = scmp.ne.s32.totalorder %s45, %s48
    %p57 = scmp.eq.s32.totalorder %s14, 1
    %p58 = por %p56, %p57
    %p59 = scmp.ne.s32.totalorder %s48, %s49
    %p60 = scmp.eq.s32.totalorder %s14, 0
    %p61 = por %p59, %p60
    %p62 = scmp.ne.s32.totalorder %s48, %s49
    %p63 = scmp.eq.s32.totalorder %s15, 1
    %p64 = por %p62, %p63
    %p66 = scmp.ne.s32.totalorder %s49, %s65
    %p67 = scmp.eq.s32.totalorder %s15, 0
    %p68 = por %p66, %p67
    %s69 = ssub.s32 %s9, %s16
    %p70 = scmp.eq.s32.totalorder %s69, 0
    %s72 = sadd.s32 %s71, 1
    %s73 = scalar_select %p70, %s71, %s72
    %p76 = pneg %p70
    %p77 = scmp.eq.s32.totalorder %s9, 1
    %p78 = por %p76, %p77
    %p79 = scmp.ne.s32.totalorder %s71, %s74
    %p80 = scmp.eq.s32.totalorder %s9, 0
    %p81 = por %p79, %p80
    %p82 = scmp.ne.s32.totalorder %s71, %s74
    %p83 = scmp.eq.s32.totalorder %s14, 1
    %p84 = por %p82, %p83
    %p85 = scmp.ne.s32.totalorder %s74, %s75
    %p86 = scmp.eq.s32.totalorder %s14, 0
    %p87 = por %p85, %p86
    %p88 = scmp.ne.s32.totalorder %s74, %s75
    %p89 = scmp.eq.s32.totalorder %s15, 1
    %p90 = por %p88, %p89
    %p92 = scmp.ne.s32.totalorder %s75, %s91
    %p93 = scmp.eq.s32.totalorder %s15, 0
    %p94 = por %p92, %p93
    %s95 = ssub.s32 %s9, %s16
    %p96 = scmp.eq.s32.totalorder %s95, 0
    %s98 = sadd.s32 %s97, 1
    %s99 = scalar_select %p96, %s97, %s98
    %p102 = pneg %p96
    %p103 = scmp.eq.s32.totalorder %s9, 1
    %p104 = por %p102, %p103
    %p105 = scmp.ne.s32.totalorder %s97, %s100
    %p106 = scmp.eq.s32.totalorder %s9, 0
    %p107 = por %p105, %p106
    %p108 = scmp.ne.s32.totalorder %s97, %s100
    %p109 = scmp.eq.s32.totalorder %s14, 1
    %p110 = por %p108, %p109
    %p111 = scmp.ne.s32.totalorder %s100, %s101
    %p112 = scmp.eq.s32.totalorder %s14, 0
    %p113 = por %p111, %p112
    %p114 = scmp.ne.s32.totalorder %s100, %s101
    %p115 = scmp.eq.s32.totalorder %s15, 1
    %p116 = por %p114, %p115
    %p118 = scmp.ne.s32.totalorder %s101, %s117
    %p119 = scmp.eq.s32.totalorder %s15, 0
    %p120 = por %p118, %p119
    %p121 = scmp.le.s32.totalorder 1, %s9
    %p122 = scmp.lt.s32.totalorder %s9, 3
    %p123 = pnand %p121, %p122
    %p124 = pneg %p123
    // Predicated region
    $region9: #{decision_transformer.7} parent=5 // pred_check
      _
    $region10: #{decision_transformer.7} parent=5 // pred_check_branch
      %126 = sbr.rel (%p123) target = $region12
    $region11: #{decision_transformer.7} parent=5 // pred_region
      %s127 = ssub.s32 %s9, 1
    $region12: #{decision_transformer.7} parent=5 // pred_fallthru
      _
    %p128 = scmp.lt.s32.totalorder %s9, 2
    // Predicated region
    $region13: #{decision_transformer.7} parent=5 // pred_check
      %p129 = pneg %p128
    $region14: #{decision_transformer.7} parent=5 // pred_check_branch
      %131 = sbr.rel (%p129) target = $region16
    $region15: #{decision_transformer.7} parent=5 // pred_region
      // Predicated region
      $region17: #{decision_transformer.7} parent=15 // pred_check
        %p132 = pneg %p29
      $region18: #{decision_transformer.7} parent=15 // pred_check_branch
        %134 = sbr.rel (%p132) target = $region20
      $region19: #{decision_transformer.7} parent=15 // pred_region
        %p135 = scmp.lt.s32.totalorder %s9, 1
        %s136 = scalar_select %p135, %s9, 1
        %s137 = smul.addr %s136, 6
        %s138 = smul.addr %s137, 8
        %s139 = scalar_lea.vmem %s0, %s138
      $region20: #{decision_transformer.7} parent=15 // pred_fallthru
        _
      // Predicated region
      $region21: #{decision_transformer.7} parent=15 // pred_check
        %p140 = pneg %p55
      $region22: #{decision_transformer.7} parent=15 // pred_check_branch
        %142 = sbr.rel (%p140) target = $region24
      $region23: #{decision_transformer.7} parent=15 // pred_region
        %p143 = scmp.lt.s32.totalorder %s9, 1
        %s144 = scalar_select %p143, %s9, 1
        %s145 = smul.addr %s144, 6
        %s146 = smul.addr %s145, 8
        %s147 = scalar_lea.vmem %s1, %s146
      $region24: #{decision_transformer.7} parent=15 // pred_fallthru
        _
      // Predicated region
      $region25: #{decision_transformer.7} parent=15 // pred_check
        %p148 = pneg %p81
      $region26: #{decision_transformer.7} parent=15 // pred_check_branch
        %150 = sbr.rel (%p148) target = $region28
      $region27: #{decision_transformer.7} parent=15 // pred_region
        %p151 = scmp.lt.s32.totalorder %s9, 1
        %s152 = scalar_select %p151, %s9, 1
        %s153 = smul.addr %s152, 6
        %s154 = smul.addr %s153, 8
        %s155 = scalar_lea.vmem %s2, %s154
      $region28: #{decision_transformer.7} parent=15 // pred_fallthru
        _
    $region16: #{decision_transformer.7} parent=5 // pred_fallthru
      _
    %p156 = scmp.le.s32.totalorder 1, %s9
    %p157 = scmp.lt.s32.totalorder %s9, 3
    %p158 = pnand %p156, %p157
    %p159 = pneg %p158
    // Predicated region
    $region29: #{decision_transformer.7} parent=5 // pred_check
      _
    $region30: #{decision_transformer.7} parent=5 // pred_check_branch
      %161 = sbr.rel (%p158) target = $region32
    $region31: #{decision_transformer.7} parent=5 // pred_region
      %s162 = ssub.s32 %s9, 1
      %p163 = scmp.lt.s32.totalorder %s14, 1
      %s164 = scalar_select %p163, %s14, 1
      %s165 = smul.addr %s164, 6
      %s166 = smul.addr %s165, 8
      %s167 = scalar_lea.vmem %s0, %s166
      %p168 = pneg %p35
      %p169 = pneg %p32
      %p170 = scmp.lt.s32.totalorder %s14, 1
      %s171 = scalar_select %p170, %s14, 1
      %s172 = smul.addr %s171, 6
      %s173 = smul.addr %s172, 8
      %s174 = scalar_lea.vmem %s1, %s173
      %p175 = pneg %p61
      %p176 = pneg %p58
      %p177 = scmp.lt.s32.totalorder %s14, 1
      %s178 = scalar_select %p177, %s14, 1
      %s179 = smul.addr %s178, 6
      %s180 = smul.addr %s179, 8
      %s181 = scalar_lea.vmem %s2, %s180
      %p182 = pneg %p87
      %p183 = pneg %p84
      %p184 = pneg %p113
      %p185 = pneg %p110
      %p186 = scmp.lt.s32.totalorder %s14, 1
      %s187 = scalar_select %p186, %s14, 1
      %s188 = smul.addr %s187, 6
      %s189 = smul.addr %s188, 8
      %s190 = scalar_lea.vmem %s3, %s189
      %p191 = scmp.lt.s32.totalorder %s14, 1
      %s192 = scalar_select %p191, %s14, 1
      %s193 = smul.addr %s192, 6
      %s194 = smul.addr %s193, 8
      %s195 = scalar_lea.vmem %s0, %s194
      %p196 = scmp.lt.s32.totalorder %s14, 1
      %s197 = scalar_select %p196, %s14, 1
      %s198 = smul.addr %s197, 6
      %s199 = smul.addr %s198, 8
      %s200 = scalar_lea.vmem %s1, %s199
      %p201 = scmp.lt.s32.totalorder %s14, 1
      %s202 = scalar_select %p201, %s14, 1
      %s203 = smul.addr %s202, 6
      %s204 = smul.addr %s203, 8
      %s205 = scalar_lea.vmem %s2, %s204
      %p206 = scmp.lt.s32.totalorder %s14, 1
      %s207 = scalar_select %p206, %s14, 1
      %s208 = smul.addr %s207, 6
      %s209 = smul.addr %s208, 8
      %s210 = scalar_lea.vmem %s3, %s209
      %v212 = vld [vmem:[%s195] sm:$0xff]
      %v213 = vld [vmem:[%s195 + $0x8] sm:$0xff]
      %v214 = vld [vmem:[%s195 + $0x10] sm:$0xff]
      %v215 = vld [vmem:[%s195 + $0x18] sm:$0xff]
      %v216 = vld [vmem:[%s195 + $0x20] sm:$0xff]
      %v217 = vld [vmem:[%s195 + $0x28] sm:$0xff]
      %v218 = vpack.c.bf16 %v213, %v212
      %v219 = vpack.c.bf16 %v214, %v214
      %v220 = vpack.c.bf16 %v216, %v215
      %v221 = vpack.c.bf16 %v217, %v217
      %v222 = vld [vmem:[%s200] sm:$0xff]
      %v223 = vld [vmem:[%s200 + $0x8] sm:$0xff]
      %v224 = vld [vmem:[%s200 + $0x10] sm:$0xff]
      %v225 = vld [vmem:[%s200 + $0x18] sm:$0xff]
      %v226 = vld [vmem:[%s200 + $0x20] sm:$0xff]
      %v227 = vld [vmem:[%s200 + $0x28] sm:$0xff]
      %v228 = vpack.c.bf16 %v223, %v222
      %v229 = vpack.c.bf16 %v224, %v224
      %v230 = vpack.c.bf16 %v226, %v225
      %v231 = vpack.c.bf16 %v227, %v227
      %v232 = vld [vmem:[%s205] sm:$0xff]
      %v233 = vld [vmem:[%s205 + $0x8] sm:$0xff]
      %v234 = vld [vmem:[%s205 + $0x10] sm:$0xff]
      %v235 = vld [vmem:[%s205 + $0x18] sm:$0xff]
      %v236 = vld [vmem:[%s205 + $0x20] sm:$0xff]
      %v237 = vld [vmem:[%s205 + $0x28] sm:$0xff]
      %v238 = vpack.c.bf16 %v233, %v232
      %v239 = vpack.c.bf16 %v234, %v234
      %v240 = vpack.c.bf16 %v236, %v235
      %v241 = vpack.c.bf16 %v237, %v237
      %vm242 = vcmask 261120
      %v244 = vsel %vm242, %v218, 0
      %v247 = vsel %vm242, %v219, 0
      %v250 = vsel %vm242, %v228, 0
      %v253 = vsel %vm242, %v229, 0
      %255 = vmatprep.subr.bf16.mxu0 0
      %256 = vmatpush1.bf16.xpose.msra.mxu0 0
      %257 = vmatprep.subr.bf16.mxu0 0
      %258 = vmatpush1.bf16.xpose.msra.mxu0 0
      %259 = vmatprep.subr.bf16.mxu0 0
      %260 = vmatpush1.bf16.xpose.msra.mxu0 0
      %261 = vmatprep.subr.bf16.mxu0 0
      %262 = vmatpush1.bf16.xpose.msra.mxu0 0
      %263 = vmatprep.subr.bf16.mxu0 0
      %264 = vmatpush1.bf16.xpose.msra.mxu0 0
      %265 = vmatprep.subr.bf16.mxu0 0
      %266 = vmatpush1.bf16.xpose.msra.mxu0 0
      %267 = vmatprep.subr.bf16.mxu0 0
      %268 = vmatpush1.bf16.xpose.msra.mxu0 %v253
      %269 = vmatprep.subr.bf16.mxu0 0
      %270 = vmatpush1.bf16.xpose.msra.mxu0 %v250
      %271 = vmatprep.subr.bf16.mxu0 0
      %272 = vmatpush2.bf16.xpose.msra.mxu0 0
      %273 = vmatprep.subr.bf16.mxu0 0
      %274 = vmatpush2.bf16.xpose.msra.mxu0 0
      %275 = vmatprep.subr.bf16.mxu0 0
      %276 = vmatpush2.bf16.xpose.msra.mxu0 0
      %277 = vmatprep.subr.bf16.mxu0 0
      %278 = vmatpush2.bf16.xpose.msra.mxu0 0
      %279 = vmatprep.subr.bf16.mxu0 0
      %280 = vmatpush2.bf16.xpose.msra.mxu0 0
      %281 = vmatprep.subr.bf16.mxu0 0
      %282 = vmatpush2.bf16.xpose.msra.mxu0 0
      %283 = vmatprep.subr.bf16.mxu0 0
      %284 = vmatpush2.bf16.xpose.msra.mxu0 0
      %285 = vmatprep.subr.bf16.mxu0 0
      %286 = vmatpush2.bf16.xpose.msra.mxu0 0
      %287 = vmatprep.mubr.bf16.mxu0 0
      %288 = vmatmul.mubr.bf16.gmra.mxu0 %v244
      %v289 = vpop.f32.mrf.mxu0
      %v290 = vadd.f32 0.0, %v289
      %v291 = vpop.f32.mrf.mxu0
      %v292 = vpop.f32.mrf.mxu0
      %v293 = vadd.f32 0.0, %v292
      %v294 = vpop.f32.mrf.mxu0
      %295 = vmatprep.mubr.bf16.mxu0 0
      %296 = vmatmul.mubr.bf16.gmra.mxu0 %v247
      %v297 = vpop.f32.mrf.mxu0
      %v298 = vadd.f32 0.0, %v297
      %v299 = vpop.f32.mrf.mxu0
      %v300 = vpop.f32.mrf.mxu0
      %v301 = vpop.f32.mrf.mxu0
      %302 = vdwg.mxu0
      %v304 = vsel %vm242, %v220, 0
      %v307 = vsel %vm242, %v221, 0
      %v310 = vsel %vm242, %v230, 0
      %v313 = vsel %vm242, %v231, 0
      %315 = vmatprep.subr.bf16.mxu0 0
      %316 = vmatpush1.bf16.xpose.msra.mxu0 0
      %317 = vmatprep.subr.bf16.mxu0 0
      %318 = vmatpush1.bf16.xpose.msra.mxu0 0
      %319 = vmatprep.subr.bf16.mxu0 0
      %320 = vmatpush1.bf16.xpose.msra.mxu0 0
      %321 = vmatprep.subr.bf16.mxu0 0
      %322 = vmatpush1.bf16.xpose.msra.mxu0 0
      %323 = vmatprep.subr.bf16.mxu0 0
      %324 = vmatpush1.bf16.xpose.msra.mxu0 0
      %325 = vmatprep.subr.bf16.mxu0 0
      %326 = vmatpush1.bf16.xpose.msra.mxu0 0
      %327 = vmatprep.subr.bf16.mxu0 0
      %328 = vmatpush1.bf16.xpose.msra.mxu0 %v313
      %329 = vmatprep.subr.bf16.mxu0 0
      %330 = vmatpush1.bf16.xpose.msra.mxu0 %v310
      %331 = vmatprep.subr.bf16.mxu0 0
      %332 = vmatpush2.bf16.xpose.msra.mxu0 0
      %333 = vmatprep.subr.bf16.mxu0 0
      %334 = vmatpush2.bf16.xpose.msra.mxu0 0
      %335 = vmatprep.subr.bf16.mxu0 0
      %336 = vmatpush2.bf16.xpose.msra.mxu0 0
      %337 = vmatprep.subr.bf16.mxu0 0
      %338 = vmatpush2.bf16.xpose.msra.mxu0 0
      %339 = vmatprep.subr.bf16.mxu0 0
      %340 = vmatpush2.bf16.xpose.msra.mxu0 0
      %341 = vmatprep.subr.bf16.mxu0 0
      %342 = vmatpush2.bf16.xpose.msra.mxu0 0
      %343 = vmatprep.subr.bf16.mxu0 0
      %344 = vmatpush2.bf16.xpose.msra.mxu0 0
      %345 = vmatprep.subr.bf16.mxu0 0
      %346 = vmatpush2.bf16.xpose.msra.mxu0 0
      %347 = vmatprep.mubr.bf16.mxu0 0
      %348 = vmatmul.mubr.bf16.gmra.mxu0 %v304
      %v349 = vpop.f32.mrf.mxu0
      %v350 = vadd.f32 0.0, %v349
      %v351 = vpop.f32.mrf.mxu0
      %v352 = vpop.f32.mrf.mxu0
      %v353 = vadd.f32 0.0, %v352
      %v354 = vpop.f32.mrf.mxu0
      %355 = vmatprep.mubr.bf16.mxu0 0
      %356 = vmatmul.mubr.bf16.gmra.mxu0 %v307
      %v357 = vpop.f32.mrf.mxu0
      %v358 = vadd.f32 0.0, %v357
      %v359 = vpop.f32.mrf.mxu0
      %v360 = vpop.f32.mrf.mxu0
      %v361 = vpop.f32.mrf.mxu0
      %362 = vdwg.mxu0
      %v363 = vmul.f32 %v290, 0.17677669
      %v364 = vmul.f32 %v293, 0.17677669
      %v365 = vmul.f32 %v298, 0.17677669
      %v366 = vmul.f32 %v350, 0.17677669
      %v367 = vmul.f32 %v353, 0.17677669
      %v368 = vmul.f32 %v358, 0.17677669
      %v369 = vlaneseq
      %v370 = vshrl.u32 %v369, 7
      %v371 = vadd.s32 %v370, 8
      %v372 = vadd.s32 %v370, 16
      %v373 = vlaneseq
      %v374 = vand.u32 %v373, 127
      %vm375 = vcmp.le.s32.totalorder %v374, %v370
      %vm376 = vcmp.le.s32.totalorder %v374, %v371
      %vm377 = vcmp.le.s32.totalorder %v374, %v372
      %v378 = vsel %vm375, %v363, -1e+30
      %v379 = vsel %vm376, %v364, -1e+30
      %v380 = vsel %vm377, %v365, -1e+30
      %v381 = vsel %vm375, %v366, -1e+30
      %v382 = vsel %vm376, %v367, -1e+30
      %v383 = vsel %vm377, %v368, -1e+30
      %vm384 = vcmask 195584
      %v385 = vsel %vm384, %v378, -inf
      %386 = vmax.xlane.f32.xlu0 %v385
      %v387 = vpop.xlane.xlu0 %386
      %v388 = vsel %vm384, %v379, -inf
      %389 = vmax.xlane.f32.xlu0 %v388
      %v390 = vpop.xlane.xlu0 %389
      %v391 = vsel %vm384, %v380, -inf
      %392 = vmax.xlane.f32.xlu0 %v391
      %v393 = vpop.xlane.xlu0 %392
      %v394 = vsel %vm384, %v381, -inf
      %395 = vmax.xlane.f32.xlu0 %v394
      %v396 = vpop.xlane.xlu0 %395
      %v397 = vsel %vm384, %v382, -inf
      %398 = vmax.xlane.f32.xlu0 %v397
      %v399 = vpop.xlane.xlu0 %398
      %v400 = vsel %vm384, %v383, -inf
      %401 = vmax.xlane.f32.xlu0 %v400
      %v402 = vpop.xlane.xlu0 %401
      %v403 = vsub.f32 %v378, %v387
      %v404 = vsub.f32 %v379, %v390
      %v405 = vsub.f32 %v380, %v393
      %v406 = vsub.f32 %v381, %v396
      %v407 = vsub.f32 %v382, %v399
      %v408 = vsub.f32 %v383, %v402
      %v409 = vmul.f32 %v403, 1.442695
      %v410 = vpow.pop %v409
      %v411 = vmul.f32 %v404, 1.442695
      %v412 = vpow.pop %v411
      %v413 = vmul.f32 %v405, 1.442695
      %v414 = vpow.pop %v413
      %v415 = vmul.f32 %v406, 1.442695
      %v416 = vpow.pop %v415
      %v417 = vmul.f32 %v407, 1.442695
      %v418 = vpow.pop %v417
      %v419 = vmul.f32 %v408, 1.442695
      %v420 = vpow.pop %v419
      %v421 = vsel %vm384, %v410, 0.0
      %422 = vadd.xlane.f32.xlu0 %v421
      %v423 = vpop.xlane.xlu0 %422
      %v424 = vsel %vm384, %v412, 0.0
      %425 = vadd.xlane.f32.xlu0 %v424
      %v426 = vpop.xlane.xlu0 %425
      %v427 = vsel %vm384, %v414, 0.0
      %428 = vadd.xlane.f32.xlu0 %v427
      %v429 = vpop.xlane.xlu0 %428
      %v430 = vsel %vm384, %v416, 0.0
      %431 = vadd.xlane.f32.xlu0 %v430
      %v432 = vpop.xlane.xlu0 %431
      %v433 = vsel %vm384, %v418, 0.0
      %434 = vadd.xlane.f32.xlu0 %v433
      %v435 = vpop.xlane.xlu0 %434
      %v436 = vsel %vm384, %v420, 0.0
      %437 = vadd.xlane.f32.xlu0 %v436
      %v438 = vpop.xlane.xlu0 %437
      %v439 = vrcp.pop %v423
      %v440 = vmul.f32 %v410, %v439
      %v441 = vrcp.pop %v426
      %v442 = vmul.f32 %v412, %v441
      %v443 = vrcp.pop %v429
      %v444 = vmul.f32 %v414, %v443
      %v445 = vrcp.pop %v432
      %v446 = vmul.f32 %v416, %v445
      %v447 = vrcp.pop %v435
      %v448 = vmul.f32 %v418, %v447
      %v449 = vrcp.pop %v438
      %v450 = vmul.f32 %v420, %v449
      %v451 = vpack.c.bf16 %v442, %v440
      %v452 = vpack.c.bf16 %v444, %v444
      %v453 = vpack.c.bf16 %v448, %v446
      %v454 = vpack.c.bf16 %v450, %v450
      %v456 = vsel %vm384, %v451, 0
      %v459 = vsel %vm384, %v452, 0
      %vm461 = vcmask 1043456
      %v463 = vsel %vm461, %v239, 0
      %465 = vmatprep.subr.bf16.mxu0 0
      %466 = vmatpush1.bf16.msra.mxu0 0
      %467 = vmatprep.subr.bf16.mxu0 0
      %468 = vmatpush1.bf16.msra.mxu0 0
      %469 = vmatprep.subr.bf16.mxu0 0
      %470 = vmatpush1.bf16.msra.mxu0 0
      %471 = vmatprep.subr.bf16.mxu0 0
      %472 = vmatpush1.bf16.msra.mxu0 0
      %473 = vmatprep.subr.bf16.mxu0 0
      %474 = vmatpush1.bf16.msra.mxu0 0
      %475 = vmatprep.subr.bf16.mxu0 0
      %476 = vmatpush1.bf16.msra.mxu0 0
      %477 = vmatprep.subr.bf16.mxu0 0
      %478 = vmatpush1.bf16.msra.mxu0 %v463
      %479 = vmatprep.subr.bf16.mxu0 0
      %480 = vmatpush1.bf16.msra.mxu0 %v238
      %481 = vmatprep.subr.bf16.mxu0 0
      %482 = vmatpush2.bf16.msra.mxu0 0
      %483 = vmatprep.subr.bf16.mxu0 0
      %484 = vmatpush2.bf16.msra.mxu0 0
      %485 = vmatprep.subr.bf16.mxu0 0
      %486 = vmatpush2.bf16.msra.mxu0 0
      %487 = vmatprep.subr.bf16.mxu0 0
      %488 = vmatpush2.bf16.msra.mxu0 0
      %489 = vmatprep.subr.bf16.mxu0 0
      %490 = vmatpush2.bf16.msra.mxu0 0
      %491 = vmatprep.subr.bf16.mxu0 0
      %492 = vmatpush2.bf16.msra.mxu0 0
      %493 = vmatprep.subr.bf16.mxu0 0
      %494 = vmatpush2.bf16.msra.mxu0 0
      %495 = vmatprep.subr.bf16.mxu0 0
      %496 = vmatpush2.bf16.msra.mxu0 0
      %497 = vmatprep.mubr.bf16.mxu0 0
      %498 = vmatmul.mubr.bf16.gmra.mxu0 %v456
      %v499 = vpop.f32.mrf.mxu0
      %v500 = vadd.f32 0.0, %v499
      %v501 = vpop.f32.mrf.mxu0
      %v502 = vpop.f32.mrf.mxu0
      %v503 = vadd.f32 0.0, %v502
      %v504 = vpop.f32.mrf.mxu0
      %505 = vmatprep.mubr.bf16.mxu0 0
      %506 = vmatmul.mubr.bf16.gmra.mxu0 %v459
      %v507 = vpop.f32.mrf.mxu0
      %v508 = vadd.f32 0.0, %v507
      %v509 = vpop.f32.mrf.mxu0
      %v510 = vpop.f32.mrf.mxu0
      %v511 = vpop.f32.mrf.mxu0
      %512 = vdwg.mxu0
      %v514 = vsel %vm384, %v453, 0
      %v517 = vsel %vm384, %v454, 0
      %v520 = vsel %vm461, %v241, 0
      %522 = vmatprep.subr.bf16.mxu0 0
      %523 = vmatpush1.bf16.msra.mxu0 0
      %524 = vmatprep.subr.bf16.mxu0 0
      %525 = vmatpush1.bf16.msra.mxu0 0
      %526 = vmatprep.subr.bf16.mxu0 0
      %527 = vmatpush1.bf16.msra.mxu0 0
      %528 = vmatprep.subr.bf16.mxu0 0
      %529 = vmatpush1.bf16.msra.mxu0 0
      %530 = vmatprep.subr.bf16.mxu0 0
      %531 = vmatpush1.bf16.msra.mxu0 0
      %532 = vmatprep.subr.bf16.mxu0 0
      %533 = vmatpush1.bf16.msra.mxu0 0
      %534 = vmatprep.subr.bf16.mxu0 0
      %535 = vmatpush1.bf16.msra.mxu0 %v520
      %536 = vmatprep.subr.bf16.mxu0 0
      %537 = vmatpush1.bf16.msra.mxu0 %v240
      %538 = vmatprep.subr.bf16.mxu0 0
      %539 = vmatpush2.bf16.msra.mxu0 0
      %540 = vmatprep.subr.bf16.mxu0 0
      %541 = vmatpush2.bf16.msra.mxu0 0
      %542 = vmatprep.subr.bf16.mxu0 0
      %543 = vmatpush2.bf16.msra.mxu0 0
      %544 = vmatprep.subr.bf16.mxu0 0
      %545 = vmatpush2.bf16.msra.mxu0 0
      %546 = vmatprep.subr.bf16.mxu0 0
      %547 = vmatpush2.bf16.msra.mxu0 0
      %548 = vmatprep.subr.bf16.mxu0 0
      %549 = vmatpush2.bf16.msra.mxu0 0
      %550 = vmatprep.subr.bf16.mxu0 0
      %551 = vmatpush2.bf16.msra.mxu0 0
      %552 = vmatprep.subr.bf16.mxu0 0
      %553 = vmatpush2.bf16.msra.mxu0 0
      %554 = vmatprep.mubr.bf16.mxu0 0
      %555 = vmatmul.mubr.bf16.gmra.mxu0 %v514
      %v556 = vpop.f32.mrf.mxu0
      %v557 = vadd.f32 0.0, %v556
      %v558 = vpop.f32.mrf.mxu0
      %v559 = vpop.f32.mrf.mxu0
      %v560 = vadd.f32 0.0, %v559
      %v561 = vpop.f32.mrf.mxu0
      %562 = vmatprep.mubr.bf16.mxu0 0
      %563 = vmatmul.mubr.bf16.gmra.mxu0 %v517
      %v564 = vpop.f32.mrf.mxu0
      %v565 = vadd.f32 0.0, %v564
      %v566 = vpop.f32.mrf.mxu0
      %v567 = vpop.f32.mrf.mxu0
      %v568 = vpop.f32.mrf.mxu0
      %569 = vdwg.mxu0
      %570 = vst.msk [vmem:[%s210] sm:$0xff] %vm242, %v500
      %571 = vst.msk [vmem:[%s210 + $0x8] sm:$0xff] %vm242, %v503
      %572 = vst.msk [vmem:[%s210 + $0x10] sm:$0xff] %vm242, %v508
      %573 = vst.msk [vmem:[%s210 + $0x18] sm:$0xff] %vm242, %v557
      %574 = vst.msk [vmem:[%s210 + $0x20] sm:$0xff] %vm242, %v560
      %575 = vst.msk [vmem:[%s210 + $0x28] sm:$0xff] %vm242, %v565
      %p576 = scmp.lt.s32.totalorder %s14, 1
      %s577 = scalar_select %p576, %s14, 1
      %s578 = smul.addr %s577, 6
      %s579 = smul.addr %s578, 8
      %s580 = scalar_lea.vmem %s3, %s579
      // Predicated region
      $region33: #{decision_transformer.7} parent=31 // pred_check
        %p581 = pneg %p110
      $region34: #{decision_transformer.7} parent=31 // pred_check_branch
        %583 = sbr.rel (%p581) target = $region36
      $region35: #{decision_transformer.7} parent=31 // pred_region
        _
      $region36: #{decision_transformer.7} parent=31 // pred_fallthru
        _
    $region32: #{decision_transformer.7} parent=5 // pred_fallthru
      _
    %p584 = scmp.le.s32.totalorder 2, %s9
    // Predicated region
    $region37: #{decision_transformer.7} parent=5 // pred_check
      %p585 = pneg %p584
    $region38: #{decision_transformer.7} parent=5 // pred_check_branch
      %587 = sbr.rel (%p585) target = $region40
    $region39: #{decision_transformer.7} parent=5 // pred_region
      %s588 = ssub.s32 %s9, 2
      // Predicated region
      $region41: #{decision_transformer.7} parent=39 // pred_check
        %p589 = pneg %p116
      $region42: #{decision_transformer.7} parent=39 // pred_check_branch
        %591 = sbr.rel (%p589) target = $region44
      $region43: #{decision_transformer.7} parent=39 // pred_region
        %p592 = scmp.lt.s32.totalorder %s15, 1
        %s593 = scalar_select %p592, %s15, 1
        %s594 = smul.addr %s593, 6
        %s595 = smul.addr %s594, 8
        %s596 = scalar_lea.vmem %s3, %s595
      $region44: #{decision_transformer.7} parent=39 // pred_fallthru
        _
    $region40: #{decision_transformer.7} parent=5 // pred_fallthru
      _
  $region6: #{decision_transformer.7} parent=0 // loop_footer
    %s13 = sadd.s32 1, %s9
  $region7: #{decision_transformer.7} parent=0 // loop_footer_branch
    %8 = sbr.rel target = $region3
  $region8: #{decision_transformer.7} parent=0 // loop_exit
    _

// kernel: decision_transformer.8
$region0: #{decision_transformer.8}
  #allocation0 [shape = 'u32[]', space=smem, size = 0x4, offset = 0x4, fixed_abs, tag = 'smem constant byte address 0x4 - core index']
  #allocation1 [shape = 'u32[144,128]{1,0:T(1,128)}', space=vmem, size = 0x12000, scoped, tag = 'internal scratch']
  %s0 = inlined_call_operand.vmem [shape: f32[2,24,64], index: 0, kind: input, shape index: {}]
  %s1 = inlined_call_operand.vmem [shape: f32[2,24,32], index: 1, kind: input, shape index: {}]
  %s2 = inlined_call_operand.vmem [shape: bf16[64,32], index: 2, kind: input, shape index: {}]
  %s3 = inlined_call_operand.vmem [shape: f32[1,32], index: 3, kind: input, shape index: {}]
  %s4 = inlined_call_operand.vmem [shape: f32[1,32], index: 4, kind: input, shape index: {}]
  %s5 = inlined_call_operand.vmem [shape: f32[1,32], index: 5, kind: input, shape index: {}]
  %s6 = inlined_call_operand.vmem [shape: bf16[32,128], index: 6, kind: input, shape index: {}]
  %s7 = inlined_call_operand.vmem [shape: f32[1,128], index: 7, kind: input, shape index: {}]
  %s8 = inlined_call_operand.vmem [shape: bf16[128,32], index: 8, kind: input, shape index: {}]
  %s9 = inlined_call_operand.vmem [shape: f32[1,32], index: 9, kind: input, shape index: {}]
  %s10 = inlined_call_operand.vmem [shape: f32[1,32], index: 10, kind: input, shape index: {}]
  %s11 = inlined_call_operand.vmem [shape: f32[1,32], index: 11, kind: input, shape index: {}]
  %s12 = inlined_call_operand.vmem [shape: bf16[32,64], index: 12, kind: input, shape index: {}]
  %s13 = inlined_call_operand.vmem [shape: f32[1,64], index: 13, kind: input, shape index: {}]
  %s14 = inlined_call_operand.vmem [shape: bf16[32,64], index: 14, kind: input, shape index: {}]
  %s15 = inlined_call_operand.vmem [shape: f32[1,64], index: 15, kind: input, shape index: {}]
  %s16 = inlined_call_operand.vmem [shape: bf16[32,64], index: 16, kind: input, shape index: {}]
  %s17 = inlined_call_operand.vmem [shape: f32[1,64], index: 17, kind: input, shape index: {}]
  %s18 = inlined_call_operand.vmem [shape: f32[2,24,32], index: 18, kind: output, shape index: {0}]
  %s19 = inlined_call_operand.vmem [shape: f32[2,24,64], index: 19, kind: output, shape index: {1}]
  %s20 = inlined_call_operand.vmem [shape: f32[2,24,64], index: 20, kind: output, shape index: {2}]
  %s21 = inlined_call_operand.vmem [shape: f32[2,24,64], index: 21, kind: output, shape index: {3}]
  %22 = xla_tuple %s18, %s19, %s20, %s21
  %s23 = sld [smem:[#allocation0]]
  $region129: #{decision_transformer.8} parent=0
    _
  %s25 = ssub.s32 1, %s23
  %s26 = scalar_select 0, %s25, %s23
  loop: start=0, step=1, limit=4
  $region2: #{decision_transformer.8} parent=0 // loop_pre_header
    _
  $region3: #{decision_transformer.8} parent=0 // loop_header
    %s28 = sphi 0, %s32
    %p29 = scmp.ge.s32.totalorder %s28, 4
    %s38 = sphi 0, %s40
    %s41 = sphi 0, %s38
    %s42 = sphi 0, %s41
    %s58 = sphi 0, %s42
    %s64 = sphi 0, %s66
    %s67 = sphi 0, %s64
    %s68 = sphi 0, %s67
    %s84 = sphi 0, %s68
    %s88 = sphi 0, %s88
    %s90 = sphi 0, %s88
    %s91 = sphi 0, %s90
    %s105 = sphi 0, %s91
    %s109 = sphi 0, %s109
    %s111 = sphi 0, %s109
    %s112 = sphi 0, %s111
    %s126 = sphi 0, %s112
    %s130 = sphi 0, %s130
    %s132 = sphi 0, %s130
    %s133 = sphi 0, %s132
    %s147 = sphi 0, %s133
    %s151 = sphi 0, %s151
    %s153 = sphi 0, %s151
    %s154 = sphi 0, %s153
    %s168 = sphi 0, %s154
    %s172 = sphi 0, %s172
    %s174 = sphi 0, %s172
    %s175 = sphi 0, %s174
    %s189 = sphi 0, %s175
    %s193 = sphi 0, %s193
    %s195 = sphi 0, %s193
    %s196 = sphi 0, %s195
    %s210 = sphi 0, %s196
    %s214 = sphi 0, %s214
    %s216 = sphi 0, %s214
    %s217 = sphi 0, %s216
    %s231 = sphi 0, %s217
    %s235 = sphi 0, %s235
    %s237 = sphi 0, %s235
    %s238 = sphi 0, %s237
    %s252 = sphi 0, %s238
    %s256 = sphi 0, %s256
    %s258 = sphi 0, %s256
    %s259 = sphi 0, %s258
    %s273 = sphi 0, %s259
    %s277 = sphi 0, %s277
    %s279 = sphi 0, %s277
    %s280 = sphi 0, %s279
    %s294 = sphi 0, %s280
    %s298 = sphi 0, %s298
    %s300 = sphi 0, %s298
    %s301 = sphi 0, %s300
    %s315 = sphi 0, %s301
    %s319 = sphi 0, %s319
    %s321 = sphi 0, %s319
    %s322 = sphi 0, %s321
    %s336 = sphi 0, %s322
    %s340 = sphi 0, %s340
    %s342 = sphi 0, %s340
    %s343 = sphi 0, %s342
    %s357 = sphi 0, %s343
    %s361 = sphi 0, %s361
    %s363 = sphi 0, %s361
    %s364 = sphi 0, %s363
    %s378 = sphi 0, %s364
    %s382 = sphi 0, %s382
    %s384 = sphi 0, %s382
    %s385 = sphi 0, %s384
    %s399 = sphi 0, %s385
    %s403 = sphi 0, %s403
    %s405 = sphi 0, %s403
    %s406 = sphi 0, %s405
    %s420 = sphi 0, %s406
    %s426 = sphi 0, %s428
    %s429 = sphi 0, %s426
    %s430 = sphi 0, %s429
    %s446 = sphi 0, %s430
    %s452 = sphi 0, %s454
    %s455 = sphi 0, %s452
    %s456 = sphi 0, %s455
    %s472 = sphi 0, %s456
    %s478 = sphi 0, %s480
    %s481 = sphi 0, %s478
    %s482 = sphi 0, %s481
    %s498 = sphi 0, %s482
    %s504 = sphi 0, %s506
    %s507 = sphi 0, %s504
    %s508 = sphi 0, %s507
    %s524 = sphi 0, %s508
  $region4: #{decision_transformer.8} parent=0 // loop_header_branch
    %31 = sbr.rel (%p29) target = $region8
  $region5: #{decision_transformer.8} parent=0 // loop_body
    %s33 = ssub.s32 %s28, 1
    %s34 = ssub.s32 %s28, 2
    %s35 = sadd.s32 %s28, 1
    %s36 = ssub.s32 %s28, %s35
    %p37 = scmp.eq.s32.totalorder %s36, 0
    %s39 = sadd.s32 %s38, 1
    %s40 = scalar_select %p37, %s38, %s39
    %p43 = pneg %p37
    %p44 = scmp.eq.s32.totalorder %s28, 1
    %p45 = por %p43, %p44
    %p46 = scmp.ne.s32.totalorder %s38, %s41
    %p47 = scmp.eq.s32.totalorder %s28, 0
    %p48 = por %p46, %p47
    %p49 = scmp.ne.s32.totalorder %s38, %s41
    %p50 = scmp.eq.s32.totalorder %s33, 1
    %p51 = por %p49, %p50
    %p52 = scmp.ne.s32.totalorder %s41, %s42
    %p53 = scmp.eq.s32.totalorder %s33, 0
    %p54 = por %p52, %p53
    %p55 = scmp.ne.s32.totalorder %s41, %s42
    %p56 = scmp.eq.s32.totalorder %s34, 1
    %p57 = por %p55, %p56
    %p59 = scmp.ne.s32.totalorder %s42, %s58
    %p60 = scmp.eq.s32.totalorder %s34, 0
    %p61 = por %p59, %p60
    %s62 = ssub.s32 %s28, %s35
    %p63 = scmp.eq.s32.totalorder %s62, 0
    %s65 = sadd.s32 %s64, 1
    %s66 = scalar_select %p63, %s64, %s65
    %p69 = pneg %p63
    %p70 = scmp.eq.s32.totalorder %s28, 1
    %p71 = por %p69, %p70
    %p72 = scmp.ne.s32.totalorder %s64, %s67
    %p73 = scmp.eq.s32.totalorder %s28, 0
    %p74 = por %p72, %p73
    %p75 = scmp.ne.s32.totalorder %s64, %s67
    %p76 = scmp.eq.s32.totalorder %s33, 1
    %p77 = por %p75, %p76
    %p78 = scmp.ne.s32.totalorder %s67, %s68
    %p79 = scmp.eq.s32.totalorder %s33, 0
    %p80 = por %p78, %p79
    %p81 = scmp.ne.s32.totalorder %s67, %s68
    %p82 = scmp.eq.s32.totalorder %s34, 1
    %p83 = por %p81, %p82
    %p85 = scmp.ne.s32.totalorder %s68, %s84
    %p86 = scmp.eq.s32.totalorder %s34, 0
    %p87 = por %p85, %p86
    %s89 = sadd.s32 %s88, 1
    %p92 = scmp.eq.s32.totalorder %s28, 1
    %p93 = scmp.ne.s32.totalorder %s88, %s90
    %p94 = scmp.eq.s32.totalorder %s28, 0
    %p95 = por %p93, %p94
    %p96 = scmp.ne.s32.totalorder %s88, %s90
    %p97 = scmp.eq.s32.totalorder %s33, 1
    %p98 = por %p96, %p97
    %p99 = scmp.ne.s32.totalorder %s90, %s91
    %p100 = scmp.eq.s32.totalorder %s33, 0
    %p101 = por %p99, %p100
    %p102 = scmp.ne.s32.totalorder %s90, %s91
    %p103 = scmp.eq.s32.totalorder %s34, 1
    %p104 = por %p102, %p103
    %p106 = scmp.ne.s32.totalorder %s91, %s105
    %p107 = scmp.eq.s32.totalorder %s34, 0
    %p108 = por %p106, %p107
    %s110 = sadd.s32 %s109, 1
    %p113 = scmp.eq.s32.totalorder %s28, 1
    %p114 = scmp.ne.s32.totalorder %s109, %s111
    %p115 = scmp.eq.s32.totalorder %s28, 0
    %p116 = por %p114, %p115
    %p117 = scmp.ne.s32.totalorder %s109, %s111
    %p118 = scmp.eq.s32.totalorder %s33, 1
    %p119 = por %p117, %p118
    %p120 = scmp.ne.s32.totalorder %s111, %s112
    %p121 = scmp.eq.s32.totalorder %s33, 0
    %p122 = por %p120, %p121
    %p123 = scmp.ne.s32.totalorder %s111, %s112
    %p124 = scmp.eq.s32.totalorder %s34, 1
    %p125 = por %p123, %p124
    %p127 = scmp.ne.s32.totalorder %s112, %s126
    %p128 = scmp.eq.s32.totalorder %s34, 0
    %p129 = por %p127, %p128
    %s131 = sadd.s32 %s130, 1
    %p134 = scmp.eq.s32.totalorder %s28, 1
    %p135 = scmp.ne.s32.totalorder %s130, %s132
    %p136 = scmp.eq.s32.totalorder %s28, 0
    %p137 = por %p135, %p136
    %p138 = scmp.ne.s32.totalorder %s130, %s132
    %p139 = scmp.eq.s32.totalorder %s33, 1
    %p140 = por %p138, %p139
    %p141 = scmp.ne.s32.totalorder %s132, %s133
    %p142 = scmp.eq.s32.totalorder %s33, 0
    %p143 = por %p141, %p142
    %p144 = scmp.ne.s32.totalorder %s132, %s133
    %p145 = scmp.eq.s32.totalorder %s34, 1
    %p146 = por %p144, %p145
    %p148 = scmp.ne.s32.totalorder %s133, %s147
    %p149 = scmp.eq.s32.totalorder %s34, 0
    %p150 = por %p148, %p149
    %s152 = sadd.s32 %s151, 1
    %p155 = scmp.eq.s32.totalorder %s28, 1
    %p156 = scmp.ne.s32.totalorder %s151, %s153
    %p157 = scmp.eq.s32.totalorder %s28, 0
    %p158 = por %p156, %p157
    %p159 = scmp.ne.s32.totalorder %s151, %s153
    %p160 = scmp.eq.s32.totalorder %s33, 1
    %p161 = por %p159, %p160
    %p162 = scmp.ne.s32.totalorder %s153, %s154
    %p163 = scmp.eq.s32.totalorder %s33, 0
    %p164 = por %p162, %p163
    %p165 = scmp.ne.s32.totalorder %s153, %s154
    %p166 = scmp.eq.s32.totalorder %s34, 1
    %p167 = por %p165, %p166
    %p169 = scmp.ne.s32.totalorder %s154, %s168
    %p170 = scmp.eq.s32.totalorder %s34, 0
    %p171 = por %p169, %p170
    %s173 = sadd.s32 %s172, 1
    %p176 = scmp.eq.s32.totalorder %s28, 1
    %p177 = scmp.ne.s32.totalorder %s172, %s174
    %p178 = scmp.eq.s32.totalorder %s28, 0
    %p179 = por %p177, %p178
    %p180 = scmp.ne.s32.totalorder %s172, %s174
    %p181 = scmp.eq.s32.totalorder %s33, 1
    %p182 = por %p180, %p181
    %p183 = scmp.ne.s32.totalorder %s174, %s175
    %p184 = scmp.eq.s32.totalorder %s33, 0
    %p185 = por %p183, %p184
    %p186 = scmp.ne.s32.totalorder %s174, %s175
    %p187 = scmp.eq.s32.totalorder %s34, 1
    %p188 = por %p186, %p187
    %p190 = scmp.ne.s32.totalorder %s175, %s189
    %p191 = scmp.eq.s32.totalorder %s34, 0
    %p192 = por %p190, %p191
    %s194 = sadd.s32 %s193, 1
    %p197 = scmp.eq.s32.totalorder %s28, 1
    %p198 = scmp.ne.s32.totalorder %s193, %s195
    %p199 = scmp.eq.s32.totalorder %s28, 0
    %p200 = por %p198, %p199
    %p201 = scmp.ne.s32.totalorder %s193, %s195
    %p202 = scmp.eq.s32.totalorder %s33, 1
    %p203 = por %p201, %p202
    %p204 = scmp.ne.s32.totalorder %s195, %s196
    %p205 = scmp.eq.s32.totalorder %s33, 0
    %p206 = por %p204, %p205
    %p207 = scmp.ne.s32.totalorder %s195, %s196
    %p208 = scmp.eq.s32.totalorder %s34, 1
    %p209 = por %p207, %p208
    %p211 = scmp.ne.s32.totalorder %s196, %s210
    %p212 = scmp.eq.s32.totalorder %s34, 0
    %p213 = por %p211, %p212
    %s215 = sadd.s32 %s214, 1
    %p218 = scmp.eq.s32.totalorder %s28, 1
    %p219 = scmp.ne.s32.totalorder %s214, %s216
    %p220 = scmp.eq.s32.totalorder %s28, 0
    %p221 = por %p219, %p220
    %p222 = scmp.ne.s32.totalorder %s214, %s216
    %p223 = scmp.eq.s32.totalorder %s33, 1
    %p224 = por %p222, %p223
    %p225 = scmp.ne.s32.totalorder %s216, %s217
    %p226 = scmp.eq.s32.totalorder %s33, 0
    %p227 = por %p225, %p226
    %p228 = scmp.ne.s32.totalorder %s216, %s217
    %p229 = scmp.eq.s32.totalorder %s34, 1
    %p230 = por %p228, %p229
    %p232 = scmp.ne.s32.totalorder %s217, %s231
    %p233 = scmp.eq.s32.totalorder %s34, 0
    %p234 = por %p232, %p233
    %s236 = sadd.s32 %s235, 1
    %p239 = scmp.eq.s32.totalorder %s28, 1
    %p240 = scmp.ne.s32.totalorder %s235, %s237
    %p241 = scmp.eq.s32.totalorder %s28, 0
    %p242 = por %p240, %p241
    %p243 = scmp.ne.s32.totalorder %s235, %s237
    %p244 = scmp.eq.s32.totalorder %s33, 1
    %p245 = por %p243, %p244
    %p246 = scmp.ne.s32.totalorder %s237, %s238
    %p247 = scmp.eq.s32.totalorder %s33, 0
    %p248 = por %p246, %p247
    %p249 = scmp.ne.s32.totalorder %s237, %s238
    %p250 = scmp.eq.s32.totalorder %s34, 1
    %p251 = por %p249, %p250
    %p253 = scmp.ne.s32.totalorder %s238, %s252
    %p254 = scmp.eq.s32.totalorder %s34, 0
    %p255 = por %p253, %p254
    %s257 = sadd.s32 %s256, 1
    %p260 = scmp.eq.s32.totalorder %s28, 1
    %p261 = scmp.ne.s32.totalorder %s256, %s258
    %p262 = scmp.eq.s32.totalorder %s28, 0
    %p263 = por %p261, %p262
    %p264 = scmp.ne.s32.totalorder %s256, %s258
    %p265 = scmp.eq.s32.totalorder %s33, 1
    %p266 = por %p264, %p265
    %p267 = scmp.ne.s32.totalorder %s258, %s259
    %p268 = scmp.eq.s32.totalorder %s33, 0
    %p269 = por %p267, %p268
    %p270 = scmp.ne.s32.totalorder %s258, %s259
    %p271 = scmp.eq.s32.totalorder %s34, 1
    %p272 = por %p270, %p271
    %p274 = scmp.ne.s32.totalorder %s259, %s273
    %p275 = scmp.eq.s32.totalorder %s34, 0
    %p276 = por %p274, %p275
    %s278 = sadd.s32 %s277, 1
    %p281 = scmp.eq.s32.totalorder %s28, 1
    %p282 = scmp.ne.s32.totalorder %s277, %s279
    %p283 = scmp.eq.s32.totalorder %s28, 0
    %p284 = por %p282, %p283
    %p285 = scmp.ne.s32.totalorder %s277, %s279
    %p286 = scmp.eq.s32.totalorder %s33, 1
    %p287 = por %p285, %p286
    %p288 = scmp.ne.s32.totalorder %s279, %s280
    %p289 = scmp.eq.s32.totalorder %s33, 0
    %p290 = por %p288, %p289
    %p291 = scmp.ne.s32.totalorder %s279, %s280
    %p292 = scmp.eq.s32.totalorder %s34, 1
    %p293 = por %p291, %p292
    %p295 = scmp.ne.s32.totalorder %s280, %s294
    %p296 = scmp.eq.s32.totalorder %s34, 0
    %p297 = por %p295, %p296
    %s299 = sadd.s32 %s298, 1
    %p302 = scmp.eq.s32.totalorder %s28, 1
    %p303 = scmp.ne.s32.totalorder %s298, %s300
    %p304 = scmp.eq.s32.totalorder %s28, 0
    %p305 = por %p303, %p304
    %p306 = scmp.ne.s32.totalorder %s298, %s300
    %p307 = scmp.eq.s32.totalorder %s33, 1
    %p308 = por %p306, %p307
    %p309 = scmp.ne.s32.totalorder %s300, %s301
    %p310 = scmp.eq.s32.totalorder %s33, 0
    %p311 = por %p309, %p310
    %p312 = scmp.ne.s32.totalorder %s300, %s301
    %p313 = scmp.eq.s32.totalorder %s34, 1
    %p314 = por %p312, %p313
    %p316 = scmp.ne.s32.totalorder %s301, %s315
    %p317 = scmp.eq.s32.totalorder %s34, 0
    %p318 = por %p316, %p317
    %s320 = sadd.s32 %s319, 1
    %p323 = scmp.eq.s32.totalorder %s28, 1
    %p324 = scmp.ne.s32.totalorder %s319, %s321
    %p325 = scmp.eq.s32.totalorder %s28, 0
    %p326 = por %p324, %p325
    %p327 = scmp.ne.s32.totalorder %s319, %s321
    %p328 = scmp.eq.s32.totalorder %s33, 1
    %p329 = por %p327, %p328
    %p330 = scmp.ne.s32.totalorder %s321, %s322
    %p331 = scmp.eq.s32.totalorder %s33, 0
    %p332 = por %p330, %p331
    %p333 = scmp.ne.s32.totalorder %s321, %s322
    %p334 = scmp.eq.s32.totalorder %s34, 1
    %p335 = por %p333, %p334
    %p337 = scmp.ne.s32.totalorder %s322, %s336
    %p338 = scmp.eq.s32.totalorder %s34, 0
    %p339 = por %p337, %p338
    %s341 = sadd.s32 %s340, 1
    %p344 = scmp.eq.s32.totalorder %s28, 1
    %p345 = scmp.ne.s32.totalorder %s340, %s342
    %p346 = scmp.eq.s32.totalorder %s28, 0
    %p347 = por %p345, %p346
    %p348 = scmp.ne.s32.totalorder %s340, %s342
    %p349 = scmp.eq.s32.totalorder %s33, 1
    %p350 = por %p348, %p349
    %p351 = scmp.ne.s32.totalorder %s342, %s343
    %p352 = scmp.eq.s32.totalorder %s33, 0
    %p353 = por %p351, %p352
    %p354 = scmp.ne.s32.totalorder %s342, %s343
    %p355 = scmp.eq.s32.totalorder %s34, 1
    %p356 = por %p354, %p355
    %p358 = scmp.ne.s32.totalorder %s343, %s357
    %p359 = scmp.eq.s32.totalorder %s34, 0
    %p360 = por %p358, %p359
    %s362 = sadd.s32 %s361, 1
    %p365 = scmp.eq.s32.totalorder %s28, 1
    %p366 = scmp.ne.s32.totalorder %s361, %s363
    %p367 = scmp.eq.s32.totalorder %s28, 0
    %p368 = por %p366, %p367
    %p369 = scmp.ne.s32.totalorder %s361, %s363
    %p370 = scmp.eq.s32.totalorder %s33, 1
    %p371 = por %p369, %p370
    %p372 = scmp.ne.s32.totalorder %s363, %s364
    %p373 = scmp.eq.s32.totalorder %s33, 0
    %p374 = por %p372, %p373
    %p375 = scmp.ne.s32.totalorder %s363, %s364
    %p376 = scmp.eq.s32.totalorder %s34, 1
    %p377 = por %p375, %p376
    %p379 = scmp.ne.s32.totalorder %s364, %s378
    %p380 = scmp.eq.s32.totalorder %s34, 0
    %p381 = por %p379, %p380
    %s383 = sadd.s32 %s382, 1
    %p386 = scmp.eq.s32.totalorder %s28, 1
    %p387 = scmp.ne.s32.totalorder %s382, %s384
    %p388 = scmp.eq.s32.totalorder %s28, 0
    %p389 = por %p387, %p388
    %p390 = scmp.ne.s32.totalorder %s382, %s384
    %p391 = scmp.eq.s32.totalorder %s33, 1
    %p392 = por %p390, %p391
    %p393 = scmp.ne.s32.totalorder %s384, %s385
    %p394 = scmp.eq.s32.totalorder %s33, 0
    %p395 = por %p393, %p394
    %p396 = scmp.ne.s32.totalorder %s384, %s385
    %p397 = scmp.eq.s32.totalorder %s34, 1
    %p398 = por %p396, %p397
    %p400 = scmp.ne.s32.totalorder %s385, %s399
    %p401 = scmp.eq.s32.totalorder %s34, 0
    %p402 = por %p400, %p401
    %s404 = sadd.s32 %s403, 1
    %p407 = scmp.eq.s32.totalorder %s28, 1
    %p408 = scmp.ne.s32.totalorder %s403, %s405
    %p409 = scmp.eq.s32.totalorder %s28, 0
    %p410 = por %p408, %p409
    %p411 = scmp.ne.s32.totalorder %s403, %s405
    %p412 = scmp.eq.s32.totalorder %s33, 1
    %p413 = por %p411, %p412
    %p414 = scmp.ne.s32.totalorder %s405, %s406
    %p415 = scmp.eq.s32.totalorder %s33, 0
    %p416 = por %p414, %p415
    %p417 = scmp.ne.s32.totalorder %s405, %s406
    %p418 = scmp.eq.s32.totalorder %s34, 1
    %p419 = por %p417, %p418
    %p421 = scmp.ne.s32.totalorder %s406, %s420
    %p422 = scmp.eq.s32.totalorder %s34, 0
    %p423 = por %p421, %p422
    %s424 = ssub.s32 %s28, %s35
    %p425 = scmp.eq.s32.totalorder %s424, 0
    %s427 = sadd.s32 %s426, 1
    %s428 = scalar_select %p425, %s426, %s427
    %p431 = pneg %p425
    %p432 = scmp.eq.s32.totalorder %s28, 1
    %p433 = por %p431, %p432
    %p434 = scmp.ne.s32.totalorder %s426, %s429
    %p435 = scmp.eq.s32.totalorder %s28, 0
    %p436 = por %p434, %p435
    %p437 = scmp.ne.s32.totalorder %s426, %s429
    %p438 = scmp.eq.s32.totalorder %s33, 1
    %p439 = por %p437, %p438
    %p440 = scmp.ne.s32.totalorder %s429, %s430
    %p441 = scmp.eq.s32.totalorder %s33, 0
    %p442 = por %p440, %p441
    %p443 = scmp.ne.s32.totalorder %s429, %s430
    %p444 = scmp.eq.s32.totalorder %s34, 1
    %p445 = por %p443, %p444
    %p447 = scmp.ne.s32.totalorder %s430, %s446
    %p448 = scmp.eq.s32.totalorder %s34, 0
    %p449 = por %p447, %p448
    %s450 = ssub.s32 %s28, %s35
    %p451 = scmp.eq.s32.totalorder %s450, 0
    %s453 = sadd.s32 %s452, 1
    %s454 = scalar_select %p451, %s452, %s453
    %p457 = pneg %p451
    %p458 = scmp.eq.s32.totalorder %s28, 1
    %p459 = por %p457, %p458
    %p460 = scmp.ne.s32.totalorder %s452, %s455
    %p461 = scmp.eq.s32.totalorder %s28, 0
    %p462 = por %p460, %p461
    %p463 = scmp.ne.s32.totalorder %s452, %s455
    %p464 = scmp.eq.s32.totalorder %s33, 1
    %p465 = por %p463, %p464
    %p466 = scmp.ne.s32.totalorder %s455, %s456
    %p467 = scmp.eq.s32.totalorder %s33, 0
    %p468 = por %p466, %p467
    %p469 = scmp.ne.s32.totalorder %s455, %s456
    %p470 = scmp.eq.s32.totalorder %s34, 1
    %p471 = por %p469, %p470
    %p473 = scmp.ne.s32.totalorder %s456, %s472
    %p474 = scmp.eq.s32.totalorder %s34, 0
    %p475 = por %p473, %p474
    %s476 = ssub.s32 %s28, %s35
    %p477 = scmp.eq.s32.totalorder %s476, 0
    %s479 = sadd.s32 %s478, 1
    %s480 = scalar_select %p477, %s478, %s479
    %p483 = pneg %p477
    %p484 = scmp.eq.s32.totalorder %s28, 1
    %p485 = por %p483, %p484
    %p486 = scmp.ne.s32.totalorder %s478, %s481
    %p487 = scmp.eq.s32.totalorder %s28, 0
    %p488 = por %p486, %p487
    %p489 = scmp.ne.s32.totalorder %s478, %s481
    %p490 = scmp.eq.s32.totalorder %s33, 1
    %p491 = por %p489, %p490
    %p492 = scmp.ne.s32.totalorder %s481, %s482
    %p493 = scmp.eq.s32.totalorder %s33, 0
    %p494 = por %p492, %p493
    %p495 = scmp.ne.s32.totalorder %s481, %s482
    %p496 = scmp.eq.s32.totalorder %s34, 1
    %p497 = por %p495, %p496
    %p499 = scmp.ne.s32.totalorder %s482, %s498
    %p500 = scmp.eq.s32.totalorder %s34, 0
    %p501 = por %p499, %p500
    %s502 = ssub.s32 %s28, %s35
    %p503 = scmp.eq.s32.totalorder %s502, 0
    %s505 = sadd.s32 %s504, 1
    %s506 = scalar_select %p503, %s504, %s505
    %p509 = pneg %p503
    %p510 = scmp.eq.s32.totalorder %s28, 1
    %p511 = por %p509, %p510
    %p512 = scmp.ne.s32.totalorder %s504, %s507
    %p513 = scmp.eq.s32.totalorder %s28, 0
    %p514 = por %p512, %p513
    %p515 = scmp.ne.s32.totalorder %s504, %s507
    %p516 = scmp.eq.s32.totalorder %s33, 1
    %p517 = por %p515, %p516
    %p518 = scmp.ne.s32.totalorder %s507, %s508
    %p519 = scmp.eq.s32.totalorder %s33, 0
    %p520 = por %p518, %p519
    %p521 = scmp.ne.s32.totalorder %s507, %s508
    %p522 = scmp.eq.s32.totalorder %s34, 1
    %p523 = por %p521, %p522
    %p525 = scmp.ne.s32.totalorder %s508, %s524
    %p526 = scmp.eq.s32.totalorder %s34, 0
    %p527 = por %p525, %p526
    %p528 = scmp.le.s32.totalorder 1, %s28
    %p529 = scmp.lt.s32.totalorder %s28, 3
    %p530 = pnand %p528, %p529
    %p531 = pneg %p530
    // Predicated region
    $region9: #{decision_transformer.8} parent=5 // pred_check
      _
    $region10: #{decision_transformer.8} parent=5 // pred_check_branch
      %533 = sbr.rel (%p530) target = $region12
    $region11: #{decision_transformer.8} parent=5 // pred_region
      %s534 = ssub.s32 %s28, 1
      // Predicated region
      $region13: #{decision_transformer.8} parent=11 // pred_check
        %p535 = pneg %p101
      $region14: #{decision_transformer.8} parent=11 // pred_check_branch
        %537 = sbr.rel (%p535) target = $region16
      $region15: #{decision_transformer.8} parent=11 // pred_region
        _
      $region16: #{decision_transformer.8} parent=11 // pred_fallthru
        _
      // Predicated region
      $region17: #{decision_transformer.8} parent=11 // pred_check
        %p538 = pneg %p122
      $region18: #{decision_transformer.8} parent=11 // pred_check_branch
        %540 = sbr.rel (%p538) target = $region20
      $region19: #{decision_transformer.8} parent=11 // pred_region
        _
      $region20: #{decision_transformer.8} parent=11 // pred_fallthru
        _
      // Predicated region
      $region21: #{decision_transformer.8} parent=11 // pred_check
        %p541 = pneg %p143
      $region22: #{decision_transformer.8} parent=11 // pred_check_branch
        %543 = sbr.rel (%p541) target = $region24
      $region23: #{decision_transformer.8} parent=11 // pred_region
        _
      $region24: #{decision_transformer.8} parent=11 // pred_fallthru
        _
      // Predicated region
      $region25: #{decision_transformer.8} parent=11 // pred_check
        %p544 = pneg %p164
      $region26: #{decision_transformer.8} parent=11 // pred_check_branch
        %546 = sbr.rel (%p544) target = $region28
      $region27: #{decision_transformer.8} parent=11 // pred_region
        _
      $region28: #{decision_transformer.8} parent=11 // pred_fallthru
        _
      // Predicated region
      $region29: #{decision_transformer.8} parent=11 // pred_check
        %p547 = pneg %p185
      $region30: #{decision_transformer.8} parent=11 // pred_check_branch
        %549 = sbr.rel (%p547) target = $region32
      $region31: #{decision_transformer.8} parent=11 // pred_region
        _
      $region32: #{decision_transformer.8} parent=11 // pred_fallthru
        _
      // Predicated region
      $region33: #{decision_transformer.8} parent=11 // pred_check
        %p550 = pneg %p206
      $region34: #{decision_transformer.8} parent=11 // pred_check_branch
        %552 = sbr.rel (%p550) target = $region36
      $region35: #{decision_transformer.8} parent=11 // pred_region
        _
      $region36: #{decision_transformer.8} parent=11 // pred_fallthru
        _
      // Predicated region
      $region37: #{decision_transformer.8} parent=11 // pred_check
        %p553 = pneg %p227
      $region38: #{decision_transformer.8} parent=11 // pred_check_branch
        %555 = sbr.rel (%p553) target = $region40
      $region39: #{decision_transformer.8} parent=11 // pred_region
        _
      $region40: #{decision_transformer.8} parent=11 // pred_fallthru
        _
      // Predicated region
      $region41: #{decision_transformer.8} parent=11 // pred_check
        %p556 = pneg %p248
      $region42: #{decision_transformer.8} parent=11 // pred_check_branch
        %558 = sbr.rel (%p556) target = $region44
      $region43: #{decision_transformer.8} parent=11 // pred_region
        _
      $region44: #{decision_transformer.8} parent=11 // pred_fallthru
        _
      // Predicated region
      $region45: #{decision_transformer.8} parent=11 // pred_check
        %p559 = pneg %p269
      $region46: #{decision_transformer.8} parent=11 // pred_check_branch
        %561 = sbr.rel (%p559) target = $region48
      $region47: #{decision_transformer.8} parent=11 // pred_region
        _
      $region48: #{decision_transformer.8} parent=11 // pred_fallthru
        _
      // Predicated region
      $region49: #{decision_transformer.8} parent=11 // pred_check
        %p562 = pneg %p290
      $region50: #{decision_transformer.8} parent=11 // pred_check_branch
        %564 = sbr.rel (%p562) target = $region52
      $region51: #{decision_transformer.8} parent=11 // pred_region
        _
      $region52: #{decision_transformer.8} parent=11 // pred_fallthru
        _
      // Predicated region
      $region53: #{decision_transformer.8} parent=11 // pred_check
        %p565 = pneg %p311
      $region54: #{decision_transformer.8} parent=11 // pred_check_branch
        %567 = sbr.rel (%p565) target = $region56
      $region55: #{decision_transformer.8} parent=11 // pred_region
        _
      $region56: #{decision_transformer.8} parent=11 // pred_fallthru
        _
      // Predicated region
      $region57: #{decision_transformer.8} parent=11 // pred_check
        %p568 = pneg %p332
      $region58: #{decision_transformer.8} parent=11 // pred_check_branch
        %570 = sbr.rel (%p568) target = $region60
      $region59: #{decision_transformer.8} parent=11 // pred_region
        _
      $region60: #{decision_transformer.8} parent=11 // pred_fallthru
        _
      // Predicated region
      $region61: #{decision_transformer.8} parent=11 // pred_check
        %p571 = pneg %p353
      $region62: #{decision_transformer.8} parent=11 // pred_check_branch
        %573 = sbr.rel (%p571) target = $region64
      $region63: #{decision_transformer.8} parent=11 // pred_region
        _
      $region64: #{decision_transformer.8} parent=11 // pred_fallthru
        _
      // Predicated region
      $region65: #{decision_transformer.8} parent=11 // pred_check
        %p574 = pneg %p374
      $region66: #{decision_transformer.8} parent=11 // pred_check_branch
        %576 = sbr.rel (%p574) target = $region68
      $region67: #{decision_transformer.8} parent=11 // pred_region
        _
      $region68: #{decision_transformer.8} parent=11 // pred_fallthru
        _
      // Predicated region
      $region69: #{decision_transformer.8} parent=11 // pred_check
        %p577 = pneg %p395
      $region70: #{decision_transformer.8} parent=11 // pred_check_branch
        %579 = sbr.rel (%p577) target = $region72
      $region71: #{decision_transformer.8} parent=11 // pred_region
        _
      $region72: #{decision_transformer.8} parent=11 // pred_fallthru
        _
      // Predicated region
      $region73: #{decision_transformer.8} parent=11 // pred_check
        %p580 = pneg %p416
      $region74: #{decision_transformer.8} parent=11 // pred_check_branch
        %582 = sbr.rel (%p580) target = $region76
      $region75: #{decision_transformer.8} parent=11 // pred_region
        _
      $region76: #{decision_transformer.8} parent=11 // pred_fallthru
        _
    $region12: #{decision_transformer.8} parent=5 // pred_fallthru
      _
    %p583 = scmp.lt.s32.totalorder %s28, 2
    // Predicated region
    $region77: #{decision_transformer.8} parent=5 // pred_check
      %p584 = pneg %p583
    $region78: #{decision_transformer.8} parent=5 // pred_check_branch
      %586 = sbr.rel (%p584) target = $region80
    $region79: #{decision_transformer.8} parent=5 // pred_region
      // Predicated region
      $region81: #{decision_transformer.8} parent=79 // pred_check
        %p587 = pneg %p48
      $region82: #{decision_transformer.8} parent=79 // pred_check_branch
        %589 = sbr.rel (%p587) target = $region84
      $region83: #{decision_transformer.8} parent=79 // pred_region
        %p590 = scmp.lt.s32.totalorder %s28, 1
        %s591 = scalar_select %p590, %s28, 1
        %s592 = smul.addr %s591, 3
        %s593 = smul.addr %s592, 8
        %s594 = scalar_lea.vmem %s0, %s593
      $region84: #{decision_transformer.8} parent=79 // pred_fallthru
        _
      // Predicated region
      $region85: #{decision_transformer.8} parent=79 // pred_check
        %p595 = pneg %p74
      $region86: #{decision_transformer.8} parent=79 // pred_check_branch
        %597 = sbr.rel (%p595) target = $region88
      $region87: #{decision_transformer.8} parent=79 // pred_region
        %p598 = scmp.lt.s32.totalorder %s28, 1
        %s599 = scalar_select %p598, %s28, 1
        %s600 = smul.addr %s599, 3
        %s601 = smul.addr %s600, 8
        %s602 = scalar_lea.vmem %s1, %s601
      $region88: #{decision_transformer.8} parent=79 // pred_fallthru
        _
    $region80: #{decision_transformer.8} parent=5 // pred_fallthru
      _
    %p603 = scmp.le.s32.totalorder 1, %s28
    %p604 = scmp.lt.s32.totalorder %s28, 3
    %p605 = pnand %p603, %p604
    %p606 = pneg %p605
    // Predicated region
    $region89: #{decision_transformer.8} parent=5 // pred_check
      _
    $region90: #{decision_transformer.8} parent=5 // pred_check_branch
      %608 = sbr.rel (%p605) target = $region92
    $region91: #{decision_transformer.8} parent=5 // pred_region
      %s609 = ssub.s32 %s28, 1
      %p610 = scmp.lt.s32.totalorder %s33, 1
      %s611 = scalar_select %p610, %s33, 1
      %s612 = smul.addr %s611, 3
      %s613 = smul.addr %s612, 8
      %s614 = scalar_lea.vmem %s0, %s613
      %p615 = pneg %p54
      %p616 = pneg %p51
      %p617 = scmp.lt.s32.totalorder %s33, 1
      %s618 = scalar_select %p617, %s33, 1
      %s619 = smul.addr %s618, 3
      %s620 = smul.addr %s619, 8
      %s621 = scalar_lea.vmem %s1, %s620
      %p622 = pneg %p80
      %p623 = pneg %p77
      %p624 = pneg %p101
      %p625 = pneg %p98
      %p626 = pneg %p122
      %p627 = pneg %p119
      %p628 = pneg %p143
      %p629 = pneg %p140
      %p630 = pneg %p164
      %p631 = pneg %p161
      %p632 = pneg %p185
      %p633 = pneg %p182
      %p634 = pneg %p206
      %p635 = pneg %p203
      %p636 = pneg %p227
      %p637 = pneg %p224
      %p638 = pneg %p248
      %p639 = pneg %p245
      %p640 = pneg %p269
      %p641 = pneg %p266
      %p642 = pneg %p290
      %p643 = pneg %p287
      %p644 = pneg %p311
      %p645 = pneg %p308
      %p646 = pneg %p332
      %p647 = pneg %p329
      %p648 = pneg %p353
      %p649 = pneg %p350
      %p650 = pneg %p374
      %p651 = pneg %p371
      %p652 = pneg %p395
      %p653 = pneg %p392
      %p654 = pneg %p416
      %p655 = pneg %p413
      %p656 = pneg %p442
      %p657 = pneg %p439
      %p658 = scmp.lt.s32.totalorder %s33, 1
      %s659 = scalar_select %p658, %s33, 1
      %s660 = smul.addr %s659, 3
      %s661 = smul.addr %s660, 8
      %s662 = scalar_lea.vmem %s18, %s661
      %p663 = pneg %p468
      %p664 = pneg %p465
      %p665 = scmp.lt.s32.totalorder %s33, 1
      %s666 = scalar_select %p665, %s33, 1
      %s667 = smul.addr %s666, 3
      %s668 = smul.addr %s667, 8
      %s669 = scalar_lea.vmem %s19, %s668
      %p670 = pneg %p494
      %p671 = pneg %p491
      %p672 = scmp.lt.s32.totalorder %s33, 1
      %s673 = scalar_select %p672, %s33, 1
      %s674 = smul.addr %s673, 3
      %s675 = smul.addr %s674, 8
      %s676 = scalar_lea.vmem %s20, %s675
      %p677 = pneg %p520
      %p678 = pneg %p517
      %p679 = scmp.lt.s32.totalorder %s33, 1
      %s680 = scalar_select %p679, %s33, 1
      %s681 = smul.addr %s680, 3
      %s682 = smul.addr %s681, 8
      %s683 = scalar_lea.vmem %s21, %s682
      %p684 = scmp.lt.s32.totalorder %s33, 1
      %s685 = scalar_select %p684, %s33, 1
      %s686 = smul.addr %s685, 3
      %s687 = smul.addr %s686, 8
      %s688 = scalar_lea.vmem %s0, %s687
      %p689 = scmp.lt.s32.totalorder %s33, 1
      %s690 = scalar_select %p689, %s33, 1
      %s691 = smul.addr %s690, 3
      %s692 = smul.addr %s691, 8
      %s693 = scalar_lea.vmem %s1, %s692
      %p694 = scmp.lt.s32.totalorder %s33, 1
      %s695 = scalar_select %p694, %s33, 1
      %s696 = smul.addr %s695, 3
      %s697 = smul.addr %s696, 8
      %s698 = scalar_lea.vmem %s18, %s697
      %p699 = scmp.lt.s32.totalorder %s33, 1
      %s700 = scalar_select %p699, %s33, 1
      %s701 = smul.addr %s700, 3
      %s702 = smul.addr %s701, 8
      %s703 = scalar_lea.vmem %s19, %s702
      %p704 = scmp.lt.s32.totalorder %s33, 1
      %s705 = scalar_select %p704, %s33, 1
      %s706 = smul.addr %s705, 3
      %s707 = smul.addr %s706, 8
      %s708 = scalar_lea.vmem %s20, %s707
      %p709 = scmp.lt.s32.totalorder %s33, 1
      %s710 = scalar_select %p709, %s33, 1
      %s711 = smul.addr %s710, 3
      %s712 = smul.addr %s711, 8
      %s713 = scalar_lea.vmem %s21, %s712
      %v715 = vld [vmem:[%s688] sm:$0xff]
      %v716 = vld [vmem:[%s688 + $0x8] sm:$0xff]
      %v717 = vld [vmem:[%s688 + $0x10] sm:$0xff]
      %v718 = vld [vmem:[%s693] sm:$0xff]
      %v719 = vld [vmem:[%s693 + $0x8] sm:$0xff]
      %v720 = vld [vmem:[%s693 + $0x10] sm:$0xff]
      %v721 = vld [vmem:[%s2] sm:$0xf]
      %v722 = vld [vmem:[%s2 + $0x4] sm:$0xf]
      %v723 = vld [vmem:[%s2 + $0x8] sm:$0xf]
      %v724 = vld [vmem:[%s2 + $0xc] sm:$0xf]
      %v725 = vld [vmem:[%s2 + $0x10] sm:$0xf]
      %v726 = vld [vmem:[%s2 + $0x14] sm:$0xf]
      %v727 = vld [vmem:[%s2 + $0x18] sm:$0xf]
      %v728 = vld [vmem:[%s2 + $0x1c] sm:$0xf]
      %v729 = vld [vmem:[%s3] sm:$0x1]
      %v730 = vld [vmem:[%s4] sm:$0x1]
      %v731 = vld [vmem:[%s5] sm:$0x1]
      %v732 = vld [vmem:[%s6] sm:$0xf]
      %v733 = vld [vmem:[%s6 + $0x4] sm:$0xf]
      %v734 = vld [vmem:[%s6 + $0x8] sm:$0xf]
      %v735 = vld [vmem:[%s6 + $0xc] sm:$0xf]
      %v736 = vld [vmem:[%s7] sm:$0x1]
      %v737 = vld [vmem:[%s8] sm:$0xf]
      %v738 = vld [vmem:[%s8 + $0x4] sm:$0xf]
      %v739 = vld [vmem:[%s8 + $0x8] sm:$0xf]
      %v740 = vld [vmem:[%s8 + $0xc] sm:$0xf]
      %v741 = vld [vmem:[%s8 + $0x10] sm:$0xf]
      %v742 = vld [vmem:[%s8 + $0x14] sm:$0xf]
      %v743 = vld [vmem:[%s8 + $0x18] sm:$0xf]
      %v744 = vld [vmem:[%s8 + $0x1c] sm:$0xf]
      %v745 = vld [vmem:[%s8 + $0x20] sm:$0xf]
      %v746 = vld [vmem:[%s8 + $0x24] sm:$0xf]
      %v747 = vld [vmem:[%s8 + $0x28] sm:$0xf]
      %v748 = vld [vmem:[%s8 + $0x2c] sm:$0xf]
      %v749 = vld [vmem:[%s8 + $0x30] sm:$0xf]
      %v750 = vld [vmem:[%s8 + $0x34] sm:$0xf]
      %v751 = vld [vmem:[%s8 + $0x38] sm:$0xf]
      %v752 = vld [vmem:[%s8 + $0x3c] sm:$0xf]
      %v753 = vld [vmem:[%s9] sm:$0x1]
      %v754 = vld [vmem:[%s10] sm:$0x1]
      %v755 = vld [vmem:[%s11] sm:$0x1]
      %v756 = vpack.c.bf16 %v716, %v715
      %v757 = vpack.c.bf16 %v717, %v717
      %v759 = vlaneseq
      %v760 = vshrl.u32 %v759, 7
      %v761 = vsub.s32 0, %v760
      %v762 = vrot.slane %v729, %v761
      %v772 = vunpack.c.l.b16 %v721
      %v773 = vunpack.c.l.b16 %v722
      %v774 = vunpack.c.l.b16 %v723
      %v775 = vunpack.c.l.b16 %v724
      %v776 = vunpack.c.l.b16 %v725
      %v777 = vunpack.c.l.b16 %v726
      %v778 = vunpack.c.l.b16 %v727
      %v779 = vunpack.c.l.b16 %v728
      %v780 = vpack.c.b16 %v773, %v772
      %v781 = vpack.c.b16 %v775, %v774
      %v782 = vpack.c.b16 %v777, %v776
      %v783 = vpack.c.b16 %v779, %v778
      %vm788 = vcmask 523264
      %v790 = vsel %vm788, %v756, 0
      %v793 = vsel %vm788, %v757, 0
      %795 = vmatprep.subr.bf16.mxu0 0
      %796 = vmatpush1.bf16.msra.mxu0 0
      %797 = vmatprep.subr.bf16.mxu0 0
      %798 = vmatpush1.bf16.msra.mxu0 0
      %799 = vmatprep.subr.bf16.mxu0 0
      %800 = vmatpush1.bf16.msra.mxu0 0
      %801 = vmatprep.subr.bf16.mxu0 0
      %802 = vmatpush1.bf16.msra.mxu0 0
      %803 = vmatprep.subr.bf16.mxu0 0
      %804 = vmatpush1.bf16.msra.mxu0 %v783
      %805 = vmatprep.subr.bf16.mxu0 0
      %806 = vmatpush1.bf16.msra.mxu0 %v782
      %807 = vmatprep.subr.bf16.mxu0 0
      %808 = vmatpush1.bf16.msra.mxu0 %v781
      %809 = vmatprep.subr.bf16.mxu0 0
      %810 = vmatpush1.bf16.msra.mxu0 %v780
      %811 = vmatprep.subr.bf16.mxu0 0
      %812 = vmatpush2.bf16.msra.mxu0 0
      %813 = vmatprep.subr.bf16.mxu0 0
      %814 = vmatpush2.bf16.msra.mxu0 0
      %815 = vmatprep.subr.bf16.mxu0 0
      %816 = vmatpush2.bf16.msra.mxu0 0
      %817 = vmatprep.subr.bf16.mxu0 0
      %818 = vmatpush2.bf16.msra.mxu0 0
      %819 = vmatprep.subr.bf16.mxu0 0
      %820 = vmatpush2.bf16.msra.mxu0 0
      %821 = vmatprep.subr.bf16.mxu0 0
      %822 = vmatpush2.bf16.msra.mxu0 0
      %823 = vmatprep.subr.bf16.mxu0 0
      %824 = vmatpush2.bf16.msra.mxu0 0
      %825 = vmatprep.subr.bf16.mxu0 0
      %826 = vmatpush2.bf16.msra.mxu0 0
      %827 = vmatprep.mubr.bf16.mxu0 0
      %828 = vmatmul.mubr.bf16.gmra.mxu0 %v790
      %v829 = vpop.f32.mrf.mxu0
      %v830 = vadd.f32 %v762, %v829
      %v831 = vpop.f32.mrf.mxu0
      %v832 = vpop.f32.mrf.mxu0
      %v833 = vadd.f32 %v762, %v832
      %v834 = vpop.f32.mrf.mxu0
      %835 = vmatprep.mubr.bf16.mxu0 0
      %836 = vmatmul.mubr.bf16.gmra.mxu0 %v793
      %v837 = vpop.f32.mrf.mxu0
      %v838 = vadd.f32 %v762, %v837
      %v839 = vpop.f32.mrf.mxu0
      %v840 = vpop.f32.mrf.mxu0
      %v841 = vpop.f32.mrf.mxu0
      %842 = vdwg.mxu0
      %v843 = vadd.f32 %v830, %v718
      %v844 = vadd.f32 %v833, %v719
      %v845 = vadd.f32 %v838, %v720
      %vm846 = vcmask 261120
      %v847 = vsel %vm846, %v843, 0.0
      %848 = vadd.xlane.f32.xlu0 %v847
      %v849 = vpop.xlane.xlu0 %848
      %v850 = vsel %vm846, %v844, 0.0
      %851 = vadd.xlane.f32.xlu0 %v850
      %v852 = vpop.xlane.xlu0 %851
      %v853 = vsel %vm846, %v845, 0.0
      %854 = vadd.xlane.f32.xlu0 %v853
      %v855 = vpop.xlane.xlu0 %854
      %v856 = vrcp.pop 32.0
      %v857 = vmul.f32 %v849, %v856
      %v858 = vmul.f32 %v852, %v856
      %v859 = vmul.f32 %v855, %v856
      %v860 = vsub.f32 %v843, %v857
      %v861 = vsub.f32 %v844, %v858
      %v862 = vsub.f32 %v845, %v859
      %v863 = vmul.f32 %v860, %v860
      %v864 = vmul.f32 %v861, %v861
      %v865 = vmul.f32 %v862, %v862
      %v866 = vsel %vm846, %v863, 0.0
      %867 = vadd.xlane.f32.xlu0 %v866
      %v868 = vpop.xlane.xlu0 %867
      %v869 = vsel %vm846, %v864, 0.0
      %870 = vadd.xlane.f32.xlu0 %v869
      %v871 = vpop.xlane.xlu0 %870
      %v872 = vsel %vm846, %v865, 0.0
      %873 = vadd.xlane.f32.xlu0 %v872
      %v874 = vpop.xlane.xlu0 %873
      %v875 = vmul.f32 %v868, %v856
      %v876 = vmul.f32 %v871, %v856
      %v877 = vmul.f32 %v874, %v856
      %v878 = vadd.f32 %v875, 1e-05
      %v879 = vadd.f32 %v876, 1e-05
      %v880 = vadd.f32 %v877, 1e-05
      %v881 = vrsqrt.pop %v878
      %v882 = vrsqrt.pop %v879
      %v883 = vrsqrt.pop %v880
      %v884 = vmul.f32 %v860, %v881
      %v885 = vmul.f32 %v861, %v882
      %v886 = vmul.f32 %v862, %v883
      %v888 = vlaneseq
      %v889 = vshrl.u32 %v888, 7
      %v890 = vsub.s32 0, %v889
      %v891 = vrot.slane %v730, %v890
      %v893 = vmul.f32 %v884, %v891
      %v894 = vmul.f32 %v885, %v891
      %v895 = vmul.f32 %v886, %v891
      %v897 = vlaneseq
      %v898 = vshrl.u32 %v897, 7
      %v899 = vsub.s32 0, %v898
      %v900 = vrot.slane %v731, %v899
      %v902 = vadd.f32 %v893, %v900
      %v903 = vadd.f32 %v894, %v900
      %v904 = vadd.f32 %v895, %v900
      %v905 = vpack.c.bf16 %v903, %v902
      %v906 = vpack.c.bf16 %v904, %v904
      %v908 = vlaneseq
      %v909 = vshrl.u32 %v908, 7
      %v910 = vsub.s32 0, %v909
      %v911 = vrot.slane %v736, %v910
      %v917 = vunpack.c.l.b16 %v732
      %v918 = vunpack.c.l.b16 %v733
      %v919 = vunpack.c.l.b16 %v734
      %v920 = vunpack.c.l.b16 %v735
      %v921 = vpack.c.b16 %v918, %v917
      %v922 = vpack.c.b16 %v920, %v919
      %v926 = vsel %vm846, %v905, 0
      %v929 = vsel %vm846, %v906, 0
      %931 = vmatprep.subr.bf16.mxu0 0
      %932 = vmatpush1.bf16.msra.mxu0 0
      %933 = vmatprep.subr.bf16.mxu0 0
      %934 = vmatpush1.bf16.msra.mxu0 0
      %935 = vmatprep.subr.bf16.mxu0 0
      %936 = vmatpush1.bf16.msra.mxu0 0
      %937 = vmatprep.subr.bf16.mxu0 0
      %938 = vmatpush1.bf16.msra.mxu0 0
      %939 = vmatprep.subr.bf16.mxu0 0
      %940 = vmatpush1.bf16.msra.mxu0 0
      %941 = vmatprep.subr.bf16.mxu0 0
      %942 = vmatpush1.bf16.msra.mxu0 0
      %943 = vmatprep.subr.bf16.mxu0 0
      %944 = vmatpush1.bf16.msra.mxu0 %v922
      %945 = vmatprep.subr.bf16.mxu0 0
      %946 = vmatpush1.bf16.msra.mxu0 %v921
      %947 = vmatprep.subr.bf16.mxu0 0
      %948 = vmatpush2.bf16.msra.mxu0 0
      %949 = vmatprep.subr.bf16.mxu0 0
      %950 = vmatpush2.bf16.msra.mxu0 0
      %951 = vmatprep.subr.bf16.mxu0 0
      %952 = vmatpush2.bf16.msra.mxu0 0
      %953 = vmatprep.subr.bf16.mxu0 0
      %954 = vmatpush2.bf16.msra.mxu0 0
      %955 = vmatprep.subr.bf16.mxu0 0
      %956 = vmatpush2.bf16.msra.mxu0 0
      %957 = vmatprep.subr.bf16.mxu0 0
      %958 = vmatpush2.bf16.msra.mxu0 0
      %959 = vmatprep.subr.bf16.mxu0 0
      %960 = vmatpush2.bf16.msra.mxu0 0
      %961 = vmatprep.subr.bf16.mxu0 0
      %962 = vmatpush2.bf16.msra.mxu0 0
      %963 = vmatprep.mubr.bf16.mxu0 0
      %964 = vmatmul.mubr.bf16.gmra.mxu0 %v926
      %v965 = vpop.f32.mrf.mxu0
      %v966 = vadd.f32 %v911, %v965
      %v967 = vpop.f32.mrf.mxu0
      %v968 = vpop.f32.mrf.mxu0
      %v969 = vadd.f32 %v911, %v968
      %v970 = vpop.f32.mrf.mxu0
      %971 = vmatprep.mubr.bf16.mxu0 0
      %972 = vmatmul.mubr.bf16.gmra.mxu0 %v929
      %v973 = vpop.f32.mrf.mxu0
      %v974 = vadd.f32 %v911, %v973
      %v975 = vpop.f32.mrf.mxu0
      %v976 = vpop.f32.mrf.mxu0
      %v977 = vpop.f32.mrf.mxu0
      %978 = vdwg.mxu0
      %v979 = vmax.f32 %v966, 0.0
      %v980 = vmax.f32 %v969, 0.0
      %v981 = vmax.f32 %v974, 0.0
      %v982 = vpack.c.bf16 %v980, %v979
      %v983 = vpack.c.bf16 %v981, %v981
      %v985 = vlaneseq
      %v986 = vshrl.u32 %v985, 7
      %v987 = vsub.s32 0, %v986
      %v988 = vrot.slane %v753, %v987
      %v1006 = vunpack.c.l.b16 %v737
      %v1007 = vunpack.c.l.b16 %v738
      %v1008 = vunpack.c.l.b16 %v739
      %v1009 = vunpack.c.l.b16 %v740
      %v1010 = vunpack.c.l.b16 %v741
      %v1011 = vunpack.c.l.b16 %v742
      %v1012 = vunpack.c.l.b16 %v743
      %v1013 = vunpack.c.l.b16 %v744
      %v1014 = vunpack.c.l.b16 %v745
      %v1015 = vunpack.c.l.b16 %v746
      %v1016 = vunpack.c.l.b16 %v747
      %v1017 = vunpack.c.l.b16 %v748
      %v1018 = vunpack.c.l.b16 %v749
      %v1019 = vunpack.c.l.b16 %v750
      %v1020 = vunpack.c.l.b16 %v751
      %v1021 = vunpack.c.l.b16 %v752
      %v1022 = vpack.c.b16 %v1007, %v1006
      %v1023 = vpack.c.b16 %v1009, %v1008
      %v1024 = vpack.c.b16 %v1011, %v1010
      %v1025 = vpack.c.b16 %v1013, %v1012
      %v1026 = vpack.c.b16 %v1015, %v1014
      %v1027 = vpack.c.b16 %v1017, %v1016
      %v1028 = vpack.c.b16 %v1019, %v1018
      %v1029 = vpack.c.b16 %v1021, %v1020
      %1038 = vmatprep.subr.bf16.mxu0 0
      %1039 = vmatpush1.bf16.msra.mxu0 %v1029
      %1040 = vmatprep.subr.bf16.mxu0 0
      %1041 = vmatpush1.bf16.msra.mxu0 %v1028
      %1042 = vmatprep.subr.bf16.mxu0 0
      %1043 = vmatpush1.bf16.msra.mxu0 %v1027
      %1044 = vmatprep.subr.bf16.mxu0 0
      %1045 = vmatpush1.bf16.msra.mxu0 %v1026
      %1046 = vmatprep.subr.bf16.mxu0 0
      %1047 = vmatpush1.bf16.msra.mxu0 %v1025
      %1048 = vmatprep.subr.bf16.mxu0 0
      %1049 = vmatpush1.bf16.msra.mxu0 %v1024
      %1050 = vmatprep.subr.bf16.mxu0 0
      %1051 = vmatpush1.bf16.msra.mxu0 %v1023
      %1052 = vmatprep.subr.bf16.mxu0 0
      %1053 = vmatpush1.bf16.msra.mxu0 %v1022
      %1054 = vmatprep.subr.bf16.mxu0 0
      %1055 = vmatpush2.bf16.msra.mxu0 0
      %1056 = vmatprep.subr.bf16.mxu0 0
      %1057 = vmatpush2.bf16.msra.mxu0 0
      %1058 = vmatprep.subr.bf16.mxu0 0
      %1059 = vmatpush2.bf16.msra.mxu0 0
      %1060 = vmatprep.subr.bf16.mxu0 0
      %1061 = vmatpush2.bf16.msra.mxu0 0
      %1062 = vmatprep.subr.bf16.mxu0 0
      %1063 = vmatpush2.bf16.msra.mxu0 0
      %1064 = vmatprep.subr.bf16.mxu0 0
      %1065 = vmatpush2.bf16.msra.mxu0 0
      %1066 = vmatprep.subr.bf16.mxu0 0
      %1067 = vmatpush2.bf16.msra.mxu0 0
      %1068 = vmatprep.subr.bf16.mxu0 0
      %1069 = vmatpush2.bf16.msra.mxu0 0
      %1070 = vmatprep.mubr.bf16.mxu0 0
      %1071 = vmatmul.mubr.bf16.gmra.mxu0 %v982
      %v1072 = vpop.f32.mrf.mxu0
      %v1073 = vadd.f32 %v988, %v1072
      %v1074 = vpop.f32.mrf.mxu0
      %v1075 = vpop.f32.mrf.mxu0
      %v1076 = vadd.f32 %v988, %v1075
      %v1077 = vpop.f32.mrf.mxu0
      %1078 = vmatprep.mubr.bf16.mxu0 0
      %1079 = vmatmul.mubr.bf16.gmra.mxu0 %v983
      %v1080 = vpop.f32.mrf.mxu0
      %v1081 = vadd.f32 %v988, %v1080
      %v1082 = vpop.f32.mrf.mxu0
      %v1083 = vpop.f32.mrf.mxu0
      %v1084 = vpop.f32.mrf.mxu0
      %1085 = vdwg.mxu0
      %v1086 = vadd.f32 %v1073, %v902
      %v1087 = vadd.f32 %v1076, %v903
      %v1088 = vadd.f32 %v1081, %v904
      %v1089 = vsel %vm846, %v1086, 0.0
      %1090 = vadd.xlane.f32.xlu0 %v1089
      %v1091 = vpop.xlane.xlu0 %1090
      %v1092 = vsel %vm846, %v1087, 0.0
      %1093 = vadd.xlane.f32.xlu0 %v1092
      %v1094 = vpop.xlane.xlu0 %1093
      %v1095 = vsel %vm846, %v1088, 0.0
      %1096 = vadd.xlane.f32.xlu0 %v1095
      %v1097 = vpop.xlane.xlu0 %1096
      %v1098 = vmul.f32 %v1091, %v856
      %v1099 = vmul.f32 %v1094, %v856
      %v1100 = vmul.f32 %v1097, %v856
      %v1101 = vsub.f32 %v1086, %v1098
      %v1102 = vsub.f32 %v1087, %v1099
      %v1103 = vsub.f32 %v1088, %v1100
      %v1104 = vmul.f32 %v1101, %v1101
      %v1105 = vmul.f32 %v1102, %v1102
      %v1106 = vmul.f32 %v1103, %v1103
      %v1107 = vsel %vm846, %v1104, 0.0
      %1108 = vadd.xlane.f32.xlu0 %v1107
      %v1109 = vpop.xlane.xlu0 %1108
      %v1110 = vsel %vm846, %v1105, 0.0
      %1111 = vadd.xlane.f32.xlu0 %v1110
      %v1112 = vpop.xlane.xlu0 %1111
      %v1113 = vsel %vm846, %v1106, 0.0
      %1114 = vadd.xlane.f32.xlu0 %v1113
      %v1115 = vpop.xlane.xlu0 %1114
      %v1116 = vmul.f32 %v1109, %v856
      %v1117 = vmul.f32 %v1112, %v856
      %v1118 = vmul.f32 %v1115, %v856
      %v1119 = vadd.f32 %v1116, 1e-05
      %v1120 = vadd.f32 %v1117, 1e-05
      %v1121 = vadd.f32 %v1118, 1e-05
      %v1122 = vrsqrt.pop %v1119
      %v1123 = vrsqrt.pop %v1120
      %v1124 = vrsqrt.pop %v1121
      %v1125 = vmul.f32 %v1101, %v1122
      %v1126 = vmul.f32 %v1102, %v1123
      %v1127 = vmul.f32 %v1103, %v1124
      %v1129 = vlaneseq
      %v1130 = vshrl.u32 %v1129, 7
      %v1131 = vsub.s32 0, %v1130
      %v1132 = vrot.slane %v754, %v1131
      %v1134 = vmul.f32 %v1125, %v1132
      %v1135 = vmul.f32 %v1126, %v1132
      %v1136 = vmul.f32 %v1127, %v1132
      %v1138 = vlaneseq
      %v1139 = vshrl.u32 %v1138, 7
      %v1140 = vsub.s32 0, %v1139
      %v1141 = vrot.slane %v755, %v1140
      %v1143 = vadd.f32 %v1134, %v1141
      %v1144 = vadd.f32 %v1135, %v1141
      %v1145 = vadd.f32 %v1136, %v1141
      %1146 = vst.msk [vmem:[%s698] sm:$0xff] %vm846, %v1143
      %1147 = vst.msk [vmem:[%s698 + $0x8] sm:$0xff] %vm846, %v1144
      %1148 = vst.msk [vmem:[%s698 + $0x10] sm:$0xff] %vm846, %v1145
      %v1149 = vpack.c.bf16 %v1144, %v1143
      %v1150 = vpack.c.bf16 %v1145, %v1145
      %v1151 = vld [vmem:[%s12] sm:$0xf]
      %v1152 = vld [vmem:[%s12 + $0x4] sm:$0xf]
      %v1153 = vld [vmem:[%s12 + $0x8] sm:$0xf]
      %v1154 = vld [vmem:[%s12 + $0xc] sm:$0xf]
      %v1155 = vld [vmem:[%s13] sm:$0x1]
      %v1157 = vlaneseq
      %v1158 = vshrl.u32 %v1157, 7
      %v1159 = vsub.s32 0, %v1158
      %v1160 = vrot.slane %v1155, %v1159
      %v1166 = vunpack.c.l.b16 %v1151
      %v1167 = vunpack.c.l.b16 %v1152
      %v1168 = vunpack.c.l.b16 %v1153
      %v1169 = vunpack.c.l.b16 %v1154
      %v1170 = vpack.c.b16 %v1167, %v1166
      %v1171 = vpack.c.b16 %v1169, %v1168
      %v1175 = vsel %vm846, %v1149, 0
      %v1178 = vsel %vm846, %v1150, 0
      %1180 = vmatprep.subr.bf16.mxu0 0
      %1181 = vmatpush1.bf16.msra.mxu0 0
      %1182 = vmatprep.subr.bf16.mxu0 0
      %1183 = vmatpush1.bf16.msra.mxu0 0
      %1184 = vmatprep.subr.bf16.mxu0 0
      %1185 = vmatpush1.bf16.msra.mxu0 0
      %1186 = vmatprep.subr.bf16.mxu0 0
      %1187 = vmatpush1.bf16.msra.mxu0 0
      %1188 = vmatprep.subr.bf16.mxu0 0
      %1189 = vmatpush1.bf16.msra.mxu0 0
      %1190 = vmatprep.subr.bf16.mxu0 0
      %1191 = vmatpush1.bf16.msra.mxu0 0
      %1192 = vmatprep.subr.bf16.mxu0 0
      %1193 = vmatpush1.bf16.msra.mxu0 %v1171
      %1194 = vmatprep.subr.bf16.mxu0 0
      %1195 = vmatpush1.bf16.msra.mxu0 %v1170
      %1196 = vmatprep.subr.bf16.mxu0 0
      %1197 = vmatpush2.bf16.msra.mxu0 0
      %1198 = vmatprep.subr.bf16.mxu0 0
      %1199 = vmatpush2.bf16.msra.mxu0 0
      %1200 = vmatprep.subr.bf16.mxu0 0
      %1201 = vmatpush2.bf16.msra.mxu0 0
      %1202 = vmatprep.subr.bf16.mxu0 0
      %1203 = vmatpush2.bf16.msra.mxu0 0
      %1204 = vmatprep.subr.bf16.mxu0 0
      %1205 = vmatpush2.bf16.msra.mxu0 0
      %1206 = vmatprep.subr.bf16.mxu0 0
      %1207 = vmatpush2.bf16.msra.mxu0 0
      %1208 = vmatprep.subr.bf16.mxu0 0
      %1209 = vmatpush2.bf16.msra.mxu0 0
      %1210 = vmatprep.subr.bf16.mxu0 0
      %1211 = vmatpush2.bf16.msra.mxu0 0
      %1212 = vmatprep.mubr.bf16.mxu0 0
      %1213 = vmatmul.mubr.bf16.gmra.mxu0 %v1175
      %v1214 = vpop.f32.mrf.mxu0
      %v1215 = vadd.f32 %v1160, %v1214
      %v1216 = vpop.f32.mrf.mxu0
      %v1217 = vpop.f32.mrf.mxu0
      %v1218 = vadd.f32 %v1160, %v1217
      %v1219 = vpop.f32.mrf.mxu0
      %1220 = vmatprep.mubr.bf16.mxu0 0
      %1221 = vmatmul.mubr.bf16.gmra.mxu0 %v1178
      %v1222 = vpop.f32.mrf.mxu0
      %v1223 = vadd.f32 %v1160, %v1222
      %v1224 = vpop.f32.mrf.mxu0
      %v1225 = vpop.f32.mrf.mxu0
      %v1226 = vpop.f32.mrf.mxu0
      %1227 = vdwg.mxu0
      %1228 = vst.msk [vmem:[%s703] sm:$0xff] %vm788, %v1215
      %1229 = vst.msk [vmem:[%s703 + $0x8] sm:$0xff] %vm788, %v1218
      %1230 = vst.msk [vmem:[%s703 + $0x10] sm:$0xff] %vm788, %v1223
      %v1231 = vld [vmem:[%s14] sm:$0xf]
      %v1232 = vld [vmem:[%s14 + $0x4] sm:$0xf]
      %v1233 = vld [vmem:[%s14 + $0x8] sm:$0xf]
      %v1234 = vld [vmem:[%s14 + $0xc] sm:$0xf]
      %v1235 = vld [vmem:[%s15] sm:$0x1]
      %v1237 = vlaneseq
      %v1238 = vshrl.u32 %v1237, 7
      %v1239 = vsub.s32 0, %v1238
      %v1240 = vrot.slane %v1235, %v1239
      %v1246 = vunpack.c.l.b16 %v1231
      %v1247 = vunpack.c.l.b16 %v1232
      %v1248 = vunpack.c.l.b16 %v1233
      %v1249 = vunpack.c.l.b16 %v1234
      %v1250 = vpack.c.b16 %v1247, %v1246
      %v1251 = vpack.c.b16 %v1249, %v1248
      %1254 = vmatprep.subr.bf16.mxu0 0
      %1255 = vmatpush1.bf16.msra.mxu0 0
      %1256 = vmatprep.subr.bf16.mxu0 0
      %1257 = vmatpush1.bf16.msra.mxu0 0
      %1258 = vmatprep.subr.bf16.mxu0 0
      %1259 = vmatpush1.bf16.msra.mxu0 0
      %1260 = vmatprep.subr.bf16.mxu0 0
      %1261 = vmatpush1.bf16.msra.mxu0 0
      %1262 = vmatprep.subr.bf16.mxu0 0
      %1263 = vmatpush1.bf16.msra.mxu0 0
      %1264 = vmatprep.subr.bf16.mxu0 0
      %1265 = vmatpush1.bf16.msra.mxu0 0
      %1266 = vmatprep.subr.bf16.mxu0 0
      %1267 = vmatpush1.bf16.msra.mxu0 %v1251
      %1268 = vmatprep.subr.bf16.mxu0 0
      %1269 = vmatpush1.bf16.msra.mxu0 %v1250
      %1270 = vmatprep.subr.bf16.mxu0 0
      %1271 = vmatpush2.bf16.msra.mxu0 0
      %1272 = vmatprep.subr.bf16.mxu0 0
      %1273 = vmatpush2.bf16.msra.mxu0 0
      %1274 = vmatprep.subr.bf16.mxu0 0
      %1275 = vmatpush2.bf16.msra.mxu0 0
      %1276 = vmatprep.subr.bf16.mxu0 0
      %1277 = vmatpush2.bf16.msra.mxu0 0
      %1278 = vmatprep.subr.bf16.mxu0 0
      %1279 = vmatpush2.bf16.msra.mxu0 0
      %1280 = vmatprep.subr.bf16.mxu0 0
      %1281 = vmatpush2.bf16.msra.mxu0 0
      %1282 = vmatprep.subr.bf16.mxu0 0
      %1283 = vmatpush2.bf16.msra.mxu0 0
      %1284 = vmatprep.subr.bf16.mxu0 0
      %1285 = vmatpush2.bf16.msra.mxu0 0
      %1286 = vmatprep.mubr.bf16.mxu0 0
      %1287 = vmatmul.mubr.bf16.gmra.mxu0 %v1175
      %v1288 = vpop.f32.mrf.mxu0
      %v1289 = vadd.f32 %v1240, %v1288
      %v1290 = vpop.f32.mrf.mxu0
      %v1291 = vpop.f32.mrf.mxu0
      %v1292 = vadd.f32 %v1240, %v1291
      %v1293 = vpop.f32.mrf.mxu0
      %1294 = vmatprep.mubr.bf16.mxu0 0
      %1295 = vmatmul.mubr.bf16.gmra.mxu0 %v1178
      %v1296 = vpop.f32.mrf.mxu0
      %v1297 = vadd.f32 %v1240, %v1296
      %v1298 = vpop.f32.mrf.mxu0
      %v1299 = vpop.f32.mrf.mxu0
      %v1300 = vpop.f32.mrf.mxu0
      %1301 = vdwg.mxu0
      %1302 = vst.msk [vmem:[%s708] sm:$0xff] %vm788, %v1289
      %1303 = vst.msk [vmem:[%s708 + $0x8] sm:$0xff] %vm788, %v1292
      %1304 = vst.msk [vmem:[%s708 + $0x10] sm:$0xff] %vm788, %v1297
      %v1305 = vld [vmem:[%s16] sm:$0xf]
      %v1306 = vld [vmem:[%s16 + $0x4] sm:$0xf]
      %v1307 = vld [vmem:[%s16 + $0x8] sm:$0xf]
      %v1308 = vld [vmem:[%s16 + $0xc] sm:$0xf]
      %v1309 = vld [vmem:[%s17] sm:$0x1]
      %v1311 = vlaneseq
      %v1312 = vshrl.u32 %v1311, 7
      %v1313 = vsub.s32 0, %v1312
      %v1314 = vrot.slane %v1309, %v1313
      %v1320 = vunpack.c.l.b16 %v1305
      %v1321 = vunpack.c.l.b16 %v1306
      %v1322 = vunpack.c.l.b16 %v1307
      %v1323 = vunpack.c.l.b16 %v1308
      %v1324 = vpack.c.b16 %v1321, %v1320
      %v1325 = vpack.c.b16 %v1323, %v1322
      %1328 = vmatprep.subr.bf16.mxu0 0
      %1329 = vmatpush1.bf16.msra.mxu0 0
      %1330 = vmatprep.subr.bf16.mxu0 0
      %1331 = vmatpush1.bf16.msra.mxu0 0
      %1332 = vmatprep.subr.bf16.mxu0 0
      %1333 = vmatpush1.bf16.msra.mxu0 0
      %1334 = vmatprep.subr.bf16.mxu0 0
      %1335 = vmatpush1.bf16.msra.mxu0 0
      %1336 = vmatprep.subr.bf16.mxu0 0
      %1337 = vmatpush1.bf16.msra.mxu0 0
      %1338 = vmatprep.subr.bf16.mxu0 0
      %1339 = vmatpush1.bf16.msra.mxu0 0
      %1340 = vmatprep.subr.bf16.mxu0 0
      %1341 = vmatpush1.bf16.msra.mxu0 %v1325
      %1342 = vmatprep.subr.bf16.mxu0 0
      %1343 = vmatpush1.bf16.msra.mxu0 %v1324
      %1344 = vmatprep.subr.bf16.mxu0 0
      %1345 = vmatpush2.bf16.msra.mxu0 0
      %1346 = vmatprep.subr.bf16.mxu0 0
      %1347 = vmatpush2.bf16.msra.mxu0 0
      %1348 = vmatprep.subr.bf16.mxu0 0
      %1349 = vmatpush2.bf16.msra.mxu0 0
      %1350 = vmatprep.subr.bf16.mxu0 0
      %1351 = vmatpush2.bf16.msra.mxu0 0
      %1352 = vmatprep.subr.bf16.mxu0 0
      %1353 = vmatpush2.bf16.msra.mxu0 0
      %1354 = vmatprep.subr.bf16.mxu0 0
      %1355 = vmatpush2.bf16.msra.mxu0 0
      %1356 = vmatprep.subr.bf16.mxu0 0
      %1357 = vmatpush2.bf16.msra.mxu0 0
      %1358 = vmatprep.subr.bf16.mxu0 0
      %1359 = vmatpush2.bf16.msra.mxu0 0
      %1360 = vmatprep.mubr.bf16.mxu0 0
      %1361 = vmatmul.mubr.bf16.gmra.mxu0 %v1175
      %v1362 = vpop.f32.mrf.mxu0
      %v1363 = vadd.f32 %v1314, %v1362
      %v1364 = vpop.f32.mrf.mxu0
      %v1365 = vpop.f32.mrf.mxu0
      %v1366 = vadd.f32 %v1314, %v1365
      %v1367 = vpop.f32.mrf.mxu0
      %1368 = vmatprep.mubr.bf16.mxu0 0
      %1369 = vmatmul.mubr.bf16.gmra.mxu0 %v1178
      %v1370 = vpop.f32.mrf.mxu0
      %v1371 = vadd.f32 %v1314, %v1370
      %v1372 = vpop.f32.mrf.mxu0
      %v1373 = vpop.f32.mrf.mxu0
      %v1374 = vpop.f32.mrf.mxu0
      %1375 = vdwg.mxu0
      %1376 = vst.msk [vmem:[%s713] sm:$0xff] %vm788, %v1363
      %1377 = vst.msk [vmem:[%s713 + $0x8] sm:$0xff] %vm788, %v1366
      %1378 = vst.msk [vmem:[%s713 + $0x10] sm:$0xff] %vm788, %v1371
      %p1379 = scmp.lt.s32.totalorder %s33, 1
      %s1380 = scalar_select %p1379, %s33, 1
      %s1381 = smul.addr %s1380, 3
      %s1382 = smul.addr %s1381, 8
      %s1383 = scalar_lea.vmem %s18, %s1382
      %p1384 = scmp.lt.s32.totalorder %s33, 1
      %s1385 = scalar_select %p1384, %s33, 1
      %s1386 = smul.addr %s1385, 3
      %s1387 = smul.addr %s1386, 8
      %s1388 = scalar_lea.vmem %s19, %s1387
      %p1389 = scmp.lt.s32.totalorder %s33, 1
      %s1390 = scalar_select %p1389, %s33, 1
      %s1391 = smul.addr %s1390, 3
      %s1392 = smul.addr %s1391, 8
      %s1393 = scalar_lea.vmem %s20, %s1392
      %p1394 = scmp.lt.s32.totalorder %s33, 1
      %s1395 = scalar_select %p1394, %s33, 1
      %s1396 = smul.addr %s1395, 3
      %s1397 = smul.addr %s1396, 8
      %s1398 = scalar_lea.vmem %s21, %s1397
      // Predicated region
      $region93: #{decision_transformer.8} parent=91 // pred_check
        %p1399 = pneg %p439
      $region94: #{decision_transformer.8} parent=91 // pred_check_branch
        %1401 = sbr.rel (%p1399) target = $region96
      $region95: #{decision_transformer.8} parent=91 // pred_region
        _
      $region96: #{decision_transformer.8} parent=91 // pred_fallthru
        _
      // Predicated region
      $region97: #{decision_transformer.8} parent=91 // pred_check
        %p1402 = pneg %p465
      $region98: #{decision_transformer.8} parent=91 // pred_check_branch
        %1404 = sbr.rel (%p1402) target = $region100
      $region99: #{decision_transformer.8} parent=91 // pred_region
        _
      $region100: #{decision_transformer.8} parent=91 // pred_fallthru
        _
      // Predicated region
      $region101: #{decision_transformer.8} parent=91 // pred_check
        %p1405 = pneg %p491
      $region102: #{decision_transformer.8} parent=91 // pred_check_branch
        %1407 = sbr.rel (%p1405) target = $region104
      $region103: #{decision_transformer.8} parent=91 // pred_region
        _
      $region104: #{decision_transformer.8} parent=91 // pred_fallthru
        _
      // Predicated region
      $region105: #{decision_transformer.8} parent=91 // pred_check
        %p1408 = pneg %p517
      $region106: #{decision_transformer.8} parent=91 // pred_check_branch
        %1410 = sbr.rel (%p1408) target = $region108
      $region107: #{decision_transformer.8} parent=91 // pred_region
        _
      $region108: #{decision_transformer.8} parent=91 // pred_fallthru
        _
    $region92: #{decision_transformer.8} parent=5 // pred_fallthru
      _
    %p1411 = scmp.le.s32.totalorder 2, %s28
    // Predicated region
    $region109: #{decision_transformer.8} parent=5 // pred_check
      %p1412 = pneg %p1411
    $region110: #{decision_transformer.8} parent=5 // pred_check_branch
      %1414 = sbr.rel (%p1412) target = $region112
    $region111: #{decision_transformer.8} parent=5 // pred_region
      %s1415 = ssub.s32 %s28, 2
      // Predicated region
      $region113: #{decision_transformer.8} parent=111 // pred_check
        %p1416 = pneg %p445
      $region114: #{decision_transformer.8} parent=111 // pred_check_branch
        %1418 = sbr.rel (%p1416) target = $region116
      $region115: #{decision_transformer.8} parent=111 // pred_region
        %p1419 = scmp.lt.s32.totalorder %s34, 1
        %s1420 = scalar_select %p1419, %s34, 1
        %s1421 = smul.addr %s1420, 3
        %s1422 = smul.addr %s1421, 8
        %s1423 = scalar_lea.vmem %s18, %s1422
      $region116: #{decision_transformer.8} parent=111 // pred_fallthru
        _
      // Predicated region
      $region117: #{decision_transformer.8} parent=111 // pred_check
        %p1424 = pneg %p471
      $region118: #{decision_transformer.8} parent=111 // pred_check_branch
        %1426 = sbr.rel (%p1424) target = $region120
      $region119: #{decision_transformer.8} parent=111 // pred_region
        %p1427 = scmp.lt.s32.totalorder %s34, 1
        %s1428 = scalar_select %p1427, %s34, 1
        %s1429 = smul.addr %s1428, 3
        %s1430 = smul.addr %s1429, 8
        %s1431 = scalar_lea.vmem %s19, %s1430
      $region120: #{decision_transformer.8} parent=111 // pred_fallthru
        _
      // Predicated region
      $region121: #{decision_transformer.8} parent=111 // pred_check
        %p1432 = pneg %p497
      $region122: #{decision_transformer.8} parent=111 // pred_check_branch
        %1434 = sbr.rel (%p1432) target = $region124
      $region123: #{decision_transformer.8} parent=111 // pred_region
        %p1435 = scmp.lt.s32.totalorder %s34, 1
        %s1436 = scalar_select %p1435, %s34, 1
        %s1437 = smul.addr %s1436, 3
        %s1438 = smul.addr %s1437, 8
        %s1439 = scalar_lea.vmem %s20, %s1438
      $region124: #{decision_transformer.8} parent=111 // pred_fallthru
        _
      // Predicated region
      $region125: #{decision_transformer.8} parent=111 // pred_check
        %p1440 = pneg %p523
      $region126: #{decision_transformer.8} parent=111 // pred_check_branch
        %1442 = sbr.rel (%p1440) target = $region128
      $region127: #{decision_transformer.8} parent=111 // pred_region
        %p1443 = scmp.lt.s32.totalorder %s34, 1
        %s1444 = scalar_select %p1443, %s34, 1
        %s1445 = smul.addr %s1444, 3
        %s1446 = smul.addr %s1445, 8
        %s1447 = scalar_lea.vmem %s21, %s1446
      $region128: #{decision_transformer.8} parent=111 // pred_fallthru
        _
    $region112: #{decision_transformer.8} parent=5 // pred_fallthru
      _
  $region6: #{decision_transformer.8} parent=0 // loop_footer
    %s32 = sadd.s32 1, %s28
  $region7: #{decision_transformer.8} parent=0 // loop_footer_branch
    %27 = sbr.rel target = $region3
  $region8: #{decision_transformer.8} parent=0 // loop_exit
    _

// kernel: decision_transformer.6
$region0: #{decision_transformer.6}
  #allocation0 [shape = 'u32[]', space=smem, size = 0x4, offset = 0x4, fixed_abs, tag = 'smem constant byte address 0x4 - core index']
  #allocation1 [shape = 'u32[144,128]{1,0:T(1,128)}', space=vmem, size = 0x12000, scoped, tag = 'internal scratch']
  %s0 = inlined_call_operand.vmem [shape: f32[2,8,32], index: 0, kind: input, shape index: {}]
  %s1 = inlined_call_operand.vmem [shape: f32[2,8,32], index: 1, kind: input, shape index: {}]
  %s2 = inlined_call_operand.vmem [shape: f32[2,8,1], index: 2, kind: input, shape index: {}]
  %s3 = inlined_call_operand.vmem [shape: f32[2,8,1024], index: 3, kind: input, shape index: {}]
  %s4 = inlined_call_operand.vmem [shape: f32[1,32], index: 4, kind: input, shape index: {}]
  %s5 = inlined_call_operand.vmem [shape: f32[1,32], index: 5, kind: input, shape index: {}]
  %s6 = inlined_call_operand.vmem [shape: bf16[1024,32], index: 6, kind: input, shape index: {}]
  %s7 = inlined_call_operand.vmem [shape: f32[1,32], index: 7, kind: input, shape index: {}]
  %s8 = inlined_call_operand.vmem [shape: f32[1,32], index: 8, kind: input, shape index: {}]
  %s9 = inlined_call_operand.vmem [shape: f32[1,32], index: 9, kind: input, shape index: {}]
  %s10 = inlined_call_operand.vmem [shape: bf16[32,64], index: 10, kind: input, shape index: {}]
  %s11 = inlined_call_operand.vmem [shape: f32[1,64], index: 11, kind: input, shape index: {}]
  %s12 = inlined_call_operand.vmem [shape: bf16[32,64], index: 12, kind: input, shape index: {}]
  %s13 = inlined_call_operand.vmem [shape: f32[1,64], index: 13, kind: input, shape index: {}]
  %s14 = inlined_call_operand.vmem [shape: bf16[32,64], index: 14, kind: input, shape index: {}]
  %s15 = inlined_call_operand.vmem [shape: f32[1,64], index: 15, kind: input, shape index: {}]
  %s16 = inlined_call_operand.vmem [shape: f32[2,8,3,32], index: 16, kind: output, shape index: {0}]
  %s17 = inlined_call_operand.vmem [shape: f32[2,8,3,64], index: 17, kind: output, shape index: {1}]
  %s18 = inlined_call_operand.vmem [shape: f32[2,8,3,64], index: 18, kind: output, shape index: {2}]
  %s19 = inlined_call_operand.vmem [shape: f32[2,8,3,64], index: 19, kind: output, shape index: {3}]
  %20 = xla_tuple %s16, %s17, %s18, %s19
  %s21 = sld [smem:[#allocation0]]
  $region121: #{decision_transformer.6} parent=0
    _
  %s23 = ssub.s32 1, %s21
  %s24 = scalar_select 0, %s23, %s21
  loop: start=0, step=1, limit=4
  $region2: #{decision_transformer.6} parent=0 // loop_pre_header
    _
  $region3: #{decision_transformer.6} parent=0 // loop_header
    %s26 = sphi 0, %s30
    %p27 = scmp.ge.s32.totalorder %s26, 4
    %s36 = sphi 0, %s38
    %s39 = sphi 0, %s36
    %s40 = sphi 0, %s39
    %s56 = sphi 0, %s40
    %s62 = sphi 0, %s64
    %s65 = sphi 0, %s62
    %s66 = sphi 0, %s65
    %s82 = sphi 0, %s66
    %s88 = sphi 0, %s90
    %s91 = sphi 0, %s88
    %s92 = sphi 0, %s91
    %s108 = sphi 0, %s92
    %s114 = sphi 0, %s116
    %s117 = sphi 0, %s114
    %s118 = sphi 0, %s117
    %s134 = sphi 0, %s118
    %s138 = sphi 0, %s138
    %s140 = sphi 0, %s138
    %s141 = sphi 0, %s140
    %s155 = sphi 0, %s141
    %s159 = sphi 0, %s159
    %s161 = sphi 0, %s159
    %s162 = sphi 0, %s161
    %s176 = sphi 0, %s162
    %s180 = sphi 0, %s180
    %s182 = sphi 0, %s180
    %s183 = sphi 0, %s182
    %s197 = sphi 0, %s183
    %s201 = sphi 0, %s201
    %s203 = sphi 0, %s201
    %s204 = sphi 0, %s203
    %s218 = sphi 0, %s204
    %s222 = sphi 0, %s222
    %s224 = sphi 0, %s222
    %s225 = sphi 0, %s224
    %s239 = sphi 0, %s225
    %s243 = sphi 0, %s243
    %s245 = sphi 0, %s243
    %s246 = sphi 0, %s245
    %s260 = sphi 0, %s246
    %s264 = sphi 0, %s264
    %s266 = sphi 0, %s264
    %s267 = sphi 0, %s266
    %s281 = sphi 0, %s267
    %s285 = sphi 0, %s285
    %s287 = sphi 0, %s285
    %s288 = sphi 0, %s287
    %s302 = sphi 0, %s288
    %s306 = sphi 0, %s306
    %s308 = sphi 0, %s306
    %s309 = sphi 0, %s308
    %s323 = sphi 0, %s309
    %s327 = sphi 0, %s327
    %s329 = sphi 0, %s327
    %s330 = sphi 0, %s329
    %s344 = sphi 0, %s330
    %s348 = sphi 0, %s348
    %s350 = sphi 0, %s348
    %s351 = sphi 0, %s350
    %s365 = sphi 0, %s351
    %s369 = sphi 0, %s369
    %s371 = sphi 0, %s369
    %s372 = sphi 0, %s371
    %s386 = sphi 0, %s372
    %s392 = sphi 0, %s394
    %s395 = sphi 0, %s392
    %s396 = sphi 0, %s395
    %s412 = sphi 0, %s396
    %s418 = sphi 0, %s420
    %s421 = sphi 0, %s418
    %s422 = sphi 0, %s421
    %s438 = sphi 0, %s422
    %s444 = sphi 0, %s446
    %s447 = sphi 0, %s444
    %s448 = sphi 0, %s447
    %s464 = sphi 0, %s448
    %s470 = sphi 0, %s472
    %s473 = sphi 0, %s470
    %s474 = sphi 0, %s473
    %s490 = sphi 0, %s474
  $region4: #{decision_transformer.6} parent=0 // loop_header_branch
    %29 = sbr.rel (%p27) target = $region8
  $region5: #{decision_transformer.6} parent=0 // loop_body
    %s31 = ssub.s32 %s26, 1
    %s32 = ssub.s32 %s26, 2
    %s33 = sadd.s32 %s26, 1
    %s34 = ssub.s32 %s26, %s33
    %p35 = scmp.eq.s32.totalorder %s34, 0
    %s37 = sadd.s32 %s36, 1
    %s38 = scalar_select %p35, %s36, %s37
    %p41 = pneg %p35
    %p42 = scmp.eq.s32.totalorder %s26, 1
    %p43 = por %p41, %p42
    %p44 = scmp.ne.s32.totalorder %s36, %s39
    %p45 = scmp.eq.s32.totalorder %s26, 0
    %p46 = por %p44, %p45
    %p47 = scmp.ne.s32.totalorder %s36, %s39
    %p48 = scmp.eq.s32.totalorder %s31, 1
    %p49 = por %p47, %p48
    %p50 = scmp.ne.s32.totalorder %s39, %s40
    %p51 = scmp.eq.s32.totalorder %s31, 0
    %p52 = por %p50, %p51
    %p53 = scmp.ne.s32.totalorder %s39, %s40
    %p54 = scmp.eq.s32.totalorder %s32, 1
    %p55 = por %p53, %p54
    %p57 = scmp.ne.s32.totalorder %s40, %s56
    %p58 = scmp.eq.s32.totalorder %s32, 0
    %p59 = por %p57, %p58
    %s60 = ssub.s32 %s26, %s33
    %p61 = scmp.eq.s32.totalorder %s60, 0
    %s63 = sadd.s32 %s62, 1
    %s64 = scalar_select %p61, %s62, %s63
    %p67 = pneg %p61
    %p68 = scmp.eq.s32.totalorder %s26, 1
    %p69 = por %p67, %p68
    %p70 = scmp.ne.s32.totalorder %s62, %s65
    %p71 = scmp.eq.s32.totalorder %s26, 0
    %p72 = por %p70, %p71
    %p73 = scmp.ne.s32.totalorder %s62, %s65
    %p74 = scmp.eq.s32.totalorder %s31, 1
    %p75 = por %p73, %p74
    %p76 = scmp.ne.s32.totalorder %s65, %s66
    %p77 = scmp.eq.s32.totalorder %s31, 0
    %p78 = por %p76, %p77
    %p79 = scmp.ne.s32.totalorder %s65, %s66
    %p80 = scmp.eq.s32.totalorder %s32, 1
    %p81 = por %p79, %p80
    %p83 = scmp.ne.s32.totalorder %s66, %s82
    %p84 = scmp.eq.s32.totalorder %s32, 0
    %p85 = por %p83, %p84
    %s86 = ssub.s32 %s26, %s33
    %p87 = scmp.eq.s32.totalorder %s86, 0
    %s89 = sadd.s32 %s88, 1
    %s90 = scalar_select %p87, %s88, %s89
    %p93 = pneg %p87
    %p94 = scmp.eq.s32.totalorder %s26, 1
    %p95 = por %p93, %p94
    %p96 = scmp.ne.s32.totalorder %s88, %s91
    %p97 = scmp.eq.s32.totalorder %s26, 0
    %p98 = por %p96, %p97
    %p99 = scmp.ne.s32.totalorder %s88, %s91
    %p100 = scmp.eq.s32.totalorder %s31, 1
    %p101 = por %p99, %p100
    %p102 = scmp.ne.s32.totalorder %s91, %s92
    %p103 = scmp.eq.s32.totalorder %s31, 0
    %p104 = por %p102, %p103
    %p105 = scmp.ne.s32.totalorder %s91, %s92
    %p106 = scmp.eq.s32.totalorder %s32, 1
    %p107 = por %p105, %p106
    %p109 = scmp.ne.s32.totalorder %s92, %s108
    %p110 = scmp.eq.s32.totalorder %s32, 0
    %p111 = por %p109, %p110
    %s112 = ssub.s32 %s26, %s33
    %p113 = scmp.eq.s32.totalorder %s112, 0
    %s115 = sadd.s32 %s114, 1
    %s116 = scalar_select %p113, %s114, %s115
    %p119 = pneg %p113
    %p120 = scmp.eq.s32.totalorder %s26, 1
    %p121 = por %p119, %p120
    %p122 = scmp.ne.s32.totalorder %s114, %s117
    %p123 = scmp.eq.s32.totalorder %s26, 0
    %p124 = por %p122, %p123
    %p125 = scmp.ne.s32.totalorder %s114, %s117
    %p126 = scmp.eq.s32.totalorder %s31, 1
    %p127 = por %p125, %p126
    %p128 = scmp.ne.s32.totalorder %s117, %s118
    %p129 = scmp.eq.s32.totalorder %s31, 0
    %p130 = por %p128, %p129
    %p131 = scmp.ne.s32.totalorder %s117, %s118
    %p132 = scmp.eq.s32.totalorder %s32, 1
    %p133 = por %p131, %p132
    %p135 = scmp.ne.s32.totalorder %s118, %s134
    %p136 = scmp.eq.s32.totalorder %s32, 0
    %p137 = por %p135, %p136
    %s139 = sadd.s32 %s138, 1
    %p142 = scmp.eq.s32.totalorder %s26, 1
    %p143 = scmp.ne.s32.totalorder %s138, %s140
    %p144 = scmp.eq.s32.totalorder %s26, 0
    %p145 = por %p143, %p144
    %p146 = scmp.ne.s32.totalorder %s138, %s140
    %p147 = scmp.eq.s32.totalorder %s31, 1
    %p148 = por %p146, %p147
    %p149 = scmp.ne.s32.totalorder %s140, %s141
    %p150 = scmp.eq.s32.totalorder %s31, 0
    %p151 = por %p149, %p150
    %p152 = scmp.ne.s32.totalorder %s140, %s141
    %p153 = scmp.eq.s32.totalorder %s32, 1
    %p154 = por %p152, %p153
    %p156 = scmp.ne.s32.totalorder %s141, %s155
    %p157 = scmp.eq.s32.totalorder %s32, 0
    %p158 = por %p156, %p157
    %s160 = sadd.s32 %s159, 1
    %p163 = scmp.eq.s32.totalorder %s26, 1
    %p164 = scmp.ne.s32.totalorder %s159, %s161
    %p165 = scmp.eq.s32.totalorder %s26, 0
    %p166 = por %p164, %p165
    %p167 = scmp.ne.s32.totalorder %s159, %s161
    %p168 = scmp.eq.s32.totalorder %s31, 1
    %p169 = por %p167, %p168
    %p170 = scmp.ne.s32.totalorder %s161, %s162
    %p171 = scmp.eq.s32.totalorder %s31, 0
    %p172 = por %p170, %p171
    %p173 = scmp.ne.s32.totalorder %s161, %s162
    %p174 = scmp.eq.s32.totalorder %s32, 1
    %p175 = por %p173, %p174
    %p177 = scmp.ne.s32.totalorder %s162, %s176
    %p178 = scmp.eq.s32.totalorder %s32, 0
    %p179 = por %p177, %p178
    %s181 = sadd.s32 %s180, 1
    %p184 = scmp.eq.s32.totalorder %s26, 1
    %p185 = scmp.ne.s32.totalorder %s180, %s182
    %p186 = scmp.eq.s32.totalorder %s26, 0
    %p187 = por %p185, %p186
    %p188 = scmp.ne.s32.totalorder %s180, %s182
    %p189 = scmp.eq.s32.totalorder %s31, 1
    %p190 = por %p188, %p189
    %p191 = scmp.ne.s32.totalorder %s182, %s183
    %p192 = scmp.eq.s32.totalorder %s31, 0
    %p193 = por %p191, %p192
    %p194 = scmp.ne.s32.totalorder %s182, %s183
    %p195 = scmp.eq.s32.totalorder %s32, 1
    %p196 = por %p194, %p195
    %p198 = scmp.ne.s32.totalorder %s183, %s197
    %p199 = scmp.eq.s32.totalorder %s32, 0
    %p200 = por %p198, %p199
    %s202 = sadd.s32 %s201, 1
    %p205 = scmp.eq.s32.totalorder %s26, 1
    %p206 = scmp.ne.s32.totalorder %s201, %s203
    %p207 = scmp.eq.s32.totalorder %s26, 0
    %p208 = por %p206, %p207
    %p209 = scmp.ne.s32.totalorder %s201, %s203
    %p210 = scmp.eq.s32.totalorder %s31, 1
    %p211 = por %p209, %p210
    %p212 = scmp.ne.s32.totalorder %s203, %s204
    %p213 = scmp.eq.s32.totalorder %s31, 0
    %p214 = por %p212, %p213
    %p215 = scmp.ne.s32.totalorder %s203, %s204
    %p216 = scmp.eq.s32.totalorder %s32, 1
    %p217 = por %p215, %p216
    %p219 = scmp.ne.s32.totalorder %s204, %s218
    %p220 = scmp.eq.s32.totalorder %s32, 0
    %p221 = por %p219, %p220
    %s223 = sadd.s32 %s222, 1
    %p226 = scmp.eq.s32.totalorder %s26, 1
    %p227 = scmp.ne.s32.totalorder %s222, %s224
    %p228 = scmp.eq.s32.totalorder %s26, 0
    %p229 = por %p227, %p228
    %p230 = scmp.ne.s32.totalorder %s222, %s224
    %p231 = scmp.eq.s32.totalorder %s31, 1
    %p232 = por %p230, %p231
    %p233 = scmp.ne.s32.totalorder %s224, %s225
    %p234 = scmp.eq.s32.totalorder %s31, 0
    %p235 = por %p233, %p234
    %p236 = scmp.ne.s32.totalorder %s224, %s225
    %p237 = scmp.eq.s32.totalorder %s32, 1
    %p238 = por %p236, %p237
    %p240 = scmp.ne.s32.totalorder %s225, %s239
    %p241 = scmp.eq.s32.totalorder %s32, 0
    %p242 = por %p240, %p241
    %s244 = sadd.s32 %s243, 1
    %p247 = scmp.eq.s32.totalorder %s26, 1
    %p248 = scmp.ne.s32.totalorder %s243, %s245
    %p249 = scmp.eq.s32.totalorder %s26, 0
    %p250 = por %p248, %p249
    %p251 = scmp.ne.s32.totalorder %s243, %s245
    %p252 = scmp.eq.s32.totalorder %s31, 1
    %p253 = por %p251, %p252
    %p254 = scmp.ne.s32.totalorder %s245, %s246
    %p255 = scmp.eq.s32.totalorder %s31, 0
    %p256 = por %p254, %p255
    %p257 = scmp.ne.s32.totalorder %s245, %s246
    %p258 = scmp.eq.s32.totalorder %s32, 1
    %p259 = por %p257, %p258
    %p261 = scmp.ne.s32.totalorder %s246, %s260
    %p262 = scmp.eq.s32.totalorder %s32, 0
    %p263 = por %p261, %p262
    %s265 = sadd.s32 %s264, 1
    %p268 = scmp.eq.s32.totalorder %s26, 1
    %p269 = scmp.ne.s32.totalorder %s264, %s266
    %p270 = scmp.eq.s32.totalorder %s26, 0
    %p271 = por %p269, %p270
    %p272 = scmp.ne.s32.totalorder %s264, %s266
    %p273 = scmp.eq.s32.totalorder %s31, 1
    %p274 = por %p272, %p273
    %p275 = scmp.ne.s32.totalorder %s266, %s267
    %p276 = scmp.eq.s32.totalorder %s31, 0
    %p277 = por %p275, %p276
    %p278 = scmp.ne.s32.totalorder %s266, %s267
    %p279 = scmp.eq.s32.totalorder %s32, 1
    %p280 = por %p278, %p279
    %p282 = scmp.ne.s32.totalorder %s267, %s281
    %p283 = scmp.eq.s32.totalorder %s32, 0
    %p284 = por %p282, %p283
    %s286 = sadd.s32 %s285, 1
    %p289 = scmp.eq.s32.totalorder %s26, 1
    %p290 = scmp.ne.s32.totalorder %s285, %s287
    %p291 = scmp.eq.s32.totalorder %s26, 0
    %p292 = por %p290, %p291
    %p293 = scmp.ne.s32.totalorder %s285, %s287
    %p294 = scmp.eq.s32.totalorder %s31, 1
    %p295 = por %p293, %p294
    %p296 = scmp.ne.s32.totalorder %s287, %s288
    %p297 = scmp.eq.s32.totalorder %s31, 0
    %p298 = por %p296, %p297
    %p299 = scmp.ne.s32.totalorder %s287, %s288
    %p300 = scmp.eq.s32.totalorder %s32, 1
    %p301 = por %p299, %p300
    %p303 = scmp.ne.s32.totalorder %s288, %s302
    %p304 = scmp.eq.s32.totalorder %s32, 0
    %p305 = por %p303, %p304
    %s307 = sadd.s32 %s306, 1
    %p310 = scmp.eq.s32.totalorder %s26, 1
    %p311 = scmp.ne.s32.totalorder %s306, %s308
    %p312 = scmp.eq.s32.totalorder %s26, 0
    %p313 = por %p311, %p312
    %p314 = scmp.ne.s32.totalorder %s306, %s308
    %p315 = scmp.eq.s32.totalorder %s31, 1
    %p316 = por %p314, %p315
    %p317 = scmp.ne.s32.totalorder %s308, %s309
    %p318 = scmp.eq.s32.totalorder %s31, 0
    %p319 = por %p317, %p318
    %p320 = scmp.ne.s32.totalorder %s308, %s309
    %p321 = scmp.eq.s32.totalorder %s32, 1
    %p322 = por %p320, %p321
    %p324 = scmp.ne.s32.totalorder %s309, %s323
    %p325 = scmp.eq.s32.totalorder %s32, 0
    %p326 = por %p324, %p325
    %s328 = sadd.s32 %s327, 1
    %p331 = scmp.eq.s32.totalorder %s26, 1
    %p332 = scmp.ne.s32.totalorder %s327, %s329
    %p333 = scmp.eq.s32.totalorder %s26, 0
    %p334 = por %p332, %p333
    %p335 = scmp.ne.s32.totalorder %s327, %s329
    %p336 = scmp.eq.s32.totalorder %s31, 1
    %p337 = por %p335, %p336
    %p338 = scmp.ne.s32.totalorder %s329, %s330
    %p339 = scmp.eq.s32.totalorder %s31, 0
    %p340 = por %p338, %p339
    %p341 = scmp.ne.s32.totalorder %s329, %s330
    %p342 = scmp.eq.s32.totalorder %s32, 1
    %p343 = por %p341, %p342
    %p345 = scmp.ne.s32.totalorder %s330, %s344
    %p346 = scmp.eq.s32.totalorder %s32, 0
    %p347 = por %p345, %p346
    %s349 = sadd.s32 %s348, 1
    %p352 = scmp.eq.s32.totalorder %s26, 1
    %p353 = scmp.ne.s32.totalorder %s348, %s350
    %p354 = scmp.eq.s32.totalorder %s26, 0
    %p355 = por %p353, %p354
    %p356 = scmp.ne.s32.totalorder %s348, %s350
    %p357 = scmp.eq.s32.totalorder %s31, 1
    %p358 = por %p356, %p357
    %p359 = scmp.ne.s32.totalorder %s350, %s351
    %p360 = scmp.eq.s32.totalorder %s31, 0
    %p361 = por %p359, %p360
    %p362 = scmp.ne.s32.totalorder %s350, %s351
    %p363 = scmp.eq.s32.totalorder %s32, 1
    %p364 = por %p362, %p363
    %p366 = scmp.ne.s32.totalorder %s351, %s365
    %p367 = scmp.eq.s32.totalorder %s32, 0
    %p368 = por %p366, %p367
    %s370 = sadd.s32 %s369, 1
    %p373 = scmp.eq.s32.totalorder %s26, 1
    %p374 = scmp.ne.s32.totalorder %s369, %s371
    %p375 = scmp.eq.s32.totalorder %s26, 0
    %p376 = por %p374, %p375
    %p377 = scmp.ne.s32.totalorder %s369, %s371
    %p378 = scmp.eq.s32.totalorder %s31, 1
    %p379 = por %p377, %p378
    %p380 = scmp.ne.s32.totalorder %s371, %s372
    %p381 = scmp.eq.s32.totalorder %s31, 0
    %p382 = por %p380, %p381
    %p383 = scmp.ne.s32.totalorder %s371, %s372
    %p384 = scmp.eq.s32.totalorder %s32, 1
    %p385 = por %p383, %p384
    %p387 = scmp.ne.s32.totalorder %s372, %s386
    %p388 = scmp.eq.s32.totalorder %s32, 0
    %p389 = por %p387, %p388
    %s390 = ssub.s32 %s26, %s33
    %p391 = scmp.eq.s32.totalorder %s390, 0
    %s393 = sadd.s32 %s392, 1
    %s394 = scalar_select %p391, %s392, %s393
    %p397 = pneg %p391
    %p398 = scmp.eq.s32.totalorder %s26, 1
    %p399 = por %p397, %p398
    %p400 = scmp.ne.s32.totalorder %s392, %s395
    %p401 = scmp.eq.s32.totalorder %s26, 0
    %p402 = por %p400, %p401
    %p403 = scmp.ne.s32.totalorder %s392, %s395
    %p404 = scmp.eq.s32.totalorder %s31, 1
    %p405 = por %p403, %p404
    %p406 = scmp.ne.s32.totalorder %s395, %s396
    %p407 = scmp.eq.s32.totalorder %s31, 0
    %p408 = por %p406, %p407
    %p409 = scmp.ne.s32.totalorder %s395, %s396
    %p410 = scmp.eq.s32.totalorder %s32, 1
    %p411 = por %p409, %p410
    %p413 = scmp.ne.s32.totalorder %s396, %s412
    %p414 = scmp.eq.s32.totalorder %s32, 0
    %p415 = por %p413, %p414
    %s416 = ssub.s32 %s26, %s33
    %p417 = scmp.eq.s32.totalorder %s416, 0
    %s419 = sadd.s32 %s418, 1
    %s420 = scalar_select %p417, %s418, %s419
    %p423 = pneg %p417
    %p424 = scmp.eq.s32.totalorder %s26, 1
    %p425 = por %p423, %p424
    %p426 = scmp.ne.s32.totalorder %s418, %s421
    %p427 = scmp.eq.s32.totalorder %s26, 0
    %p428 = por %p426, %p427
    %p429 = scmp.ne.s32.totalorder %s418, %s421
    %p430 = scmp.eq.s32.totalorder %s31, 1
    %p431 = por %p429, %p430
    %p432 = scmp.ne.s32.totalorder %s421, %s422
    %p433 = scmp.eq.s32.totalorder %s31, 0
    %p434 = por %p432, %p433
    %p435 = scmp.ne.s32.totalorder %s421, %s422
    %p436 = scmp.eq.s32.totalorder %s32, 1
    %p437 = por %p435, %p436
    %p439 = scmp.ne.s32.totalorder %s422, %s438
    %p440 = scmp.eq.s32.totalorder %s32, 0
    %p441 = por %p439, %p440
    %s442 = ssub.s32 %s26, %s33
    %p443 = scmp.eq.s32.totalorder %s442, 0
    %s445 = sadd.s32 %s444, 1
    %s446 = scalar_select %p443, %s444, %s445
    %p449 = pneg %p443
    %p450 = scmp.eq.s32.totalorder %s26, 1
    %p451 = por %p449, %p450
    %p452 = scmp.ne.s32.totalorder %s444, %s447
    %p453 = scmp.eq.s32.totalorder %s26, 0
    %p454 = por %p452, %p453
    %p455 = scmp.ne.s32.totalorder %s444, %s447
    %p456 = scmp.eq.s32.totalorder %s31, 1
    %p457 = por %p455, %p456
    %p458 = scmp.ne.s32.totalorder %s447, %s448
    %p459 = scmp.eq.s32.totalorder %s31, 0
    %p460 = por %p458, %p459
    %p461 = scmp.ne.s32.totalorder %s447, %s448
    %p462 = scmp.eq.s32.totalorder %s32, 1
    %p463 = por %p461, %p462
    %p465 = scmp.ne.s32.totalorder %s448, %s464
    %p466 = scmp.eq.s32.totalorder %s32, 0
    %p467 = por %p465, %p466
    %s468 = ssub.s32 %s26, %s33
    %p469 = scmp.eq.s32.totalorder %s468, 0
    %s471 = sadd.s32 %s470, 1
    %s472 = scalar_select %p469, %s470, %s471
    %p475 = pneg %p469
    %p476 = scmp.eq.s32.totalorder %s26, 1
    %p477 = por %p475, %p476
    %p478 = scmp.ne.s32.totalorder %s470, %s473
    %p479 = scmp.eq.s32.totalorder %s26, 0
    %p480 = por %p478, %p479
    %p481 = scmp.ne.s32.totalorder %s470, %s473
    %p482 = scmp.eq.s32.totalorder %s31, 1
    %p483 = por %p481, %p482
    %p484 = scmp.ne.s32.totalorder %s473, %s474
    %p485 = scmp.eq.s32.totalorder %s31, 0
    %p486 = por %p484, %p485
    %p487 = scmp.ne.s32.totalorder %s473, %s474
    %p488 = scmp.eq.s32.totalorder %s32, 1
    %p489 = por %p487, %p488
    %p491 = scmp.ne.s32.totalorder %s474, %s490
    %p492 = scmp.eq.s32.totalorder %s32, 0
    %p493 = por %p491, %p492
    %p494 = scmp.le.s32.totalorder 1, %s26
    %p495 = scmp.lt.s32.totalorder %s26, 3
    %p496 = pnand %p494, %p495
    %p497 = pneg %p496
    // Predicated region
    $region9: #{decision_transformer.6} parent=5 // pred_check
      _
    $region10: #{decision_transformer.6} parent=5 // pred_check_branch
      %499 = sbr.rel (%p496) target = $region12
    $region11: #{decision_transformer.6} parent=5 // pred_region
      %s500 = ssub.s32 %s26, 1
      // Predicated region
      $region13: #{decision_transformer.6} parent=11 // pred_check
        %p501 = pneg %p151
      $region14: #{decision_transformer.6} parent=11 // pred_check_branch
        %503 = sbr.rel (%p501) target = $region16
      $region15: #{decision_transformer.6} parent=11 // pred_region
        _
      $region16: #{decision_transformer.6} parent=11 // pred_fallthru
        _
      // Predicated region
      $region17: #{decision_transformer.6} parent=11 // pred_check
        %p504 = pneg %p172
      $region18: #{decision_transformer.6} parent=11 // pred_check_branch
        %506 = sbr.rel (%p504) target = $region20
      $region19: #{decision_transformer.6} parent=11 // pred_region
        _
      $region20: #{decision_transformer.6} parent=11 // pred_fallthru
        _
      // Predicated region
      $region21: #{decision_transformer.6} parent=11 // pred_check
        %p507 = pneg %p193
      $region22: #{decision_transformer.6} parent=11 // pred_check_branch
        %509 = sbr.rel (%p507) target = $region24
      $region23: #{decision_transformer.6} parent=11 // pred_region
        _
      $region24: #{decision_transformer.6} parent=11 // pred_fallthru
        _
      // Predicated region
      $region25: #{decision_transformer.6} parent=11 // pred_check
        %p510 = pneg %p214
      $region26: #{decision_transformer.6} parent=11 // pred_check_branch
        %512 = sbr.rel (%p510) target = $region28
      $region27: #{decision_transformer.6} parent=11 // pred_region
        _
      $region28: #{decision_transformer.6} parent=11 // pred_fallthru
        _
      // Predicated region
      $region29: #{decision_transformer.6} parent=11 // pred_check
        %p513 = pneg %p235
      $region30: #{decision_transformer.6} parent=11 // pred_check_branch
        %515 = sbr.rel (%p513) target = $region32
      $region31: #{decision_transformer.6} parent=11 // pred_region
        _
      $region32: #{decision_transformer.6} parent=11 // pred_fallthru
        _
      // Predicated region
      $region33: #{decision_transformer.6} parent=11 // pred_check
        %p516 = pneg %p256
      $region34: #{decision_transformer.6} parent=11 // pred_check_branch
        %518 = sbr.rel (%p516) target = $region36
      $region35: #{decision_transformer.6} parent=11 // pred_region
        _
      $region36: #{decision_transformer.6} parent=11 // pred_fallthru
        _
      // Predicated region
      $region37: #{decision_transformer.6} parent=11 // pred_check
        %p519 = pneg %p277
      $region38: #{decision_transformer.6} parent=11 // pred_check_branch
        %521 = sbr.rel (%p519) target = $region40
      $region39: #{decision_transformer.6} parent=11 // pred_region
        _
      $region40: #{decision_transformer.6} parent=11 // pred_fallthru
        _
      // Predicated region
      $region41: #{decision_transformer.6} parent=11 // pred_check
        %p522 = pneg %p298
      $region42: #{decision_transformer.6} parent=11 // pred_check_branch
        %524 = sbr.rel (%p522) target = $region44
      $region43: #{decision_transformer.6} parent=11 // pred_region
        _
      $region44: #{decision_transformer.6} parent=11 // pred_fallthru
        _
      // Predicated region
      $region45: #{decision_transformer.6} parent=11 // pred_check
        %p525 = pneg %p319
      $region46: #{decision_transformer.6} parent=11 // pred_check_branch
        %527 = sbr.rel (%p525) target = $region48
      $region47: #{decision_transformer.6} parent=11 // pred_region
        _
      $region48: #{decision_transformer.6} parent=11 // pred_fallthru
        _
      // Predicated region
      $region49: #{decision_transformer.6} parent=11 // pred_check
        %p528 = pneg %p340
      $region50: #{decision_transformer.6} parent=11 // pred_check_branch
        %530 = sbr.rel (%p528) target = $region52
      $region51: #{decision_transformer.6} parent=11 // pred_region
        _
      $region52: #{decision_transformer.6} parent=11 // pred_fallthru
        _
      // Predicated region
      $region53: #{decision_transformer.6} parent=11 // pred_check
        %p531 = pneg %p361
      $region54: #{decision_transformer.6} parent=11 // pred_check_branch
        %533 = sbr.rel (%p531) target = $region56
      $region55: #{decision_transformer.6} parent=11 // pred_region
        _
      $region56: #{decision_transformer.6} parent=11 // pred_fallthru
        _
      // Predicated region
      $region57: #{decision_transformer.6} parent=11 // pred_check
        %p534 = pneg %p382
      $region58: #{decision_transformer.6} parent=11 // pred_check_branch
        %536 = sbr.rel (%p534) target = $region60
      $region59: #{decision_transformer.6} parent=11 // pred_region
        _
      $region60: #{decision_transformer.6} parent=11 // pred_fallthru
        _
    $region12: #{decision_transformer.6} parent=5 // pred_fallthru
      _
    %p537 = scmp.lt.s32.totalorder %s26, 2
    // Predicated region
    $region61: #{decision_transformer.6} parent=5 // pred_check
      %p538 = pneg %p537
    $region62: #{decision_transformer.6} parent=5 // pred_check_branch
      %540 = sbr.rel (%p538) target = $region64
    $region63: #{decision_transformer.6} parent=5 // pred_region
      // Predicated region
      $region65: #{decision_transformer.6} parent=63 // pred_check
        %p541 = pneg %p46
      $region66: #{decision_transformer.6} parent=63 // pred_check_branch
        %543 = sbr.rel (%p541) target = $region68
      $region67: #{decision_transformer.6} parent=63 // pred_region
        %p544 = scmp.lt.s32.totalorder %s26, 1
        %s545 = scalar_select %p544, %s26, 1
        %s546 = smul.addr %s545, 8
        %s547 = scalar_lea.vmem %s0, %s546
      $region68: #{decision_transformer.6} parent=63 // pred_fallthru
        _
      // Predicated region
      $region69: #{decision_transformer.6} parent=63 // pred_check
        %p548 = pneg %p72
      $region70: #{decision_transformer.6} parent=63 // pred_check_branch
        %550 = sbr.rel (%p548) target = $region72
      $region71: #{decision_transformer.6} parent=63 // pred_region
        %p551 = scmp.lt.s32.totalorder %s26, 1
        %s552 = scalar_select %p551, %s26, 1
        %s553 = smul.addr %s552, 8
        %s554 = scalar_lea.vmem %s1, %s553
      $region72: #{decision_transformer.6} parent=63 // pred_fallthru
        _
      // Predicated region
      $region73: #{decision_transformer.6} parent=63 // pred_check
        %p555 = pneg %p98
      $region74: #{decision_transformer.6} parent=63 // pred_check_branch
        %557 = sbr.rel (%p555) target = $region76
      $region75: #{decision_transformer.6} parent=63 // pred_region
        %p558 = scmp.lt.s32.totalorder %s26, 1
        %s559 = scalar_select %p558, %s26, 1
        %s560 = smul.addr %s559, 8
        %s561 = scalar_lea.vmem %s2, %s560
      $region76: #{decision_transformer.6} parent=63 // pred_fallthru
        _
      // Predicated region
      $region77: #{decision_transformer.6} parent=63 // pred_check
        %p562 = pneg %p124
      $region78: #{decision_transformer.6} parent=63 // pred_check_branch
        %564 = sbr.rel (%p562) target = $region80
      $region79: #{decision_transformer.6} parent=63 // pred_region
        %p565 = scmp.lt.s32.totalorder %s26, 1
        %s566 = scalar_select %p565, %s26, 1
        %s567 = smul.addr %s566, 8
        %s568 = smul.addr %s567, 8
        %s569 = scalar_lea.vmem %s3, %s568
      $region80: #{decision_transformer.6} parent=63 // pred_fallthru
        _
    $region64: #{decision_transformer.6} parent=5 // pred_fallthru
      _
    %p570 = scmp.le.s32.totalorder 1, %s26
    %p571 = scmp.lt.s32.totalorder %s26, 3
    %p572 = pnand %p570, %p571
    %p573 = pneg %p572
    // Predicated region
    $region81: #{decision_transformer.6} parent=5 // pred_check
      _
    $region82: #{decision_transformer.6} parent=5 // pred_check_branch
      %575 = sbr.rel (%p572) target = $region84
    $region83: #{decision_transformer.6} parent=5 // pred_region
      %s576 = ssub.s32 %s26, 1
      %p577 = scmp.lt.s32.totalorder %s31, 1
      %s578 = scalar_select %p577, %s31, 1
      %s579 = smul.addr %s578, 8
      %s580 = scalar_lea.vmem %s0, %s579
      %p581 = pneg %p52
      %p582 = pneg %p49
      %p583 = scmp.lt.s32.totalorder %s31, 1
      %s584 = scalar_select %p583, %s31, 1
      %s585 = smul.addr %s584, 8
      %s586 = scalar_lea.vmem %s1, %s585
      %p587 = pneg %p78
      %p588 = pneg %p75
      %p589 = scmp.lt.s32.totalorder %s31, 1
      %s590 = scalar_select %p589, %s31, 1
      %s591 = smul.addr %s590, 8
      %s592 = scalar_lea.vmem %s2, %s591
      %p593 = pneg %p104
      %p594 = pneg %p101
      %p595 = scmp.lt.s32.totalorder %s31, 1
      %s596 = scalar_select %p595, %s31, 1
      %s597 = smul.addr %s596, 8
      %s598 = smul.addr %s597, 8
      %s599 = scalar_lea.vmem %s3, %s598
      %p600 = pneg %p130
      %p601 = pneg %p127
      %p602 = pneg %p151
      %p603 = pneg %p148
      %p604 = pneg %p172
      %p605 = pneg %p169
      %p606 = pneg %p193
      %p607 = pneg %p190
      %p608 = pneg %p214
      %p609 = pneg %p211
      %p610 = pneg %p235
      %p611 = pneg %p232
      %p612 = pneg %p256
      %p613 = pneg %p253
      %p614 = pneg %p277
      %p615 = pneg %p274
      %p616 = pneg %p298
      %p617 = pneg %p295
      %p618 = pneg %p319
      %p619 = pneg %p316
      %p620 = pneg %p340
      %p621 = pneg %p337
      %p622 = pneg %p361
      %p623 = pneg %p358
      %p624 = pneg %p382
      %p625 = pneg %p379
      %p626 = pneg %p408
      %p627 = pneg %p405
      %p628 = scmp.lt.s32.totalorder %s31, 1
      %s629 = scalar_select %p628, %s31, 1
      %s630 = smul.addr %s629, 8
      %s631 = smul.addr %s630, 4
      %s632 = scalar_lea.vmem %s16, %s631
      %p633 = pneg %p434
      %p634 = pneg %p431
      %p635 = scmp.lt.s32.totalorder %s31, 1
      %s636 = scalar_select %p635, %s31, 1
      %s637 = smul.addr %s636, 8
      %s638 = smul.addr %s637, 4
      %s639 = scalar_lea.vmem %s17, %s638
      %p640 = pneg %p460
      %p641 = pneg %p457
      %p642 = scmp.lt.s32.totalorder %s31, 1
      %s643 = scalar_select %p642, %s31, 1
      %s644 = smul.addr %s643, 8
      %s645 = smul.addr %s644, 4
      %s646 = scalar_lea.vmem %s18, %s645
      %p647 = pneg %p486
      %p648 = pneg %p483
      %p649 = scmp.lt.s32.totalorder %s31, 1
      %s650 = scalar_select %p649, %s31, 1
      %s651 = smul.addr %s650, 8
      %s652 = smul.addr %s651, 4
      %s653 = scalar_lea.vmem %s19, %s652
      %p654 = scmp.lt.s32.totalorder %s31, 1
      %s655 = scalar_select %p654, %s31, 1
      %s656 = smul.addr %s655, 8
      %s657 = scalar_lea.vmem %s0, %s656
      %p658 = scmp.lt.s32.totalorder %s31, 1
      %s659 = scalar_select %p658, %s31, 1
      %s660 = smul.addr %s659, 8
      %s661 = scalar_lea.vmem %s1, %s660
      %p662 = scmp.lt.s32.totalorder %s31, 1
      %s663 = scalar_select %p662, %s31, 1
      %s664 = smul.addr %s663, 8
      %s665 = scalar_lea.vmem %s2, %s664
      %p666 = scmp.lt.s32.totalorder %s31, 1
      %s667 = scalar_select %p666, %s31, 1
      %s668 = smul.addr %s667, 8
      %s669 = smul.addr %s668, 8
      %s670 = scalar_lea.vmem %s3, %s669
      %p671 = scmp.lt.s32.totalorder %s31, 1
      %s672 = scalar_select %p671, %s31, 1
      %s673 = smul.addr %s672, 8
      %s674 = smul.addr %s673, 4
      %s675 = scalar_lea.vmem %s16, %s674
      %p676 = scmp.lt.s32.totalorder %s31, 1
      %s677 = scalar_select %p676, %s31, 1
      %s678 = smul.addr %s677, 8
      %s679 = smul.addr %s678, 4
      %s680 = scalar_lea.vmem %s17, %s679
      %p681 = scmp.lt.s32.totalorder %s31, 1
      %s682 = scalar_select %p681, %s31, 1
      %s683 = smul.addr %s682, 8
      %s684 = smul.addr %s683, 4
      %s685 = scalar_lea.vmem %s18, %s684
      %p686 = scmp.lt.s32.totalorder %s31, 1
      %s687 = scalar_select %p686, %s31, 1
      %s688 = smul.addr %s687, 8
      %s689 = smul.addr %s688, 4
      %s690 = scalar_lea.vmem %s19, %s689
      %v692 = vld [vmem:[%s657] sm:$0xff]
      %v693 = vld [vmem:[%s665] sm:$0xff]
      %v694 = vld [vmem:[%s4] sm:$0x1]
      %696 = vset.pattern.permute.xlu0 0
      %697 = vperm.xlu0 %696, %v693
      %v698 = vpop.permute.xlu0 %697
      %v701 = vlaneseq
      %v702 = vshrl.u32 %v701, 7
      %v703 = vsub.s32 0, %v702
      %v704 = vrot.slane %v694, %v703
      %v706 = vmul.f32 %v698, %v704
      %v707 = vld [vmem:[%s5] sm:$0x1]
      %v709 = vlaneseq
      %v710 = vshrl.u32 %v709, 7
      %v711 = vsub.s32 0, %v710
      %v712 = vrot.slane %v707, %v711
      %v714 = vadd.f32 %v706, %v712
      %v715 = vld [vmem:[%s670] sm:$0xff]
      %v716 = vld [vmem:[%s670 + $0x8] sm:$0xff]
      %v717 = vld [vmem:[%s670 + $0x10] sm:$0xff]
      %v718 = vld [vmem:[%s670 + $0x18] sm:$0xff]
      %v719 = vld [vmem:[%s670 + $0x20] sm:$0xff]
      %v720 = vld [vmem:[%s670 + $0x28] sm:$0xff]
      %v721 = vld [vmem:[%s670 + $0x30] sm:$0xff]
      %v722 = vld [vmem:[%s670 + $0x38] sm:$0xff]
      %v723 = vld [vmem:[%s6] sm:$0xf]
      %v724 = vld [vmem:[%s6 + $0x4] sm:$0xf]
      %v725 = vld [vmem:[%s6 + $0x8] sm:$0xf]
      %v726 = vld [vmem:[%s6 + $0xc] sm:$0xf]
      %v727 = vld [vmem:[%s6 + $0x10] sm:$0xf]
      %v728 = vld [vmem:[%s6 + $0x14] sm:$0xf]
      %v729 = vld [vmem:[%s6 + $0x18] sm:$0xf]
      %v730 = vld [vmem:[%s6 + $0x1c] sm:$0xf]
      %v731 = vld [vmem:[%s6 + $0x20] sm:$0xf]
      %v732 = vld [vmem:[%s6 + $0x24] sm:$0xf]
      %v733 = vld [vmem:[%s6 + $0x28] sm:$0xf]
      %v734 = vld [vmem:[%s6 + $0x2c] sm:$0xf]
      %v735 = vld [vmem:[%s6 + $0x30] sm:$0xf]
      %v736 = vld [vmem:[%s6 + $0x34] sm:$0xf]
      %v737 = vld [vmem:[%s6 + $0x38] sm:$0xf]
      %v738 = vld [vmem:[%s6 + $0x3c] sm:$0xf]
      %v739 = vld [vmem:[%s6 + $0x40] sm:$0xf]
      %v740 = vld [vmem:[%s6 + $0x44] sm:$0xf]
      %v741 = vld [vmem:[%s6 + $0x48] sm:$0xf]
      %v742 = vld [vmem:[%s6 + $0x4c] sm:$0xf]
      %v743 = vld [vmem:[%s6 + $0x50] sm:$0xf]
      %v744 = vld [vmem:[%s6 + $0x54] sm:$0xf]
      %v745 = vld [vmem:[%s6 + $0x58] sm:$0xf]
      %v746 = vld [vmem:[%s6 + $0x5c] sm:$0xf]
      %v747 = vld [vmem:[%s6 + $0x60] sm:$0xf]
      %v748 = vld [vmem:[%s6 + $0x64] sm:$0xf]
      %v749 = vld [vmem:[%s6 + $0x68] sm:$0xf]
      %v750 = vld [vmem:[%s6 + $0x6c] sm:$0xf]
      %v751 = vld [vmem:[%s6 + $0x70] sm:$0xf]
      %v752 = vld [vmem:[%s6 + $0x74] sm:$0xf]
      %v753 = vld [vmem:[%s6 + $0x78] sm:$0xf]
      %v754 = vld [vmem:[%s6 + $0x7c] sm:$0xf]
      %v755 = vld [vmem:[%s6 + $0x80] sm:$0xf]
      %v756 = vld [vmem:[%s6 + $0x84] sm:$0xf]
      %v757 = vld [vmem:[%s6 + $0x88] sm:$0xf]
      %v758 = vld [vmem:[%s6 + $0x8c] sm:$0xf]
      %v759 = vld [vmem:[%s6 + $0x90] sm:$0xf]
      %v760 = vld [vmem:[%s6 + $0x94] sm:$0xf]
      %v761 = vld [vmem:[%s6 + $0x98] sm:$0xf]
      %v762 = vld [vmem:[%s6 + $0x9c] sm:$0xf]
      %v763 = vld [vmem:[%s6 + $0xa0] sm:$0xf]
      %v764 = vld [vmem:[%s6 + $0xa4] sm:$0xf]
      %v765 = vld [vmem:[%s6 + $0xa8] sm:$0xf]
      %v766 = vld [vmem:[%s6 + $0xac] sm:$0xf]
      %v767 = vld [vmem:[%s6 + $0xb0] sm:$0xf]
      %v768 = vld [vmem:[%s6 + $0xb4] sm:$0xf]
      %v769 = vld [vmem:[%s6 + $0xb8] sm:$0xf]
      %v770 = vld [vmem:[%s6 + $0xbc] sm:$0xf]
      %v771 = vld [vmem:[%s6 + $0xc0] sm:$0xf]
      %v772 = vld [vmem:[%s6 + $0xc4] sm:$0xf]
      %v773 = vld [vmem:[%s6 + $0xc8] sm:$0xf]
      %v774 = vld [vmem:[%s6 + $0xcc] sm:$0xf]
      %v775 = vld [vmem:[%s6 + $0xd0] sm:$0xf]
      %v776 = vld [vmem:[%s6 + $0xd4] sm:$0xf]
      %v777 = vld [vmem:[%s6 + $0xd8] sm:$0xf]
      %v778 = vld [vmem:[%s6 + $0xdc] sm:$0xf]
      %v779 = vld [vmem:[%s6 + $0xe0] sm:$0xf]
      %v780 = vld [vmem:[%s6 + $0xe4] sm:$0xf]
      %v781 = vld [vmem:[%s6 + $0xe8] sm:$0xf]
      %v782 = vld [vmem:[%s6 + $0xec] sm:$0xf]
      %v783 = vld [vmem:[%s6 + $0xf0] sm:$0xf]
      %v784 = vld [vmem:[%s6 + $0xf4] sm:$0xf]
      %v785 = vld [vmem:[%s6 + $0xf8] sm:$0xf]
      %v786 = vld [vmem:[%s6 + $0xfc] sm:$0xf]
      %v787 = vld [vmem:[%s6 + $0x100] sm:$0xf]
      %v788 = vld [vmem:[%s6 + $0x104] sm:$0xf]
      %v789 = vld [vmem:[%s6 + $0x108] sm:$0xf]
      %v790 = vld [vmem:[%s6 + $0x10c] sm:$0xf]
      %v791 = vld [vmem:[%s6 + $0x110] sm:$0xf]
      %v792 = vld [vmem:[%s6 + $0x114] sm:$0xf]
      %v793 = vld [vmem:[%s6 + $0x118] sm:$0xf]
      %v794 = vld [vmem:[%s6 + $0x11c] sm:$0xf]
      %v795 = vld [vmem:[%s6 + $0x120] sm:$0xf]
      %v796 = vld [vmem:[%s6 + $0x124] sm:$0xf]
      %v797 = vld [vmem:[%s6 + $0x128] sm:$0xf]
      %v798 = vld [vmem:[%s6 + $0x12c] sm:$0xf]
      %v799 = vld [vmem:[%s6 + $0x130] sm:$0xf]
      %v800 = vld [vmem:[%s6 + $0x134] sm:$0xf]
      %v801 = vld [vmem:[%s6 + $0x138] sm:$0xf]
      %v802 = vld [vmem:[%s6 + $0x13c] sm:$0xf]
      %v803 = vld [vmem:[%s6 + $0x140] sm:$0xf]
      %v804 = vld [vmem:[%s6 + $0x144] sm:$0xf]
      %v805 = vld [vmem:[%s6 + $0x148] sm:$0xf]
      %v806 = vld [vmem:[%s6 + $0x14c] sm:$0xf]
      %v807 = vld [vmem:[%s6 + $0x150] sm:$0xf]
      %v808 = vld [vmem:[%s6 + $0x154] sm:$0xf]
      %v809 = vld [vmem:[%s6 + $0x158] sm:$0xf]
      %v810 = vld [vmem:[%s6 + $0x15c] sm:$0xf]
      %v811 = vld [vmem:[%s6 + $0x160] sm:$0xf]
      %v812 = vld [vmem:[%s6 + $0x164] sm:$0xf]
      %v813 = vld [vmem:[%s6 + $0x168] sm:$0xf]
      %v814 = vld [vmem:[%s6 + $0x16c] sm:$0xf]
      %v815 = vld [vmem:[%s6 + $0x170] sm:$0xf]
      %v816 = vld [vmem:[%s6 + $0x174] sm:$0xf]
      %v817 = vld [vmem:[%s6 + $0x178] sm:$0xf]
      %v818 = vld [vmem:[%s6 + $0x17c] sm:$0xf]
      %v819 = vld [vmem:[%s6 + $0x180] sm:$0xf]
      %v820 = vld [vmem:[%s6 + $0x184] sm:$0xf]
      %v821 = vld [vmem:[%s6 + $0x188] sm:$0xf]
      %v822 = vld [vmem:[%s6 + $0x18c] sm:$0xf]
      %v823 = vld [vmem:[%s6 + $0x190] sm:$0xf]
      %v824 = vld [vmem:[%s6 + $0x194] sm:$0xf]
      %v825 = vld [vmem:[%s6 + $0x198] sm:$0xf]
      %v826 = vld [vmem:[%s6 + $0x19c] sm:$0xf]
      %v827 = vld [vmem:[%s6 + $0x1a0] sm:$0xf]
      %v828 = vld [vmem:[%s6 + $0x1a4] sm:$0xf]
      %v829 = vld [vmem:[%s6 + $0x1a8] sm:$0xf]
      %v830 = vld [vmem:[%s6 + $0x1ac] sm:$0xf]
      %v831 = vld [vmem:[%s6 + $0x1b0] sm:$0xf]
      %v832 = vld [vmem:[%s6 + $0x1b4] sm:$0xf]
      %v833 = vld [vmem:[%s6 + $0x1b8] sm:$0xf]
      %v834 = vld [vmem:[%s6 + $0x1bc] sm:$0xf]
      %v835 = vld [vmem:[%s6 + $0x1c0] sm:$0xf]
      %v836 = vld [vmem:[%s6 + $0x1c4] sm:$0xf]
      %v837 = vld [vmem:[%s6 + $0x1c8] sm:$0xf]
      %v838 = vld [vmem:[%s6 + $0x1cc] sm:$0xf]
      %v839 = vld [vmem:[%s6 + $0x1d0] sm:$0xf]
      %v840 = vld [vmem:[%s6 + $0x1d4] sm:$0xf]
      %v841 = vld [vmem:[%s6 + $0x1d8] sm:$0xf]
      %v842 = vld [vmem:[%s6 + $0x1dc] sm:$0xf]
      %v843 = vld [vmem:[%s6 + $0x1e0] sm:$0xf]
      %v844 = vld [vmem:[%s6 + $0x1e4] sm:$0xf]
      %v845 = vld [vmem:[%s6 + $0x1e8] sm:$0xf]
      %v846 = vld [vmem:[%s6 + $0x1ec] sm:$0xf]
      %v847 = vld [vmem:[%s6 + $0x1f0] sm:$0xf]
      %v848 = vld [vmem:[%s6 + $0x1f4] sm:$0xf]
      %v849 = vld [vmem:[%s6 + $0x1f8] sm:$0xf]
      %v850 = vld [vmem:[%s6 + $0x1fc] sm:$0xf]
      %v851 = vpack.c.bf16 %v715, %v715
      %v852 = vpack.c.bf16 %v716, %v716
      %v853 = vpack.c.bf16 %v717, %v717
      %v854 = vpack.c.bf16 %v718, %v718
      %v855 = vpack.c.bf16 %v719, %v719
      %v856 = vpack.c.bf16 %v720, %v720
      %v857 = vpack.c.bf16 %v721, %v721
      %v858 = vpack.c.bf16 %v722, %v722
      %v859 = vld [vmem:[%s7] sm:$0x1]
      %v861 = vlaneseq
      %v862 = vshrl.u32 %v861, 7
      %v863 = vsub.s32 0, %v862
      %v864 = vrot.slane %v859, %v863
      %v994 = vunpack.c.l.b16 %v723
      %v995 = vunpack.c.l.b16 %v724
      %v996 = vunpack.c.l.b16 %v725
      %v997 = vunpack.c.l.b16 %v726
      %v998 = vunpack.c.l.b16 %v727
      %v999 = vunpack.c.l.b16 %v728
      %v1000 = vunpack.c.l.b16 %v729
      %v1001 = vunpack.c.l.b16 %v730
      %v1002 = vunpack.c.l.b16 %v731
      %v1003 = vunpack.c.l.b16 %v732
      %v1004 = vunpack.c.l.b16 %v733
      %v1005 = vunpack.c.l.b16 %v734
      %v1006 = vunpack.c.l.b16 %v735
      %v1007 = vunpack.c.l.b16 %v736
      %v1008 = vunpack.c.l.b16 %v737
      %v1009 = vunpack.c.l.b16 %v738
      %v1010 = vunpack.c.l.b16 %v739
      %v1011 = vunpack.c.l.b16 %v740
      %v1012 = vunpack.c.l.b16 %v741
      %v1013 = vunpack.c.l.b16 %v742
      %v1014 = vunpack.c.l.b16 %v743
      %v1015 = vunpack.c.l.b16 %v744
      %v1016 = vunpack.c.l.b16 %v745
      %v1017 = vunpack.c.l.b16 %v746
      %v1018 = vunpack.c.l.b16 %v747
      %v1019 = vunpack.c.l.b16 %v748
      %v1020 = vunpack.c.l.b16 %v749
      %v1021 = vunpack.c.l.b16 %v750
      %v1022 = vunpack.c.l.b16 %v751
      %v1023 = vunpack.c.l.b16 %v752
      %v1024 = vunpack.c.l.b16 %v753
      %v1025 = vunpack.c.l.b16 %v754
      %v1026 = vunpack.c.l.b16 %v755
      %v1027 = vunpack.c.l.b16 %v756
      %v1028 = vunpack.c.l.b16 %v757
      %v1029 = vunpack.c.l.b16 %v758
      %v1030 = vunpack.c.l.b16 %v759
      %v1031 = vunpack.c.l.b16 %v760
      %v1032 = vunpack.c.l.b16 %v761
      %v1033 = vunpack.c.l.b16 %v762
      %v1034 = vunpack.c.l.b16 %v763
      %v1035 = vunpack.c.l.b16 %v764
      %v1036 = vunpack.c.l.b16 %v765
      %v1037 = vunpack.c.l.b16 %v766
      %v1038 = vunpack.c.l.b16 %v767
      %v1039 = vunpack.c.l.b16 %v768
      %v1040 = vunpack.c.l.b16 %v769
      %v1041 = vunpack.c.l.b16 %v770
      %v1042 = vunpack.c.l.b16 %v771
      %v1043 = vunpack.c.l.b16 %v772
      %v1044 = vunpack.c.l.b16 %v773
      %v1045 = vunpack.c.l.b16 %v774
      %v1046 = vunpack.c.l.b16 %v775
      %v1047 = vunpack.c.l.b16 %v776
      %v1048 = vunpack.c.l.b16 %v777
      %v1049 = vunpack.c.l.b16 %v778
      %v1050 = vunpack.c.l.b16 %v779
      %v1051 = vunpack.c.l.b16 %v780
      %v1052 = vunpack.c.l.b16 %v781
      %v1053 = vunpack.c.l.b16 %v782
      %v1054 = vunpack.c.l.b16 %v783
      %v1055 = vunpack.c.l.b16 %v784
      %v1056 = vunpack.c.l.b16 %v785
      %v1057 = vunpack.c.l.b16 %v786
      %v1058 = vunpack.c.l.b16 %v787
      %v1059 = vunpack.c.l.b16 %v788
      %v1060 = vunpack.c.l.b16 %v789
      %v1061 = vunpack.c.l.b16 %v790
      %v1062 = vunpack.c.l.b16 %v791
      %v1063 = vunpack.c.l.b16 %v792
      %v1064 = vunpack.c.l.b16 %v793
      %v1065 = vunpack.c.l.b16 %v794
      %v1066 = vunpack.c.l.b16 %v795
      %v1067 = vunpack.c.l.b16 %v796
      %v1068 = vunpack.c.l.b16 %v797
      %v1069 = vunpack.c.l.b16 %v798
      %v1070 = vunpack.c.l.b16 %v799
      %v1071 = vunpack.c.l.b16 %v800
      %v1072 = vunpack.c.l.b16 %v801
      %v1073 = vunpack.c.l.b16 %v802
      %v1074 = vunpack.c.l.b16 %v803
      %v1075 = vunpack.c.l.b16 %v804
      %v1076 = vunpack.c.l.b16 %v805
      %v1077 = vunpack.c.l.b16 %v806
      %v1078 = vunpack.c.l.b16 %v807
      %v1079 = vunpack.c.l.b16 %v808
      %v1080 = vunpack.c.l.b16 %v809
      %v1081 = vunpack.c.l.b16 %v810
      %v1082 = vunpack.c.l.b16 %v811
      %v1083 = vunpack.c.l.b16 %v812
      %v1084 = vunpack.c.l.b16 %v813
      %v1085 = vunpack.c.l.b16 %v814
      %v1086 = vunpack.c.l.b16 %v815
      %v1087 = vunpack.c.l.b16 %v816
      %v1088 = vunpack.c.l.b16 %v817
      %v1089 = vunpack.c.l.b16 %v818
      %v1090 = vunpack.c.l.b16 %v819
      %v1091 = vunpack.c.l.b16 %v820
      %v1092 = vunpack.c.l.b16 %v821
      %v1093 = vunpack.c.l.b16 %v822
      %v1094 = vunpack.c.l.b16 %v823
      %v1095 = vunpack.c.l.b16 %v824
      %v1096 = vunpack.c.l.b16 %v825
      %v1097 = vunpack.c.l.b16 %v826
      %v1098 = vunpack.c.l.b16 %v827
      %v1099 = vunpack.c.l.b16 %v828
      %v1100 = vunpack.c.l.b16 %v829
      %v1101 = vunpack.c.l.b16 %v830
      %v1102 = vunpack.c.l.b16 %v831
      %v1103 = vunpack.c.l.b16 %v832
      %v1104 = vunpack.c.l.b16 %v833
      %v1105 = vunpack.c.l.b16 %v834
      %v1106 = vunpack.c.l.b16 %v835
      %v1107 = vunpack.c.l.b16 %v836
      %v1108 = vunpack.c.l.b16 %v837
      %v1109 = vunpack.c.l.b16 %v838
      %v1110 = vunpack.c.l.b16 %v839
      %v1111 = vunpack.c.l.b16 %v840
      %v1112 = vunpack.c.l.b16 %v841
      %v1113 = vunpack.c.l.b16 %v842
      %v1114 = vunpack.c.l.b16 %v843
      %v1115 = vunpack.c.l.b16 %v844
      %v1116 = vunpack.c.l.b16 %v845
      %v1117 = vunpack.c.l.b16 %v846
      %v1118 = vunpack.c.l.b16 %v847
      %v1119 = vunpack.c.l.b16 %v848
      %v1120 = vunpack.c.l.b16 %v849
      %v1121 = vunpack.c.l.b16 %v850
      %v1122 = vpack.c.b16 %v995, %v994
      %v1123 = vpack.c.b16 %v997, %v996
      %v1124 = vpack.c.b16 %v999, %v998
      %v1125 = vpack.c.b16 %v1001, %v1000
      %v1126 = vpack.c.b16 %v1003, %v1002
      %v1127 = vpack.c.b16 %v1005, %v1004
      %v1128 = vpack.c.b16 %v1007, %v1006
      %v1129 = vpack.c.b16 %v1009, %v1008
      %v1130 = vpack.c.b16 %v1011, %v1010
      %v1131 = vpack.c.b16 %v1013, %v1012
      %v1132 = vpack.c.b16 %v1015, %v1014
      %v1133 = vpack.c.b16 %v1017, %v1016
      %v1134 = vpack.c.b16 %v1019, %v1018
      %v1135 = vpack.c.b16 %v1021, %v1020
      %v1136 = vpack.c.b16 %v1023, %v1022
      %v1137 = vpack.c.b16 %v1025, %v1024
      %v1138 = vpack.c.b16 %v1027, %v1026
      %v1139 = vpack.c.b16 %v1029, %v1028
      %v1140 = vpack.c.b16 %v1031, %v1030
      %v1141 = vpack.c.b16 %v1033, %v1032
      %v1142 = vpack.c.b16 %v1035, %v1034
      %v1143 = vpack.c.b16 %v1037, %v1036
      %v1144 = vpack.c.b16 %v1039, %v1038
      %v1145 = vpack.c.b16 %v1041, %v1040
      %v1146 = vpack.c.b16 %v1043, %v1042
      %v1147 = vpack.c.b16 %v1045, %v1044
      %v1148 = vpack.c.b16 %v1047, %v1046
      %v1149 = vpack.c.b16 %v1049, %v1048
      %v1150 = vpack.c.b16 %v1051, %v1050
      %v1151 = vpack.c.b16 %v1053, %v1052
      %v1152 = vpack.c.b16 %v1055, %v1054
      %v1153 = vpack.c.b16 %v1057, %v1056
      %v1154 = vpack.c.b16 %v1059, %v1058
      %v1155 = vpack.c.b16 %v1061, %v1060
      %v1156 = vpack.c.b16 %v1063, %v1062
      %v1157 = vpack.c.b16 %v1065, %v1064
      %v1158 = vpack.c.b16 %v1067, %v1066
      %v1159 = vpack.c.b16 %v1069, %v1068
      %v1160 = vpack.c.b16 %v1071, %v1070
      %v1161 = vpack.c.b16 %v1073, %v1072
      %v1162 = vpack.c.b16 %v1075, %v1074
      %v1163 = vpack.c.b16 %v1077, %v1076
      %v1164 = vpack.c.b16 %v1079, %v1078
      %v1165 = vpack.c.b16 %v1081, %v1080
      %v1166 = vpack.c.b16 %v1083, %v1082
      %v1167 = vpack.c.b16 %v1085, %v1084
      %v1168 = vpack.c.b16 %v1087, %v1086
      %v1169 = vpack.c.b16 %v1089, %v1088
      %v1170 = vpack.c.b16 %v1091, %v1090
      %v1171 = vpack.c.b16 %v1093, %v1092
      %v1172 = vpack.c.b16 %v1095, %v1094
      %v1173 = vpack.c.b16 %v1097, %v1096
      %v1174 = vpack.c.b16 %v1099, %v1098
      %v1175 = vpack.c.b16 %v1101, %v1100
      %v1176 = vpack.c.b16 %v1103, %v1102
      %v1177 = vpack.c.b16 %v1105, %v1104
      %v1178 = vpack.c.b16 %v1107, %v1106
      %v1179 = vpack.c.b16 %v1109, %v1108
      %v1180 = vpack.c.b16 %v1111, %v1110
      %v1181 = vpack.c.b16 %v1113, %v1112
      %v1182 = vpack.c.b16 %v1115, %v1114
      %v1183 = vpack.c.b16 %v1117, %v1116
      %v1184 = vpack.c.b16 %v1119, %v1118
      %v1185 = vpack.c.b16 %v1121, %v1120
      %1250 = vmatprep.subr.bf16.mxu0 0
      %1251 = vmatpush1.bf16.msra.mxu0 %v1129
      %1252 = vmatprep.subr.bf16.mxu0 0
      %1253 = vmatpush1.bf16.msra.mxu0 %v1128
      %1254 = vmatprep.subr.bf16.mxu0 0
      %1255 = vmatpush1.bf16.msra.mxu0 %v1127
      %1256 = vmatprep.subr.bf16.mxu0 0
      %1257 = vmatpush1.bf16.msra.mxu0 %v1126
      %1258 = vmatprep.subr.bf16.mxu0 0
      %1259 = vmatpush1.bf16.msra.mxu0 %v1125
      %1260 = vmatprep.subr.bf16.mxu0 0
      %1261 = vmatpush1.bf16.msra.mxu0 %v1124
      %1262 = vmatprep.subr.bf16.mxu0 0
      %1263 = vmatpush1.bf16.msra.mxu0 %v1123
      %1264 = vmatprep.subr.bf16.mxu0 0
      %1265 = vmatpush1.bf16.msra.mxu0 %v1122
      %1266 = vmatprep.subr.bf16.mxu0 0
      %1267 = vmatpush2.bf16.msra.mxu0 %v1137
      %1268 = vmatprep.subr.bf16.mxu0 0
      %1269 = vmatpush2.bf16.msra.mxu0 %v1136
      %1270 = vmatprep.subr.bf16.mxu0 0
      %1271 = vmatpush2.bf16.msra.mxu0 %v1135
      %1272 = vmatprep.subr.bf16.mxu0 0
      %1273 = vmatpush2.bf16.msra.mxu0 %v1134
      %1274 = vmatprep.subr.bf16.mxu0 0
      %1275 = vmatpush2.bf16.msra.mxu0 %v1133
      %1276 = vmatprep.subr.bf16.mxu0 0
      %1277 = vmatpush2.bf16.msra.mxu0 %v1132
      %1278 = vmatprep.subr.bf16.mxu0 0
      %1279 = vmatpush2.bf16.msra.mxu0 %v1131
      %1280 = vmatprep.subr.bf16.mxu0 0
      %1281 = vmatpush2.bf16.msra.mxu0 %v1130
      %1282 = vmatprep.mubr.bf16.mxu0 %v852
      %1283 = vmatmul.mubr.bf16.gmra.mxu0 %v851
      %v1284 = vpop.f32.mrf.mxu0
      %v1285 = vadd.f32 %v864, %v1284
      %v1286 = vpop.f32.mrf.mxu0
      %v1287 = vpop.f32.mrf.mxu0
      %v1288 = vpop.f32.mrf.mxu0
      %1289 = vdwg.mxu0
      %1290 = vmatprep.subr.bf16.mxu0 0
      %1291 = vmatpush1.bf16.msra.mxu0 %v1145
      %1292 = vmatprep.subr.bf16.mxu0 0
      %1293 = vmatpush1.bf16.msra.mxu0 %v1144
      %1294 = vmatprep.subr.bf16.mxu0 0
      %1295 = vmatpush1.bf16.msra.mxu0 %v1143
      %1296 = vmatprep.subr.bf16.mxu0 0
      %1297 = vmatpush1.bf16.msra.mxu0 %v1142
      %1298 = vmatprep.subr.bf16.mxu0 0
      %1299 = vmatpush1.bf16.msra.mxu0 %v1141
      %1300 = vmatprep.subr.bf16.mxu0 0
      %1301 = vmatpush1.bf16.msra.mxu0 %v1140
      %1302 = vmatprep.subr.bf16.mxu0 0
      %1303 = vmatpush1.bf16.msra.mxu0 %v1139
      %1304 = vmatprep.subr.bf16.mxu0 0
      %1305 = vmatpush1.bf16.msra.mxu0 %v1138
      %1306 = vmatprep.subr.bf16.mxu0 0
      %1307 = vmatpush2.bf16.msra.mxu0 %v1153
      %1308 = vmatprep.subr.bf16.mxu0 0
      %1309 = vmatpush2.bf16.msra.mxu0 %v1152
      %1310 = vmatprep.subr.bf16.mxu0 0
      %1311 = vmatpush2.bf16.msra.mxu0 %v1151
      %1312 = vmatprep.subr.bf16.mxu0 0
      %1313 = vmatpush2.bf16.msra.mxu0 %v1150
      %1314 = vmatprep.subr.bf16.mxu0 0
      %1315 = vmatpush2.bf16.msra.mxu0 %v1149
      %1316 = vmatprep.subr.bf16.mxu0 0
      %1317 = vmatpush2.bf16.msra.mxu0 %v1148
      %1318 = vmatprep.subr.bf16.mxu0 0
      %1319 = vmatpush2.bf16.msra.mxu0 %v1147
      %1320 = vmatprep.subr.bf16.mxu0 0
      %1321 = vmatpush2.bf16.msra.mxu0 %v1146
      %1322 = vmatprep.mubr.bf16.mxu0 %v854
      %1323 = vmatmul.mubr.bf16.gmra.mxu0 %v853
      %v1324 = vpop.f32.mrf.mxu0
      %v1325 = vadd.f32 %v1285, %v1324
      %v1326 = vpop.f32.mrf.mxu0
      %v1327 = vpop.f32.mrf.mxu0
      %v1328 = vpop.f32.mrf.mxu0
      %1329 = vdwg.mxu0
      %1330 = vmatprep.subr.bf16.mxu0 0
      %1331 = vmatpush1.bf16.msra.mxu0 %v1161
      %1332 = vmatprep.subr.bf16.mxu0 0
      %1333 = vmatpush1.bf16.msra.mxu0 %v1160
      %1334 = vmatprep.subr.bf16.mxu0 0
      %1335 = vmatpush1.bf16.msra.mxu0 %v1159
      %1336 = vmatprep.subr.bf16.mxu0 0
      %1337 = vmatpush1.bf16.msra.mxu0 %v1158
      %1338 = vmatprep.subr.bf16.mxu0 0
      %1339 = vmatpush1.bf16.msra.mxu0 %v1157
      %1340 = vmatprep.subr.bf16.mxu0 0
      %1341 = vmatpush1.bf16.msra.mxu0 %v1156
      %1342 = vmatprep.subr.bf16.mxu0 0
      %1343 = vmatpush1.bf16.msra.mxu0 %v1155
      %1344 = vmatprep.subr.bf16.mxu0 0
      %1345 = vmatpush1.bf16.msra.mxu0 %v1154
      %1346 = vmatprep.subr.bf16.mxu0 0
      %1347 = vmatpush2.bf16.msra.mxu0 %v1169
      %1348 = vmatprep.subr.bf16.mxu0 0
      %1349 = vmatpush2.bf16.msra.mxu0 %v1168
      %1350 = vmatprep.subr.bf16.mxu0 0
      %1351 = vmatpush2.bf16.msra.mxu0 %v1167
      %1352 = vmatprep.subr.bf16.mxu0 0
      %1353 = vmatpush2.bf16.msra.mxu0 %v1166
      %1354 = vmatprep.subr.bf16.mxu0 0
      %1355 = vmatpush2.bf16.msra.mxu0 %v1165
      %1356 = vmatprep.subr.bf16.mxu0 0
      %1357 = vmatpush2.bf16.msra.mxu0 %v1164
      %1358 = vmatprep.subr.bf16.mxu0 0
      %1359 = vmatpush2.bf16.msra.mxu0 %v1163
      %1360 = vmatprep.subr.bf16.mxu0 0
      %1361 = vmatpush2.bf16.msra.mxu0 %v1162
      %1362 = vmatprep.mubr.bf16.mxu0 %v856
      %1363 = vmatmul.mubr.bf16.gmra.mxu0 %v855
      %v1364 = vpop.f32.mrf.mxu0
      %v1365 = vadd.f32 %v1325, %v1364
      %v1366 = vpop.f32.mrf.mxu0
      %v1367 = vpop.f32.mrf.mxu0
      %v1368 = vpop.f32.mrf.mxu0
      %1369 = vdwg.mxu0
      %1370 = vmatprep.subr.bf16.mxu0 0
      %1371 = vmatpush1.bf16.msra.mxu0 %v1177
      %1372 = vmatprep.subr.bf16.mxu0 0
      %1373 = vmatpush1.bf16.msra.mxu0 %v1176
      %1374 = vmatprep.subr.bf16.mxu0 0
      %1375 = vmatpush1.bf16.msra.mxu0 %v1175
      %1376 = vmatprep.subr.bf16.mxu0 0
      %1377 = vmatpush1.bf16.msra.mxu0 %v1174
      %1378 = vmatprep.subr.bf16.mxu0 0
      %1379 = vmatpush1.bf16.msra.mxu0 %v1173
      %1380 = vmatprep.subr.bf16.mxu0 0
      %1381 = vmatpush1.bf16.msra.mxu0 %v1172
      %1382 = vmatprep.subr.bf16.mxu0 0
      %1383 = vmatpush1.bf16.msra.mxu0 %v1171
      %1384 = vmatprep.subr.bf16.mxu0 0
      %1385 = vmatpush1.bf16.msra.mxu0 %v1170
      %1386 = vmatprep.subr.bf16.mxu0 0
      %1387 = vmatpush2.bf16.msra.mxu0 %v1185
      %1388 = vmatprep.subr.bf16.mxu0 0
      %1389 = vmatpush2.bf16.msra.mxu0 %v1184
      %1390 = vmatprep.subr.bf16.mxu0 0
      %1391 = vmatpush2.bf16.msra.mxu0 %v1183
      %1392 = vmatprep.subr.bf16.mxu0 0
      %1393 = vmatpush2.bf16.msra.mxu0 %v1182
      %1394 = vmatprep.subr.bf16.mxu0 0
      %1395 = vmatpush2.bf16.msra.mxu0 %v1181
      %1396 = vmatprep.subr.bf16.mxu0 0
      %1397 = vmatpush2.bf16.msra.mxu0 %v1180
      %1398 = vmatprep.subr.bf16.mxu0 0
      %1399 = vmatpush2.bf16.msra.mxu0 %v1179
      %1400 = vmatprep.subr.bf16.mxu0 0
      %1401 = vmatpush2.bf16.msra.mxu0 %v1178
      %1402 = vmatprep.mubr.bf16.mxu0 %v858
      %1403 = vmatmul.mubr.bf16.gmra.mxu0 %v857
      %v1404 = vpop.f32.mrf.mxu0
      %v1405 = vadd.f32 %v1365, %v1404
      %v1406 = vpop.f32.mrf.mxu0
      %v1407 = vpop.f32.mrf.mxu0
      %v1408 = vpop.f32.mrf.mxu0
      %1409 = vdwg.mxu0
      %v1410 = vld [vmem:[%s661] sm:$0xff]
      %v1411 = vld [vmem:[%s8] sm:$0x1]
      %v1412 = vld [vmem:[%s9] sm:$0x1]
      %v1413 = vadd.f32 %v714, %v692
      %vm1414 = vcmask 261120
      %v1415 = vsel %vm1414, %v1413, 0.0
      %1416 = vadd.xlane.f32.xlu0 %v1415
      %v1417 = vpop.xlane.xlu0 %1416
      %v1418 = vrcp.pop 32.0
      %v1419 = vmul.f32 %v1417, %v1418
      %v1420 = vsub.f32 %v1413, %v1419
      %v1421 = vmul.f32 %v1420, %v1420
      %v1422 = vsel %vm1414, %v1421, 0.0
      %1423 = vadd.xlane.f32.xlu0 %v1422
      %v1424 = vpop.xlane.xlu0 %1423
      %v1425 = vmul.f32 %v1424, %v1418
      %v1426 = vadd.f32 %v1425, 1e-05
      %v1427 = vrsqrt.pop %v1426
      %v1428 = vmul.f32 %v1420, %v1427
      %v1430 = vlaneseq
      %v1431 = vshrl.u32 %v1430, 7
      %v1432 = vsub.s32 0, %v1431
      %v1433 = vrot.slane %v1411, %v1432
      %v1435 = vmul.f32 %v1428, %v1433
      %v1437 = vlaneseq
      %v1438 = vshrl.u32 %v1437, 7
      %v1439 = vsub.s32 0, %v1438
      %v1440 = vrot.slane %v1412, %v1439
      %v1442 = vadd.f32 %v1435, %v1440
      %v1443 = vadd.f32 %v1405, %v692
      %v1444 = vsel %vm1414, %v1443, 0.0
      %1445 = vadd.xlane.f32.xlu0 %v1444
      %v1446 = vpop.xlane.xlu0 %1445
      %v1447 = vmul.f32 %v1446, %v1418
      %v1448 = vsub.f32 %v1443, %v1447
      %v1449 = vmul.f32 %v1448, %v1448
      %v1450 = vsel %vm1414, %v1449, 0.0
      %1451 = vadd.xlane.f32.xlu0 %v1450
      %v1452 = vpop.xlane.xlu0 %1451
      %v1453 = vmul.f32 %v1452, %v1418
      %v1454 = vadd.f32 %v1453, 1e-05
      %v1455 = vrsqrt.pop %v1454
      %v1456 = vmul.f32 %v1448, %v1455
      %v1457 = vmul.f32 %v1456, %v1433
      %v1458 = vadd.f32 %v1457, %v1440
      %v1459 = vadd.f32 %v1410, %v692
      %v1460 = vsel %vm1414, %v1459, 0.0
      %1461 = vadd.xlane.f32.xlu0 %v1460
      %v1462 = vpop.xlane.xlu0 %1461
      %v1463 = vmul.f32 %v1462, %v1418
      %v1464 = vsub.f32 %v1459, %v1463
      %v1465 = vmul.f32 %v1464, %v1464
      %v1466 = vsel %vm1414, %v1465, 0.0
      %1467 = vadd.xlane.f32.xlu0 %v1466
      %v1468 = vpop.xlane.xlu0 %1467
      %v1469 = vmul.f32 %v1468, %v1418
      %v1470 = vadd.f32 %v1469, 1e-05
      %v1471 = vrsqrt.pop %v1470
      %v1472 = vmul.f32 %v1464, %v1471
      %v1473 = vmul.f32 %v1472, %v1433
      %v1474 = vadd.f32 %v1473, %v1440
      %v1475 = vld [vmem:[%s10] sm:$0xf]
      %v1476 = vld [vmem:[%s10 + $0x4] sm:$0xf]
      %v1477 = vld [vmem:[%s10 + $0x8] sm:$0xf]
      %v1478 = vld [vmem:[%s10 + $0xc] sm:$0xf]
      %v1479 = vld [vmem:[%s12] sm:$0xf]
      %v1480 = vld [vmem:[%s12 + $0x4] sm:$0xf]
      %v1481 = vld [vmem:[%s12 + $0x8] sm:$0xf]
      %v1482 = vld [vmem:[%s12 + $0xc] sm:$0xf]
      %v1483 = vld [vmem:[%s14] sm:$0xf]
      %v1484 = vld [vmem:[%s14 + $0x4] sm:$0xf]
      %v1485 = vld [vmem:[%s14 + $0x8] sm:$0xf]
      %v1486 = vld [vmem:[%s14 + $0xc] sm:$0xf]
      %v1487 = vld [vmem:[%s11] sm:$0x1]
      %v1488 = vld [vmem:[%s13] sm:$0x1]
      %v1489 = vld [vmem:[%s15] sm:$0x1]
      %v1491 = vcombine.high %v1442, %v1442
      %v1493 = vunpack.c.l.s4 1966171168
      %v1494 = vunpack.c.0.s8 %v1493
      %v1495 = vlaneseq
      %v1496 = vshrl.u32 %v1495, 7
      %v1497 = vsub.s32 %v1494, %v1496
      %v1498 = vrot.slane %v1442, %v1497
      %v1500 = vunpack.c.l.s4 1966171168
      %v1501 = vunpack.c.0.s8 %v1500
      %v1502 = vlaneseq
      %v1503 = vshrl.u32 %v1502, 7
      %v1504 = vsub.s32 %v1501, %v1503
      %v1505 = vrot.slane %v1491, %v1504
      %v1506 = vcombine.high %v1498, %v1498
      %v1507 = vcombine.high %v1505, %v1505
      %v1509 = vunpack.c.l.s4 1966171168
      %v1510 = vunpack.c.0.s8 %v1509
      %v1511 = vlaneseq
      %v1512 = vshrl.u32 %v1511, 7
      %v1513 = vsub.s32 %v1510, %v1512
      %v1514 = vrot.slane %v1498, %v1513
      %v1516 = vunpack.c.l.s4 1966171168
      %v1517 = vunpack.c.0.s8 %v1516
      %v1518 = vlaneseq
      %v1519 = vshrl.u32 %v1518, 7
      %v1520 = vsub.s32 %v1517, %v1519
      %v1521 = vrot.slane %v1505, %v1520
      %v1523 = vunpack.c.l.s4 1966171168
      %v1524 = vunpack.c.0.s8 %v1523
      %v1525 = vlaneseq
      %v1526 = vshrl.u32 %v1525, 7
      %v1527 = vsub.s32 %v1524, %v1526
      %v1528 = vrot.slane %v1506, %v1527
      %v1530 = vunpack.c.l.s4 1966171168
      %v1531 = vunpack.c.0.s8 %v1530
      %v1532 = vlaneseq
      %v1533 = vshrl.u32 %v1532, 7
      %v1534 = vsub.s32 %v1531, %v1533
      %v1535 = vrot.slane %v1507, %v1534
      %v1536 = vcombine.high %v1514, %v1514
      %v1537 = vcombine.high %v1521, %v1521
      %v1538 = vcombine.high %v1528, %v1528
      %v1539 = vcombine.high %v1535, %v1535
      %vm1548 = vcmask 253952
      %1549 = vst.msk [vmem:[%s675] sm:$0x1] %vm1548, %v1514
      %1550 = vst.msk [vmem:[%s675 + $0x4] sm:$0x1] %vm1548, %v1528
      %1551 = vst.msk [vmem:[%s675 + $0x8] sm:$0x1] %vm1548, %v1536
      %1552 = vst.msk [vmem:[%s675 + $0xc] sm:$0x1] %vm1548, %v1538
      %1553 = vst.msk [vmem:[%s675 + $0x10] sm:$0x1] %vm1548, %v1521
      %1554 = vst.msk [vmem:[%s675 + $0x14] sm:$0x1] %vm1548, %v1535
      %1555 = vst.msk [vmem:[%s675 + $0x18] sm:$0x1] %vm1548, %v1537
      %1556 = vst.msk [vmem:[%s675 + $0x1c] sm:$0x1] %vm1548, %v1539
      %v1557 = vpack.c.bf16 %v1442, %v1442
      %v1559 = vlaneseq
      %v1560 = vshrl.u32 %v1559, 7
      %v1561 = vsub.s32 0, %v1560
      %v1562 = vrot.slane %v1487, %v1561
      %v1568 = vunpack.c.l.b16 %v1475
      %v1569 = vunpack.c.l.b16 %v1476
      %v1570 = vunpack.c.l.b16 %v1477
      %v1571 = vunpack.c.l.b16 %v1478
      %v1572 = vpack.c.b16 %v1569, %v1568
      %v1573 = vpack.c.b16 %v1571, %v1570
      %v1577 = vsel %vm1414, %v1557, 0
      %1579 = vmatprep.subr.bf16.mxu0 0
      %1580 = vmatpush1.bf16.msra.mxu0 0
      %1581 = vmatprep.subr.bf16.mxu0 0
      %1582 = vmatpush1.bf16.msra.mxu0 0
      %1583 = vmatprep.subr.bf16.mxu0 0
      %1584 = vmatpush1.bf16.msra.mxu0 0
      %1585 = vmatprep.subr.bf16.mxu0 0
      %1586 = vmatpush1.bf16.msra.mxu0 0
      %1587 = vmatprep.subr.bf16.mxu0 0
      %1588 = vmatpush1.bf16.msra.mxu0 0
      %1589 = vmatprep.subr.bf16.mxu0 0
      %1590 = vmatpush1.bf16.msra.mxu0 0
      %1591 = vmatprep.subr.bf16.mxu0 0
      %1592 = vmatpush1.bf16.msra.mxu0 %v1573
      %1593 = vmatprep.subr.bf16.mxu0 0
      %1594 = vmatpush1.bf16.msra.mxu0 %v1572
      %1595 = vmatprep.subr.bf16.mxu0 0
      %1596 = vmatpush2.bf16.msra.mxu0 0
      %1597 = vmatprep.subr.bf16.mxu0 0
      %1598 = vmatpush2.bf16.msra.mxu0 0
      %1599 = vmatprep.subr.bf16.mxu0 0
      %1600 = vmatpush2.bf16.msra.mxu0 0
      %1601 = vmatprep.subr.bf16.mxu0 0
      %1602 = vmatpush2.bf16.msra.mxu0 0
      %1603 = vmatprep.subr.bf16.mxu0 0
      %1604 = vmatpush2.bf16.msra.mxu0 0
      %1605 = vmatprep.subr.bf16.mxu0 0
      %1606 = vmatpush2.bf16.msra.mxu0 0
      %1607 = vmatprep.subr.bf16.mxu0 0
      %1608 = vmatpush2.bf16.msra.mxu0 0
      %1609 = vmatprep.subr.bf16.mxu0 0
      %1610 = vmatpush2.bf16.msra.mxu0 0
      %1611 = vmatprep.mubr.bf16.mxu0 0
      %1612 = vmatmul.mubr.bf16.gmra.mxu0 %v1577
      %v1613 = vpop.f32.mrf.mxu0
      %v1614 = vadd.f32 %v1562, %v1613
      %v1615 = vpop.f32.mrf.mxu0
      %v1616 = vpop.f32.mrf.mxu0
      %v1617 = vpop.f32.mrf.mxu0
      %1618 = vdwg.mxu0
      %v1620 = vcombine.high %v1614, %v1614
      %v1622 = vunpack.c.l.s4 1966171168
      %v1623 = vunpack.c.0.s8 %v1622
      %v1624 = vlaneseq
      %v1625 = vshrl.u32 %v1624, 7
      %v1626 = vsub.s32 %v1623, %v1625
      %v1627 = vrot.slane %v1614, %v1626
      %v1629 = vunpack.c.l.s4 1966171168
      %v1630 = vunpack.c.0.s8 %v1629
      %v1631 = vlaneseq
      %v1632 = vshrl.u32 %v1631, 7
      %v1633 = vsub.s32 %v1630, %v1632
      %v1634 = vrot.slane %v1620, %v1633
      %v1635 = vcombine.high %v1627, %v1627
      %v1636 = vcombine.high %v1634, %v1634
      %v1638 = vunpack.c.l.s4 1966171168
      %v1639 = vunpack.c.0.s8 %v1638
      %v1640 = vlaneseq
      %v1641 = vshrl.u32 %v1640, 7
      %v1642 = vsub.s32 %v1639, %v1641
      %v1643 = vrot.slane %v1627, %v1642
      %v1645 = vunpack.c.l.s4 1966171168
      %v1646 = vunpack.c.0.s8 %v1645
      %v1647 = vlaneseq
      %v1648 = vshrl.u32 %v1647, 7
      %v1649 = vsub.s32 %v1646, %v1648
      %v1650 = vrot.slane %v1634, %v1649
      %v1652 = vunpack.c.l.s4 1966171168
      %v1653 = vunpack.c.0.s8 %v1652
      %v1654 = vlaneseq
      %v1655 = vshrl.u32 %v1654, 7
      %v1656 = vsub.s32 %v1653, %v1655
      %v1657 = vrot.slane %v1635, %v1656
      %v1659 = vunpack.c.l.s4 1966171168
      %v1660 = vunpack.c.0.s8 %v1659
      %v1661 = vlaneseq
      %v1662 = vshrl.u32 %v1661, 7
      %v1663 = vsub.s32 %v1660, %v1662
      %v1664 = vrot.slane %v1636, %v1663
      %v1665 = vcombine.high %v1643, %v1643
      %v1666 = vcombine.high %v1650, %v1650
      %v1667 = vcombine.high %v1657, %v1657
      %v1668 = vcombine.high %v1664, %v1664
      %vm1677 = vcmask 516096
      %1678 = vst.msk [vmem:[%s680] sm:$0x1] %vm1677, %v1643
      %1679 = vst.msk [vmem:[%s680 + $0x4] sm:$0x1] %vm1677, %v1657
      %1680 = vst.msk [vmem:[%s680 + $0x8] sm:$0x1] %vm1677, %v1665
      %1681 = vst.msk [vmem:[%s680 + $0xc] sm:$0x1] %vm1677, %v1667
      %1682 = vst.msk [vmem:[%s680 + $0x10] sm:$0x1] %vm1677, %v1650
      %1683 = vst.msk [vmem:[%s680 + $0x14] sm:$0x1] %vm1677, %v1664
      %1684 = vst.msk [vmem:[%s680 + $0x18] sm:$0x1] %vm1677, %v1666
      %1685 = vst.msk [vmem:[%s680 + $0x1c] sm:$0x1] %vm1677, %v1668
      %v1687 = vlaneseq
      %v1688 = vshrl.u32 %v1687, 7
      %v1689 = vsub.s32 0, %v1688
      %v1690 = vrot.slane %v1488, %v1689
      %v1696 = vunpack.c.l.b16 %v1479
      %v1697 = vunpack.c.l.b16 %v1480
      %v1698 = vunpack.c.l.b16 %v1481
      %v1699 = vunpack.c.l.b16 %v1482
      %v1700 = vpack.c.b16 %v1697, %v1696
      %v1701 = vpack.c.b16 %v1699, %v1698
      %1704 = vmatprep.subr.bf16.mxu0 0
      %1705 = vmatpush1.bf16.msra.mxu0 0
      %1706 = vmatprep.subr.bf16.mxu0 0
      %1707 = vmatpush1.bf16.msra.mxu0 0
      %1708 = vmatprep.subr.bf16.mxu0 0
      %1709 = vmatpush1.bf16.msra.mxu0 0
      %1710 = vmatprep.subr.bf16.mxu0 0
      %1711 = vmatpush1.bf16.msra.mxu0 0
      %1712 = vmatprep.subr.bf16.mxu0 0
      %1713 = vmatpush1.bf16.msra.mxu0 0
      %1714 = vmatprep.subr.bf16.mxu0 0
      %1715 = vmatpush1.bf16.msra.mxu0 0
      %1716 = vmatprep.subr.bf16.mxu0 0
      %1717 = vmatpush1.bf16.msra.mxu0 %v1701
      %1718 = vmatprep.subr.bf16.mxu0 0
      %1719 = vmatpush1.bf16.msra.mxu0 %v1700
      %1720 = vmatprep.subr.bf16.mxu0 0
      %1721 = vmatpush2.bf16.msra.mxu0 0
      %1722 = vmatprep.subr.bf16.mxu0 0
      %1723 = vmatpush2.bf16.msra.mxu0 0
      %1724 = vmatprep.subr.bf16.mxu0 0
      %1725 = vmatpush2.bf16.msra.mxu0 0
      %1726 = vmatprep.subr.bf16.mxu0 0
      %1727 = vmatpush2.bf16.msra.mxu0 0
      %1728 = vmatprep.subr.bf16.mxu0 0
      %1729 = vmatpush2.bf16.msra.mxu0 0
      %1730 = vmatprep.subr.bf16.mxu0 0
      %1731 = vmatpush2.bf16.msra.mxu0 0
      %1732 = vmatprep.subr.bf16.mxu0 0
      %1733 = vmatpush2.bf16.msra.mxu0 0
      %1734 = vmatprep.subr.bf16.mxu0 0
      %1735 = vmatpush2.bf16.msra.mxu0 0
      %1736 = vmatprep.mubr.bf16.mxu0 0
      %1737 = vmatmul.mubr.bf16.gmra.mxu0 %v1577
      %v1738 = vpop.f32.mrf.mxu0
      %v1739 = vadd.f32 %v1690, %v1738
      %v1740 = vpop.f32.mrf.mxu0
      %v1741 = vpop.f32.mrf.mxu0
      %v1742 = vpop.f32.mrf.mxu0
      %1743 = vdwg.mxu0
      %v1745 = vcombine.high %v1739, %v1739
      %v1747 = vunpack.c.l.s4 1966171168
      %v1748 = vunpack.c.0.s8 %v1747
      %v1749 = vlaneseq
      %v1750 = vshrl.u32 %v1749, 7
      %v1751 = vsub.s32 %v1748, %v1750
      %v1752 = vrot.slane %v1739, %v1751
      %v1754 = vunpack.c.l.s4 1966171168
      %v1755 = vunpack.c.0.s8 %v1754
      %v1756 = vlaneseq
      %v1757 = vshrl.u32 %v1756, 7
      %v1758 = vsub.s32 %v1755, %v1757
      %v1759 = vrot.slane %v1745, %v1758
      %v1760 = vcombine.high %v1752, %v1752
      %v1761 = vcombine.high %v1759, %v1759
      %v1763 = vunpack.c.l.s4 1966171168
      %v1764 = vunpack.c.0.s8 %v1763
      %v1765 = vlaneseq
      %v1766 = vshrl.u32 %v1765, 7
      %v1767 = vsub.s32 %v1764, %v1766
      %v1768 = vrot.slane %v1752, %v1767
      %v1770 = vunpack.c.l.s4 1966171168
      %v1771 = vunpack.c.0.s8 %v1770
      %v1772 = vlaneseq
      %v1773 = vshrl.u32 %v1772, 7
      %v1774 = vsub.s32 %v1771, %v1773
      %v1775 = vrot.slane %v1759, %v1774
      %v1777 = vunpack.c.l.s4 1966171168
      %v1778 = vunpack.c.0.s8 %v1777
      %v1779 = vlaneseq
      %v1780 = vshrl.u32 %v1779, 7
      %v1781 = vsub.s32 %v1778, %v1780
      %v1782 = vrot.slane %v1760, %v1781
      %v1784 = vunpack.c.l.s4 1966171168
      %v1785 = vunpack.c.0.s8 %v1784
      %v1786 = vlaneseq
      %v1787 = vshrl.u32 %v1786, 7
      %v1788 = vsub.s32 %v1785, %v1787
      %v1789 = vrot.slane %v1761, %v1788
      %v1790 = vcombine.high %v1768, %v1768
      %v1791 = vcombine.high %v1775, %v1775
      %v1792 = vcombine.high %v1782, %v1782
      %v1793 = vcombine.high %v1789, %v1789
      %1802 = vst.msk [vmem:[%s685] sm:$0x1] %vm1677, %v1768
      %1803 = vst.msk [vmem:[%s685 + $0x4] sm:$0x1] %vm1677, %v1782
      %1804 = vst.msk [vmem:[%s685 + $0x8] sm:$0x1] %vm1677, %v1790
      %1805 = vst.msk [vmem:[%s685 + $0xc] sm:$0x1] %vm1677, %v1792
      %1806 = vst.msk [vmem:[%s685 + $0x10] sm:$0x1] %vm1677, %v1775
      %1807 = vst.msk [vmem:[%s685 + $0x14] sm:$0x1] %vm1677, %v1789
      %1808 = vst.msk [vmem:[%s685 + $0x18] sm:$0x1] %vm1677, %v1791
      %1809 = vst.msk [vmem:[%s685 + $0x1c] sm:$0x1] %vm1677, %v1793
      %v1811 = vlaneseq
      %v1812 = vshrl.u32 %v1811, 7
      %v1813 = vsub.s32 0, %v1812
      %v1814 = vrot.slane %v1489, %v1813
      %v1820 = vunpack.c.l.b16 %v1483
      %v1821 = vunpack.c.l.b16 %v1484
      %v1822 = vunpack.c.l.b16 %v1485
      %v1823 = vunpack.c.l.b16 %v1486
      %v1824 = vpack.c.b16 %v1821, %v1820
      %v1825 = vpack.c.b16 %v1823, %v1822
      %1828 = vmatprep.subr.bf16.mxu0 0
      %1829 = vmatpush1.bf16.msra.mxu0 0
      %1830 = vmatprep.subr.bf16.mxu0 0
      %1831 = vmatpush1.bf16.msra.mxu0 0
      %1832 = vmatprep.subr.bf16.mxu0 0
      %1833 = vmatpush1.bf16.msra.mxu0 0
      %1834 = vmatprep.subr.bf16.mxu0 0
      %1835 = vmatpush1.bf16.msra.mxu0 0
      %1836 = vmatprep.subr.bf16.mxu0 0
      %1837 = vmatpush1.bf16.msra.mxu0 0
      %1838 = vmatprep.subr.bf16.mxu0 0
      %1839 = vmatpush1.bf16.msra.mxu0 0
      %1840 = vmatprep.subr.bf16.mxu0 0
      %1841 = vmatpush1.bf16.msra.mxu0 %v1825
      %1842 = vmatprep.subr.bf16.mxu0 0
      %1843 = vmatpush1.bf16.msra.mxu0 %v1824
      %1844 = vmatprep.subr.bf16.mxu0 0
      %1845 = vmatpush2.bf16.msra.mxu0 0
      %1846 = vmatprep.subr.bf16.mxu0 0
      %1847 = vmatpush2.bf16.msra.mxu0 0
      %1848 = vmatprep.subr.bf16.mxu0 0
      %1849 = vmatpush2.bf16.msra.mxu0 0
      %1850 = vmatprep.subr.bf16.mxu0 0
      %1851 = vmatpush2.bf16.msra.mxu0 0
      %1852 = vmatprep.subr.bf16.mxu0 0
      %1853 = vmatpush2.bf16.msra.mxu0 0
      %1854 = vmatprep.subr.bf16.mxu0 0
      %1855 = vmatpush2.bf16.msra.mxu0 0
      %1856 = vmatprep.subr.bf16.mxu0 0
      %1857 = vmatpush2.bf16.msra.mxu0 0
      %1858 = vmatprep.subr.bf16.mxu0 0
      %1859 = vmatpush2.bf16.msra.mxu0 0
      %1860 = vmatprep.mubr.bf16.mxu0 0
      %1861 = vmatmul.mubr.bf16.gmra.mxu0 %v1577
      %v1862 = vpop.f32.mrf.mxu0
      %v1863 = vadd.f32 %v1814, %v1862
      %v1864 = vpop.f32.mrf.mxu0
      %v1865 = vpop.f32.mrf.mxu0
      %v1866 = vpop.f32.mrf.mxu0
      %1867 = vdwg.mxu0
      %v1869 = vcombine.high %v1863, %v1863
      %v1871 = vunpack.c.l.s4 1966171168
      %v1872 = vunpack.c.0.s8 %v1871
      %v1873 = vlaneseq
      %v1874 = vshrl.u32 %v1873, 7
      %v1875 = vsub.s32 %v1872, %v1874
      %v1876 = vrot.slane %v1863, %v1875
      %v1878 = vunpack.c.l.s4 1966171168
      %v1879 = vunpack.c.0.s8 %v1878
      %v1880 = vlaneseq
      %v1881 = vshrl.u32 %v1880, 7
      %v1882 = vsub.s32 %v1879, %v1881
      %v1883 = vrot.slane %v1869, %v1882
      %v1884 = vcombine.high %v1876, %v1876
      %v1885 = vcombine.high %v1883, %v1883
      %v1887 = vunpack.c.l.s4 1966171168
      %v1888 = vunpack.c.0.s8 %v1887
      %v1889 = vlaneseq
      %v1890 = vshrl.u32 %v1889, 7
      %v1891 = vsub.s32 %v1888, %v1890
      %v1892 = vrot.slane %v1876, %v1891
      %v1894 = vunpack.c.l.s4 1966171168
      %v1895 = vunpack.c.0.s8 %v1894
      %v1896 = vlaneseq
      %v1897 = vshrl.u32 %v1896, 7
      %v1898 = vsub.s32 %v1895, %v1897
      %v1899 = vrot.slane %v1883, %v1898
      %v1901 = vunpack.c.l.s4 1966171168
      %v1902 = vunpack.c.0.s8 %v1901
      %v1903 = vlaneseq
      %v1904 = vshrl.u32 %v1903, 7
      %v1905 = vsub.s32 %v1902, %v1904
      %v1906 = vrot.slane %v1884, %v1905
      %v1908 = vunpack.c.l.s4 1966171168
      %v1909 = vunpack.c.0.s8 %v1908
      %v1910 = vlaneseq
      %v1911 = vshrl.u32 %v1910, 7
      %v1912 = vsub.s32 %v1909, %v1911
      %v1913 = vrot.slane %v1885, %v1912
      %v1914 = vcombine.high %v1892, %v1892
      %v1915 = vcombine.high %v1899, %v1899
      %v1916 = vcombine.high %v1906, %v1906
      %v1917 = vcombine.high %v1913, %v1913
      %1926 = vst.msk [vmem:[%s690] sm:$0x1] %vm1677, %v1892
      %1927 = vst.msk [vmem:[%s690 + $0x4] sm:$0x1] %vm1677, %v1906
      %1928 = vst.msk [vmem:[%s690 + $0x8] sm:$0x1] %vm1677, %v1914
      %1929 = vst.msk [vmem:[%s690 + $0xc] sm:$0x1] %vm1677, %v1916
      %1930 = vst.msk [vmem:[%s690 + $0x10] sm:$0x1] %vm1677, %v1899
      %1931 = vst.msk [vmem:[%s690 + $0x14] sm:$0x1] %vm1677, %v1913
      %1932 = vst.msk [vmem:[%s690 + $0x18] sm:$0x1] %vm1677, %v1915
      %1933 = vst.msk [vmem:[%s690 + $0x1c] sm:$0x1] %vm1677, %v1917
      %v1935 = vcombine.high %v1458, %v1458
      %v1937 = vunpack.c.l.s4 1966171168
      %v1938 = vunpack.c.0.s8 %v1937
      %v1939 = vlaneseq
      %v1940 = vshrl.u32 %v1939, 7
      %v1941 = vsub.s32 %v1938, %v1940
      %v1942 = vrot.slane %v1458, %v1941
      %v1944 = vunpack.c.l.s4 1966171168
      %v1945 = vunpack.c.0.s8 %v1944
      %v1946 = vlaneseq
      %v1947 = vshrl.u32 %v1946, 7
      %v1948 = vsub.s32 %v1945, %v1947
      %v1949 = vrot.slane %v1935, %v1948
      %v1950 = vcombine.high %v1942, %v1942
      %v1951 = vcombine.high %v1949, %v1949
      %v1953 = vunpack.c.l.s4 1966171168
      %v1954 = vunpack.c.0.s8 %v1953
      %v1955 = vlaneseq
      %v1956 = vshrl.u32 %v1955, 7
      %v1957 = vsub.s32 %v1954, %v1956
      %v1958 = vrot.slane %v1942, %v1957
      %v1960 = vunpack.c.l.s4 1966171168
      %v1961 = vunpack.c.0.s8 %v1960
      %v1962 = vlaneseq
      %v1963 = vshrl.u32 %v1962, 7
      %v1964 = vsub.s32 %v1961, %v1963
      %v1965 = vrot.slane %v1949, %v1964
      %v1967 = vunpack.c.l.s4 1966171168
      %v1968 = vunpack.c.0.s8 %v1967
      %v1969 = vlaneseq
      %v1970 = vshrl.u32 %v1969, 7
      %v1971 = vsub.s32 %v1968, %v1970
      %v1972 = vrot.slane %v1950, %v1971
      %v1974 = vunpack.c.l.s4 1966171168
      %v1975 = vunpack.c.0.s8 %v1974
      %v1976 = vlaneseq
      %v1977 = vshrl.u32 %v1976, 7
      %v1978 = vsub.s32 %v1975, %v1977
      %v1979 = vrot.slane %v1951, %v1978
      %v1980 = vcombine.high %v1958, %v1958
      %v1981 = vcombine.high %v1965, %v1965
      %v1982 = vcombine.high %v1972, %v1972
      %v1983 = vcombine.high %v1979, %v1979
      %1992 = vst.msk [vmem:[%s675 + $0x1] sm:$0x1] %vm1548, %v1958
      %1993 = vst.msk [vmem:[%s675 + $0x5] sm:$0x1] %vm1548, %v1972
      %1994 = vst.msk [vmem:[%s675 + $0x9] sm:$0x1] %vm1548, %v1980
      %1995 = vst.msk [vmem:[%s675 + $0xd] sm:$0x1] %vm1548, %v1982
      %1996 = vst.msk [vmem:[%s675 + $0x11] sm:$0x1] %vm1548, %v1965
      %1997 = vst.msk [vmem:[%s675 + $0x15] sm:$0x1] %vm1548, %v1979
      %1998 = vst.msk [vmem:[%s675 + $0x19] sm:$0x1] %vm1548, %v1981
      %1999 = vst.msk [vmem:[%s675 + $0x1d] sm:$0x1] %vm1548, %v1983
      %v2000 = vpack.c.bf16 %v1458, %v1458
      %v2002 = vsel %vm1414, %v2000, 0
      %2004 = vmatprep.subr.bf16.mxu0 0
      %2005 = vmatpush1.bf16.msra.mxu0 0
      %2006 = vmatprep.subr.bf16.mxu0 0
      %2007 = vmatpush1.bf16.msra.mxu0 0
      %2008 = vmatprep.subr.bf16.mxu0 0
      %2009 = vmatpush1.bf16.msra.mxu0 0
      %2010 = vmatprep.subr.bf16.mxu0 0
      %2011 = vmatpush1.bf16.msra.mxu0 0
      %2012 = vmatprep.subr.bf16.mxu0 0
      %2013 = vmatpush1.bf16.msra.mxu0 0
      %2014 = vmatprep.subr.bf16.mxu0 0
      %2015 = vmatpush1.bf16.msra.mxu0 0
      %2016 = vmatprep.subr.bf16.mxu0 0
      %2017 = vmatpush1.bf16.msra.mxu0 %v1573
      %2018 = vmatprep.subr.bf16.mxu0 0
      %2019 = vmatpush1.bf16.msra.mxu0 %v1572
      %2020 = vmatprep.subr.bf16.mxu0 0
      %2021 = vmatpush2.bf16.msra.mxu0 0
      %2022 = vmatprep.subr.bf16.mxu0 0
      %2023 = vmatpush2.bf16.msra.mxu0 0
      %2024 = vmatprep.subr.bf16.mxu0 0
      %2025 = vmatpush2.bf16.msra.mxu0 0
      %2026 = vmatprep.subr.bf16.mxu0 0
      %2027 = vmatpush2.bf16.msra.mxu0 0
      %2028 = vmatprep.subr.bf16.mxu0 0
      %2029 = vmatpush2.bf16.msra.mxu0 0
      %2030 = vmatprep.subr.bf16.mxu0 0
      %2031 = vmatpush2.bf16.msra.mxu0 0
      %2032 = vmatprep.subr.bf16.mxu0 0
      %2033 = vmatpush2.bf16.msra.mxu0 0
      %2034 = vmatprep.subr.bf16.mxu0 0
      %2035 = vmatpush2.bf16.msra.mxu0 0
      %2036 = vmatprep.mubr.bf16.mxu0 0
      %2037 = vmatmul.mubr.bf16.gmra.mxu0 %v2002
      %v2038 = vpop.f32.mrf.mxu0
      %v2039 = vadd.f32 %v1562, %v2038
      %v2040 = vpop.f32.mrf.mxu0
      %v2041 = vpop.f32.mrf.mxu0
      %v2042 = vpop.f32.mrf.mxu0
      %2043 = vdwg.mxu0
      %v2045 = vcombine.high %v2039, %v2039
      %v2047 = vunpack.c.l.s4 1966171168
      %v2048 = vunpack.c.0.s8 %v2047
      %v2049 = vlaneseq
      %v2050 = vshrl.u32 %v2049, 7
      %v2051 = vsub.s32 %v2048, %v2050
      %v2052 = vrot.slane %v2039, %v2051
      %v2054 = vunpack.c.l.s4 1966171168
      %v2055 = vunpack.c.0.s8 %v2054
      %v2056 = vlaneseq
      %v2057 = vshrl.u32 %v2056, 7
      %v2058 = vsub.s32 %v2055, %v2057
      %v2059 = vrot.slane %v2045, %v2058
      %v2060 = vcombine.high %v2052, %v2052
      %v2061 = vcombine.high %v2059, %v2059
      %v2063 = vunpack.c.l.s4 1966171168
      %v2064 = vunpack.c.0.s8 %v2063
      %v2065 = vlaneseq
      %v2066 = vshrl.u32 %v2065, 7
      %v2067 = vsub.s32 %v2064, %v2066
      %v2068 = vrot.slane %v2052, %v2067
      %v2070 = vunpack.c.l.s4 1966171168
      %v2071 = vunpack.c.0.s8 %v2070
      %v2072 = vlaneseq
      %v2073 = vshrl.u32 %v2072, 7
      %v2074 = vsub.s32 %v2071, %v2073
      %v2075 = vrot.slane %v2059, %v2074
      %v2077 = vunpack.c.l.s4 1966171168
      %v2078 = vunpack.c.0.s8 %v2077
      %v2079 = vlaneseq
      %v2080 = vshrl.u32 %v2079, 7
      %v2081 = vsub.s32 %v2078, %v2080
      %v2082 = vrot.slane %v2060, %v2081
      %v2084 = vunpack.c.l.s4 1966171168
      %v2085 = vunpack.c.0.s8 %v2084
      %v2086 = vlaneseq
      %v2087 = vshrl.u32 %v2086, 7
      %v2088 = vsub.s32 %v2085, %v2087
      %v2089 = vrot.slane %v2061, %v2088
      %v2090 = vcombine.high %v2068, %v2068
      %v2091 = vcombine.high %v2075, %v2075
      %v2092 = vcombine.high %v2082, %v2082
      %v2093 = vcombine.high %v2089, %v2089
      %2102 = vst.msk [vmem:[%s680 + $0x1] sm:$0x1] %vm1677, %v2068
      %2103 = vst.msk [vmem:[%s680 + $0x5] sm:$0x1] %vm1677, %v2082
      %2104 = vst.msk [vmem:[%s680 + $0x9] sm:$0x1] %vm1677, %v2090
      %2105 = vst.msk [vmem:[%s680 + $0xd] sm:$0x1] %vm1677, %v2092
      %2106 = vst.msk [vmem:[%s680 + $0x11] sm:$0x1] %vm1677, %v2075
      %2107 = vst.msk [vmem:[%s680 + $0x15] sm:$0x1] %vm1677, %v2089
      %2108 = vst.msk [vmem:[%s680 + $0x19] sm:$0x1] %vm1677, %v2091
      %2109 = vst.msk [vmem:[%s680 + $0x1d] sm:$0x1] %vm1677, %v2093
      %2110 = vmatprep.subr.bf16.mxu0 0
      %2111 = vmatpush1.bf16.msra.mxu0 0
      %2112 = vmatprep.subr.bf16.mxu0 0
      %2113 = vmatpush1.bf16.msra.mxu0 0
      %2114 = vmatprep.subr.bf16.mxu0 0
      %2115 = vmatpush1.bf16.msra.mxu0 0
      %2116 = vmatprep.subr.bf16.mxu0 0
      %2117 = vmatpush1.bf16.msra.mxu0 0
      %2118 = vmatprep.subr.bf16.mxu0 0
      %2119 = vmatpush1.bf16.msra.mxu0 0
      %2120 = vmatprep.subr.bf16.mxu0 0
      %2121 = vmatpush1.bf16.msra.mxu0 0
      %2122 = vmatprep.subr.bf16.mxu0 0
      %2123 = vmatpush1.bf16.msra.mxu0 %v1701
      %2124 = vmatprep.subr.bf16.mxu0 0
      %2125 = vmatpush1.bf16.msra.mxu0 %v1700
      %2126 = vmatprep.subr.bf16.mxu0 0
      %2127 = vmatpush2.bf16.msra.mxu0 0
      %2128 = vmatprep.subr.bf16.mxu0 0
      %2129 = vmatpush2.bf16.msra.mxu0 0
      %2130 = vmatprep.subr.bf16.mxu0 0
      %2131 = vmatpush2.bf16.msra.mxu0 0
      %2132 = vmatprep.subr.bf16.mxu0 0
      %2133 = vmatpush2.bf16.msra.mxu0 0
      %2134 = vmatprep.subr.bf16.mxu0 0
      %2135 = vmatpush2.bf16.msra.mxu0 0
      %2136 = vmatprep.subr.bf16.mxu0 0
      %2137 = vmatpush2.bf16.msra.mxu0 0
      %2138 = vmatprep.subr.bf16.mxu0 0
      %2139 = vmatpush2.bf16.msra.mxu0 0
      %2140 = vmatprep.subr.bf16.mxu0 0
      %2141 = vmatpush2.bf16.msra.mxu0 0
      %2142 = vmatprep.mubr.bf16.mxu0 0
      %2143 = vmatmul.mubr.bf16.gmra.mxu0 %v2002
      %v2144 = vpop.f32.mrf.mxu0
      %v2145 = vadd.f32 %v1690, %v2144
      %v2146 = vpop.f32.mrf.mxu0
      %v2147 = vpop.f32.mrf.mxu0
      %v2148 = vpop.f32.mrf.mxu0
      %2149 = vdwg.mxu0
      %v2151 = vcombine.high %v2145, %v2145
      %v2153 = vunpack.c.l.s4 1966171168
      %v2154 = vunpack.c.0.s8 %v2153
      %v2155 = vlaneseq
      %v2156 = vshrl.u32 %v2155, 7
      %v2157 = vsub.s32 %v2154, %v2156
      %v2158 = vrot.slane %v2145, %v2157
      %v2160 = vunpack.c.l.s4 1966171168
      %v2161 = vunpack.c.0.s8 %v2160
      %v2162 = vlaneseq
      %v2163 = vshrl.u32 %v2162, 7
      %v2164 = vsub.s32 %v2161, %v2163
      %v2165 = vrot.slane %v2151, %v2164
      %v2166 = vcombine.high %v2158, %v2158
      %v2167 = vcombine.high %v2165, %v2165
      %v2169 = vunpack.c.l.s4 1966171168
      %v2170 = vunpack.c.0.s8 %v2169
      %v2171 = vlaneseq
      %v2172 = vshrl.u32 %v2171, 7
      %v2173 = vsub.s32 %v2170, %v2172
      %v2174 = vrot.slane %v2158, %v2173
      %v2176 = vunpack.c.l.s4 1966171168
      %v2177 = vunpack.c.0.s8 %v2176
      %v2178 = vlaneseq
      %v2179 = vshrl.u32 %v2178, 7
      %v2180 = vsub.s32 %v2177, %v2179
      %v2181 = vrot.slane %v2165, %v2180
      %v2183 = vunpack.c.l.s4 1966171168
      %v2184 = vunpack.c.0.s8 %v2183
      %v2185 = vlaneseq
      %v2186 = vshrl.u32 %v2185, 7
      %v2187 = vsub.s32 %v2184, %v2186
      %v2188 = vrot.slane %v2166, %v2187
      %v2190 = vunpack.c.l.s4 1966171168
      %v2191 = vunpack.c.0.s8 %v2190
      %v2192 = vlaneseq
      %v2193 = vshrl.u32 %v2192, 7
      %v2194 = vsub.s32 %v2191, %v2193
      %v2195 = vrot.slane %v2167, %v2194
      %v2196 = vcombine.high %v2174, %v2174
      %v2197 = vcombine.high %v2181, %v2181
      %v2198 = vcombine.high %v2188, %v2188
      %v2199 = vcombine.high %v2195, %v2195
      %2208 = vst.msk [vmem:[%s685 + $0x1] sm:$0x1] %vm1677, %v2174
      %2209 = vst.msk [vmem:[%s685 + $0x5] sm:$0x1] %vm1677, %v2188
      %2210 = vst.msk [vmem:[%s685 + $0x9] sm:$0x1] %vm1677, %v2196
      %2211 = vst.msk [vmem:[%s685 + $0xd] sm:$0x1] %vm1677, %v2198
      %2212 = vst.msk [vmem:[%s685 + $0x11] sm:$0x1] %vm1677, %v2181
      %2213 = vst.msk [vmem:[%s685 + $0x15] sm:$0x1] %vm1677, %v2195
      %2214 = vst.msk [vmem:[%s685 + $0x19] sm:$0x1] %vm1677, %v2197
      %2215 = vst.msk [vmem:[%s685 + $0x1d] sm:$0x1] %vm1677, %v2199
      %2216 = vmatprep.subr.bf16.mxu0 0
      %2217 = vmatpush1.bf16.msra.mxu0 0
      %2218 = vmatprep.subr.bf16.mxu0 0
      %2219 = vmatpush1.bf16.msra.mxu0 0
      %2220 = vmatprep.subr.bf16.mxu0 0
      %2221 = vmatpush1.bf16.msra.mxu0 0
      %2222 = vmatprep.subr.bf16.mxu0 0
      %2223 = vmatpush1.bf16.msra.mxu0 0
      %2224 = vmatprep.subr.bf16.mxu0 0
      %2225 = vmatpush1.bf16.msra.mxu0 0
      %2226 = vmatprep.subr.bf16.mxu0 0
      %2227 = vmatpush1.bf16.msra.mxu0 0
      %2228 = vmatprep.subr.bf16.mxu0 0
      %2229 = vmatpush1.bf16.msra.mxu0 %v1825
      %2230 = vmatprep.subr.bf16.mxu0 0
      %2231 = vmatpush1.bf16.msra.mxu0 %v1824
      %2232 = vmatprep.subr.bf16.mxu0 0
      %2233 = vmatpush2.bf16.msra.mxu0 0
      %2234 = vmatprep.subr.bf16.mxu0 0
      %2235 = vmatpush2.bf16.msra.mxu0 0
      %2236 = vmatprep.subr.bf16.mxu0 0
      %2237 = vmatpush2.bf16.msra.mxu0 0
      %2238 = vmatprep.subr.bf16.mxu0 0
      %2239 = vmatpush2.bf16.msra.mxu0 0
      %2240 = vmatprep.subr.bf16.mxu0 0
      %2241 = vmatpush2.bf16.msra.mxu0 0
      %2242 = vmatprep.subr.bf16.mxu0 0
      %2243 = vmatpush2.bf16.msra.mxu0 0
      %2244 = vmatprep.subr.bf16.mxu0 0
      %2245 = vmatpush2.bf16.msra.mxu0 0
      %2246 = vmatprep.subr.bf16.mxu0 0
      %2247 = vmatpush2.bf16.msra.mxu0 0
      %2248 = vmatprep.mubr.bf16.mxu0 0
      %2249 = vmatmul.mubr.bf16.gmra.mxu0 %v2002
      %v2250 = vpop.f32.mrf.mxu0
      %v2251 = vadd.f32 %v1814, %v2250
      %v2252 = vpop.f32.mrf.mxu0
      %v2253 = vpop.f32.mrf.mxu0
      %v2254 = vpop.f32.mrf.mxu0
      %2255 = vdwg.mxu0
      %v2257 = vcombine.high %v2251, %v2251
      %v2259 = vunpack.c.l.s4 1966171168
      %v2260 = vunpack.c.0.s8 %v2259
      %v2261 = vlaneseq
      %v2262 = vshrl.u32 %v2261, 7
      %v2263 = vsub.s32 %v2260, %v2262
      %v2264 = vrot.slane %v2251, %v2263
      %v2266 = vunpack.c.l.s4 1966171168
      %v2267 = vunpack.c.0.s8 %v2266
      %v2268 = vlaneseq
      %v2269 = vshrl.u32 %v2268, 7
      %v2270 = vsub.s32 %v2267, %v2269
      %v2271 = vrot.slane %v2257, %v2270
      %v2272 = vcombine.high %v2264, %v2264
      %v2273 = vcombine.high %v2271, %v2271
      %v2275 = vunpack.c.l.s4 1966171168
      %v2276 = vunpack.c.0.s8 %v2275
      %v2277 = vlaneseq
      %v2278 = vshrl.u32 %v2277, 7
      %v2279 = vsub.s32 %v2276, %v2278
      %v2280 = vrot.slane %v2264, %v2279
      %v2282 = vunpack.c.l.s4 1966171168
      %v2283 = vunpack.c.0.s8 %v2282
      %v2284 = vlaneseq
      %v2285 = vshrl.u32 %v2284, 7
      %v2286 = vsub.s32 %v2283, %v2285
      %v2287 = vrot.slane %v2271, %v2286
      %v2289 = vunpack.c.l.s4 1966171168
      %v2290 = vunpack.c.0.s8 %v2289
      %v2291 = vlaneseq
      %v2292 = vshrl.u32 %v2291, 7
      %v2293 = vsub.s32 %v2290, %v2292
      %v2294 = vrot.slane %v2272, %v2293
      %v2296 = vunpack.c.l.s4 1966171168
      %v2297 = vunpack.c.0.s8 %v2296
      %v2298 = vlaneseq
      %v2299 = vshrl.u32 %v2298, 7
      %v2300 = vsub.s32 %v2297, %v2299
      %v2301 = vrot.slane %v2273, %v2300
      %v2302 = vcombine.high %v2280, %v2280
      %v2303 = vcombine.high %v2287, %v2287
      %v2304 = vcombine.high %v2294, %v2294
      %v2305 = vcombine.high %v2301, %v2301
      %2314 = vst.msk [vmem:[%s690 + $0x1] sm:$0x1] %vm1677, %v2280
      %2315 = vst.msk [vmem:[%s690 + $0x5] sm:$0x1] %vm1677, %v2294
      %2316 = vst.msk [vmem:[%s690 + $0x9] sm:$0x1] %vm1677, %v2302
      %2317 = vst.msk [vmem:[%s690 + $0xd] sm:$0x1] %vm1677, %v2304
      %2318 = vst.msk [vmem:[%s690 + $0x11] sm:$0x1] %vm1677, %v2287
      %2319 = vst.msk [vmem:[%s690 + $0x15] sm:$0x1] %vm1677, %v2301
      %2320 = vst.msk [vmem:[%s690 + $0x19] sm:$0x1] %vm1677, %v2303
      %2321 = vst.msk [vmem:[%s690 + $0x1d] sm:$0x1] %vm1677, %v2305
      %v2323 = vcombine.high %v1474, %v1474
      %v2325 = vunpack.c.l.s4 1966171168
      %v2326 = vunpack.c.0.s8 %v2325
      %v2327 = vlaneseq
      %v2328 = vshrl.u32 %v2327, 7
      %v2329 = vsub.s32 %v2326, %v2328
      %v2330 = vrot.slane %v1474, %v2329
      %v2332 = vunpack.c.l.s4 1966171168
      %v2333 = vunpack.c.0.s8 %v2332
      %v2334 = vlaneseq
      %v2335 = vshrl.u32 %v2334, 7
      %v2336 = vsub.s32 %v2333, %v2335
      %v2337 = vrot.slane %v2323, %v2336
      %v2338 = vcombine.high %v2330, %v2330
      %v2339 = vcombine.high %v2337, %v2337
      %v2341 = vunpack.c.l.s4 1966171168
      %v2342 = vunpack.c.0.s8 %v2341
      %v2343 = vlaneseq
      %v2344 = vshrl.u32 %v2343, 7
      %v2345 = vsub.s32 %v2342, %v2344
      %v2346 = vrot.slane %v2330, %v2345
      %v2348 = vunpack.c.l.s4 1966171168
      %v2349 = vunpack.c.0.s8 %v2348
      %v2350 = vlaneseq
      %v2351 = vshrl.u32 %v2350, 7
      %v2352 = vsub.s32 %v2349, %v2351
      %v2353 = vrot.slane %v2337, %v2352
      %v2355 = vunpack.c.l.s4 1966171168
      %v2356 = vunpack.c.0.s8 %v2355
      %v2357 = vlaneseq
      %v2358 = vshrl.u32 %v2357, 7
      %v2359 = vsub.s32 %v2356, %v2358
      %v2360 = vrot.slane %v2338, %v2359
      %v2362 = vunpack.c.l.s4 1966171168
      %v2363 = vunpack.c.0.s8 %v2362
      %v2364 = vlaneseq
      %v2365 = vshrl.u32 %v2364, 7
      %v2366 = vsub.s32 %v2363, %v2365
      %v2367 = vrot.slane %v2339, %v2366
      %v2368 = vcombine.high %v2346, %v2346
      %v2369 = vcombine.high %v2353, %v2353
      %v2370 = vcombine.high %v2360, %v2360
      %v2371 = vcombine.high %v2367, %v2367
      %2380 = vst.msk [vmem:[%s675 + $0x2] sm:$0x1] %vm1548, %v2346
      %2381 = vst.msk [vmem:[%s675 + $0x6] sm:$0x1] %vm1548, %v2360
      %2382 = vst.msk [vmem:[%s675 + $0xa] sm:$0x1] %vm1548, %v2368
      %2383 = vst.msk [vmem:[%s675 + $0xe] sm:$0x1] %vm1548, %v2370
      %2384 = vst.msk [vmem:[%s675 + $0x12] sm:$0x1] %vm1548, %v2353
      %2385 = vst.msk [vmem:[%s675 + $0x16] sm:$0x1] %vm1548, %v2367
      %2386 = vst.msk [vmem:[%s675 + $0x1a] sm:$0x1] %vm1548, %v2369
      %2387 = vst.msk [vmem:[%s675 + $0x1e] sm:$0x1] %vm1548, %v2371
      %v2388 = vpack.c.bf16 %v1474, %v1474
      %v2390 = vsel %vm1414, %v2388, 0
      %2392 = vmatprep.subr.bf16.mxu0 0
      %2393 = vmatpush1.bf16.msra.mxu0 0
      %2394 = vmatprep.subr.bf16.mxu0 0
      %2395 = vmatpush1.bf16.msra.mxu0 0
      %2396 = vmatprep.subr.bf16.mxu0 0
      %2397 = vmatpush1.bf16.msra.mxu0 0
      %2398 = vmatprep.subr.bf16.mxu0 0
      %2399 = vmatpush1.bf16.msra.mxu0 0
      %2400 = vmatprep.subr.bf16.mxu0 0
      %2401 = vmatpush1.bf16.msra.mxu0 0
      %2402 = vmatprep.subr.bf16.mxu0 0
      %2403 = vmatpush1.bf16.msra.mxu0 0
      %2404 = vmatprep.subr.bf16.mxu0 0
      %2405 = vmatpush1.bf16.msra.mxu0 %v1573
      %2406 = vmatprep.subr.bf16.mxu0 0
      %2407 = vmatpush1.bf16.msra.mxu0 %v1572
      %2408 = vmatprep.subr.bf16.mxu0 0
      %2409 = vmatpush2.bf16.msra.mxu0 0
      %2410 = vmatprep.subr.bf16.mxu0 0
      %2411 = vmatpush2.bf16.msra.mxu0 0
      %2412 = vmatprep.subr.bf16.mxu0 0
      %2413 = vmatpush2.bf16.msra.mxu0 0
      %2414 = vmatprep.subr.bf16.mxu0 0
      %2415 = vmatpush2.bf16.msra.mxu0 0
      %2416 = vmatprep.subr.bf16.mxu0 0
      %2417 = vmatpush2.bf16.msra.mxu0 0
      %2418 = vmatprep.subr.bf16.mxu0 0
      %2419 = vmatpush2.bf16.msra.mxu0 0
      %2420 = vmatprep.subr.bf16.mxu0 0
      %2421 = vmatpush2.bf16.msra.mxu0 0
      %2422 = vmatprep.subr.bf16.mxu0 0
      %2423 = vmatpush2.bf16.msra.mxu0 0
      %2424 = vmatprep.mubr.bf16.mxu0 0
      %2425 = vmatmul.mubr.bf16.gmra.mxu0 %v2390
      %v2426 = vpop.f32.mrf.mxu0
      %v2427 = vadd.f32 %v1562, %v2426
      %v2428 = vpop.f32.mrf.mxu0
      %v2429 = vpop.f32.mrf.mxu0
      %v2430 = vpop.f32.mrf.mxu0
      %2431 = vdwg.mxu0
      %v2433 = vcombine.high %v2427, %v2427
      %v2435 = vunpack.c.l.s4 1966171168
      %v2436 = vunpack.c.0.s8 %v2435
      %v2437 = vlaneseq
      %v2438 = vshrl.u32 %v2437, 7
      %v2439 = vsub.s32 %v2436, %v2438
      %v2440 = vrot.slane %v2427, %v2439
      %v2442 = vunpack.c.l.s4 1966171168
      %v2443 = vunpack.c.0.s8 %v2442
      %v2444 = vlaneseq
      %v2445 = vshrl.u32 %v2444, 7
      %v2446 = vsub.s32 %v2443, %v2445
      %v2447 = vrot.slane %v2433, %v2446
      %v2448 = vcombine.high %v2440, %v2440
      %v2449 = vcombine.high %v2447, %v2447
      %v2451 = vunpack.c.l.s4 1966171168
      %v2452 = vunpack.c.0.s8 %v2451
      %v2453 = vlaneseq
      %v2454 = vshrl.u32 %v2453, 7
      %v2455 = vsub.s32 %v2452, %v2454
      %v2456 = vrot.slane %v2440, %v2455
      %v2458 = vunpack.c.l.s4 1966171168
      %v2459 = vunpack.c.0.s8 %v2458
      %v2460 = vlaneseq
      %v2461 = vshrl.u32 %v2460, 7
      %v2462 = vsub.s32 %v2459, %v2461
      %v2463 = vrot.slane %v2447, %v2462
      %v2465 = vunpack.c.l.s4 1966171168
      %v2466 = vunpack.c.0.s8 %v2465
      %v2467 = vlaneseq
      %v2468 = vshrl.u32 %v2467, 7
      %v2469 = vsub.s32 %v2466, %v2468
      %v2470 = vrot.slane %v2448, %v2469
      %v2472 = vunpack.c.l.s4 1966171168
      %v2473 = vunpack.c.0.s8 %v2472
      %v2474 = vlaneseq
      %v2475 = vshrl.u32 %v2474, 7
      %v2476 = vsub.s32 %v2473, %v2475
      %v2477 = vrot.slane %v2449, %v2476
      %v2478 = vcombine.high %v2456, %v2456
      %v2479 = vcombine.high %v2463, %v2463
      %v2480 = vcombine.high %v2470, %v2470
      %v2481 = vcombine.high %v2477, %v2477
      %2490 = vst.msk [vmem:[%s680 + $0x2] sm:$0x1] %vm1677, %v2456
      %2491 = vst.msk [vmem:[%s680 + $0x6] sm:$0x1] %vm1677, %v2470
      %2492 = vst.msk [vmem:[%s680 + $0xa] sm:$0x1] %vm1677, %v2478
      %2493 = vst.msk [vmem:[%s680 + $0xe] sm:$0x1] %vm1677, %v2480
      %2494 = vst.msk [vmem:[%s680 + $0x12] sm:$0x1] %vm1677, %v2463
      %2495 = vst.msk [vmem:[%s680 + $0x16] sm:$0x1] %vm1677, %v2477
      %2496 = vst.msk [vmem:[%s680 + $0x1a] sm:$0x1] %vm1677, %v2479
      %2497 = vst.msk [vmem:[%s680 + $0x1e] sm:$0x1] %vm1677, %v2481
      %2498 = vmatprep.subr.bf16.mxu0 0
      %2499 = vmatpush1.bf16.msra.mxu0 0
      %2500 = vmatprep.subr.bf16.mxu0 0
      %2501 = vmatpush1.bf16.msra.mxu0 0
      %2502 = vmatprep.subr.bf16.mxu0 0
      %2503 = vmatpush1.bf16.msra.mxu0 0
      %2504 = vmatprep.subr.bf16.mxu0 0
      %2505 = vmatpush1.bf16.msra.mxu0 0
      %2506 = vmatprep.subr.bf16.mxu0 0
      %2507 = vmatpush1.bf16.msra.mxu0 0
      %2508 = vmatprep.subr.bf16.mxu0 0
      %2509 = vmatpush1.bf16.msra.mxu0 0
      %2510 = vmatprep.subr.bf16.mxu0 0
      %2511 = vmatpush1.bf16.msra.mxu0 %v1701
      %2512 = vmatprep.subr.bf16.mxu0 0
      %2513 = vmatpush1.bf16.msra.mxu0 %v1700
      %2514 = vmatprep.subr.bf16.mxu0 0
      %2515 = vmatpush2.bf16.msra.mxu0 0
      %2516 = vmatprep.subr.bf16.mxu0 0
      %2517 = vmatpush2.bf16.msra.mxu0 0
      %2518 = vmatprep.subr.bf16.mxu0 0
      %2519 = vmatpush2.bf16.msra.mxu0 0
      %2520 = vmatprep.subr.bf16.mxu0 0
      %2521 = vmatpush2.bf16.msra.mxu0 0
      %2522 = vmatprep.subr.bf16.mxu0 0
      %2523 = vmatpush2.bf16.msra.mxu0 0
      %2524 = vmatprep.subr.bf16.mxu0 0
      %2525 = vmatpush2.bf16.msra.mxu0 0
      %2526 = vmatprep.subr.bf16.mxu0 0
      %2527 = vmatpush2.bf16.msra.mxu0 0
      %2528 = vmatprep.subr.bf16.mxu0 0
      %2529 = vmatpush2.bf16.msra.mxu0 0
      %2530 = vmatprep.mubr.bf16.mxu0 0
      %2531 = vmatmul.mubr.bf16.gmra.mxu0 %v2390
      %v2532 = vpop.f32.mrf.mxu0
      %v2533 = vadd.f32 %v1690, %v2532
      %v2534 = vpop.f32.mrf.mxu0
      %v2535 = vpop.f32.mrf.mxu0
      %v2536 = vpop.f32.mrf.mxu0
      %2537 = vdwg.mxu0
      %v2539 = vcombine.high %v2533, %v2533
      %v2541 = vunpack.c.l.s4 1966171168
      %v2542 = vunpack.c.0.s8 %v2541
      %v2543 = vlaneseq
      %v2544 = vshrl.u32 %v2543, 7
      %v2545 = vsub.s32 %v2542, %v2544
      %v2546 = vrot.slane %v2533, %v2545
      %v2548 = vunpack.c.l.s4 1966171168
      %v2549 = vunpack.c.0.s8 %v2548
      %v2550 = vlaneseq
      %v2551 = vshrl.u32 %v2550, 7
      %v2552 = vsub.s32 %v2549, %v2551
      %v2553 = vrot.slane %v2539, %v2552
      %v2554 = vcombine.high %v2546, %v2546
      %v2555 = vcombine.high %v2553, %v2553
      %v2557 = vunpack.c.l.s4 1966171168
      %v2558 = vunpack.c.0.s8 %v2557
      %v2559 = vlaneseq
      %v2560 = vshrl.u32 %v2559, 7
      %v2561 = vsub.s32 %v2558, %v2560
      %v2562 = vrot.slane %v2546, %v2561
      %v2564 = vunpack.c.l.s4 1966171168
      %v2565 = vunpack.c.0.s8 %v2564
      %v2566 = vlaneseq
      %v2567 = vshrl.u32 %v2566, 7
      %v2568 = vsub.s32 %v2565, %v2567
      %v2569 = vrot.slane %v2553, %v2568
      %v2571 = vunpack.c.l.s4 1966171168
      %v2572 = vunpack.c.0.s8 %v2571
      %v2573 = vlaneseq
      %v2574 = vshrl.u32 %v2573, 7
      %v2575 = vsub.s32 %v2572, %v2574
      %v2576 = vrot.slane %v2554, %v2575
      %v2578 = vunpack.c.l.s4 1966171168
      %v2579 = vunpack.c.0.s8 %v2578
      %v2580 = vlaneseq
      %v2581 = vshrl.u32 %v2580, 7
      %v2582 = vsub.s32 %v2579, %v2581
      %v2583 = vrot.slane %v2555, %v2582
      %v2584 = vcombine.high %v2562, %v2562
      %v2585 = vcombine.high %v2569, %v2569
      %v2586 = vcombine.high %v2576, %v2576
      %v2587 = vcombine.high %v2583, %v2583
      %2596 = vst.msk [vmem:[%s685 + $0x2] sm:$0x1] %vm1677, %v2562
      %2597 = vst.msk [vmem:[%s685 + $0x6] sm:$0x1] %vm1677, %v2576
      %2598 = vst.msk [vmem:[%s685 + $0xa] sm:$0x1] %vm1677, %v2584
      %2599 = vst.msk [vmem:[%s685 + $0xe] sm:$0x1] %vm1677, %v2586
      %2600 = vst.msk [vmem:[%s685 + $0x12] sm:$0x1] %vm1677, %v2569
      %2601 = vst.msk [vmem:[%s685 + $0x16] sm:$0x1] %vm1677, %v2583
      %2602 = vst.msk [vmem:[%s685 + $0x1a] sm:$0x1] %vm1677, %v2585
      %2603 = vst.msk [vmem:[%s685 + $0x1e] sm:$0x1] %vm1677, %v2587
      %2604 = vmatprep.subr.bf16.mxu0 0
      %2605 = vmatpush1.bf16.msra.mxu0 0
      %2606 = vmatprep.subr.bf16.mxu0 0
      %2607 = vmatpush1.bf16.msra.mxu0 0
      %2608 = vmatprep.subr.bf16.mxu0 0
      %2609 = vmatpush1.bf16.msra.mxu0 0
      %2610 = vmatprep.subr.bf16.mxu0 0
      %2611 = vmatpush1.bf16.msra.mxu0 0
      %2612 = vmatprep.subr.bf16.mxu0 0
      %2613 = vmatpush1.bf16.msra.mxu0 0
      %2614 = vmatprep.subr.bf16.mxu0 0
      %2615 = vmatpush1.bf16.msra.mxu0 0
      %2616 = vmatprep.subr.bf16.mxu0 0
      %2617 = vmatpush1.bf16.msra.mxu0 %v1825
      %2618 = vmatprep.subr.bf16.mxu0 0
      %2619 = vmatpush1.bf16.msra.mxu0 %v1824
      %2620 = vmatprep.subr.bf16.mxu0 0
      %2621 = vmatpush2.bf16.msra.mxu0 0
      %2622 = vmatprep.subr.bf16.mxu0 0
      %2623 = vmatpush2.bf16.msra.mxu0 0
      %2624 = vmatprep.subr.bf16.mxu0 0
      %2625 = vmatpush2.bf16.msra.mxu0 0
      %2626 = vmatprep.subr.bf16.mxu0 0
      %2627 = vmatpush2.bf16.msra.mxu0 0
      %2628 = vmatprep.subr.bf16.mxu0 0
      %2629 = vmatpush2.bf16.msra.mxu0 0
      %2630 = vmatprep.subr.bf16.mxu0 0
      %2631 = vmatpush2.bf16.msra.mxu0 0
      %2632 = vmatprep.subr.bf16.mxu0 0
      %2633 = vmatpush2.bf16.msra.mxu0 0
      %2634 = vmatprep.subr.bf16.mxu0 0
      %2635 = vmatpush2.bf16.msra.mxu0 0
      %2636 = vmatprep.mubr.bf16.mxu0 0
      %2637 = vmatmul.mubr.bf16.gmra.mxu0 %v2390
      %v2638 = vpop.f32.mrf.mxu0
      %v2639 = vadd.f32 %v1814, %v2638
      %v2640 = vpop.f32.mrf.mxu0
      %v2641 = vpop.f32.mrf.mxu0
      %v2642 = vpop.f32.mrf.mxu0
      %2643 = vdwg.mxu0
      %v2645 = vcombine.high %v2639, %v2639
      %v2647 = vunpack.c.l.s4 1966171168
      %v2648 = vunpack.c.0.s8 %v2647
      %v2649 = vlaneseq
      %v2650 = vshrl.u32 %v2649, 7
      %v2651 = vsub.s32 %v2648, %v2650
      %v2652 = vrot.slane %v2639, %v2651
      %v2654 = vunpack.c.l.s4 1966171168
      %v2655 = vunpack.c.0.s8 %v2654
      %v2656 = vlaneseq
      %v2657 = vshrl.u32 %v2656, 7
      %v2658 = vsub.s32 %v2655, %v2657
      %v2659 = vrot.slane %v2645, %v2658
      %v2660 = vcombine.high %v2652, %v2652
      %v2661 = vcombine.high %v2659, %v2659
      %v2663 = vunpack.c.l.s4 1966171168
      %v2664 = vunpack.c.0.s8 %v2663
      %v2665 = vlaneseq
      %v2666 = vshrl.u32 %v2665, 7
      %v2667 = vsub.s32 %v2664, %v2666
      %v2668 = vrot.slane %v2652, %v2667
      %v2670 = vunpack.c.l.s4 1966171168
      %v2671 = vunpack.c.0.s8 %v2670
      %v2672 = vlaneseq
      %v2673 = vshrl.u32 %v2672, 7
      %v2674 = vsub.s32 %v2671, %v2673
      %v2675 = vrot.slane %v2659, %v2674
      %v2677 = vunpack.c.l.s4 1966171168
      %v2678 = vunpack.c.0.s8 %v2677
      %v2679 = vlaneseq
      %v2680 = vshrl.u32 %v2679, 7
      %v2681 = vsub.s32 %v2678, %v2680
      %v2682 = vrot.slane %v2660, %v2681
      %v2684 = vunpack.c.l.s4 1966171168
      %v2685 = vunpack.c.0.s8 %v2684
      %v2686 = vlaneseq
      %v2687 = vshrl.u32 %v2686, 7
      %v2688 = vsub.s32 %v2685, %v2687
      %v2689 = vrot.slane %v2661, %v2688
      %v2690 = vcombine.high %v2668, %v2668
      %v2691 = vcombine.high %v2675, %v2675
      %v2692 = vcombine.high %v2682, %v2682
      %v2693 = vcombine.high %v2689, %v2689
      %2702 = vst.msk [vmem:[%s690 + $0x2] sm:$0x1] %vm1677, %v2668
      %2703 = vst.msk [vmem:[%s690 + $0x6] sm:$0x1] %vm1677, %v2682
      %2704 = vst.msk [vmem:[%s690 + $0xa] sm:$0x1] %vm1677, %v2690
      %2705 = vst.msk [vmem:[%s690 + $0xe] sm:$0x1] %vm1677, %v2692
      %2706 = vst.msk [vmem:[%s690 + $0x12] sm:$0x1] %vm1677, %v2675
      %2707 = vst.msk [vmem:[%s690 + $0x16] sm:$0x1] %vm1677, %v2689
      %2708 = vst.msk [vmem:[%s690 + $0x1a] sm:$0x1] %vm1677, %v2691
      %2709 = vst.msk [vmem:[%s690 + $0x1e] sm:$0x1] %vm1677, %v2693
      %p2710 = scmp.lt.s32.totalorder %s31, 1
      %s2711 = scalar_select %p2710, %s31, 1
      %s2712 = smul.addr %s2711, 8
      %s2713 = smul.addr %s2712, 4
      %s2714 = scalar_lea.vmem %s16, %s2713
      %p2715 = scmp.lt.s32.totalorder %s31, 1
      %s2716 = scalar_select %p2715, %s31, 1
      %s2717 = smul.addr %s2716, 8
      %s2718 = smul.addr %s2717, 4
      %s2719 = scalar_lea.vmem %s17, %s2718
      %p2720 = scmp.lt.s32.totalorder %s31, 1
      %s2721 = scalar_select %p2720, %s31, 1
      %s2722 = smul.addr %s2721, 8
      %s2723 = smul.addr %s2722, 4
      %s2724 = scalar_lea.vmem %s18, %s2723
      %p2725 = scmp.lt.s32.totalorder %s31, 1
      %s2726 = scalar_select %p2725, %s31, 1
      %s2727 = smul.addr %s2726, 8
      %s2728 = smul.addr %s2727, 4
      %s2729 = scalar_lea.vmem %s19, %s2728
      // Predicated region
      $region85: #{decision_transformer.6} parent=83 // pred_check
        %p2730 = pneg %p405
      $region86: #{decision_transformer.6} parent=83 // pred_check_branch
        %2732 = sbr.rel (%p2730) target = $region88
      $region87: #{decision_transformer.6} parent=83 // pred_region
        _
      $region88: #{decision_transformer.6} parent=83 // pred_fallthru
        _
      // Predicated region
      $region89: #{decision_transformer.6} parent=83 // pred_check
        %p2733 = pneg %p431
      $region90: #{decision_transformer.6} parent=83 // pred_check_branch
        %2735 = sbr.rel (%p2733) target = $region92
      $region91: #{decision_transformer.6} parent=83 // pred_region
        _
      $region92: #{decision_transformer.6} parent=83 // pred_fallthru
        _
      // Predicated region
      $region93: #{decision_transformer.6} parent=83 // pred_check
        %p2736 = pneg %p457
      $region94: #{decision_transformer.6} parent=83 // pred_check_branch
        %2738 = sbr.rel (%p2736) target = $region96
      $region95: #{decision_transformer.6} parent=83 // pred_region
        _
      $region96: #{decision_transformer.6} parent=83 // pred_fallthru
        _
      // Predicated region
      $region97: #{decision_transformer.6} parent=83 // pred_check
        %p2739 = pneg %p483
      $region98: #{decision_transformer.6} parent=83 // pred_check_branch
        %2741 = sbr.rel (%p2739) target = $region100
      $region99: #{decision_transformer.6} parent=83 // pred_region
        _
      $region100: #{decision_transformer.6} parent=83 // pred_fallthru
        _
    $region84: #{decision_transformer.6} parent=5 // pred_fallthru
      _
    %p2742 = scmp.le.s32.totalorder 2, %s26
    // Predicated region
    $region101: #{decision_transformer.6} parent=5 // pred_check
      %p2743 = pneg %p2742
    $region102: #{decision_transformer.6} parent=5 // pred_check_branch
      %2745 = sbr.rel (%p2743) target = $region104
    $region103: #{decision_transformer.6} parent=5 // pred_region
      %s2746 = ssub.s32 %s26, 2
      // Predicated region
      $region105: #{decision_transformer.6} parent=103 // pred_check
        %p2747 = pneg %p411
      $region106: #{decision_transformer.6} parent=103 // pred_check_branch
        %2749 = sbr.rel (%p2747) target = $region108
      $region107: #{decision_transformer.6} parent=103 // pred_region
        %p2750 = scmp.lt.s32.totalorder %s32, 1
        %s2751 = scalar_select %p2750, %s32, 1
        %s2752 = smul.addr %s2751, 8
        %s2753 = smul.addr %s2752, 4
        %s2754 = scalar_lea.vmem %s16, %s2753
      $region108: #{decision_transformer.6} parent=103 // pred_fallthru
        _
      // Predicated region
      $region109: #{decision_transformer.6} parent=103 // pred_check
        %p2755 = pneg %p437
      $region110: #{decision_transformer.6} parent=103 // pred_check_branch
        %2757 = sbr.rel (%p2755) target = $region112
      $region111: #{decision_transformer.6} parent=103 // pred_region
        %p2758 = scmp.lt.s32.totalorder %s32, 1
        %s2759 = scalar_select %p2758, %s32, 1
        %s2760 = smul.addr %s2759, 8
        %s2761 = smul.addr %s2760, 4
        %s2762 = scalar_lea.vmem %s17, %s2761
      $region112: #{decision_transformer.6} parent=103 // pred_fallthru
        _
      // Predicated region
      $region113: #{decision_transformer.6} parent=103 // pred_check
        %p2763 = pneg %p463
      $region114: #{decision_transformer.6} parent=103 // pred_check_branch
        %2765 = sbr.rel (%p2763) target = $region116
      $region115: #{decision_transformer.6} parent=103 // pred_region
        %p2766 = scmp.lt.s32.totalorder %s32, 1
        %s2767 = scalar_select %p2766, %s32, 1
        %s2768 = smul.addr %s2767, 8
        %s2769 = smul.addr %s2768, 4
        %s2770 = scalar_lea.vmem %s18, %s2769
      $region116: #{decision_transformer.6} parent=103 // pred_fallthru
        _
      // Predicated region
      $region117: #{decision_transformer.6} parent=103 // pred_check
        %p2771 = pneg %p489
      $region118: #{decision_transformer.6} parent=103 // pred_check_branch
        %2773 = sbr.rel (%p2771) target = $region120
      $region119: #{decision_transformer.6} parent=103 // pred_region
        %p2774 = scmp.lt.s32.totalorder %s32, 1
        %s2775 = scalar_select %p2774, %s32, 1
        %s2776 = smul.addr %s2775, 8
        %s2777 = smul.addr %s2776, 4
        %s2778 = scalar_lea.vmem %s19, %s2777
      $region120: #{decision_transformer.6} parent=103 // pred_fallthru
        _
    $region104: #{decision_transformer.6} parent=5 // pred_fallthru
      _
  $region6: #{decision_transformer.6} parent=0 // loop_footer
    %s30 = sadd.s32 1, %s26
  $region7: #{decision_transformer.6} parent=0 // loop_footer_branch
    %25 = sbr.rel target = $region3
  $region8: #{decision_transformer.6} parent=0 // loop_exit
    _

// kernel: decision_transformer.10
$region0: #{decision_transformer.10}
  #allocation0 [shape = 'u32[]', space=smem, size = 0x4, offset = 0x4, fixed_abs, tag = 'smem constant byte address 0x4 - core index']
  #allocation1 [shape = 'u32[144,128]{1,0:T(1,128)}', space=vmem, size = 0x12000, scoped, tag = 'internal scratch']
  %s0 = inlined_call_operand.vmem [shape: f32[2,24,64], index: 0, kind: input, shape index: {}]
  %s1 = inlined_call_operand.vmem [shape: f32[2,24,32], index: 1, kind: input, shape index: {}]
  %s2 = inlined_call_operand.vmem [shape: bf16[64,32], index: 2, kind: input, shape index: {}]
  %s3 = inlined_call_operand.vmem [shape: f32[1,32], index: 3, kind: input, shape index: {}]
  %s4 = inlined_call_operand.vmem [shape: f32[1,32], index: 4, kind: input, shape index: {}]
  %s5 = inlined_call_operand.vmem [shape: f32[1,32], index: 5, kind: input, shape index: {}]
  %s6 = inlined_call_operand.vmem [shape: bf16[32,128], index: 6, kind: input, shape index: {}]
  %s7 = inlined_call_operand.vmem [shape: f32[1,128], index: 7, kind: input, shape index: {}]
  %s8 = inlined_call_operand.vmem [shape: bf16[128,32], index: 8, kind: input, shape index: {}]
  %s9 = inlined_call_operand.vmem [shape: f32[1,32], index: 9, kind: input, shape index: {}]
  %s10 = inlined_call_operand.vmem [shape: f32[1,32], index: 10, kind: input, shape index: {}]
  %s11 = inlined_call_operand.vmem [shape: f32[1,32], index: 11, kind: input, shape index: {}]
  %s12 = inlined_call_operand.vmem [shape: f32[2,24,32], index: 12, kind: output, shape index: {}]
  %s13 = sld [smem:[#allocation0]]
  $region81: #{decision_transformer.10} parent=0
    _
  %s15 = ssub.s32 1, %s13
  %s16 = scalar_select 0, %s15, %s13
  loop: start=0, step=1, limit=4
  $region2: #{decision_transformer.10} parent=0 // loop_pre_header
    _
  $region3: #{decision_transformer.10} parent=0 // loop_header
    %s18 = sphi 0, %s22
    %p19 = scmp.ge.s32.totalorder %s18, 4
    %s28 = sphi 0, %s30
    %s31 = sphi 0, %s28
    %s32 = sphi 0, %s31
    %s48 = sphi 0, %s32
    %s54 = sphi 0, %s56
    %s57 = sphi 0, %s54
    %s58 = sphi 0, %s57
    %s74 = sphi 0, %s58
    %s78 = sphi 0, %s78
    %s80 = sphi 0, %s78
    %s81 = sphi 0, %s80
    %s95 = sphi 0, %s81
    %s99 = sphi 0, %s99
    %s101 = sphi 0, %s99
    %s102 = sphi 0, %s101
    %s116 = sphi 0, %s102
    %s120 = sphi 0, %s120
    %s122 = sphi 0, %s120
    %s123 = sphi 0, %s122
    %s137 = sphi 0, %s123
    %s141 = sphi 0, %s141
    %s143 = sphi 0, %s141
    %s144 = sphi 0, %s143
    %s158 = sphi 0, %s144
    %s162 = sphi 0, %s162
    %s164 = sphi 0, %s162
    %s165 = sphi 0, %s164
    %s179 = sphi 0, %s165
    %s183 = sphi 0, %s183
    %s185 = sphi 0, %s183
    %s186 = sphi 0, %s185
    %s200 = sphi 0, %s186
    %s204 = sphi 0, %s204
    %s206 = sphi 0, %s204
    %s207 = sphi 0, %s206
    %s221 = sphi 0, %s207
    %s225 = sphi 0, %s225
    %s227 = sphi 0, %s225
    %s228 = sphi 0, %s227
    %s242 = sphi 0, %s228
    %s246 = sphi 0, %s246
    %s248 = sphi 0, %s246
    %s249 = sphi 0, %s248
    %s263 = sphi 0, %s249
    %s267 = sphi 0, %s267
    %s269 = sphi 0, %s267
    %s270 = sphi 0, %s269
    %s284 = sphi 0, %s270
    %s290 = sphi 0, %s292
    %s293 = sphi 0, %s290
    %s294 = sphi 0, %s293
    %s310 = sphi 0, %s294
  $region4: #{decision_transformer.10} parent=0 // loop_header_branch
    %21 = sbr.rel (%p19) target = $region8
  $region5: #{decision_transformer.10} parent=0 // loop_body
    %s23 = ssub.s32 %s18, 1
    %s24 = ssub.s32 %s18, 2
    %s25 = sadd.s32 %s18, 1
    %s26 = ssub.s32 %s18, %s25
    %p27 = scmp.eq.s32.totalorder %s26, 0
    %s29 = sadd.s32 %s28, 1
    %s30 = scalar_select %p27, %s28, %s29
    %p33 = pneg %p27
    %p34 = scmp.eq.s32.totalorder %s18, 1
    %p35 = por %p33, %p34
    %p36 = scmp.ne.s32.totalorder %s28, %s31
    %p37 = scmp.eq.s32.totalorder %s18, 0
    %p38 = por %p36, %p37
    %p39 = scmp.ne.s32.totalorder %s28, %s31
    %p40 = scmp.eq.s32.totalorder %s23, 1
    %p41 = por %p39, %p40
    %p42 = scmp.ne.s32.totalorder %s31, %s32
    %p43 = scmp.eq.s32.totalorder %s23, 0
    %p44 = por %p42, %p43
    %p45 = scmp.ne.s32.totalorder %s31, %s32
    %p46 = scmp.eq.s32.totalorder %s24, 1
    %p47 = por %p45, %p46
    %p49 = scmp.ne.s32.totalorder %s32, %s48
    %p50 = scmp.eq.s32.totalorder %s24, 0
    %p51 = por %p49, %p50
    %s52 = ssub.s32 %s18, %s25
    %p53 = scmp.eq.s32.totalorder %s52, 0
    %s55 = sadd.s32 %s54, 1
    %s56 = scalar_select %p53, %s54, %s55
    %p59 = pneg %p53
    %p60 = scmp.eq.s32.totalorder %s18, 1
    %p61 = por %p59, %p60
    %p62 = scmp.ne.s32.totalorder %s54, %s57
    %p63 = scmp.eq.s32.totalorder %s18, 0
    %p64 = por %p62, %p63
    %p65 = scmp.ne.s32.totalorder %s54, %s57
    %p66 = scmp.eq.s32.totalorder %s23, 1
    %p67 = por %p65, %p66
    %p68 = scmp.ne.s32.totalorder %s57, %s58
    %p69 = scmp.eq.s32.totalorder %s23, 0
    %p70 = por %p68, %p69
    %p71 = scmp.ne.s32.totalorder %s57, %s58
    %p72 = scmp.eq.s32.totalorder %s24, 1
    %p73 = por %p71, %p72
    %p75 = scmp.ne.s32.totalorder %s58, %s74
    %p76 = scmp.eq.s32.totalorder %s24, 0
    %p77 = por %p75, %p76
    %s79 = sadd.s32 %s78, 1
    %p82 = scmp.eq.s32.totalorder %s18, 1
    %p83 = scmp.ne.s32.totalorder %s78, %s80
    %p84 = scmp.eq.s32.totalorder %s18, 0
    %p85 = por %p83, %p84
    %p86 = scmp.ne.s32.totalorder %s78, %s80
    %p87 = scmp.eq.s32.totalorder %s23, 1
    %p88 = por %p86, %p87
    %p89 = scmp.ne.s32.totalorder %s80, %s81
    %p90 = scmp.eq.s32.totalorder %s23, 0
    %p91 = por %p89, %p90
    %p92 = scmp.ne.s32.totalorder %s80, %s81
    %p93 = scmp.eq.s32.totalorder %s24, 1
    %p94 = por %p92, %p93
    %p96 = scmp.ne.s32.totalorder %s81, %s95
    %p97 = scmp.eq.s32.totalorder %s24, 0
    %p98 = por %p96, %p97
    %s100 = sadd.s32 %s99, 1
    %p103 = scmp.eq.s32.totalorder %s18, 1
    %p104 = scmp.ne.s32.totalorder %s99, %s101
    %p105 = scmp.eq.s32.totalorder %s18, 0
    %p106 = por %p104, %p105
    %p107 = scmp.ne.s32.totalorder %s99, %s101
    %p108 = scmp.eq.s32.totalorder %s23, 1
    %p109 = por %p107, %p108
    %p110 = scmp.ne.s32.totalorder %s101, %s102
    %p111 = scmp.eq.s32.totalorder %s23, 0
    %p112 = por %p110, %p111
    %p113 = scmp.ne.s32.totalorder %s101, %s102
    %p114 = scmp.eq.s32.totalorder %s24, 1
    %p115 = por %p113, %p114
    %p117 = scmp.ne.s32.totalorder %s102, %s116
    %p118 = scmp.eq.s32.totalorder %s24, 0
    %p119 = por %p117, %p118
    %s121 = sadd.s32 %s120, 1
    %p124 = scmp.eq.s32.totalorder %s18, 1
    %p125 = scmp.ne.s32.totalorder %s120, %s122
    %p126 = scmp.eq.s32.totalorder %s18, 0
    %p127 = por %p125, %p126
    %p128 = scmp.ne.s32.totalorder %s120, %s122
    %p129 = scmp.eq.s32.totalorder %s23, 1
    %p130 = por %p128, %p129
    %p131 = scmp.ne.s32.totalorder %s122, %s123
    %p132 = scmp.eq.s32.totalorder %s23, 0
    %p133 = por %p131, %p132
    %p134 = scmp.ne.s32.totalorder %s122, %s123
    %p135 = scmp.eq.s32.totalorder %s24, 1
    %p136 = por %p134, %p135
    %p138 = scmp.ne.s32.totalorder %s123, %s137
    %p139 = scmp.eq.s32.totalorder %s24, 0
    %p140 = por %p138, %p139
    %s142 = sadd.s32 %s141, 1
    %p145 = scmp.eq.s32.totalorder %s18, 1
    %p146 = scmp.ne.s32.totalorder %s141, %s143
    %p147 = scmp.eq.s32.totalorder %s18, 0
    %p148 = por %p146, %p147
    %p149 = scmp.ne.s32.totalorder %s141, %s143
    %p150 = scmp.eq.s32.totalorder %s23, 1
    %p151 = por %p149, %p150
    %p152 = scmp.ne.s32.totalorder %s143, %s144
    %p153 = scmp.eq.s32.totalorder %s23, 0
    %p154 = por %p152, %p153
    %p155 = scmp.ne.s32.totalorder %s143, %s144
    %p156 = scmp.eq.s32.totalorder %s24, 1
    %p157 = por %p155, %p156
    %p159 = scmp.ne.s32.totalorder %s144, %s158
    %p160 = scmp.eq.s32.totalorder %s24, 0
    %p161 = por %p159, %p160
    %s163 = sadd.s32 %s162, 1
    %p166 = scmp.eq.s32.totalorder %s18, 1
    %p167 = scmp.ne.s32.totalorder %s162, %s164
    %p168 = scmp.eq.s32.totalorder %s18, 0
    %p169 = por %p167, %p168
    %p170 = scmp.ne.s32.totalorder %s162, %s164
    %p171 = scmp.eq.s32.totalorder %s23, 1
    %p172 = por %p170, %p171
    %p173 = scmp.ne.s32.totalorder %s164, %s165
    %p174 = scmp.eq.s32.totalorder %s23, 0
    %p175 = por %p173, %p174
    %p176 = scmp.ne.s32.totalorder %s164, %s165
    %p177 = scmp.eq.s32.totalorder %s24, 1
    %p178 = por %p176, %p177
    %p180 = scmp.ne.s32.totalorder %s165, %s179
    %p181 = scmp.eq.s32.totalorder %s24, 0
    %p182 = por %p180, %p181
    %s184 = sadd.s32 %s183, 1
    %p187 = scmp.eq.s32.totalorder %s18, 1
    %p188 = scmp.ne.s32.totalorder %s183, %s185
    %p189 = scmp.eq.s32.totalorder %s18, 0
    %p190 = por %p188, %p189
    %p191 = scmp.ne.s32.totalorder %s183, %s185
    %p192 = scmp.eq.s32.totalorder %s23, 1
    %p193 = por %p191, %p192
    %p194 = scmp.ne.s32.totalorder %s185, %s186
    %p195 = scmp.eq.s32.totalorder %s23, 0
    %p196 = por %p194, %p195
    %p197 = scmp.ne.s32.totalorder %s185, %s186
    %p198 = scmp.eq.s32.totalorder %s24, 1
    %p199 = por %p197, %p198
    %p201 = scmp.ne.s32.totalorder %s186, %s200
    %p202 = scmp.eq.s32.totalorder %s24, 0
    %p203 = por %p201, %p202
    %s205 = sadd.s32 %s204, 1
    %p208 = scmp.eq.s32.totalorder %s18, 1
    %p209 = scmp.ne.s32.totalorder %s204, %s206
    %p210 = scmp.eq.s32.totalorder %s18, 0
    %p211 = por %p209, %p210
    %p212 = scmp.ne.s32.totalorder %s204, %s206
    %p213 = scmp.eq.s32.totalorder %s23, 1
    %p214 = por %p212, %p213
    %p215 = scmp.ne.s32.totalorder %s206, %s207
    %p216 = scmp.eq.s32.totalorder %s23, 0
    %p217 = por %p215, %p216
    %p218 = scmp.ne.s32.totalorder %s206, %s207
    %p219 = scmp.eq.s32.totalorder %s24, 1
    %p220 = por %p218, %p219
    %p222 = scmp.ne.s32.totalorder %s207, %s221
    %p223 = scmp.eq.s32.totalorder %s24, 0
    %p224 = por %p222, %p223
    %s226 = sadd.s32 %s225, 1
    %p229 = scmp.eq.s32.totalorder %s18, 1
    %p230 = scmp.ne.s32.totalorder %s225, %s227
    %p231 = scmp.eq.s32.totalorder %s18, 0
    %p232 = por %p230, %p231
    %p233 = scmp.ne.s32.totalorder %s225, %s227
    %p234 = scmp.eq.s32.totalorder %s23, 1
    %p235 = por %p233, %p234
    %p236 = scmp.ne.s32.totalorder %s227, %s228
    %p237 = scmp.eq.s32.totalorder %s23, 0
    %p238 = por %p236, %p237
    %p239 = scmp.ne.s32.totalorder %s227, %s228
    %p240 = scmp.eq.s32.totalorder %s24, 1
    %p241 = por %p239, %p240
    %p243 = scmp.ne.s32.totalorder %s228, %s242
    %p244 = scmp.eq.s32.totalorder %s24, 0
    %p245 = por %p243, %p244
    %s247 = sadd.s32 %s246, 1
    %p250 = scmp.eq.s32.totalorder %s18, 1
    %p251 = scmp.ne.s32.totalorder %s246, %s248
    %p252 = scmp.eq.s32.totalorder %s18, 0
    %p253 = por %p251, %p252
    %p254 = scmp.ne.s32.totalorder %s246, %s248
    %p255 = scmp.eq.s32.totalorder %s23, 1
    %p256 = por %p254, %p255
    %p257 = scmp.ne.s32.totalorder %s248, %s249
    %p258 = scmp.eq.s32.totalorder %s23, 0
    %p259 = por %p257, %p258
    %p260 = scmp.ne.s32.totalorder %s248, %s249
    %p261 = scmp.eq.s32.totalorder %s24, 1
    %p262 = por %p260, %p261
    %p264 = scmp.ne.s32.totalorder %s249, %s263
    %p265 = scmp.eq.s32.totalorder %s24, 0
    %p266 = por %p264, %p265
    %s268 = sadd.s32 %s267, 1
    %p271 = scmp.eq.s32.totalorder %s18, 1
    %p272 = scmp.ne.s32.totalorder %s267, %s269
    %p273 = scmp.eq.s32.totalorder %s18, 0
    %p274 = por %p272, %p273
    %p275 = scmp.ne.s32.totalorder %s267, %s269
    %p276 = scmp.eq.s32.totalorder %s23, 1
    %p277 = por %p275, %p276
    %p278 = scmp.ne.s32.totalorder %s269, %s270
    %p279 = scmp.eq.s32.totalorder %s23, 0
    %p280 = por %p278, %p279
    %p281 = scmp.ne.s32.totalorder %s269, %s270
    %p282 = scmp.eq.s32.totalorder %s24, 1
    %p283 = por %p281, %p282
    %p285 = scmp.ne.s32.totalorder %s270, %s284
    %p286 = scmp.eq.s32.totalorder %s24, 0
    %p287 = por %p285, %p286
    %s288 = ssub.s32 %s18, %s25
    %p289 = scmp.eq.s32.totalorder %s288, 0
    %s291 = sadd.s32 %s290, 1
    %s292 = scalar_select %p289, %s290, %s291
    %p295 = pneg %p289
    %p296 = scmp.eq.s32.totalorder %s18, 1
    %p297 = por %p295, %p296
    %p298 = scmp.ne.s32.totalorder %s290, %s293
    %p299 = scmp.eq.s32.totalorder %s18, 0
    %p300 = por %p298, %p299
    %p301 = scmp.ne.s32.totalorder %s290, %s293
    %p302 = scmp.eq.s32.totalorder %s23, 1
    %p303 = por %p301, %p302
    %p304 = scmp.ne.s32.totalorder %s293, %s294
    %p305 = scmp.eq.s32.totalorder %s23, 0
    %p306 = por %p304, %p305
    %p307 = scmp.ne.s32.totalorder %s293, %s294
    %p308 = scmp.eq.s32.totalorder %s24, 1
    %p309 = por %p307, %p308
    %p311 = scmp.ne.s32.totalorder %s294, %s310
    %p312 = scmp.eq.s32.totalorder %s24, 0
    %p313 = por %p311, %p312
    %p314 = scmp.le.s32.totalorder 1, %s18
    %p315 = scmp.lt.s32.totalorder %s18, 3
    %p316 = pnand %p314, %p315
    %p317 = pneg %p316
    // Predicated region
    $region9: #{decision_transformer.10} parent=5 // pred_check
      _
    $region10: #{decision_transformer.10} parent=5 // pred_check_branch
      %319 = sbr.rel (%p316) target = $region12
    $region11: #{decision_transformer.10} parent=5 // pred_region
      %s320 = ssub.s32 %s18, 1
      // Predicated region
      $region13: #{decision_transformer.10} parent=11 // pred_check
        %p321 = pneg %p91
      $region14: #{decision_transformer.10} parent=11 // pred_check_branch
        %323 = sbr.rel (%p321) target = $region16
      $region15: #{decision_transformer.10} parent=11 // pred_region
        _
      $region16: #{decision_transformer.10} parent=11 // pred_fallthru
        _
      // Predicated region
      $region17: #{decision_transformer.10} parent=11 // pred_check
        %p324 = pneg %p112
      $region18: #{decision_transformer.10} parent=11 // pred_check_branch
        %326 = sbr.rel (%p324) target = $region20
      $region19: #{decision_transformer.10} parent=11 // pred_region
        _
      $region20: #{decision_transformer.10} parent=11 // pred_fallthru
        _
      // Predicated region
      $region21: #{decision_transformer.10} parent=11 // pred_check
        %p327 = pneg %p133
      $region22: #{decision_transformer.10} parent=11 // pred_check_branch
        %329 = sbr.rel (%p327) target = $region24
      $region23: #{decision_transformer.10} parent=11 // pred_region
        _
      $region24: #{decision_transformer.10} parent=11 // pred_fallthru
        _
      // Predicated region
      $region25: #{decision_transformer.10} parent=11 // pred_check
        %p330 = pneg %p154
      $region26: #{decision_transformer.10} parent=11 // pred_check_branch
        %332 = sbr.rel (%p330) target = $region28
      $region27: #{decision_transformer.10} parent=11 // pred_region
        _
      $region28: #{decision_transformer.10} parent=11 // pred_fallthru
        _
      // Predicated region
      $region29: #{decision_transformer.10} parent=11 // pred_check
        %p333 = pneg %p175
      $region30: #{decision_transformer.10} parent=11 // pred_check_branch
        %335 = sbr.rel (%p333) target = $region32
      $region31: #{decision_transformer.10} parent=11 // pred_region
        _
      $region32: #{decision_transformer.10} parent=11 // pred_fallthru
        _
      // Predicated region
      $region33: #{decision_transformer.10} parent=11 // pred_check
        %p336 = pneg %p196
      $region34: #{decision_transformer.10} parent=11 // pred_check_branch
        %338 = sbr.rel (%p336) target = $region36
      $region35: #{decision_transformer.10} parent=11 // pred_region
        _
      $region36: #{decision_transformer.10} parent=11 // pred_fallthru
        _
      // Predicated region
      $region37: #{decision_transformer.10} parent=11 // pred_check
        %p339 = pneg %p217
      $region38: #{decision_transformer.10} parent=11 // pred_check_branch
        %341 = sbr.rel (%p339) target = $region40
      $region39: #{decision_transformer.10} parent=11 // pred_region
        _
      $region40: #{decision_transformer.10} parent=11 // pred_fallthru
        _
      // Predicated region
      $region41: #{decision_transformer.10} parent=11 // pred_check
        %p342 = pneg %p238
      $region42: #{decision_transformer.10} parent=11 // pred_check_branch
        %344 = sbr.rel (%p342) target = $region44
      $region43: #{decision_transformer.10} parent=11 // pred_region
        _
      $region44: #{decision_transformer.10} parent=11 // pred_fallthru
        _
      // Predicated region
      $region45: #{decision_transformer.10} parent=11 // pred_check
        %p345 = pneg %p259
      $region46: #{decision_transformer.10} parent=11 // pred_check_branch
        %347 = sbr.rel (%p345) target = $region48
      $region47: #{decision_transformer.10} parent=11 // pred_region
        _
      $region48: #{decision_transformer.10} parent=11 // pred_fallthru
        _
      // Predicated region
      $region49: #{decision_transformer.10} parent=11 // pred_check
        %p348 = pneg %p280
      $region50: #{decision_transformer.10} parent=11 // pred_check_branch
        %350 = sbr.rel (%p348) target = $region52
      $region51: #{decision_transformer.10} parent=11 // pred_region
        _
      $region52: #{decision_transformer.10} parent=11 // pred_fallthru
        _
    $region12: #{decision_transformer.10} parent=5 // pred_fallthru
      _
    %p351 = scmp.lt.s32.totalorder %s18, 2
    // Predicated region
    $region53: #{decision_transformer.10} parent=5 // pred_check
      %p352 = pneg %p351
    $region54: #{decision_transformer.10} parent=5 // pred_check_branch
      %354 = sbr.rel (%p352) target = $region56
    $region55: #{decision_transformer.10} parent=5 // pred_region
      // Predicated region
      $region57: #{decision_transformer.10} parent=55 // pred_check
        %p355 = pneg %p38
      $region58: #{decision_transformer.10} parent=55 // pred_check_branch
        %357 = sbr.rel (%p355) target = $region60
      $region59: #{decision_transformer.10} parent=55 // pred_region
        %p358 = scmp.lt.s32.totalorder %s18, 1
        %s359 = scalar_select %p358, %s18, 1
        %s360 = smul.addr %s359, 3
        %s361 = smul.addr %s360, 8
        %s362 = scalar_lea.vmem %s0, %s361
      $region60: #{decision_transformer.10} parent=55 // pred_fallthru
        _
      // Predicated region
      $region61: #{decision_transformer.10} parent=55 // pred_check
        %p363 = pneg %p64
      $region62: #{decision_transformer.10} parent=55 // pred_check_branch
        %365 = sbr.rel (%p363) target = $region64
      $region63: #{decision_transformer.10} parent=55 // pred_region
        %p366 = scmp.lt.s32.totalorder %s18, 1
        %s367 = scalar_select %p366, %s18, 1
        %s368 = smul.addr %s367, 3
        %s369 = smul.addr %s368, 8
        %s370 = scalar_lea.vmem %s1, %s369
      $region64: #{decision_transformer.10} parent=55 // pred_fallthru
        _
    $region56: #{decision_transformer.10} parent=5 // pred_fallthru
      _
    %p371 = scmp.le.s32.totalorder 1, %s18
    %p372 = scmp.lt.s32.totalorder %s18, 3
    %p373 = pnand %p371, %p372
    %p374 = pneg %p373
    // Predicated region
    $region65: #{decision_transformer.10} parent=5 // pred_check
      _
    $region66: #{decision_transformer.10} parent=5 // pred_check_branch
      %376 = sbr.rel (%p373) target = $region68
    $region67: #{decision_transformer.10} parent=5 // pred_region
      %s377 = ssub.s32 %s18, 1
      %p378 = scmp.lt.s32.totalorder %s23, 1
      %s379 = scalar_select %p378, %s23, 1
      %s380 = smul.addr %s379, 3
      %s381 = smul.addr %s380, 8
      %s382 = scalar_lea.vmem %s0, %s381
      %p383 = pneg %p44
      %p384 = pneg %p41
      %p385 = scmp.lt.s32.totalorder %s23, 1
      %s386 = scalar_select %p385, %s23, 1
      %s387 = smul.addr %s386, 3
      %s388 = smul.addr %s387, 8
      %s389 = scalar_lea.vmem %s1, %s388
      %p390 = pneg %p70
      %p391 = pneg %p67
      %p392 = pneg %p91
      %p393 = pneg %p88
      %p394 = pneg %p112
      %p395 = pneg %p109
      %p396 = pneg %p133
      %p397 = pneg %p130
      %p398 = pneg %p154
      %p399 = pneg %p151
      %p400 = pneg %p175
      %p401 = pneg %p172
      %p402 = pneg %p196
      %p403 = pneg %p193
      %p404 = pneg %p217
      %p405 = pneg %p214
      %p406 = pneg %p238
      %p407 = pneg %p235
      %p408 = pneg %p259
      %p409 = pneg %p256
      %p410 = pneg %p280
      %p411 = pneg %p277
      %p412 = pneg %p306
      %p413 = pneg %p303
      %p414 = scmp.lt.s32.totalorder %s23, 1
      %s415 = scalar_select %p414, %s23, 1
      %s416 = smul.addr %s415, 3
      %s417 = smul.addr %s416, 8
      %s418 = scalar_lea.vmem %s12, %s417
      %p419 = scmp.lt.s32.totalorder %s23, 1
      %s420 = scalar_select %p419, %s23, 1
      %s421 = smul.addr %s420, 3
      %s422 = smul.addr %s421, 8
      %s423 = scalar_lea.vmem %s0, %s422
      %p424 = scmp.lt.s32.totalorder %s23, 1
      %s425 = scalar_select %p424, %s23, 1
      %s426 = smul.addr %s425, 3
      %s427 = smul.addr %s426, 8
      %s428 = scalar_lea.vmem %s1, %s427
      %p429 = scmp.lt.s32.totalorder %s23, 1
      %s430 = scalar_select %p429, %s23, 1
      %s431 = smul.addr %s430, 3
      %s432 = smul.addr %s431, 8
      %s433 = scalar_lea.vmem %s12, %s432
      %v435 = vld [vmem:[%s423] sm:$0xff]
      %v436 = vld [vmem:[%s423 + $0x8] sm:$0xff]
      %v437 = vld [vmem:[%s423 + $0x10] sm:$0xff]
      %v438 = vld [vmem:[%s428] sm:$0xff]
      %v439 = vld [vmem:[%s428 + $0x8] sm:$0xff]
      %v440 = vld [vmem:[%s428 + $0x10] sm:$0xff]
      %v441 = vld [vmem:[%s2] sm:$0xf]
      %v442 = vld [vmem:[%s2 + $0x4] sm:$0xf]
      %v443 = vld [vmem:[%s2 + $0x8] sm:$0xf]
      %v444 = vld [vmem:[%s2 + $0xc] sm:$0xf]
      %v445 = vld [vmem:[%s2 + $0x10] sm:$0xf]
      %v446 = vld [vmem:[%s2 + $0x14] sm:$0xf]
      %v447 = vld [vmem:[%s2 + $0x18] sm:$0xf]
      %v448 = vld [vmem:[%s2 + $0x1c] sm:$0xf]
      %v449 = vld [vmem:[%s3] sm:$0x1]
      %v450 = vld [vmem:[%s4] sm:$0x1]
      %v451 = vld [vmem:[%s5] sm:$0x1]
      %v452 = vld [vmem:[%s6] sm:$0xf]
      %v453 = vld [vmem:[%s6 + $0x4] sm:$0xf]
      %v454 = vld [vmem:[%s6 + $0x8] sm:$0xf]
      %v455 = vld [vmem:[%s6 + $0xc] sm:$0xf]
      %v456 = vld [vmem:[%s7] sm:$0x1]
      %v457 = vld [vmem:[%s8] sm:$0xf]
      %v458 = vld [vmem:[%s8 + $0x4] sm:$0xf]
      %v459 = vld [vmem:[%s8 + $0x8] sm:$0xf]
      %v460 = vld [vmem:[%s8 + $0xc] sm:$0xf]
      %v461 = vld [vmem:[%s8 + $0x10] sm:$0xf]
      %v462 = vld [vmem:[%s8 + $0x14] sm:$0xf]
      %v463 = vld [vmem:[%s8 + $0x18] sm:$0xf]
      %v464 = vld [vmem:[%s8 + $0x1c] sm:$0xf]
      %v465 = vld [vmem:[%s8 + $0x20] sm:$0xf]
      %v466 = vld [vmem:[%s8 + $0x24] sm:$0xf]
      %v467 = vld [vmem:[%s8 + $0x28] sm:$0xf]
      %v468 = vld [vmem:[%s8 + $0x2c] sm:$0xf]
      %v469 = vld [vmem:[%s8 + $0x30] sm:$0xf]
      %v470 = vld [vmem:[%s8 + $0x34] sm:$0xf]
      %v471 = vld [vmem:[%s8 + $0x38] sm:$0xf]
      %v472 = vld [vmem:[%s8 + $0x3c] sm:$0xf]
      %v473 = vld [vmem:[%s9] sm:$0x1]
      %v474 = vld [vmem:[%s10] sm:$0x1]
      %v475 = vld [vmem:[%s11] sm:$0x1]
      %v476 = vpack.c.bf16 %v436, %v435
      %v477 = vpack.c.bf16 %v437, %v437
      %v479 = vlaneseq
      %v480 = vshrl.u32 %v479, 7
      %v481 = vsub.s32 0, %v480
      %v482 = vrot.slane %v449, %v481
      %v492 = vunpack.c.l.b16 %v441
      %v493 = vunpack.c.l.b16 %v442
      %v494 = vunpack.c.l.b16 %v443
      %v495 = vunpack.c.l.b16 %v444
      %v496 = vunpack.c.l.b16 %v445
      %v497 = vunpack.c.l.b16 %v446
      %v498 = vunpack.c.l.b16 %v447
      %v499 = vunpack.c.l.b16 %v448
      %v500 = vpack.c.b16 %v493, %v492
      %v501 = vpack.c.b16 %v495, %v494
      %v502 = vpack.c.b16 %v497, %v496
      %v503 = vpack.c.b16 %v499, %v498
      %vm508 = vcmask 523264
      %v510 = vsel %vm508, %v476, 0
      %v513 = vsel %vm508, %v477, 0
      %515 = vmatprep.subr.bf16.mxu0 0
      %516 = vmatpush1.bf16.msra.mxu0 0
      %517 = vmatprep.subr.bf16.mxu0 0
      %518 = vmatpush1.bf16.msra.mxu0 0
      %519 = vmatprep.subr.bf16.mxu0 0
      %520 = vmatpush1.bf16.msra.mxu0 0
      %521 = vmatprep.subr.bf16.mxu0 0
      %522 = vmatpush1.bf16.msra.mxu0 0
      %523 = vmatprep.subr.bf16.mxu0 0
      %524 = vmatpush1.bf16.msra.mxu0 %v503
      %525 = vmatprep.subr.bf16.mxu0 0
      %526 = vmatpush1.bf16.msra.mxu0 %v502
      %527 = vmatprep.subr.bf16.mxu0 0
      %528 = vmatpush1.bf16.msra.mxu0 %v501
      %529 = vmatprep.subr.bf16.mxu0 0
      %530 = vmatpush1.bf16.msra.mxu0 %v500
      %531 = vmatprep.subr.bf16.mxu0 0
      %532 = vmatpush2.bf16.msra.mxu0 0
      %533 = vmatprep.subr.bf16.mxu0 0
      %534 = vmatpush2.bf16.msra.mxu0 0
      %535 = vmatprep.subr.bf16.mxu0 0
      %536 = vmatpush2.bf16.msra.mxu0 0
      %537 = vmatprep.subr.bf16.mxu0 0
      %538 = vmatpush2.bf16.msra.mxu0 0
      %539 = vmatprep.subr.bf16.mxu0 0
      %540 = vmatpush2.bf16.msra.mxu0 0
      %541 = vmatprep.subr.bf16.mxu0 0
      %542 = vmatpush2.bf16.msra.mxu0 0
      %543 = vmatprep.subr.bf16.mxu0 0
      %544 = vmatpush2.bf16.msra.mxu0 0
      %545 = vmatprep.subr.bf16.mxu0 0
      %546 = vmatpush2.bf16.msra.mxu0 0
      %547 = vmatprep.mubr.bf16.mxu0 0
      %548 = vmatmul.mubr.bf16.gmra.mxu0 %v510
      %v549 = vpop.f32.mrf.mxu0
      %v550 = vadd.f32 %v482, %v549
      %v551 = vpop.f32.mrf.mxu0
      %v552 = vpop.f32.mrf.mxu0
      %v553 = vadd.f32 %v482, %v552
      %v554 = vpop.f32.mrf.mxu0
      %555 = vmatprep.mubr.bf16.mxu0 0
      %556 = vmatmul.mubr.bf16.gmra.mxu0 %v513
      %v557 = vpop.f32.mrf.mxu0
      %v558 = vadd.f32 %v482, %v557
      %v559 = vpop.f32.mrf.mxu0
      %v560 = vpop.f32.mrf.mxu0
      %v561 = vpop.f32.mrf.mxu0
      %562 = vdwg.mxu0
      %v563 = vadd.f32 %v550, %v438
      %v564 = vadd.f32 %v553, %v439
      %v565 = vadd.f32 %v558, %v440
      %vm566 = vcmask 261120
      %v567 = vsel %vm566, %v563, 0.0
      %568 = vadd.xlane.f32.xlu0 %v567
      %v569 = vpop.xlane.xlu0 %568
      %v570 = vsel %vm566, %v564, 0.0
      %571 = vadd.xlane.f32.xlu0 %v570
      %v572 = vpop.xlane.xlu0 %571
      %v573 = vsel %vm566, %v565, 0.0
      %574 = vadd.xlane.f32.xlu0 %v573
      %v575 = vpop.xlane.xlu0 %574
      %v576 = vrcp.pop 32.0
      %v577 = vmul.f32 %v569, %v576
      %v578 = vmul.f32 %v572, %v576
      %v579 = vmul.f32 %v575, %v576
      %v580 = vsub.f32 %v563, %v577
      %v581 = vsub.f32 %v564, %v578
      %v582 = vsub.f32 %v565, %v579
      %v583 = vmul.f32 %v580, %v580
      %v584 = vmul.f32 %v581, %v581
      %v585 = vmul.f32 %v582, %v582
      %v586 = vsel %vm566, %v583, 0.0
      %587 = vadd.xlane.f32.xlu0 %v586
      %v588 = vpop.xlane.xlu0 %587
      %v589 = vsel %vm566, %v584, 0.0
      %590 = vadd.xlane.f32.xlu0 %v589
      %v591 = vpop.xlane.xlu0 %590
      %v592 = vsel %vm566, %v585, 0.0
      %593 = vadd.xlane.f32.xlu0 %v592
      %v594 = vpop.xlane.xlu0 %593
      %v595 = vmul.f32 %v588, %v576
      %v596 = vmul.f32 %v591, %v576
      %v597 = vmul.f32 %v594, %v576
      %v598 = vadd.f32 %v595, 1e-05
      %v599 = vadd.f32 %v596, 1e-05
      %v600 = vadd.f32 %v597, 1e-05
      %v601 = vrsqrt.pop %v598
      %v602 = vrsqrt.pop %v599
      %v603 = vrsqrt.pop %v600
      %v604 = vmul.f32 %v580, %v601
      %v605 = vmul.f32 %v581, %v602
      %v606 = vmul.f32 %v582, %v603
      %v608 = vlaneseq
      %v609 = vshrl.u32 %v608, 7
      %v610 = vsub.s32 0, %v609
      %v611 = vrot.slane %v450, %v610
      %v613 = vmul.f32 %v604, %v611
      %v614 = vmul.f32 %v605, %v611
      %v615 = vmul.f32 %v606, %v611
      %v617 = vlaneseq
      %v618 = vshrl.u32 %v617, 7
      %v619 = vsub.s32 0, %v618
      %v620 = vrot.slane %v451, %v619
      %v622 = vadd.f32 %v613, %v620
      %v623 = vadd.f32 %v614, %v620
      %v624 = vadd.f32 %v615, %v620
      %v625 = vpack.c.bf16 %v623, %v622
      %v626 = vpack.c.bf16 %v624, %v624
      %v628 = vlaneseq
      %v629 = vshrl.u32 %v628, 7
      %v630 = vsub.s32 0, %v629
      %v631 = vrot.slane %v456, %v630
      %v637 = vunpack.c.l.b16 %v452
      %v638 = vunpack.c.l.b16 %v453
      %v639 = vunpack.c.l.b16 %v454
      %v640 = vunpack.c.l.b16 %v455
      %v641 = vpack.c.b16 %v638, %v637
      %v642 = vpack.c.b16 %v640, %v639
      %v646 = vsel %vm566, %v625, 0
      %v649 = vsel %vm566, %v626, 0
      %651 = vmatprep.subr.bf16.mxu0 0
      %652 = vmatpush1.bf16.msra.mxu0 0
      %653 = vmatprep.subr.bf16.mxu0 0
      %654 = vmatpush1.bf16.msra.mxu0 0
      %655 = vmatprep.subr.bf16.mxu0 0
      %656 = vmatpush1.bf16.msra.mxu0 0
      %657 = vmatprep.subr.bf16.mxu0 0
      %658 = vmatpush1.bf16.msra.mxu0 0
      %659 = vmatprep.subr.bf16.mxu0 0
      %660 = vmatpush1.bf16.msra.mxu0 0
      %661 = vmatprep.subr.bf16.mxu0 0
      %662 = vmatpush1.bf16.msra.mxu0 0
      %663 = vmatprep.subr.bf16.mxu0 0
      %664 = vmatpush1.bf16.msra.mxu0 %v642
      %665 = vmatprep.subr.bf16.mxu0 0
      %666 = vmatpush1.bf16.msra.mxu0 %v641
      %667 = vmatprep.subr.bf16.mxu0 0
      %668 = vmatpush2.bf16.msra.mxu0 0
      %669 = vmatprep.subr.bf16.mxu0 0
      %670 = vmatpush2.bf16.msra.mxu0 0
      %671 = vmatprep.subr.bf16.mxu0 0
      %672 = vmatpush2.bf16.msra.mxu0 0
      %673 = vmatprep.subr.bf16.mxu0 0
      %674 = vmatpush2.bf16.msra.mxu0 0
      %675 = vmatprep.subr.bf16.mxu0 0
      %676 = vmatpush2.bf16.msra.mxu0 0
      %677 = vmatprep.subr.bf16.mxu0 0
      %678 = vmatpush2.bf16.msra.mxu0 0
      %679 = vmatprep.subr.bf16.mxu0 0
      %680 = vmatpush2.bf16.msra.mxu0 0
      %681 = vmatprep.subr.bf16.mxu0 0
      %682 = vmatpush2.bf16.msra.mxu0 0
      %683 = vmatprep.mubr.bf16.mxu0 0
      %684 = vmatmul.mubr.bf16.gmra.mxu0 %v646
      %v685 = vpop.f32.mrf.mxu0
      %v686 = vadd.f32 %v631, %v685
      %v687 = vpop.f32.mrf.mxu0
      %v688 = vpop.f32.mrf.mxu0
      %v689 = vadd.f32 %v631, %v688
      %v690 = vpop.f32.mrf.mxu0
      %691 = vmatprep.mubr.bf16.mxu0 0
      %692 = vmatmul.mubr.bf16.gmra.mxu0 %v649
      %v693 = vpop.f32.mrf.mxu0
      %v694 = vadd.f32 %v631, %v693
      %v695 = vpop.f32.mrf.mxu0
      %v696 = vpop.f32.mrf.mxu0
      %v697 = vpop.f32.mrf.mxu0
      %698 = vdwg.mxu0
      %v699 = vmax.f32 %v686, 0.0
      %v700 = vmax.f32 %v689, 0.0
      %v701 = vmax.f32 %v694, 0.0
      %v702 = vpack.c.bf16 %v700, %v699
      %v703 = vpack.c.bf16 %v701, %v701
      %v705 = vlaneseq
      %v706 = vshrl.u32 %v705, 7
      %v707 = vsub.s32 0, %v706
      %v708 = vrot.slane %v473, %v707
      %v726 = vunpack.c.l.b16 %v457
      %v727 = vunpack.c.l.b16 %v458
      %v728 = vunpack.c.l.b16 %v459
      %v729 = vunpack.c.l.b16 %v460
      %v730 = vunpack.c.l.b16 %v461
      %v731 = vunpack.c.l.b16 %v462
      %v732 = vunpack.c.l.b16 %v463
      %v733 = vunpack.c.l.b16 %v464
      %v734 = vunpack.c.l.b16 %v465
      %v735 = vunpack.c.l.b16 %v466
      %v736 = vunpack.c.l.b16 %v467
      %v737 = vunpack.c.l.b16 %v468
      %v738 = vunpack.c.l.b16 %v469
      %v739 = vunpack.c.l.b16 %v470
      %v740 = vunpack.c.l.b16 %v471
      %v741 = vunpack.c.l.b16 %v472
      %v742 = vpack.c.b16 %v727, %v726
      %v743 = vpack.c.b16 %v729, %v728
      %v744 = vpack.c.b16 %v731, %v730
      %v745 = vpack.c.b16 %v733, %v732
      %v746 = vpack.c.b16 %v735, %v734
      %v747 = vpack.c.b16 %v737, %v736
      %v748 = vpack.c.b16 %v739, %v738
      %v749 = vpack.c.b16 %v741, %v740
      %758 = vmatprep.subr.bf16.mxu0 0
      %759 = vmatpush1.bf16.msra.mxu0 %v749
      %760 = vmatprep.subr.bf16.mxu0 0
      %761 = vmatpush1.bf16.msra.mxu0 %v748
      %762 = vmatprep.subr.bf16.mxu0 0
      %763 = vmatpush1.bf16.msra.mxu0 %v747
      %764 = vmatprep.subr.bf16.mxu0 0
      %765 = vmatpush1.bf16.msra.mxu0 %v746
      %766 = vmatprep.subr.bf16.mxu0 0
      %767 = vmatpush1.bf16.msra.mxu0 %v745
      %768 = vmatprep.subr.bf16.mxu0 0
      %769 = vmatpush1.bf16.msra.mxu0 %v744
      %770 = vmatprep.subr.bf16.mxu0 0
      %771 = vmatpush1.bf16.msra.mxu0 %v743
      %772 = vmatprep.subr.bf16.mxu0 0
      %773 = vmatpush1.bf16.msra.mxu0 %v742
      %774 = vmatprep.subr.bf16.mxu0 0
      %775 = vmatpush2.bf16.msra.mxu0 0
      %776 = vmatprep.subr.bf16.mxu0 0
      %777 = vmatpush2.bf16.msra.mxu0 0
      %778 = vmatprep.subr.bf16.mxu0 0
      %779 = vmatpush2.bf16.msra.mxu0 0
      %780 = vmatprep.subr.bf16.mxu0 0
      %781 = vmatpush2.bf16.msra.mxu0 0
      %782 = vmatprep.subr.bf16.mxu0 0
      %783 = vmatpush2.bf16.msra.mxu0 0
      %784 = vmatprep.subr.bf16.mxu0 0
      %785 = vmatpush2.bf16.msra.mxu0 0
      %786 = vmatprep.subr.bf16.mxu0 0
      %787 = vmatpush2.bf16.msra.mxu0 0
      %788 = vmatprep.subr.bf16.mxu0 0
      %789 = vmatpush2.bf16.msra.mxu0 0
      %790 = vmatprep.mubr.bf16.mxu0 0
      %791 = vmatmul.mubr.bf16.gmra.mxu0 %v702
      %v792 = vpop.f32.mrf.mxu0
      %v793 = vadd.f32 %v708, %v792
      %v794 = vpop.f32.mrf.mxu0
      %v795 = vpop.f32.mrf.mxu0
      %v796 = vadd.f32 %v708, %v795
      %v797 = vpop.f32.mrf.mxu0
      %798 = vmatprep.mubr.bf16.mxu0 0
      %799 = vmatmul.mubr.bf16.gmra.mxu0 %v703
      %v800 = vpop.f32.mrf.mxu0
      %v801 = vadd.f32 %v708, %v800
      %v802 = vpop.f32.mrf.mxu0
      %v803 = vpop.f32.mrf.mxu0
      %v804 = vpop.f32.mrf.mxu0
      %805 = vdwg.mxu0
      %v806 = vadd.f32 %v793, %v622
      %v807 = vadd.f32 %v796, %v623
      %v808 = vadd.f32 %v801, %v624
      %v809 = vsel %vm566, %v806, 0.0
      %810 = vadd.xlane.f32.xlu0 %v809
      %v811 = vpop.xlane.xlu0 %810
      %v812 = vsel %vm566, %v807, 0.0
      %813 = vadd.xlane.f32.xlu0 %v812
      %v814 = vpop.xlane.xlu0 %813
      %v815 = vsel %vm566, %v808, 0.0
      %816 = vadd.xlane.f32.xlu0 %v815
      %v817 = vpop.xlane.xlu0 %816
      %v818 = vmul.f32 %v811, %v576
      %v819 = vmul.f32 %v814, %v576
      %v820 = vmul.f32 %v817, %v576
      %v821 = vsub.f32 %v806, %v818
      %v822 = vsub.f32 %v807, %v819
      %v823 = vsub.f32 %v808, %v820
      %v824 = vmul.f32 %v821, %v821
      %v825 = vmul.f32 %v822, %v822
      %v826 = vmul.f32 %v823, %v823
      %v827 = vsel %vm566, %v824, 0.0
      %828 = vadd.xlane.f32.xlu0 %v827
      %v829 = vpop.xlane.xlu0 %828
      %v830 = vsel %vm566, %v825, 0.0
      %831 = vadd.xlane.f32.xlu0 %v830
      %v832 = vpop.xlane.xlu0 %831
      %v833 = vsel %vm566, %v826, 0.0
      %834 = vadd.xlane.f32.xlu0 %v833
      %v835 = vpop.xlane.xlu0 %834
      %v836 = vmul.f32 %v829, %v576
      %v837 = vmul.f32 %v832, %v576
      %v838 = vmul.f32 %v835, %v576
      %v839 = vadd.f32 %v836, 1e-05
      %v840 = vadd.f32 %v837, 1e-05
      %v841 = vadd.f32 %v838, 1e-05
      %v842 = vrsqrt.pop %v839
      %v843 = vrsqrt.pop %v840
      %v844 = vrsqrt.pop %v841
      %v845 = vmul.f32 %v821, %v842
      %v846 = vmul.f32 %v822, %v843
      %v847 = vmul.f32 %v823, %v844
      %v849 = vlaneseq
      %v850 = vshrl.u32 %v849, 7
      %v851 = vsub.s32 0, %v850
      %v852 = vrot.slane %v474, %v851
      %v854 = vmul.f32 %v845, %v852
      %v855 = vmul.f32 %v846, %v852
      %v856 = vmul.f32 %v847, %v852
      %v858 = vlaneseq
      %v859 = vshrl.u32 %v858, 7
      %v860 = vsub.s32 0, %v859
      %v861 = vrot.slane %v475, %v860
      %v863 = vadd.f32 %v854, %v861
      %v864 = vadd.f32 %v855, %v861
      %v865 = vadd.f32 %v856, %v861
      %866 = vst.msk [vmem:[%s433] sm:$0xff] %vm566, %v863
      %867 = vst.msk [vmem:[%s433 + $0x8] sm:$0xff] %vm566, %v864
      %868 = vst.msk [vmem:[%s433 + $0x10] sm:$0xff] %vm566, %v865
      %p869 = scmp.lt.s32.totalorder %s23, 1
      %s870 = scalar_select %p869, %s23, 1
      %s871 = smul.addr %s870, 3
      %s872 = smul.addr %s871, 8
      %s873 = scalar_lea.vmem %s12, %s872
      // Predicated region
      $region69: #{decision_transformer.10} parent=67 // pred_check
        %p874 = pneg %p303
      $region70: #{decision_transformer.10} parent=67 // pred_check_branch
        %876 = sbr.rel (%p874) target = $region72
      $region71: #{decision_transformer.10} parent=67 // pred_region
        _
      $region72: #{decision_transformer.10} parent=67 // pred_fallthru
        _
    $region68: #{decision_transformer.10} parent=5 // pred_fallthru
      _
    %p877 = scmp.le.s32.totalorder 2, %s18
    // Predicated region
    $region73: #{decision_transformer.10} parent=5 // pred_check
      %p878 = pneg %p877
    $region74: #{decision_transformer.10} parent=5 // pred_check_branch
      %880 = sbr.rel (%p878) target = $region76
    $region75: #{decision_transformer.10} parent=5 // pred_region
      %s881 = ssub.s32 %s18, 2
      // Predicated region
      $region77: #{decision_transformer.10} parent=75 // pred_check
        %p882 = pneg %p309
      $region78: #{decision_transformer.10} parent=75 // pred_check_branch
        %884 = sbr.rel (%p882) target = $region80
      $region79: #{decision_transformer.10} parent=75 // pred_region
        %p885 = scmp.lt.s32.totalorder %s24, 1
        %s886 = scalar_select %p885, %s24, 1
        %s887 = smul.addr %s886, 3
        %s888 = smul.addr %s887, 8
        %s889 = scalar_lea.vmem %s12, %s888
      $region80: #{decision_transformer.10} parent=75 // pred_fallthru
        _
    $region76: #{decision_transformer.10} parent=5 // pred_fallthru
      _
  $region6: #{decision_transformer.10} parent=0 // loop_footer
    %s22 = sadd.s32 1, %s18
  $region7: #{decision_transformer.10} parent=0 // loop_footer_branch
    %17 = sbr.rel target = $region3
  $region8: #{decision_transformer.10} parent=0 // loop_exit
    _

// kernel: decision_transformer.11
$region0: #{decision_transformer.11}
  #allocation0 [shape = 'u32[]', space=smem, size = 0x4, offset = 0x4, fixed_abs, tag = 'smem constant byte address 0x4 - core index']
  #allocation1 [shape = 'u32[144,128]{1,0:T(1,128)}', space=vmem, size = 0x12000, scoped, tag = 'internal scratch']
  %s0 = inlined_call_operand.vmem [shape: f32[2,8,32], index: 0, kind: input, shape index: {}]
  %s1 = inlined_call_operand.vmem [shape: bf16[32,128], index: 1, kind: input, shape index: {}]
  %s2 = inlined_call_operand.vmem [shape: f32[1,128], index: 2, kind: input, shape index: {}]
  %s3 = inlined_call_operand.vmem [shape: bf16[128,128], index: 3, kind: input, shape index: {}]
  %s4 = inlined_call_operand.vmem [shape: f32[1,128], index: 4, kind: input, shape index: {}]
  %s5 = inlined_call_operand.hbm [shape: f32[2,8,128], index: 5, kind: output, shape index: {}]
  %s6 = sld [smem:[#allocation0]]
  $region53: #{decision_transformer.11} parent=0
    _
  %s8 = ssub.s32 1, %s6
  %s9 = scalar_select 0, %s8, %s6
  $region1: #{decision_transformer.11} parent=0
    #allocation2 [shape = 'u8[8192]{0}', space=vmem, size = 0x2000, scoped, tag = 'output window, operand 0']
    #allocation3 [shape = 's32[2]{0}', space=sflag, size = 0x8, scoped, tag = 'scoped memory for decision_transformer.11']
    %10 = vsyncpa [#allocation3], 0
    %s11 = scalar_lea.sflag [#allocation3], 1
    %12 = vsyncpa %s11, 0
    loop: start=0, step=1, limit=4
    $region2: #{decision_transformer.11} parent=1 // loop_pre_header
      _
    $region3: #{decision_transformer.11} parent=1 // loop_header
      %s14 = sphi 0, %s18
      %p15 = scmp.ge.s32.totalorder %s14, 4
      %s24 = sphi 0, %s26
      %s27 = sphi 0, %s24
      %s28 = sphi 0, %s27
      %s44 = sphi 0, %s28
      %s48 = sphi 0, %s48
      %s50 = sphi 0, %s48
      %s51 = sphi 0, %s50
      %s65 = sphi 0, %s51
      %s69 = sphi 0, %s69
      %s71 = sphi 0, %s69
      %s72 = sphi 0, %s71
      %s86 = sphi 0, %s72
      %s90 = sphi 0, %s90
      %s92 = sphi 0, %s90
      %s93 = sphi 0, %s92
      %s107 = sphi 0, %s93
      %s111 = sphi 0, %s111
      %s113 = sphi 0, %s111
      %s114 = sphi 0, %s113
      %s128 = sphi 0, %s114
      %s134 = sphi 0, %s136
      %s137 = sphi 0, %s134
      %s138 = sphi 0, %s137
      %s154 = sphi 0, %s138
    $region4: #{decision_transformer.11} parent=1 // loop_header_branch
      %17 = sbr.rel (%p15) target = $region8
    $region5: #{decision_transformer.11} parent=1 // loop_body
      %s19 = ssub.s32 %s14, 1
      %s20 = ssub.s32 %s14, 2
      %s21 = sadd.s32 %s14, 1
      %s22 = ssub.s32 %s14, %s21
      %p23 = scmp.eq.s32.totalorder %s22, 0
      %s25 = sadd.s32 %s24, 1
      %s26 = scalar_select %p23, %s24, %s25
      %p29 = pneg %p23
      %p30 = scmp.eq.s32.totalorder %s14, 1
      %p31 = por %p29, %p30
      %p32 = scmp.ne.s32.totalorder %s24, %s27
      %p33 = scmp.eq.s32.totalorder %s14, 0
      %p34 = por %p32, %p33
      %p35 = scmp.ne.s32.totalorder %s24, %s27
      %p36 = scmp.eq.s32.totalorder %s19, 1
      %p37 = por %p35, %p36
      %p38 = scmp.ne.s32.totalorder %s27, %s28
      %p39 = scmp.eq.s32.totalorder %s19, 0
      %p40 = por %p38, %p39
      %p41 = scmp.ne.s32.totalorder %s27, %s28
      %p42 = scmp.eq.s32.totalorder %s20, 1
      %p43 = por %p41, %p42
      %p45 = scmp.ne.s32.totalorder %s28, %s44
      %p46 = scmp.eq.s32.totalorder %s20, 0
      %p47 = por %p45, %p46
      %s49 = sadd.s32 %s48, 1
      %p52 = scmp.eq.s32.totalorder %s14, 1
      %p53 = scmp.ne.s32.totalorder %s48, %s50
      %p54 = scmp.eq.s32.totalorder %s14, 0
      %p55 = por %p53, %p54
      %p56 = scmp.ne.s32.totalorder %s48, %s50
      %p57 = scmp.eq.s32.totalorder %s19, 1
      %p58 = por %p56, %p57
      %p59 = scmp.ne.s32.totalorder %s50, %s51
      %p60 = scmp.eq.s32.totalorder %s19, 0
      %p61 = por %p59, %p60
      %p62 = scmp.ne.s32.totalorder %s50, %s51
      %p63 = scmp.eq.s32.totalorder %s20, 1
      %p64 = por %p62, %p63
      %p66 = scmp.ne.s32.totalorder %s51, %s65
      %p67 = scmp.eq.s32.totalorder %s20, 0
      %p68 = por %p66, %p67
      %s70 = sadd.s32 %s69, 1
      %p73 = scmp.eq.s32.totalorder %s14, 1
      %p74 = scmp.ne.s32.totalorder %s69, %s71
      %p75 = scmp.eq.s32.totalorder %s14, 0
      %p76 = por %p74, %p75
      %p77 = scmp.ne.s32.totalorder %s69, %s71
      %p78 = scmp.eq.s32.totalorder %s19, 1
      %p79 = por %p77, %p78
      %p80 = scmp.ne.s32.totalorder %s71, %s72
      %p81 = scmp.eq.s32.totalorder %s19, 0
      %p82 = por %p80, %p81
      %p83 = scmp.ne.s32.totalorder %s71, %s72
      %p84 = scmp.eq.s32.totalorder %s20, 1
      %p85 = por %p83, %p84
      %p87 = scmp.ne.s32.totalorder %s72, %s86
      %p88 = scmp.eq.s32.totalorder %s20, 0
      %p89 = por %p87, %p88
      %s91 = sadd.s32 %s90, 1
      %p94 = scmp.eq.s32.totalorder %s14, 1
      %p95 = scmp.ne.s32.totalorder %s90, %s92
      %p96 = scmp.eq.s32.totalorder %s14, 0
      %p97 = por %p95, %p96
      %p98 = scmp.ne.s32.totalorder %s90, %s92
      %p99 = scmp.eq.s32.totalorder %s19, 1
      %p100 = por %p98, %p99
      %p101 = scmp.ne.s32.totalorder %s92, %s93
      %p102 = scmp.eq.s32.totalorder %s19, 0
      %p103 = por %p101, %p102
      %p104 = scmp.ne.s32.totalorder %s92, %s93
      %p105 = scmp.eq.s32.totalorder %s20, 1
      %p106 = por %p104, %p105
      %p108 = scmp.ne.s32.totalorder %s93, %s107
      %p109 = scmp.eq.s32.totalorder %s20, 0
      %p110 = por %p108, %p109
      %s112 = sadd.s32 %s111, 1
      %p115 = scmp.eq.s32.totalorder %s14, 1
      %p116 = scmp.ne.s32.totalorder %s111, %s113
      %p117 = scmp.eq.s32.totalorder %s14, 0
      %p118 = por %p116, %p117
      %p119 = scmp.ne.s32.totalorder %s111, %s113
      %p120 = scmp.eq.s32.totalorder %s19, 1
      %p121 = por %p119, %p120
      %p122 = scmp.ne.s32.totalorder %s113, %s114
      %p123 = scmp.eq.s32.totalorder %s19, 0
      %p124 = por %p122, %p123
      %p125 = scmp.ne.s32.totalorder %s113, %s114
      %p126 = scmp.eq.s32.totalorder %s20, 1
      %p127 = por %p125, %p126
      %p129 = scmp.ne.s32.totalorder %s114, %s128
      %p130 = scmp.eq.s32.totalorder %s20, 0
      %p131 = por %p129, %p130
      %s132 = ssub.s32 %s14, %s21
      %p133 = scmp.eq.s32.totalorder %s132, 0
      %s135 = sadd.s32 %s134, 1
      %s136 = scalar_select %p133, %s134, %s135
      %p139 = pneg %p133
      %p140 = scmp.eq.s32.totalorder %s14, 1
      %p141 = por %p139, %p140
      %p142 = scmp.ne.s32.totalorder %s134, %s137
      %p143 = scmp.eq.s32.totalorder %s14, 0
      %p144 = por %p142, %p143
      %p145 = scmp.ne.s32.totalorder %s134, %s137
      %p146 = scmp.eq.s32.totalorder %s19, 1
      %p147 = por %p145, %p146
      %p148 = scmp.ne.s32.totalorder %s137, %s138
      %p149 = scmp.eq.s32.totalorder %s19, 0
      %p150 = por %p148, %p149
      %p151 = scmp.ne.s32.totalorder %s137, %s138
      %p152 = scmp.eq.s32.totalorder %s20, 1
      %p153 = por %p151, %p152
      %p155 = scmp.ne.s32.totalorder %s138, %s154
      %p156 = scmp.eq.s32.totalorder %s20, 0
      %p157 = por %p155, %p156
      %p158 = scmp.le.s32.totalorder 1, %s14
      %p159 = scmp.lt.s32.totalorder %s14, 3
      %p160 = pnand %p158, %p159
      %p161 = pneg %p160
      // Predicated region
      $region9: #{decision_transformer.11} parent=5 // pred_check
        _
      $region10: #{decision_transformer.11} parent=5 // pred_check_branch
        %163 = sbr.rel (%p160) target = $region12
      $region11: #{decision_transformer.11} parent=5 // pred_region
        %s164 = ssub.s32 %s14, 1
        // Predicated region
        $region13: #{decision_transformer.11} parent=11 // pred_check
          %p165 = pneg %p61
        $region14: #{decision_transformer.11} parent=11 // pred_check_branch
          %167 = sbr.rel (%p165) target = $region16
        $region15: #{decision_transformer.11} parent=11 // pred_region
          _
        $region16: #{decision_transformer.11} parent=11 // pred_fallthru
          _
        // Predicated region
        $region17: #{decision_transformer.11} parent=11 // pred_check
          %p168 = pneg %p82
        $region18: #{decision_transformer.11} parent=11 // pred_check_branch
          %170 = sbr.rel (%p168) target = $region20
        $region19: #{decision_transformer.11} parent=11 // pred_region
          _
        $region20: #{decision_transformer.11} parent=11 // pred_fallthru
          _
        // Predicated region
        $region21: #{decision_transformer.11} parent=11 // pred_check
          %p171 = pneg %p103
        $region22: #{decision_transformer.11} parent=11 // pred_check_branch
          %173 = sbr.rel (%p171) target = $region24
        $region23: #{decision_transformer.11} parent=11 // pred_region
          _
        $region24: #{decision_transformer.11} parent=11 // pred_fallthru
          _
        // Predicated region
        $region25: #{decision_transformer.11} parent=11 // pred_check
          %p174 = pneg %p124
        $region26: #{decision_transformer.11} parent=11 // pred_check_branch
          %176 = sbr.rel (%p174) target = $region28
        $region27: #{decision_transformer.11} parent=11 // pred_region
          _
        $region28: #{decision_transformer.11} parent=11 // pred_fallthru
          _
      $region12: #{decision_transformer.11} parent=5 // pred_fallthru
        _
      %p177 = scmp.lt.s32.totalorder %s14, 2
      // Predicated region
      $region29: #{decision_transformer.11} parent=5 // pred_check
        %p178 = pneg %p177
      $region30: #{decision_transformer.11} parent=5 // pred_check_branch
        %180 = sbr.rel (%p178) target = $region32
      $region31: #{decision_transformer.11} parent=5 // pred_region
        // Predicated region
        $region33: #{decision_transformer.11} parent=31 // pred_check
          %p181 = pneg %p34
        $region34: #{decision_transformer.11} parent=31 // pred_check_branch
          %183 = sbr.rel (%p181) target = $region36
        $region35: #{decision_transformer.11} parent=31 // pred_region
          %p184 = scmp.lt.s32.totalorder %s14, 1
          %s185 = scalar_select %p184, %s14, 1
          %s186 = smul.addr %s185, 8
          %s187 = scalar_lea.vmem %s0, %s186
        $region36: #{decision_transformer.11} parent=31 // pred_fallthru
          _
      $region32: #{decision_transformer.11} parent=5 // pred_fallthru
        _
      %p188 = scmp.le.s32.totalorder 1, %s14
      %p189 = scmp.lt.s32.totalorder %s14, 3
      %p190 = pnand %p188, %p189
      %p191 = pneg %p190
      // Predicated region
      $region37: #{decision_transformer.11} parent=5 // pred_check
        _
      $region38: #{decision_transformer.11} parent=5 // pred_check_branch
        %193 = sbr.rel (%p190) target = $region40
      $region39: #{decision_transformer.11} parent=5 // pred_region
        %s194 = ssub.s32 %s14, 1
        %p195 = scmp.lt.s32.totalorder %s19, 1
        %s196 = scalar_select %p195, %s19, 1
        %s197 = smul.addr %s196, 8
        %s198 = scalar_lea.vmem %s0, %s197
        %p199 = pneg %p40
        %p200 = pneg %p37
        %p201 = pneg %p61
        %p202 = pneg %p58
        %p203 = pneg %p82
        %p204 = pneg %p79
        %p205 = pneg %p103
        %p206 = pneg %p100
        %p207 = pneg %p124
        %p208 = pneg %p121
        %p209 = pneg %p150
        %p210 = pneg %p147
        %s211 = sand.u32 %s137, 1
        %s212 = scalar_lea.sflag [#allocation3], %s211
        %s213 = sand.u32 %s137, 1
        %s214 = smul.addr %s213, 8
        %s215 = scalar_lea.vmem [#allocation2], %s214
        %p216 = scmp.lt.s32.totalorder %s19, 1
        %s217 = scalar_select %p216, %s19, 1
        %s218 = smul.addr %s217, 8
        %s219 = scalar_lea.vmem %s0, %s218
        %v221 = vld [vmem:[%s219] sm:$0xff]
        %v222 = vld [vmem:[%s1] sm:$0xf]
        %v223 = vld [vmem:[%s1 + $0x4] sm:$0xf]
        %v224 = vld [vmem:[%s1 + $0x8] sm:$0xf]
        %v225 = vld [vmem:[%s1 + $0xc] sm:$0xf]
        %v226 = vpack.c.bf16 %v221, %v221
        %v227 = vld [vmem:[%s2] sm:$0x1]
        %v229 = vlaneseq
        %v230 = vshrl.u32 %v229, 7
        %v231 = vsub.s32 0, %v230
        %v232 = vrot.slane %v227, %v231
        %v238 = vunpack.c.l.b16 %v222
        %v239 = vunpack.c.l.b16 %v223
        %v240 = vunpack.c.l.b16 %v224
        %v241 = vunpack.c.l.b16 %v225
        %v242 = vpack.c.b16 %v239, %v238
        %v243 = vpack.c.b16 %v241, %v240
        %vm246 = vcmask 261120
        %v248 = vsel %vm246, %v226, 0
        %250 = vmatprep.subr.bf16.mxu0 0
        %251 = vmatpush1.bf16.msra.mxu0 0
        %252 = vmatprep.subr.bf16.mxu0 0
        %253 = vmatpush1.bf16.msra.mxu0 0
        %254 = vmatprep.subr.bf16.mxu0 0
        %255 = vmatpush1.bf16.msra.mxu0 0
        %256 = vmatprep.subr.bf16.mxu0 0
        %257 = vmatpush1.bf16.msra.mxu0 0
        %258 = vmatprep.subr.bf16.mxu0 0
        %259 = vmatpush1.bf16.msra.mxu0 0
        %260 = vmatprep.subr.bf16.mxu0 0
        %261 = vmatpush1.bf16.msra.mxu0 0
        %262 = vmatprep.subr.bf16.mxu0 0
        %263 = vmatpush1.bf16.msra.mxu0 %v243
        %264 = vmatprep.subr.bf16.mxu0 0
        %265 = vmatpush1.bf16.msra.mxu0 %v242
        %266 = vmatprep.subr.bf16.mxu0 0
        %267 = vmatpush2.bf16.msra.mxu0 0
        %268 = vmatprep.subr.bf16.mxu0 0
        %269 = vmatpush2.bf16.msra.mxu0 0
        %270 = vmatprep.subr.bf16.mxu0 0
        %271 = vmatpush2.bf16.msra.mxu0 0
        %272 = vmatprep.subr.bf16.mxu0 0
        %273 = vmatpush2.bf16.msra.mxu0 0
        %274 = vmatprep.subr.bf16.mxu0 0
        %275 = vmatpush2.bf16.msra.mxu0 0
        %276 = vmatprep.subr.bf16.mxu0 0
        %277 = vmatpush2.bf16.msra.mxu0 0
        %278 = vmatprep.subr.bf16.mxu0 0
        %279 = vmatpush2.bf16.msra.mxu0 0
        %280 = vmatprep.subr.bf16.mxu0 0
        %281 = vmatpush2.bf16.msra.mxu0 0
        %282 = vmatprep.mubr.bf16.mxu0 0
        %283 = vmatmul.mubr.bf16.gmra.mxu0 %v248
        %v284 = vpop.f32.mrf.mxu0
        %v285 = vadd.f32 %v232, %v284
        %v286 = vpop.f32.mrf.mxu0
        %v287 = vpop.f32.mrf.mxu0
        %v288 = vpop.f32.mrf.mxu0
        %289 = vdwg.mxu0
        %v290 = vmax.f32 %v285, 0.0
        %v291 = vld [vmem:[%s3] sm:$0xf]
        %v292 = vld [vmem:[%s3 + $0x4] sm:$0xf]
        %v293 = vld [vmem:[%s3 + $0x8] sm:$0xf]
        %v294 = vld [vmem:[%s3 + $0xc] sm:$0xf]
        %v295 = vld [vmem:[%s3 + $0x10] sm:$0xf]
        %v296 = vld [vmem:[%s3 + $0x14] sm:$0xf]
        %v297 = vld [vmem:[%s3 + $0x18] sm:$0xf]
        %v298 = vld [vmem:[%s3 + $0x1c] sm:$0xf]
        %v299 = vld [vmem:[%s3 + $0x20] sm:$0xf]
        %v300 = vld [vmem:[%s3 + $0x24] sm:$0xf]
        %v301 = vld [vmem:[%s3 + $0x28] sm:$0xf]
        %v302 = vld [vmem:[%s3 + $0x2c] sm:$0xf]
        %v303 = vld [vmem:[%s3 + $0x30] sm:$0xf]
        %v304 = vld [vmem:[%s3 + $0x34] sm:$0xf]
        %v305 = vld [vmem:[%s3 + $0x38] sm:$0xf]
        %v306 = vld [vmem:[%s3 + $0x3c] sm:$0xf]
        %v307 = vpack.c.bf16 %v290, %v290
        %v308 = vld [vmem:[%s4] sm:$0x1]
        %v310 = vlaneseq
        %v311 = vshrl.u32 %v310, 7
        %v312 = vsub.s32 0, %v311
        %v313 = vrot.slane %v308, %v312
        %v331 = vunpack.c.l.b16 %v291
        %v332 = vunpack.c.l.b16 %v292
        %v333 = vunpack.c.l.b16 %v293
        %v334 = vunpack.c.l.b16 %v294
        %v335 = vunpack.c.l.b16 %v295
        %v336 = vunpack.c.l.b16 %v296
        %v337 = vunpack.c.l.b16 %v297
        %v338 = vunpack.c.l.b16 %v298
        %v339 = vunpack.c.l.b16 %v299
        %v340 = vunpack.c.l.b16 %v300
        %v341 = vunpack.c.l.b16 %v301
        %v342 = vunpack.c.l.b16 %v302
        %v343 = vunpack.c.l.b16 %v303
        %v344 = vunpack.c.l.b16 %v304
        %v345 = vunpack.c.l.b16 %v305
        %v346 = vunpack.c.l.b16 %v306
        %v347 = vpack.c.b16 %v332, %v331
        %v348 = vpack.c.b16 %v334, %v333
        %v349 = vpack.c.b16 %v336, %v335
        %v350 = vpack.c.b16 %v338, %v337
        %v351 = vpack.c.b16 %v340, %v339
        %v352 = vpack.c.b16 %v342, %v341
        %v353 = vpack.c.b16 %v344, %v343
        %v354 = vpack.c.b16 %v346, %v345
        %363 = vmatprep.subr.bf16.mxu0 0
        %364 = vmatpush1.bf16.msra.mxu0 %v354
        %365 = vmatprep.subr.bf16.mxu0 0
        %366 = vmatpush1.bf16.msra.mxu0 %v353
        %367 = vmatprep.subr.bf16.mxu0 0
        %368 = vmatpush1.bf16.msra.mxu0 %v352
        %369 = vmatprep.subr.bf16.mxu0 0
        %370 = vmatpush1.bf16.msra.mxu0 %v351
        %371 = vmatprep.subr.bf16.mxu0 0
        %372 = vmatpush1.bf16.msra.mxu0 %v350
        %373 = vmatprep.subr.bf16.mxu0 0
        %374 = vmatpush1.bf16.msra.mxu0 %v349
        %375 = vmatprep.subr.bf16.mxu0 0
        %376 = vmatpush1.bf16.msra.mxu0 %v348
        %377 = vmatprep.subr.bf16.mxu0 0
        %378 = vmatpush1.bf16.msra.mxu0 %v347
        %379 = vmatprep.subr.bf16.mxu0 0
        %380 = vmatpush2.bf16.msra.mxu0 0
        %381 = vmatprep.subr.bf16.mxu0 0
        %382 = vmatpush2.bf16.msra.mxu0 0
        %383 = vmatprep.subr.bf16.mxu0 0
        %384 = vmatpush2.bf16.msra.mxu0 0
        %385 = vmatprep.subr.bf16.mxu0 0
        %386 = vmatpush2.bf16.msra.mxu0 0
        %387 = vmatprep.subr.bf16.mxu0 0
        %388 = vmatpush2.bf16.msra.mxu0 0
        %389 = vmatprep.subr.bf16.mxu0 0
        %390 = vmatpush2.bf16.msra.mxu0 0
        %391 = vmatprep.subr.bf16.mxu0 0
        %392 = vmatpush2.bf16.msra.mxu0 0
        %393 = vmatprep.subr.bf16.mxu0 0
        %394 = vmatpush2.bf16.msra.mxu0 0
        %395 = vmatprep.mubr.bf16.mxu0 0
        %396 = vmatmul.mubr.bf16.gmra.mxu0 %v307
        %v397 = vpop.f32.mrf.mxu0
        %v398 = vadd.f32 %v313, %v397
        %v399 = vpop.f32.mrf.mxu0
        %v400 = vpop.f32.mrf.mxu0
        %v401 = vpop.f32.mrf.mxu0
        %402 = vdwg.mxu0
        %v403 = vlaneseq
        %v404 = vand.u32 %v403, 127
        %vm405 = vcmp.lt.s32.totalorder %v404, 9
        %v406 = vsel %vm405, %v398, -1e+30
        %407 = vmax.xlane.f32.xlu0 %v406
        %v408 = vpop.xlane.xlu0 %407
        %v409 = vsub.f32 %v406, %v408
        %v410 = vmul.f32 %v409, 1.442695
        %v411 = vpow.pop %v410
        %412 = vadd.xlane.f32.xlu0 %v411
        %v413 = vpop.xlane.xlu0 %412
        %v414 = vrcp.pop %v413
        %v415 = vmul.f32 %v411, %v414
        %416 = vst [vmem:[%s215] sm:$0xff] %v415
        %s417 = sand.u32 %s137, 1
        %s418 = scalar_lea.sflag [#allocation3], %s417
        %s419 = sand.u32 %s137, 1
        %s420 = smul.addr %s419, 8
        %s421 = scalar_lea.vmem [#allocation2], %s420
        // Predicated region
        $region41: #{decision_transformer.11} parent=39 // pred_check
          %p422 = pneg %p147
        $region42: #{decision_transformer.11} parent=39 // pred_check_branch
          %424 = sbr.rel (%p422) target = $region44
        $region43: #{decision_transformer.11} parent=39 // pred_region
          %s426 = ssub.s32 128, 128
          %427 = vsyncadd %s418, %s426
          %s428 = smul.addr %s19, 128
          %s429 = scalar_lea.hbm %s5, %s428
          %s431 = sshll.u32 %s421, 4
          %s432 = int_to_ptr.vmem [resolvable:$true] %s431
          %434 = dma.vmem_to_hbm [thread:$0]  %s432, 128, %s429, %s418
        $region44: #{decision_transformer.11} parent=39 // pred_fallthru
          _
      $region40: #{decision_transformer.11} parent=5 // pred_fallthru
        _
      %p435 = scmp.le.s32.totalorder 2, %s14
      // Predicated region
      $region45: #{decision_transformer.11} parent=5 // pred_check
        %p436 = pneg %p435
      $region46: #{decision_transformer.11} parent=5 // pred_check_branch
        %438 = sbr.rel (%p436) target = $region48
      $region47: #{decision_transformer.11} parent=5 // pred_region
        %s439 = ssub.s32 %s14, 2
        // Predicated region
        $region49: #{decision_transformer.11} parent=47 // pred_check
          %p440 = pneg %p153
        $region50: #{decision_transformer.11} parent=47 // pred_check_branch
          %442 = sbr.rel (%p440) target = $region52
        $region51: #{decision_transformer.11} parent=47 // pred_region
          %s443 = sand.u32 %s138, 1
          %s444 = scalar_lea.sflag [#allocation3], %s443
          %s445 = sand.u32 %s138, 1
          %s446 = smul.addr %s445, 8
          %s447 = scalar_lea.vmem [#allocation2], %s446
          %448 = dma.done %s444, 128
        $region52: #{decision_transformer.11} parent=47 // pred_fallthru
          _
      $region48: #{decision_transformer.11} parent=5 // pred_fallthru
        _
    $region6: #{decision_transformer.11} parent=1 // loop_footer
      %s18 = sadd.s32 1, %s14
    $region7: #{decision_transformer.11} parent=1 // loop_footer_branch
      %13 = sbr.rel target = $region3
    $region8: #{decision_transformer.11} parent=1 // loop_exit
      _
    %449 = vsyncpa [#allocation3], 1
    %s450 = scalar_lea.sflag [#allocation3], 1
    %451 = vsyncpa %s450, 1

</llo_original>
